<compile_context>
chip_gen: v6e
topology: v6e:2x2x1
jax: 0.10.0
libtpu: 0.0.40
codegen_flags: <defaults>
</compile_context>

<pallas_src>
import jax
import jax.numpy as jnp
from jax.experimental import pallas as pl
from jax.experimental.pallas import tpu as pltpu


def _round_up(x, m):
    return (x + m - 1) // m * m


def _vmem_limit_bytes():
    """Scoped-VMEM budget sized per TPU generation (v7x: 64 MiB physical)."""
    budget = 48 * 1024 * 1024            # safe default on every generation
    try:
        phys = int(pltpu.get_tpu_info().vmem_capacity_bytes)
        if phys >= 32 * 1024 * 1024:
            budget = int(min(phys * 3 // 4, 96 * 1024 * 1024))
    except Exception:
        pass
    return budget


def fold_bn(w, b, gamma, beta, mean, var, eps=1e-5):
    """Fold eval-mode BatchNorm into the 1x1 conv: y = x @ w_f.T + b_f."""
    scale = gamma / jnp.sqrt(var + eps)          # (Cout,)
    w_f = w * scale[:, None]                     # (Cout, Cin)
    b_f = (b - mean) * scale + beta              # (Cout,)
    return w_f, b_f


# ----------------------------------------------------------------------------
# Kernel 1: pointwise (1x1) conv (BN folded) + ReLU as a tiled matmul.
# ----------------------------------------------------------------------------
def _pw_conv_bias_relu_kernel(x_ref, w_ref, b_ref, o_ref):
    # Activations cast to bf16 in VMEM (no-op when already bf16, no extra HBM
    # cast pass); bf16 x bf16 -> f32 accumulation on the MXU; bias + ReLU
    # epilogue in f32; bf16 store (halves writeback of this mem-bound kernel).
    x = x_ref[...].astype(jnp.bfloat16)
    y = jnp.dot(x, w_ref[...], preferred_element_type=jnp.float32)
    o_ref[...] = jnp.maximum(y + b_ref[...], 0.0).astype(o_ref.dtype)


def pw_conv_bn_relu_nhwc(x_nhwc, w, b, gamma, beta, mean, var, eps=1e-5,
                         out_dtype=jnp.bfloat16):
    """1x1 conv + folded BN + ReLU: (B, H, W, Cin) -> (B, H, W, Cout_pad).

    Cout is padded to a multiple of 128 (zero weight columns, zero bias) so
    every output store is lane-dense; the padded channels are exactly zero and
    are sliced off once at the end of the FRC block.
    """
    B, H, W, Cin = x_nhwc.shape
    Cout = w.shape[0]
    Cp = _round_up(Cout, 128)

    w_f, b_f = fold_bn(w, b, gamma, beta, mean, var, eps)
    wT = jnp.zeros((Cin, Cp), jnp.bfloat16).at[:, :Cout].set(
        w_f.T.astype(jnp.bfloat16))
    bp = jnp.zeros((1, Cp), jnp.float32).at[:, :Cout].set(b_f)

    N = B * H * W
    xf = x_nhwc.reshape(N, Cin)

    # >= 8 grid steps (>= 4 per v7x TensorCore) when N allows, <= 1024 rows.
    # A ragged last block (if any) is handled by Pallas (out-of-range rows are
    # dropped on write), so no wrapper-side row padding / extra HBM pass.
    tile_n = int(min(1024, max(16, _round_up(pl.cdiv(N, 8), 16))))
    grid = pl.cdiv(N, tile_n)

    out = pl.pallas_call(
        _pw_conv_bias_relu_kernel,
        out_shape=jax.ShapeDtypeStruct((N, Cp), out_dtype),
        grid_spec=pltpu.PrefetchScalarGridSpec(
            num_scalar_prefetch=0,
            grid=(grid,),
            in_specs=[
                pl.BlockSpec((tile_n, Cin), lambda i: (i, 0)),
                pl.BlockSpec((Cin, Cp), lambda i: (0, 0)),
                pl.BlockSpec((1, Cp), lambda i: (0, 0)),
            ],
            out_specs=pl.BlockSpec((tile_n, Cp), lambda i: (i, 0)),
        ),
        compiler_params=pltpu.CompilerParams(
            dimension_semantics=("parallel",),
            vmem_limit_bytes=_vmem_limit_bytes(),
        ),
    )(xf, wT, bp)
    return out.reshape(B, H, W, Cp)


# ----------------------------------------------------------------------------
# Kernel 2: calcMask + masked 3x3 average of upsampled conv1(x) + conv2(ref).
# Grid over (batch, 128-wide channel tiles); halo built in VMEM scratch.
# ----------------------------------------------------------------------------
_HALO_OFF = 8   # sublane-aligned interior column offset inside the scratch


def _frc_fuse_kernel(ref_ref, xup_ref, c2_ref, o_ref, rscr, xscr):
    _, H, W, C = o_ref.shape
    off = _HALO_OFF

    # Build the 1-px zero halo in VMEM (replaces wrapper-side jnp.pad, i.e.
    # one fewer full HBM read+write pass over ref and xup).  The interior is
    # stored at a sublane-aligned column offset so the store stays unmasked.
    rscr[...] = jnp.zeros_like(rscr)
    xscr[...] = jnp.zeros_like(xscr)
    rscr[1:H + 1, off:off + W, :] = ref_ref[0]
    xscr[1:H + 1, off:off + W, :] = xup_ref[0].astype(jnp.float32)
    rp = rscr[...]                                   # (H+2, W+16, C), zero halo
    xp = xscr[...]

    # Separable 3x3 box mean: 3 W(sublane)-shifted slabs of ref (reused by the
    # neighbor loop below) + 3 H(leading-axis) slices, instead of 9 slabs.
    r_w = [rp[:, off - 1 + dj:off - 1 + dj + W, :] for dj in range(3)]
    row3 = (r_w[0] + r_w[1]) + r_w[2]                              # (H+2, W, C)
    um = ((row3[0:H] + row3[1:H + 1]) + row3[2:H + 2]) * (1.0 / 9.0)

    center = r_w[1][1:H + 1]                                       # == ref tile
    ure = center > um

    # mask = ure*pos + (1-ure)*(1-pos)  ==  (pos == ure); select-based num/den
    # accumulation (fewer VALU ops than float mask arithmetic).
    num = jnp.zeros((H, W, C), jnp.float32)
    den = jnp.zeros((H, W, C), jnp.float32)
    for dj in range(3):
        x_wj = xp[:, off - 1 + dj:off - 1 + dj + W, :]             # (H+2, W, C)
        r_wj = r_w[dj]
        for di in range(3):
            pos = r_wj[di:di + H] > um
            eq = jnp.logical_not(jnp.logical_xor(pos, ure))        # pos == ure
            num = num + jnp.where(eq, x_wj[di:di + H], 0.0)
            den = den + jnp.where(eq, 1.0, 0.0)

    # den is an integer in [1, 9]: exact f32 division (parity with PyTorch).
    o_ref[0] = num / (den + 1e-6) + c2_ref[0].astype(jnp.float32)


def frc_fuse_nhwc(ref_cp, xup, c2):
    """ref_cp: (B,H,W,Cp) f32; xup/c2: (B,H,W,Cp) bf16 -> (B,H,W,Cp) f32."""
    B, H, W, Cp = ref_cp.shape
    tc = min(Cp, 128)                       # Cp is a multiple of 128
    spec = pl.BlockSpec((1, H, W, tc), lambda b, c: (b, 0, 0, c))
    return pl.pallas_call(
        _frc_fuse_kernel,
        out_shape=jax.ShapeDtypeStruct((B, H, W, Cp), jnp.float32),
        grid_spec=pltpu.PrefetchScalarGridSpec(
            num_scalar_prefetch=0,
            grid=(B, Cp // tc),
            in_specs=[spec, spec, spec],
            out_specs=spec,
            scratch_shapes=[
                pltpu.VMEM((H + 2, W + 2 * _HALO_OFF, tc), jnp.float32),
                pltpu.VMEM((H + 2, W + 2 * _HALO_OFF, tc), jnp.float32),
            ],
        ),
        compiler_params=pltpu.CompilerParams(
            dimension_semantics=("parallel", "parallel"),
            vmem_limit_bytes=_vmem_limit_bytes(),
        ),
    )(ref_cp, xup, c2)


# ----------------------------------------------------------------------------
# Glue (plain JAX): nearest interpolate, param init, full FRC forward
# ----------------------------------------------------------------------------
def nearest_resize_nhwc(x, out_h, out_w):
    """F.interpolate(..., mode='nearest') semantics: src = floor(dst*in/out)."""
    B, H, W, C = x.shape
    ih = (jnp.arange(out_h) * H) // out_h
    iw = (jnp.arange(out_w) * W) // out_w
    return x[:, ih[:, None], iw[None, :], :]


def init_frc_params(key, d_in, d_out):
    ks = jax.random.split(key, 8)
    return {
        "w1": 0.2 * jax.random.normal(ks[0], (d_out, d_in), jnp.float32),
        "b1": 0.1 * jax.random.normal(ks[1], (d_out,), jnp.float32),
        "bn1_gamma": 1.0 + 0.1 * jax.random.normal(ks[2], (d_out,), jnp.float32),
        "bn1_beta": 0.1 * jax.random.normal(ks[3], (d_out,), jnp.float32),
        "bn1_mean": 0.05 * jax.random.normal(ks[4], (d_out,), jnp.float32),
        "bn1_var": 1.0 + 0.1 * jax.nn.softplus(jax.random.normal(ks[5], (d_out,), jnp.float32)),
        "w2": 0.2 * jax.random.normal(ks[6], (d_out, d_out), jnp.float32),
        "b2": 0.1 * jax.random.normal(ks[7], (d_out,), jnp.float32),
        "bn2_gamma": jnp.ones((d_out,), jnp.float32),
        "bn2_beta": jnp.zeros((d_out,), jnp.float32),
        "bn2_mean": jnp.zeros((d_out,), jnp.float32),
        "bn2_var": jnp.ones((d_out,), jnp.float32),
    }


def frc_forward(params, x_nchw, ref_nchw):
    """FRC.forward — NCHW at the PyTorch boundary, channel-last (NHWC) inside."""
    d_out = ref_nchw.shape[1]
    # bf16 cast rides the layout transpose (x only feeds conv1).
    x = jnp.transpose(x_nchw, (0, 2, 3, 1)).astype(jnp.bfloat16)
    ref = jnp.transpose(ref_nchw, (0, 2, 3, 1))          # f32: mask math stays f32
    c1 = pw_conv_bn_relu_nhwc(x, params["w1"], params["b1"], params["bn1_gamma"],
                              params["bn1_beta"], params["bn1_mean"], params["bn1_var"])
    xup = nearest_resize_nhwc(c1, ref.shape[1], ref.shape[2])          # bf16
    c2 = pw_conv_bn_relu_nhwc(ref, params["w2"], params["b2"], params["bn2_gamma"],
                              params["bn2_beta"], params["bn2_mean"], params["bn2_var"])
    Cp = c2.shape[-1]
    if Cp != d_out:
        # Real FrcPN widths (256/512/1024) are already multiples of 128; only
        # narrow levels (e.g. 64-channel necks) pay this zero-channel pad in
        # exchange for lane-dense fuse blocks and stores.
        ref_cp = jnp.pad(ref, ((0, 0), (0, 0), (0, 0), (0, Cp - d_out)))
    else:
        ref_cp = ref
    out = frc_fuse_nhwc(ref_cp, xup, c2)                  # (B, Hr, Wr, Cp) f32
    return jnp.transpose(out[..., :d_out], (0, 3, 1, 2))


# ----------------------------------------------------------------------------
# Pure-JAX reference (same folded weights / bf16 operand rounding / addition
# grouping for the 3x3 mean) for the correctness check.
# ----------------------------------------------------------------------------
def _pw_conv_bn_relu_ref(x_nhwc, w, b, gamma, beta, mean, var, eps=1e-5):
    w_f, b_f = fold_bn(w, b, gamma, beta, mean, var, eps)
    xc = x_nhwc.astype(jnp.bfloat16).astype(jnp.float32)
    wc = w_f.astype(jnp.bfloat16).astype(jnp.float32)
    y = jnp.einsum("bhwc,oc->bhwo", xc, wc) + b_f
    return jnp.maximum(y, 0.0).astype(jnp.bfloat16)


def frc_forward_ref(params, x_nchw, ref_nchw):
    x = jnp.transpose(x_nchw, (0, 2, 3, 1))
    ref = jnp.transpose(ref_nchw, (0, 2, 3, 1))
    c1 = _pw_conv_bn_relu_ref(x, params["w1"], params["b1"], params["bn1_gamma"],
                              params["bn1_beta"], params["bn1_mean"], params["bn1_var"])
    xup = nearest_resize_nhwc(c1, ref.shape[1], ref.shape[2]).astype(jnp.float32)
    c2 = _pw_conv_bn_relu_ref(ref, params["w2"], params["b2"], params["bn2_gamma"],
                              params["bn2_beta"], params["bn2_mean"], params["bn2_var"]
                              ).astype(jnp.float32)

    B, H, W, C = ref.shape
    rp = jnp.pad(ref, ((0, 0), (1, 1), (1, 1), (0, 0)))
    xpad = jnp.pad(xup, ((0, 0), (1, 1), (1, 1), (0, 0)))

    # Same separable grouping for the 3x3 mean as the kernel so the strict `>`
    # mask comparisons agree exactly.
    r_w = [rp[:, :, dj:dj + W, :] for dj in range(3)]
    row3 = (r_w[0] + r_w[1]) + r_w[2]
    um = ((row3[:, 0:H] + row3[:, 1:H + 1]) + row3[:, 2:H + 2]) * (1.0 / 9.0)

    ure = ((ref - um) > 0.0).astype(jnp.float32)
    num = jnp.zeros_like(ref)
    den = jnp.zeros_like(ref)
    for dj in range(3):
        for di in range(3):
            nbr_r = rp[:, di:di + H, dj:dj + W, :]
            nbr_x = xpad[:, di:di + H, dj:dj + W, :]
            pos = ((nbr_r - um) > 0.0).astype(jnp.float32)
            m = ure * pos + (1.0 - ure) * (1.0 - pos)   # original PyTorch formula
            num = num + nbr_x * m
            den = den + m
    out = num / (den + 1e-6) + c2
    return jnp.transpose(out, (0, 3, 1, 2))


# ----------------------------------------------------------------------------
if __name__ == "__main__":
    key = jax.random.PRNGKey(0)
    k_p, k_x, k_r = jax.random.split(key, 3)

    B, d_in, d_out = 2, 4, 8
    Hx, Wx = 8, 8          # low-res input x
    Hr, Wr = 16, 16        # reference (target) resolution

    params = init_frc_params(k_p, d_in, d_out)
    x = jax.random.normal(k_x, (B, d_in, Hx, Wx), jnp.float32)
    ref = jax.random.normal(k_r, (B, d_out, Hr, Wr), jnp.float32)

    fwd = jax.jit(frc_forward)
    out = jax.block_until_ready(fwd(params, x, ref))
    out_ref = jax.block_until_ready(frc_forward_ref(params, x, ref))

    assert out.shape == (B, d_out, Hr, Wr)
    err = float(jnp.max(jnp.abs(out - out_ref)))
    # Fuse math (mask + division) is exact f32; the only tolerance needed is
    # for bf16 rounding of the conv outputs (MXU vs einsum accumulation order).
    assert err < 2e-2, err
    print("KERNEL_OK")
</pallas_src>

<mosaic_0001>
module attributes {stable_mosaic.version = 11 : i64} {
  func.func @_pw_conv_bias_relu_kernel(%arg0: i32, %arg1: memref<16x4xbf16, #tpu.memory_space<vmem>>, %arg2: memref<4x128xbf16, #tpu.memory_space<vmem>>, %arg3: memref<1x128xf32, #tpu.memory_space<vmem>>, %arg4: memref<16x128xbf16, #tpu.memory_space<vmem>>) attributes {dimension_semantics = [#tpu.dimension_semantics<parallel>], iteration_bounds = array<i64: 8>, scalar_prefetch = 0 : i64, scratch_operands = 0 : i64, tpu.core_type = #tpu.core_type<tc>, window_params = [{transform_indices = @transform_0, window_bounds = array<i64: 16, 4>}, {pipeline_mode = #tpu.pipeline_mode<synchronous>, transform_indices = @transform_1, window_bounds = array<i64: 4, 128>}, {pipeline_mode = #tpu.pipeline_mode<synchronous>, transform_indices = @transform_2, window_bounds = array<i64: 1, 128>}, {transform_indices = @transform_3, window_bounds = array<i64: 16, 128>}]} {
    %c0 = arith.constant 0 : index
    %c0_0 = arith.constant 0 : index
    %0 = vector.load %arg1[%c0, %c0_0] : memref<16x4xbf16, #tpu.memory_space<vmem>>, vector<16x4xbf16>
    %c0_1 = arith.constant 0 : index
    %c0_2 = arith.constant 0 : index
    %1 = vector.load %arg2[%c0_1, %c0_2] : memref<4x128xbf16, #tpu.memory_space<vmem>>, vector<4x128xbf16>
    %cst = arith.constant dense<0.000000e+00> : vector<16x128xf32>
    %2 = tpu.matmul %0, %1, %cst {dimension_numbers = #tpu.dot_dimension_numbers<[1], [0], [0], [1], [0, 0, 1, 1], [], []>} : vector<16x4xbf16>, vector<4x128xbf16>, vector<16x128xf32> -> vector<16x128xf32>
    %c0_3 = arith.constant 0 : index
    %c0_4 = arith.constant 0 : index
    %3 = vector.load %arg3[%c0_3, %c0_4] : memref<1x128xf32, #tpu.memory_space<vmem>>, vector<1x128xf32>
    %4 = vector.broadcast %3 : vector<1x128xf32> to vector<16x128xf32>
    %5 = arith.addf %2, %4 : vector<16x128xf32>
    %cst_5 = arith.constant 0.000000e+00 : f32
    %6 = vector.broadcast %cst_5 : f32 to vector<16x128xf32>
    %7 = arith.maximumf %5, %6 : vector<16x128xf32>
    %8 = arith.truncf %7 : vector<16x128xf32> to vector<16x128xbf16>
    %c0_6 = arith.constant 0 : index
    %c0_7 = arith.constant 0 : index
    %9 = vector.load %arg4[%c0_6, %c0_7] : memref<16x128xbf16, #tpu.memory_space<vmem>>, vector<16x128xbf16>
    tpu.vector_store %arg4[%c0_6, %c0_7], %8 {strides = array<i32>} : memref<16x128xbf16, #tpu.memory_space<vmem>>, vector<16x128xbf16>,
    return
  }
  func.func @transform_0(%arg0: i32) -> (i32, i32) {
    %c0_i32 = arith.constant 0 : i32
    %c0_i32_0 = arith.constant 0 : i32
    return %arg0, %c0_i32 : i32, i32
  }
  func.func @transform_1(%arg0: i32) -> (i32, i32) {
    %c0_i32 = arith.constant 0 : i32
    %c0_i32_0 = arith.constant 0 : i32
    %c0_i32_1 = arith.constant 0 : i32
    return %c0_i32, %c0_i32_0 : i32, i32
  }
  func.func @transform_2(%arg0: i32) -> (i32, i32) {
    %c0_i32 = arith.constant 0 : i32
    %c0_i32_0 = arith.constant 0 : i32
    %c0_i32_1 = arith.constant 0 : i32
    return %c0_i32, %c0_i32_0 : i32, i32
  }
  func.func @transform_3(%arg0: i32) -> (i32, i32) {
    %c0_i32 = arith.constant 0 : i32
    %c0_i32_0 = arith.constant 0 : i32
    return %arg0, %c0_i32 : i32, i32
  }
}

module attributes {stable_mosaic.version = 11 : i64} {
  func.func @_pw_conv_bias_relu_kernel(%arg0: i32, %arg1: memref<64x8xf32, #tpu.memory_space<vmem>>, %arg2: memref<8x128xbf16, #tpu.memory_space<vmem>>, %arg3: memref<1x128xf32, #tpu.memory_space<vmem>>, %arg4: memref<64x128xbf16, #tpu.memory_space<vmem>>) attributes {dimension_semantics = [#tpu.dimension_semantics<parallel>], iteration_bounds = array<i64: 8>, scalar_prefetch = 0 : i64, scratch_operands = 0 : i64, tpu.core_type = #tpu.core_type<tc>, window_params = [{transform_indices = @transform_0, window_bounds = array<i64: 64, 8>}, {pipeline_mode = #tpu.pipeline_mode<synchronous>, transform_indices = @transform_1, window_bounds = array<i64: 8, 128>}, {pipeline_mode = #tpu.pipeline_mode<synchronous>, transform_indices = @transform_2, window_bounds = array<i64: 1, 128>}, {transform_indices = @transform_3, window_bounds = array<i64: 64, 128>}]} {
    %c0 = arith.constant 0 : index
    %c0_0 = arith.constant 0 : index
    %0 = vector.load %arg1[%c0, %c0_0] : memref<64x8xf32, #tpu.memory_space<vmem>>, vector<64x8xf32>
    %1 = arith.truncf %0 : vector<64x8xf32> to vector<64x8xbf16>
    %c0_1 = arith.constant 0 : index
    %c0_2 = arith.constant 0 : index
    %2 = vector.load %arg2[%c0_1, %c0_2] : memref<8x128xbf16, #tpu.memory_space<vmem>>, vector<8x128xbf16>
    %cst = arith.constant dense<0.000000e+00> : vector<64x128xf32>
    %3 = tpu.matmul %1, %2, %cst {dimension_numbers = #tpu.dot_dimension_numbers<[1], [0], [0], [1], [0, 0, 1, 1], [], []>} : vector<64x8xbf16>, vector<8x128xbf16>, vector<64x128xf32> -> vector<64x128xf32>
    %c0_3 = arith.constant 0 : index
    %c0_4 = arith.constant 0 : index
    %4 = vector.load %arg3[%c0_3, %c0_4] : memref<1x128xf32, #tpu.memory_space<vmem>>, vector<1x128xf32>
    %5 = vector.broadcast %4 : vector<1x128xf32> to vector<64x128xf32>
    %6 = arith.addf %3, %5 : vector<64x128xf32>
    %cst_5 = arith.constant 0.000000e+00 : f32
    %7 = vector.broadcast %cst_5 : f32 to vector<64x128xf32>
    %8 = arith.maximumf %6, %7 : vector<64x128xf32>
    %9 = arith.truncf %8 : vector<64x128xf32> to vector<64x128xbf16>
    %c0_6 = arith.constant 0 : index
    %c0_7 = arith.constant 0 : index
    %10 = vector.load %arg4[%c0_6, %c0_7] : memref<64x128xbf16, #tpu.memory_space<vmem>>, vector<64x128xbf16>
    tpu.vector_store %arg4[%c0_6, %c0_7], %9 {strides = array<i32>} : memref<64x128xbf16, #tpu.memory_space<vmem>>, vector<64x128xbf16>,
    return
  }
  func.func @transform_0(%arg0: i32) -> (i32, i32) {
    %c0_i32 = arith.constant 0 : i32
    %c0_i32_0 = arith.constant 0 : i32
    return %arg0, %c0_i32 : i32, i32
  }
  func.func @transform_1(%arg0: i32) -> (i32, i32) {
    %c0_i32 = arith.constant 0 : i32
    %c0_i32_0 = arith.constant 0 : i32
    %c0_i32_1 = arith.constant 0 : i32
    return %c0_i32, %c0_i32_0 : i32, i32
  }
  func.func @transform_2(%arg0: i32) -> (i32, i32) {
    %c0_i32 = arith.constant 0 : i32
    %c0_i32_0 = arith.constant 0 : i32
    %c0_i32_1 = arith.constant 0 : i32
    return %c0_i32, %c0_i32_0 : i32, i32
  }
  func.func @transform_3(%arg0: i32) -> (i32, i32) {
    %c0_i32 = arith.constant 0 : i32
    %c0_i32_0 = arith.constant 0 : i32
    return %arg0, %c0_i32 : i32, i32
  }
}

module attributes {stable_mosaic.version = 11 : i64} {
  func.func @_frc_fuse_kernel(%arg0: i32, %arg1: i32, %arg2: memref<1x16x16x128xf32, #tpu.memory_space<vmem>>, %arg3: memref<1x16x16x128xbf16, #tpu.memory_space<vmem>>, %arg4: memref<1x16x16x128xbf16, #tpu.memory_space<vmem>>, %arg5: memref<1x16x16x128xf32, #tpu.memory_space<vmem>>, %arg6: memref<18x32x128xf32, #tpu.memory_space<vmem>>, %arg7: memref<18x32x128xf32, #tpu.memory_space<vmem>>) attributes {dimension_semantics = [#tpu.dimension_semantics<parallel>, #tpu.dimension_semantics<parallel>], iteration_bounds = array<i64: 2, 1>, scalar_prefetch = 0 : i64, scratch_operands = 2 : i64, tpu.core_type = #tpu.core_type<tc>, window_params = [{transform_indices = @transform_0, window_bounds = array<i64: 1, 16, 16, 128>}, {transform_indices = @transform_1, window_bounds = array<i64: 1, 16, 16, 128>}, {transform_indices = @transform_2, window_bounds = array<i64: 1, 16, 16, 128>}, {transform_indices = @transform_3, window_bounds = array<i64: 1, 16, 16, 128>}]} {
    %cst = arith.constant 0.000000e+00 : f32
    %0 = vector.broadcast %cst : f32 to vector<18x32x128xf32>
    %c0 = arith.constant 0 : index
    %c0_0 = arith.constant 0 : index
    %c0_1 = arith.constant 0 : index
    %1 = vector.load %arg6[%c0, %c0_0, %c0_1] : memref<18x32x128xf32, #tpu.memory_space<vmem>>, vector<18x32x128xf32>
    tpu.vector_store %arg6[%c0, %c0_0, %c0_1], %0 {strides = array<i32>} : memref<18x32x128xf32, #tpu.memory_space<vmem>>, vector<18x32x128xf32>,
    %cst_2 = arith.constant 0.000000e+00 : f32
    %2 = vector.broadcast %cst_2 : f32 to vector<18x32x128xf32>
    %c0_3 = arith.constant 0 : index
    %c0_4 = arith.constant 0 : index
    %c0_5 = arith.constant 0 : index
    %3 = vector.load %arg7[%c0_3, %c0_4, %c0_5] : memref<18x32x128xf32, #tpu.memory_space<vmem>>, vector<18x32x128xf32>
    tpu.vector_store %arg7[%c0_3, %c0_4, %c0_5], %2 {strides = array<i32>} : memref<18x32x128xf32, #tpu.memory_space<vmem>>, vector<18x32x128xf32>,
    %c0_6 = arith.constant 0 : index
    %c0_7 = arith.constant 0 : index
    %c0_8 = arith.constant 0 : index
    %c0_9 = arith.constant 0 : index
    %4 = vector.load %arg2[%c0_6, %c0_7, %c0_8, %c0_9] : memref<1x16x16x128xf32, #tpu.memory_space<vmem>>, vector<1x16x16x128xf32>
    %5 = vector.shape_cast %4 : vector<1x16x16x128xf32> to vector<16x16x128xf32>
    %c1 = arith.constant 1 : index
    %c8 = arith.constant 8 : index
    %c0_10 = arith.constant 0 : index
    %6 = vector.load %arg6[%c1, %c8, %c0_10] : memref<18x32x128xf32, #tpu.memory_space<vmem>>, vector<16x16x128xf32>
    tpu.vector_store %arg6[%c1, %c8, %c0_10], %5 {strides = array<i32>} : memref<18x32x128xf32, #tpu.memory_space<vmem>>, vector<16x16x128xf32>,
    %c0_11 = arith.constant 0 : index
    %c0_12 = arith.constant 0 : index
    %c0_13 = arith.constant 0 : index
    %c0_14 = arith.constant 0 : index
    %7 = vector.load %arg3[%c0_11, %c0_12, %c0_13, %c0_14] : memref<1x16x16x128xbf16, #tpu.memory_space<vmem>>, vector<1x16x16x128xbf16>
    %8 = vector.shape_cast %7 : vector<1x16x16x128xbf16> to vector<16x16x128xbf16>
    %9 = arith.extf %8 : vector<16x16x128xbf16> to vector<16x16x128xf32>
    %c1_15 = arith.constant 1 : index
    %c8_16 = arith.constant 8 : index
    %c0_17 = arith.constant 0 : index
    %10 = vector.load %arg7[%c1_15, %c8_16, %c0_17] : memref<18x32x128xf32, #tpu.memory_space<vmem>>, vector<16x16x128xf32>
    tpu.vector_store %arg7[%c1_15, %c8_16, %c0_17], %9 {strides = array<i32>} : memref<18x32x128xf32, #tpu.memory_space<vmem>>, vector<16x16x128xf32>,
    %c0_18 = arith.constant 0 : index
    %c0_19 = arith.constant 0 : index
    %c0_20 = arith.constant 0 : index
    %11 = vector.load %arg6[%c0_18, %c0_19, %c0_20] : memref<18x32x128xf32, #tpu.memory_space<vmem>>, vector<18x32x128xf32>
    %c0_21 = arith.constant 0 : index
    %c0_22 = arith.constant 0 : index
    %c0_23 = arith.constant 0 : index
    %12 = vector.load %arg7[%c0_21, %c0_22, %c0_23] : memref<18x32x128xf32, #tpu.memory_space<vmem>>, vector<18x32x128xf32>
    %13 = vector.extract_strided_slice %11 {offsets = [0, 7, 0], sizes = [18, 16, 128], strides = [1, 1, 1]} : vector<18x32x128xf32> to vector<18x16x128xf32>
    %14 = vector.extract_strided_slice %11 {offsets = [0, 8, 0], sizes = [18, 16, 128], strides = [1, 1, 1]} : vector<18x32x128xf32> to vector<18x16x128xf32>
    %15 = vector.extract_strided_slice %11 {offsets = [0, 9, 0], sizes = [18, 16, 128], strides = [1, 1, 1]} : vector<18x32x128xf32> to vector<18x16x128xf32>
    %16 = arith.addf %13, %14 : vector<18x16x128xf32>
    %17 = arith.addf %16, %15 : vector<18x16x128xf32>
    %18 = vector.extract_strided_slice %17 {offsets = [0, 0, 0], sizes = [16, 16, 128], strides = [1, 1, 1]} : vector<18x16x128xf32> to vector<16x16x128xf32>
    %19 = vector.extract_strided_slice %17 {offsets = [1, 0, 0], sizes = [16, 16, 128], strides = [1, 1, 1]} : vector<18x16x128xf32> to vector<16x16x128xf32>
    %20 = arith.addf %18, %19 : vector<16x16x128xf32>
    %21 = vector.extract_strided_slice %17 {offsets = [2, 0, 0], sizes = [16, 16, 128], strides = [1, 1, 1]} : vector<18x16x128xf32> to vector<16x16x128xf32>
    %22 = arith.addf %20, %21 : vector<16x16x128xf32>
    %cst_24 = arith.constant 0.111111112 : f32
    %23 = vector.broadcast %cst_24 : f32 to vector<16x16x128xf32>
    %24 = arith.mulf %22, %23 : vector<16x16x128xf32>
    %25 = vector.extract_strided_slice %14 {offsets = [1, 0, 0], sizes = [16, 16, 128], strides = [1, 1, 1]} : vector<18x16x128xf32> to vector<16x16x128xf32>
    %26 = arith.cmpf ogt, %25, %24 : vector<16x16x128xf32>
    %cst_25 = arith.constant 0.000000e+00 : f32
    %27 = vector.broadcast %cst_25 : f32 to vector<16x16x128xf32>
    %cst_26 = arith.constant 0.000000e+00 : f32
    %28 = vector.broadcast %cst_26 : f32 to vector<16x16x128xf32>
    %29 = vector.extract_strided_slice %12 {offsets = [0, 7, 0], sizes = [18, 16, 128], strides = [1, 1, 1]} : vector<18x32x128xf32> to vector<18x16x128xf32>
    %30 = vector.extract_strided_slice %13 {offsets = [0, 0, 0], sizes = [16, 16, 128], strides = [1, 1, 1]} : vector<18x16x128xf32> to vector<16x16x128xf32>
    %31 = arith.cmpf ogt, %30, %24 : vector<16x16x128xf32>
    %32 = arith.xori %31, %26 : vector<16x16x128xi1>
    %cst_27 = arith.constant dense<true> : vector<16x16x128xi1>
    %33 = arith.xori %32, %cst_27 : vector<16x16x128xi1>
    %34 = vector.extract_strided_slice %29 {offsets = [0, 0, 0], sizes = [16, 16, 128], strides = [1, 1, 1]} : vector<18x16x128xf32> to vector<16x16x128xf32>
    %cst_28 = arith.constant 0.000000e+00 : f32
    %35 = vector.broadcast %cst_28 : f32 to vector<16x16x128xf32>
    %36 = arith.select %33, %34, %35 : vector<16x16x128xi1>, vector<16x16x128xf32>
    %37 = arith.addf %27, %36 : vector<16x16x128xf32>
    %cst_29 = arith.constant 1.000000e+00 : f32
    %cst_30 = arith.constant 0.000000e+00 : f32
    %38 = vector.broadcast %cst_29 : f32 to vector<16x16x128xf32>
    %39 = vector.broadcast %cst_30 : f32 to vector<16x16x128xf32>
    %40 = arith.select %33, %38, %39 : vector<16x16x128xi1>, vector<16x16x128xf32>
    %41 = arith.addf %28, %40 : vector<16x16x128xf32>
    %42 = vector.extract_strided_slice %13 {offsets = [1, 0, 0], sizes = [16, 16, 128], strides = [1, 1, 1]} : vector<18x16x128xf32> to vector<16x16x128xf32>
    %43 = arith.cmpf ogt, %42, %24 : vector<16x16x128xf32>
    %44 = arith.xori %43, %26 : vector<16x16x128xi1>
    %cst_31 = arith.constant dense<true> : vector<16x16x128xi1>
    %45 = arith.xori %44, %cst_31 : vector<16x16x128xi1>
    %46 = vector.extract_strided_slice %29 {offsets = [1, 0, 0], sizes = [16, 16, 128], strides = [1, 1, 1]} : vector<18x16x128xf32> to vector<16x16x128xf32>
    %cst_32 = arith.constant 0.000000e+00 : f32
    %47 = vector.broadcast %cst_32 : f32 to vector<16x16x128xf32>
    %48 = arith.select %45, %46, %47 : vector<16x16x128xi1>, vector<16x16x128xf32>
    %49 = arith.addf %37, %48 : vector<16x16x128xf32>
    %cst_33 = arith.constant 1.000000e+00 : f32
    %cst_34 = arith.constant 0.000000e+00 : f32
    %50 = vector.broadcast %cst_33 : f32 to vector<16x16x128xf32>
    %51 = vector.broadcast %cst_34 : f32 to vector<16x16x128xf32>
    %52 = arith.select %45, %50, %51 : vector<16x16x128xi1>, vector<16x16x128xf32>
    %53 = arith.addf %41, %52 : vector<16x16x128xf32>
    %54 = vector.extract_strided_slice %13 {offsets = [2, 0, 0], sizes = [16, 16, 128], strides = [1, 1, 1]} : vector<18x16x128xf32> to vector<16x16x128xf32>
    %55 = arith.cmpf ogt, %54, %24 : vector<16x16x128xf32>
    %56 = arith.xori %55, %26 : vector<16x16x128xi1>
    %cst_35 = arith.constant dense<true> : vector<16x16x128xi1>
    %57 = arith.xori %56, %cst_35 : vector<16x16x128xi1>
    %58 = vector.extract_strided_slice %29 {offsets = [2, 0, 0], sizes = [16, 16, 128], strides = [1, 1, 1]} : vector<18x16x128xf32> to vector<16x16x128xf32>
    %cst_36 = arith.constant 0.000000e+00 : f32
    %59 = vector.broadcast %cst_36 : f32 to vector<16x16x128xf32>
    %60 = arith.select %57, %58, %59 : vector<16x16x128xi1>, vector<16x16x128xf32>
    %61 = arith.addf %49, %60 : vector<16x16x128xf32>
    %cst_37 = arith.constant 1.000000e+00 : f32
    %cst_38 = arith.constant 0.000000e+00 : f32
    %62 = vector.broadcast %cst_37 : f32 to vector<16x16x128xf32>
    %63 = vector.broadcast %cst_38 : f32 to vector<16x16x128xf32>
    %64 = arith.select %57, %62, %63 : vector<16x16x128xi1>, vector<16x16x128xf32>
    %65 = arith.addf %53, %64 : vector<16x16x128xf32>
    %66 = vector.extract_strided_slice %12 {offsets = [0, 8, 0], sizes = [18, 16, 128], strides = [1, 1, 1]} : vector<18x32x128xf32> to vector<18x16x128xf32>
    %67 = vector.extract_strided_slice %14 {offsets = [0, 0, 0], sizes = [16, 16, 128], strides = [1, 1, 1]} : vector<18x16x128xf32> to vector<16x16x128xf32>
    %68 = arith.cmpf ogt, %67, %24 : vector<16x16x128xf32>
    %69 = arith.xori %68, %26 : vector<16x16x128xi1>
    %cst_39 = arith.constant dense<true> : vector<16x16x128xi1>
    %70 = arith.xori %69, %cst_39 : vector<16x16x128xi1>
    %71 = vector.extract_strided_slice %66 {offsets = [0, 0, 0], sizes = [16, 16, 128], strides = [1, 1, 1]} : vector<18x16x128xf32> to vector<16x16x128xf32>
    %cst_40 = arith.constant 0.000000e+00 : f32
    %72 = vector.broadcast %cst_40 : f32 to vector<16x16x128xf32>
    %73 = arith.select %70, %71, %72 : vector<16x16x128xi1>, vector<16x16x128xf32>
    %74 = arith.addf %61, %73 : vector<16x16x128xf32>
    %cst_41 = arith.constant 1.000000e+00 : f32
    %cst_42 = arith.constant 0.000000e+00 : f32
    %75 = vector.broadcast %cst_41 : f32 to vector<16x16x128xf32>
    %76 = vector.broadcast %cst_42 : f32 to vector<16x16x128xf32>
    %77 = arith.select %70, %75, %76 : vector<16x16x128xi1>, vector<16x16x128xf32>
    %78 = arith.addf %65, %77 : vector<16x16x128xf32>
    %79 = vector.extract_strided_slice %14 {offsets = [1, 0, 0], sizes = [16, 16, 128], strides = [1, 1, 1]} : vector<18x16x128xf32> to vector<16x16x128xf32>
    %80 = arith.cmpf ogt, %79, %24 : vector<16x16x128xf32>
    %81 = arith.xori %80, %26 : vector<16x16x128xi1>
    %cst_43 = arith.constant dense<true> : vector<16x16x128xi1>
    %82 = arith.xori %81, %cst_43 : vector<16x16x128xi1>
    %83 = vector.extract_strided_slice %66 {offsets = [1, 0, 0], sizes = [16, 16, 128], strides = [1, 1, 1]} : vector<18x16x128xf32> to vector<16x16x128xf32>
    %cst_44 = arith.constant 0.000000e+00 : f32
    %84 = vector.broadcast %cst_44 : f32 to vector<16x16x128xf32>
    %85 = arith.select %82, %83, %84 : vector<16x16x128xi1>, vector<16x16x128xf32>
    %86 = arith.addf %74, %85 : vector<16x16x128xf32>
    %cst_45 = arith.constant 1.000000e+00 : f32
    %cst_46 = arith.constant 0.000000e+00 : f32
    %87 = vector.broadcast %cst_45 : f32 to vector<16x16x128xf32>
    %88 = vector.broadcast %cst_46 : f32 to vector<16x16x128xf32>
    %89 = arith.select %82, %87, %88 : vector<16x16x128xi1>, vector<16x16x128xf32>
    %90 = arith.addf %78, %89 : vector<16x16x128xf32>
    %91 = vector.extract_strided_slice %14 {offsets = [2, 0, 0], sizes = [16, 16, 128], strides = [1, 1, 1]} : vector<18x16x128xf32> to vector<16x16x128xf32>
    %92 = arith.cmpf ogt, %91, %24 : vector<16x16x128xf32>
    %93 = arith.xori %92, %26 : vector<16x16x128xi1>
    %cst_47 = arith.constant dense<true> : vector<16x16x128xi1>
    %94 = arith.xori %93, %cst_47 : vector<16x16x128xi1>
    %95 = vector.extract_strided_slice %66 {offsets = [2, 0, 0], sizes = [16, 16, 128], strides = [1, 1, 1]} : vector<18x16x128xf32> to vector<16x16x128xf32>
    %cst_48 = arith.constant 0.000000e+00 : f32
    %96 = vector.broadcast %cst_48 : f32 to vector<16x16x128xf32>
    %97 = arith.select %94, %95, %96 : vector<16x16x128xi1>, vector<16x16x128xf32>
    %98 = arith.addf %86, %97 : vector<16x16x128xf32>
    %cst_49 = arith.constant 1.000000e+00 : f32
    %cst_50 = arith.constant 0.000000e+00 : f32
    %99 = vector.broadcast %cst_49 : f32 to vector<16x16x128xf32>
    %100 = vector.broadcast %cst_50 : f32 to vector<16x16x128xf32>
    %101 = arith.select %94, %99, %100 : vector<16x16x128xi1>, vector<16x16x128xf32>
    %102 = arith.addf %90, %101 : vector<16x16x128xf32>
    %103 = vector.extract_strided_slice %12 {offsets = [0, 9, 0], sizes = [18, 16, 128], strides = [1, 1, 1]} : vector<18x32x128xf32> to vector<18x16x128xf32>
    %104 = vector.extract_strided_slice %15 {offsets = [0, 0, 0], sizes = [16, 16, 128], strides = [1, 1, 1]} : vector<18x16x128xf32> to vector<16x16x128xf32>
    %105 = arith.cmpf ogt, %104, %24 : vector<16x16x128xf32>
    %106 = arith.xori %105, %26 : vector<16x16x128xi1>
    %cst_51 = arith.constant dense<true> : vector<16x16x128xi1>
    %107 = arith.xori %106, %cst_51 : vector<16x16x128xi1>
    %108 = vector.extract_strided_slice %103 {offsets = [0, 0, 0], sizes = [16, 16, 128], strides = [1, 1, 1]} : vector<18x16x128xf32> to vector<16x16x128xf32>
    %cst_52 = arith.constant 0.000000e+00 : f32
    %109 = vector.broadcast %cst_52 : f32 to vector<16x16x128xf32>
    %110 = arith.select %107, %108, %109 : vector<16x16x128xi1>, vector<16x16x128xf32>
    %111 = arith.addf %98, %110 : vector<16x16x128xf32>
    %cst_53 = arith.constant 1.000000e+00 : f32
    %cst_54 = arith.constant 0.000000e+00 : f32
    %112 = vector.broadcast %cst_53 : f32 to vector<16x16x128xf32>
    %113 = vector.broadcast %cst_54 : f32 to vector<16x16x128xf32>
    %114 = arith.select %107, %112, %113 : vector<16x16x128xi1>, vector<16x16x128xf32>
    %115 = arith.addf %102, %114 : vector<16x16x128xf32>
    %116 = vector.extract_strided_slice %15 {offsets = [1, 0, 0], sizes = [16, 16, 128], strides = [1, 1, 1]} : vector<18x16x128xf32> to vector<16x16x128xf32>
    %117 = arith.cmpf ogt, %116, %24 : vector<16x16x128xf32>
    %118 = arith.xori %117, %26 : vector<16x16x128xi1>
    %cst_55 = arith.constant dense<true> : vector<16x16x128xi1>
    %119 = arith.xori %118, %cst_55 : vector<16x16x128xi1>
    %120 = vector.extract_strided_slice %103 {offsets = [1, 0, 0], sizes = [16, 16, 128], strides = [1, 1, 1]} : vector<18x16x128xf32> to vector<16x16x128xf32>
    %cst_56 = arith.constant 0.000000e+00 : f32
    %121 = vector.broadcast %cst_56 : f32 to vector<16x16x128xf32>
    %122 = arith.select %119, %120, %121 : vector<16x16x128xi1>, vector<16x16x128xf32>
    %123 = arith.addf %111, %122 : vector<16x16x128xf32>
    %cst_57 = arith.constant 1.000000e+00 : f32
    %cst_58 = arith.constant 0.000000e+00 : f32
    %124 = vector.broadcast %cst_57 : f32 to vector<16x16x128xf32>
    %125 = vector.broadcast %cst_58 : f32 to vector<16x16x128xf32>
    %126 = arith.select %119, %124, %125 : vector<16x16x128xi1>, vector<16x16x128xf32>
    %127 = arith.addf %115, %126 : vector<16x16x128xf32>
    %128 = vector.extract_strided_slice %15 {offsets = [2, 0, 0], sizes = [16, 16, 128], strides = [1, 1, 1]} : vector<18x16x128xf32> to vector<16x16x128xf32>
    %129 = arith.cmpf ogt, %128, %24 : vector<16x16x128xf32>
    %130 = arith.xori %129, %26 : vector<16x16x128xi1>
    %cst_59 = arith.constant dense<true> : vector<16x16x128xi1>
    %131 = arith.xori %130, %cst_59 : vector<16x16x128xi1>
    %132 = vector.extract_strided_slice %103 {offsets = [2, 0, 0], sizes = [16, 16, 128], strides = [1, 1, 1]} : vector<18x16x128xf32> to vector<16x16x128xf32>
    %cst_60 = arith.constant 0.000000e+00 : f32
    %133 = vector.broadcast %cst_60 : f32 to vector<16x16x128xf32>
    %134 = arith.select %131, %132, %133 : vector<16x16x128xi1>, vector<16x16x128xf32>
    %135 = arith.addf %123, %134 : vector<16x16x128xf32>
    %cst_61 = arith.constant 1.000000e+00 : f32
    %cst_62 = arith.constant 0.000000e+00 : f32
    %136 = vector.broadcast %cst_61 : f32 to vector<16x16x128xf32>
    %137 = vector.broadcast %cst_62 : f32 to vector<16x16x128xf32>
    %138 = arith.select %131, %136, %137 : vector<16x16x128xi1>, vector<16x16x128xf32>
    %139 = arith.addf %127, %138 : vector<16x16x128xf32>
    %cst_63 = arith.constant 9.99999997E-7 : f32
    %140 = vector.broadcast %cst_63 : f32 to vector<16x16x128xf32>
    %141 = arith.addf %139, %140 : vector<16x16x128xf32>
    %142 = arith.divf %135, %141 : vector<16x16x128xf32>
    %c0_64 = arith.constant 0 : index
    %c0_65 = arith.constant 0 : index
    %c0_66 = arith.constant 0 : index
    %c0_67 = arith.constant 0 : index
    %143 = vector.load %arg4[%c0_64, %c0_65, %c0_66, %c0_67] : memref<1x16x16x128xbf16, #tpu.memory_space<vmem>>, vector<1x16x16x128xbf16>
    %144 = vector.shape_cast %143 : vector<1x16x16x128xbf16> to vector<16x16x128xbf16>
    %145 = arith.extf %144 : vector<16x16x128xbf16> to vector<16x16x128xf32>
    %146 = arith.addf %142, %145 : vector<16x16x128xf32>
    %c0_68 = arith.constant 0 : index
    %c0_69 = arith.constant 0 : index
    %c0_70 = arith.constant 0 : index
    %c0_71 = arith.constant 0 : index
    %147 = vector.load %arg5[%c0_68, %c0_69, %c0_70, %c0_71] : memref<1x16x16x128xf32, #tpu.memory_space<vmem>>, vector<1x16x16x128xf32>
    %148 = vector.shape_cast %147 : vector<1x16x16x128xf32> to vector<16x16x128xf32>
    %149 = vector.shape_cast %146 : vector<16x16x128xf32> to vector<1x16x16x128xf32>
    tpu.vector_store %arg5[%c0_68, %c0_69, %c0_70, %c0_71], %149 {strides = array<i32>} : memref<1x16x16x128xf32, #tpu.memory_space<vmem>>, vector<1x16x16x128xf32>,
    return
  }
  func.func @transform_0(%arg0: i32, %arg1: i32) -> (i32, i32, i32, i32) {
    %c0_i32 = arith.constant 0 : i32
    %c0_i32_0 = arith.constant 0 : i32
    %c0_i32_1 = arith.constant 0 : i32
    return %arg0, %c0_i32, %c0_i32_0, %arg1 : i32, i32, i32, i32
  }
  func.func @transform_1(%arg0: i32, %arg1: i32) -> (i32, i32, i32, i32) {
    %c0_i32 = arith.constant 0 : i32
    %c0_i32_0 = arith.constant 0 : i32
    %c0_i32_1 = arith.constant 0 : i32
    return %arg0, %c0_i32, %c0_i32_0, %arg1 : i32, i32, i32, i32
  }
  func.func @transform_2(%arg0: i32, %arg1: i32) -> (i32, i32, i32, i32) {
    %c0_i32 = arith.constant 0 : i32
    %c0_i32_0 = arith.constant 0 : i32
    %c0_i32_1 = arith.constant 0 : i32
    return %arg0, %c0_i32, %c0_i32_0, %arg1 : i32, i32, i32, i32
  }
  func.func @transform_3(%arg0: i32, %arg1: i32) -> (i32, i32, i32, i32) {
    %c0_i32 = arith.constant 0 : i32
    %c0_i32_0 = arith.constant 0 : i32
    %c0_i32_1 = arith.constant 0 : i32
    return %arg0, %c0_i32, %c0_i32_0, %arg1 : i32, i32, i32, i32
  }
}

</mosaic_0001>

<llo_original>
// kernel: frc_forward.3
$region0: #{frc_forward.3}
  #allocation0 [shape = 'u32[]', space=smem, size = 0x4, offset = 0x4, fixed_abs, tag = 'smem constant byte address 0x4 - core index']
  #allocation1 [shape = 'u32[144,128]{1,0:T(1,128)}', space=vmem, size = 0x12000, scoped, tag = 'internal scratch']
  %s0 = inlined_call_operand.vmem [shape: bf16[128,4], index: 0, kind: input, shape index: {}]
  %s1 = inlined_call_operand.vmem [shape: bf16[4,128], index: 1, kind: input, shape index: {}]
  %s2 = inlined_call_operand.vmem [shape: f32[1,128], index: 2, kind: input, shape index: {}]
  %s3 = inlined_call_operand.vmem [shape: bf16[128,128], index: 3, kind: output, shape index: {}]
  %s4 = sld [smem:[#allocation0]]
  $region45: #{frc_forward.3} parent=0
    _
  %s6 = ssub.s32 1, %s4
  %s7 = scalar_select 0, %s6, %s4
  loop: start=0, step=1, limit=10
  $region2: #{frc_forward.3} parent=0 // loop_pre_header
    _
  $region3: #{frc_forward.3} parent=0 // loop_header
    %s9 = sphi 0, %s13
    %p10 = scmp.ge.s32.totalorder %s9, 10
    %s19 = sphi 0, %s21
    %s22 = sphi 0, %s19
    %s23 = sphi 0, %s22
    %s39 = sphi 0, %s23
    %s43 = sphi 0, %s43
    %s45 = sphi 0, %s43
    %s46 = sphi 0, %s45
    %s60 = sphi 0, %s46
    %s64 = sphi 0, %s64
    %s66 = sphi 0, %s64
    %s67 = sphi 0, %s66
    %s81 = sphi 0, %s67
    %s87 = sphi 0, %s89
    %s90 = sphi 0, %s87
    %s91 = sphi 0, %s90
    %s107 = sphi 0, %s91
  $region4: #{frc_forward.3} parent=0 // loop_header_branch
    %12 = sbr.rel (%p10) target = $region8
  $region5: #{frc_forward.3} parent=0 // loop_body
    %s14 = ssub.s32 %s9, 1
    %s15 = ssub.s32 %s9, 2
    %s16 = sadd.s32 %s9, 1
    %s17 = ssub.s32 %s9, %s16
    %p18 = scmp.eq.s32.totalorder %s17, 0
    %s20 = sadd.s32 %s19, 1
    %s21 = scalar_select %p18, %s19, %s20
    %p24 = pneg %p18
    %p25 = scmp.eq.s32.totalorder %s9, 7
    %p26 = por %p24, %p25
    %p27 = scmp.ne.s32.totalorder %s19, %s22
    %p28 = scmp.eq.s32.totalorder %s9, 0
    %p29 = por %p27, %p28
    %p30 = scmp.ne.s32.totalorder %s19, %s22
    %p31 = scmp.eq.s32.totalorder %s14, 7
    %p32 = por %p30, %p31
    %p33 = scmp.ne.s32.totalorder %s22, %s23
    %p34 = scmp.eq.s32.totalorder %s14, 0
    %p35 = por %p33, %p34
    %p36 = scmp.ne.s32.totalorder %s22, %s23
    %p37 = scmp.eq.s32.totalorder %s15, 7
    %p38 = por %p36, %p37
    %p40 = scmp.ne.s32.totalorder %s23, %s39
    %p41 = scmp.eq.s32.totalorder %s15, 0
    %p42 = por %p40, %p41
    %s44 = sadd.s32 %s43, 1
    %p47 = scmp.eq.s32.totalorder %s9, 7
    %p48 = scmp.ne.s32.totalorder %s43, %s45
    %p49 = scmp.eq.s32.totalorder %s9, 0
    %p50 = por %p48, %p49
    %p51 = scmp.ne.s32.totalorder %s43, %s45
    %p52 = scmp.eq.s32.totalorder %s14, 7
    %p53 = por %p51, %p52
    %p54 = scmp.ne.s32.totalorder %s45, %s46
    %p55 = scmp.eq.s32.totalorder %s14, 0
    %p56 = por %p54, %p55
    %p57 = scmp.ne.s32.totalorder %s45, %s46
    %p58 = scmp.eq.s32.totalorder %s15, 7
    %p59 = por %p57, %p58
    %p61 = scmp.ne.s32.totalorder %s46, %s60
    %p62 = scmp.eq.s32.totalorder %s15, 0
    %p63 = por %p61, %p62
    %s65 = sadd.s32 %s64, 1
    %p68 = scmp.eq.s32.totalorder %s9, 7
    %p69 = scmp.ne.s32.totalorder %s64, %s66
    %p70 = scmp.eq.s32.totalorder %s9, 0
    %p71 = por %p69, %p70
    %p72 = scmp.ne.s32.totalorder %s64, %s66
    %p73 = scmp.eq.s32.totalorder %s14, 7
    %p74 = por %p72, %p73
    %p75 = scmp.ne.s32.totalorder %s66, %s67
    %p76 = scmp.eq.s32.totalorder %s14, 0
    %p77 = por %p75, %p76
    %p78 = scmp.ne.s32.totalorder %s66, %s67
    %p79 = scmp.eq.s32.totalorder %s15, 7
    %p80 = por %p78, %p79
    %p82 = scmp.ne.s32.totalorder %s67, %s81
    %p83 = scmp.eq.s32.totalorder %s15, 0
    %p84 = por %p82, %p83
    %s85 = ssub.s32 %s9, %s16
    %p86 = scmp.eq.s32.totalorder %s85, 0
    %s88 = sadd.s32 %s87, 1
    %s89 = scalar_select %p86, %s87, %s88
    %p92 = pneg %p86
    %p93 = scmp.eq.s32.totalorder %s9, 7
    %p94 = por %p92, %p93
    %p95 = scmp.ne.s32.totalorder %s87, %s90
    %p96 = scmp.eq.s32.totalorder %s9, 0
    %p97 = por %p95, %p96
    %p98 = scmp.ne.s32.totalorder %s87, %s90
    %p99 = scmp.eq.s32.totalorder %s14, 7
    %p100 = por %p98, %p99
    %p101 = scmp.ne.s32.totalorder %s90, %s91
    %p102 = scmp.eq.s32.totalorder %s14, 0
    %p103 = por %p101, %p102
    %p104 = scmp.ne.s32.totalorder %s90, %s91
    %p105 = scmp.eq.s32.totalorder %s15, 7
    %p106 = por %p104, %p105
    %p108 = scmp.ne.s32.totalorder %s91, %s107
    %p109 = scmp.eq.s32.totalorder %s15, 0
    %p110 = por %p108, %p109
    %p111 = scmp.le.s32.totalorder 1, %s9
    %p112 = scmp.lt.s32.totalorder %s9, 9
    %p113 = pnand %p111, %p112
    %p114 = pneg %p113
    // Predicated region
    $region9: #{frc_forward.3} parent=5 // pred_check
      _
    $region10: #{frc_forward.3} parent=5 // pred_check_branch
      %116 = sbr.rel (%p113) target = $region12
    $region11: #{frc_forward.3} parent=5 // pred_region
      %s117 = ssub.s32 %s9, 1
      // Predicated region
      $region13: #{frc_forward.3} parent=11 // pred_check
        %p118 = pneg %p56
      $region14: #{frc_forward.3} parent=11 // pred_check_branch
        %120 = sbr.rel (%p118) target = $region16
      $region15: #{frc_forward.3} parent=11 // pred_region
        _
      $region16: #{frc_forward.3} parent=11 // pred_fallthru
        _
      // Predicated region
      $region17: #{frc_forward.3} parent=11 // pred_check
        %p121 = pneg %p77
      $region18: #{frc_forward.3} parent=11 // pred_check_branch
        %123 = sbr.rel (%p121) target = $region20
      $region19: #{frc_forward.3} parent=11 // pred_region
        _
      $region20: #{frc_forward.3} parent=11 // pred_fallthru
        _
    $region12: #{frc_forward.3} parent=5 // pred_fallthru
      _
    %p124 = scmp.lt.s32.totalorder %s9, 8
    // Predicated region
    $region21: #{frc_forward.3} parent=5 // pred_check
      %p125 = pneg %p124
    $region22: #{frc_forward.3} parent=5 // pred_check_branch
      %127 = sbr.rel (%p125) target = $region24
    $region23: #{frc_forward.3} parent=5 // pred_region
      // Predicated region
      $region25: #{frc_forward.3} parent=23 // pred_check
        %p128 = pneg %p29
      $region26: #{frc_forward.3} parent=23 // pred_check_branch
        %130 = sbr.rel (%p128) target = $region28
      $region27: #{frc_forward.3} parent=23 // pred_region
        %s131 = smul.u32 2, %s9
        %p132 = scmp.lt.s32.totalorder %s131, 15
        %s133 = scalar_select %p132, %s131, 15
        %s134 = smul.addr %s133, 4
        %s135 = scalar_lea.vmem %s0, %s134
        %s136 = smul.u32 2, %s9
      $region28: #{frc_forward.3} parent=23 // pred_fallthru
        _
    $region24: #{frc_forward.3} parent=5 // pred_fallthru
      _
    %p137 = scmp.le.s32.totalorder 1, %s9
    %p138 = scmp.lt.s32.totalorder %s9, 9
    %p139 = pnand %p137, %p138
    %p140 = pneg %p139
    // Predicated region
    $region29: #{frc_forward.3} parent=5 // pred_check
      _
    $region30: #{frc_forward.3} parent=5 // pred_check_branch
      %142 = sbr.rel (%p139) target = $region32
    $region31: #{frc_forward.3} parent=5 // pred_region
      %s143 = ssub.s32 %s9, 1
      %s144 = smul.u32 2, %s14
      %p145 = scmp.lt.s32.totalorder %s144, 15
      %s146 = scalar_select %p145, %s144, 15
      %s147 = smul.addr %s146, 4
      %s148 = scalar_lea.vmem %s0, %s147
      %p149 = pneg %p35
      %p150 = pneg %p32
      %p151 = pneg %p56
      %p152 = pneg %p53
      %p153 = pneg %p77
      %p154 = pneg %p74
      %p155 = pneg %p103
      %p156 = pneg %p100
      %s157 = smul.u32 2, %s14
      %p158 = scmp.lt.s32.totalorder %s157, 15
      %s159 = scalar_select %p158, %s157, 15
      %s160 = smul.addr %s159, 4
      %s161 = scalar_lea.vmem %s3, %s160
      %s162 = smul.u32 2, %s14
      %p163 = scmp.lt.s32.totalorder %s162, 15
      %s164 = scalar_select %p163, %s162, 15
      %s165 = smul.addr %s164, 4
      %s166 = scalar_lea.vmem %s0, %s165
      %s167 = smul.u32 2, %s14
      %s168 = smul.u32 2, %s14
      %p169 = scmp.lt.s32.totalorder %s168, 15
      %s170 = scalar_select %p169, %s168, 15
      %s171 = smul.addr %s170, 4
      %s172 = scalar_lea.vmem %s3, %s171
      %s173 = smul.u32 2, %s14
      %v175 = vld [vmem:[%s166] sm:$0xf]
      %v176 = vld [vmem:[%s166 + $0x4] sm:$0xf]
      %v177 = vld [vmem:[%s1] sm:$0x3]
      %v178 = vld [vmem:[%s2] sm:$0x1]
      %v180 = vlaneseq
      %v181 = vshrl.u32 %v180, 7
      %v182 = vsub.s32 0, %v181
      %v183 = vrot.slane %v178, %v182
      %v187 = vunpack.c.l.b16 %v175
      %v188 = vunpack.c.l.b16 %v176
      %v189 = vpack.c.b16 %v188, %v187
      %vm190 = vcmask 31744
      %v192 = vsel %vm190, %v189, 0
      %vm194 = vcmask 1041408
      %v196 = vsel %vm194, %v177, 0
      %198 = vmatprep.subr.bf16.mxu0 0
      %199 = vmatpush1.bf16.msra.mxu0 0
      %200 = vmatprep.subr.bf16.mxu0 0
      %201 = vmatpush1.bf16.msra.mxu0 0
      %202 = vmatprep.subr.bf16.mxu0 0
      %203 = vmatpush1.bf16.msra.mxu0 0
      %204 = vmatprep.subr.bf16.mxu0 0
      %205 = vmatpush1.bf16.msra.mxu0 0
      %206 = vmatprep.subr.bf16.mxu0 0
      %207 = vmatpush1.bf16.msra.mxu0 0
      %208 = vmatprep.subr.bf16.mxu0 0
      %209 = vmatpush1.bf16.msra.mxu0 0
      %210 = vmatprep.subr.bf16.mxu0 0
      %211 = vmatpush1.bf16.msra.mxu0 0
      %212 = vmatprep.subr.bf16.mxu0 0
      %213 = vmatpush1.bf16.msra.mxu0 %v196
      %214 = vmatprep.subr.bf16.mxu0 0
      %215 = vmatpush2.bf16.msra.mxu0 0
      %216 = vmatprep.subr.bf16.mxu0 0
      %217 = vmatpush2.bf16.msra.mxu0 0
      %218 = vmatprep.subr.bf16.mxu0 0
      %219 = vmatpush2.bf16.msra.mxu0 0
      %220 = vmatprep.subr.bf16.mxu0 0
      %221 = vmatpush2.bf16.msra.mxu0 0
      %222 = vmatprep.subr.bf16.mxu0 0
      %223 = vmatpush2.bf16.msra.mxu0 0
      %224 = vmatprep.subr.bf16.mxu0 0
      %225 = vmatpush2.bf16.msra.mxu0 0
      %226 = vmatprep.subr.bf16.mxu0 0
      %227 = vmatpush2.bf16.msra.mxu0 0
      %228 = vmatprep.subr.bf16.mxu0 0
      %229 = vmatpush2.bf16.msra.mxu0 0
      %230 = vmatprep.mubr.bf16.mxu0 0
      %231 = vmatmul.mubr.bf16.gmra.mxu0 %v192
      %v232 = vpop.f32.mrf.mxu0
      %v233 = vadd.f32 %v183, %v232
      %v234 = vpop.f32.mrf.mxu0
      %v235 = vpop.f32.mrf.mxu0
      %v236 = vadd.f32 %v183, %v235
      %v237 = vpop.f32.mrf.mxu0
      %238 = vdwg.mxu0
      %v239 = vmax.f32 %v233, 0.0
      %v240 = vmax.f32 %v236, 0.0
      %v241 = vpack.c.bf16 %v240, %v239
      %v243 = vunpack.c.l.b16 %v241
      %v244 = vunpack.c.h.b16 %v241
      %v245 = vpack.c.b16 %v243, %v243
      %v246 = vpack.c.b16 %v244, %v244
      %249 = vst [vmem:[%s172] sm:$0xf] %v245
      %250 = vst [vmem:[%s172 + $0x4] sm:$0xf] %v246
      %s251 = smul.u32 2, %s14
      %p252 = scmp.lt.s32.totalorder %s251, 15
      %s253 = scalar_select %p252, %s251, 15
      %s254 = smul.addr %s253, 4
      %s255 = scalar_lea.vmem %s3, %s254
      // Predicated region
      $region33: #{frc_forward.3} parent=31 // pred_check
        %p256 = pneg %p100
      $region34: #{frc_forward.3} parent=31 // pred_check_branch
        %258 = sbr.rel (%p256) target = $region36
      $region35: #{frc_forward.3} parent=31 // pred_region
        %s259 = smul.u32 2, %s14
      $region36: #{frc_forward.3} parent=31 // pred_fallthru
        _
    $region32: #{frc_forward.3} parent=5 // pred_fallthru
      _
    %p260 = scmp.le.s32.totalorder 2, %s9
    // Predicated region
    $region37: #{frc_forward.3} parent=5 // pred_check
      %p261 = pneg %p260
    $region38: #{frc_forward.3} parent=5 // pred_check_branch
      %263 = sbr.rel (%p261) target = $region40
    $region39: #{frc_forward.3} parent=5 // pred_region
      %s264 = ssub.s32 %s9, 2
      // Predicated region
      $region41: #{frc_forward.3} parent=39 // pred_check
        %p265 = pneg %p106
      $region42: #{frc_forward.3} parent=39 // pred_check_branch
        %267 = sbr.rel (%p265) target = $region44
      $region43: #{frc_forward.3} parent=39 // pred_region
        %s268 = smul.u32 2, %s15
        %p269 = scmp.lt.s32.totalorder %s268, 15
        %s270 = scalar_select %p269, %s268, 15
        %s271 = smul.addr %s270, 4
        %s272 = scalar_lea.vmem %s3, %s271
      $region44: #{frc_forward.3} parent=39 // pred_fallthru
        _
    $region40: #{frc_forward.3} parent=5 // pred_fallthru
      _
  $region6: #{frc_forward.3} parent=0 // loop_footer
    %s13 = sadd.s32 1, %s9
  $region7: #{frc_forward.3} parent=0 // loop_footer_branch
    %8 = sbr.rel target = $region3
  $region8: #{frc_forward.3} parent=0 // loop_exit
    _

// kernel: frc_forward.4
$region0: #{frc_forward.4}
  #allocation0 [shape = 'u32[]', space=smem, size = 0x4, offset = 0x4, fixed_abs, tag = 'smem constant byte address 0x4 - core index']
  #allocation1 [shape = 'u32[144,128]{1,0:T(1,128)}', space=vmem, size = 0x12000, scoped, tag = 'internal scratch']
  %s0 = inlined_call_operand.vmem [shape: f32[512,8], index: 0, kind: input, shape index: {}]
  %s1 = inlined_call_operand.vmem [shape: bf16[8,128], index: 1, kind: input, shape index: {}]
  %s2 = inlined_call_operand.vmem [shape: f32[1,128], index: 2, kind: input, shape index: {}]
  %s3 = inlined_call_operand.vmem [shape: bf16[512,128], index: 3, kind: output, shape index: {}]
  %s4 = sld [smem:[#allocation0]]
  $region45: #{frc_forward.4} parent=0
    _
  %s6 = ssub.s32 1, %s4
  %s7 = scalar_select 0, %s6, %s4
  loop: start=0, step=1, limit=10
  $region2: #{frc_forward.4} parent=0 // loop_pre_header
    _
  $region3: #{frc_forward.4} parent=0 // loop_header
    %s9 = sphi 0, %s13
    %p10 = scmp.ge.s32.totalorder %s9, 10
    %s19 = sphi 0, %s21
    %s22 = sphi 0, %s19
    %s23 = sphi 0, %s22
    %s39 = sphi 0, %s23
    %s43 = sphi 0, %s43
    %s45 = sphi 0, %s43
    %s46 = sphi 0, %s45
    %s60 = sphi 0, %s46
    %s64 = sphi 0, %s64
    %s66 = sphi 0, %s64
    %s67 = sphi 0, %s66
    %s81 = sphi 0, %s67
    %s87 = sphi 0, %s89
    %s90 = sphi 0, %s87
    %s91 = sphi 0, %s90
    %s107 = sphi 0, %s91
  $region4: #{frc_forward.4} parent=0 // loop_header_branch
    %12 = sbr.rel (%p10) target = $region8
  $region5: #{frc_forward.4} parent=0 // loop_body
    %s14 = ssub.s32 %s9, 1
    %s15 = ssub.s32 %s9, 2
    %s16 = sadd.s32 %s9, 1
    %s17 = ssub.s32 %s9, %s16
    %p18 = scmp.eq.s32.totalorder %s17, 0
    %s20 = sadd.s32 %s19, 1
    %s21 = scalar_select %p18, %s19, %s20
    %p24 = pneg %p18
    %p25 = scmp.eq.s32.totalorder %s9, 7
    %p26 = por %p24, %p25
    %p27 = scmp.ne.s32.totalorder %s19, %s22
    %p28 = scmp.eq.s32.totalorder %s9, 0
    %p29 = por %p27, %p28
    %p30 = scmp.ne.s32.totalorder %s19, %s22
    %p31 = scmp.eq.s32.totalorder %s14, 7
    %p32 = por %p30, %p31
    %p33 = scmp.ne.s32.totalorder %s22, %s23
    %p34 = scmp.eq.s32.totalorder %s14, 0
    %p35 = por %p33, %p34
    %p36 = scmp.ne.s32.totalorder %s22, %s23
    %p37 = scmp.eq.s32.totalorder %s15, 7
    %p38 = por %p36, %p37
    %p40 = scmp.ne.s32.totalorder %s23, %s39
    %p41 = scmp.eq.s32.totalorder %s15, 0
    %p42 = por %p40, %p41
    %s44 = sadd.s32 %s43, 1
    %p47 = scmp.eq.s32.totalorder %s9, 7
    %p48 = scmp.ne.s32.totalorder %s43, %s45
    %p49 = scmp.eq.s32.totalorder %s9, 0
    %p50 = por %p48, %p49
    %p51 = scmp.ne.s32.totalorder %s43, %s45
    %p52 = scmp.eq.s32.totalorder %s14, 7
    %p53 = por %p51, %p52
    %p54 = scmp.ne.s32.totalorder %s45, %s46
    %p55 = scmp.eq.s32.totalorder %s14, 0
    %p56 = por %p54, %p55
    %p57 = scmp.ne.s32.totalorder %s45, %s46
    %p58 = scmp.eq.s32.totalorder %s15, 7
    %p59 = por %p57, %p58
    %p61 = scmp.ne.s32.totalorder %s46, %s60
    %p62 = scmp.eq.s32.totalorder %s15, 0
    %p63 = por %p61, %p62
    %s65 = sadd.s32 %s64, 1
    %p68 = scmp.eq.s32.totalorder %s9, 7
    %p69 = scmp.ne.s32.totalorder %s64, %s66
    %p70 = scmp.eq.s32.totalorder %s9, 0
    %p71 = por %p69, %p70
    %p72 = scmp.ne.s32.totalorder %s64, %s66
    %p73 = scmp.eq.s32.totalorder %s14, 7
    %p74 = por %p72, %p73
    %p75 = scmp.ne.s32.totalorder %s66, %s67
    %p76 = scmp.eq.s32.totalorder %s14, 0
    %p77 = por %p75, %p76
    %p78 = scmp.ne.s32.totalorder %s66, %s67
    %p79 = scmp.eq.s32.totalorder %s15, 7
    %p80 = por %p78, %p79
    %p82 = scmp.ne.s32.totalorder %s67, %s81
    %p83 = scmp.eq.s32.totalorder %s15, 0
    %p84 = por %p82, %p83
    %s85 = ssub.s32 %s9, %s16
    %p86 = scmp.eq.s32.totalorder %s85, 0
    %s88 = sadd.s32 %s87, 1
    %s89 = scalar_select %p86, %s87, %s88
    %p92 = pneg %p86
    %p93 = scmp.eq.s32.totalorder %s9, 7
    %p94 = por %p92, %p93
    %p95 = scmp.ne.s32.totalorder %s87, %s90
    %p96 = scmp.eq.s32.totalorder %s9, 0
    %p97 = por %p95, %p96
    %p98 = scmp.ne.s32.totalorder %s87, %s90
    %p99 = scmp.eq.s32.totalorder %s14, 7
    %p100 = por %p98, %p99
    %p101 = scmp.ne.s32.totalorder %s90, %s91
    %p102 = scmp.eq.s32.totalorder %s14, 0
    %p103 = por %p101, %p102
    %p104 = scmp.ne.s32.totalorder %s90, %s91
    %p105 = scmp.eq.s32.totalorder %s15, 7
    %p106 = por %p104, %p105
    %p108 = scmp.ne.s32.totalorder %s91, %s107
    %p109 = scmp.eq.s32.totalorder %s15, 0
    %p110 = por %p108, %p109
    %p111 = scmp.le.s32.totalorder 1, %s9
    %p112 = scmp.lt.s32.totalorder %s9, 9
    %p113 = pnand %p111, %p112
    %p114 = pneg %p113
    // Predicated region
    $region9: #{frc_forward.4} parent=5 // pred_check
      _
    $region10: #{frc_forward.4} parent=5 // pred_check_branch
      %116 = sbr.rel (%p113) target = $region12
    $region11: #{frc_forward.4} parent=5 // pred_region
      %s117 = ssub.s32 %s9, 1
      // Predicated region
      $region13: #{frc_forward.4} parent=11 // pred_check
        %p118 = pneg %p56
      $region14: #{frc_forward.4} parent=11 // pred_check_branch
        %120 = sbr.rel (%p118) target = $region16
      $region15: #{frc_forward.4} parent=11 // pred_region
        _
      $region16: #{frc_forward.4} parent=11 // pred_fallthru
        _
      // Predicated region
      $region17: #{frc_forward.4} parent=11 // pred_check
        %p121 = pneg %p77
      $region18: #{frc_forward.4} parent=11 // pred_check_branch
        %123 = sbr.rel (%p121) target = $region20
      $region19: #{frc_forward.4} parent=11 // pred_region
        _
      $region20: #{frc_forward.4} parent=11 // pred_fallthru
        _
    $region12: #{frc_forward.4} parent=5 // pred_fallthru
      _
    %p124 = scmp.lt.s32.totalorder %s9, 8
    // Predicated region
    $region21: #{frc_forward.4} parent=5 // pred_check
      %p125 = pneg %p124
    $region22: #{frc_forward.4} parent=5 // pred_check_branch
      %127 = sbr.rel (%p125) target = $region24
    $region23: #{frc_forward.4} parent=5 // pred_region
      // Predicated region
      $region25: #{frc_forward.4} parent=23 // pred_check
        %p128 = pneg %p29
      $region26: #{frc_forward.4} parent=23 // pred_check_branch
        %130 = sbr.rel (%p128) target = $region28
      $region27: #{frc_forward.4} parent=23 // pred_region
        %s131 = smul.u32 8, %s9
        %p132 = scmp.lt.s32.totalorder %s131, 63
        %s133 = scalar_select %p132, %s131, 63
        %s134 = smul.addr %s133, 8
        %s135 = scalar_lea.vmem %s0, %s134
        %s136 = smul.u32 8, %s9
      $region28: #{frc_forward.4} parent=23 // pred_fallthru
        _
    $region24: #{frc_forward.4} parent=5 // pred_fallthru
      _
    %p137 = scmp.le.s32.totalorder 1, %s9
    %p138 = scmp.lt.s32.totalorder %s9, 9
    %p139 = pnand %p137, %p138
    %p140 = pneg %p139
    // Predicated region
    $region29: #{frc_forward.4} parent=5 // pred_check
      _
    $region30: #{frc_forward.4} parent=5 // pred_check_branch
      %142 = sbr.rel (%p139) target = $region32
    $region31: #{frc_forward.4} parent=5 // pred_region
      %s143 = ssub.s32 %s9, 1
      %s144 = smul.u32 8, %s14
      %p145 = scmp.lt.s32.totalorder %s144, 63
      %s146 = scalar_select %p145, %s144, 63
      %s147 = smul.addr %s146, 8
      %s148 = scalar_lea.vmem %s0, %s147
      %p149 = pneg %p35
      %p150 = pneg %p32
      %p151 = pneg %p56
      %p152 = pneg %p53
      %p153 = pneg %p77
      %p154 = pneg %p74
      %p155 = pneg %p103
      %p156 = pneg %p100
      %s157 = smul.u32 8, %s14
      %p158 = scmp.lt.s32.totalorder %s157, 63
      %s159 = scalar_select %p158, %s157, 63
      %s160 = smul.addr %s159, 4
      %s161 = scalar_lea.vmem %s3, %s160
      %s162 = smul.u32 8, %s14
      %p163 = scmp.lt.s32.totalorder %s162, 63
      %s164 = scalar_select %p163, %s162, 63
      %s165 = smul.addr %s164, 8
      %s166 = scalar_lea.vmem %s0, %s165
      %s167 = smul.u32 8, %s14
      %s168 = smul.u32 8, %s14
      %p169 = scmp.lt.s32.totalorder %s168, 63
      %s170 = scalar_select %p169, %s168, 63
      %s171 = smul.addr %s170, 4
      %s172 = scalar_lea.vmem %s3, %s171
      %s173 = smul.u32 8, %s14
      %v175 = vld [vmem:[%s166] sm:$0xff]
      %v176 = vld [vmem:[%s166 + $0x8] sm:$0xff]
      %v177 = vld [vmem:[%s166 + $0x10] sm:$0xff]
      %v178 = vld [vmem:[%s166 + $0x18] sm:$0xff]
      %v179 = vld [vmem:[%s166 + $0x20] sm:$0xff]
      %v180 = vld [vmem:[%s166 + $0x28] sm:$0xff]
      %v181 = vld [vmem:[%s166 + $0x30] sm:$0xff]
      %v182 = vld [vmem:[%s166 + $0x38] sm:$0xff]
      %v183 = vpack.c.bf16 %v176, %v175
      %v184 = vpack.c.bf16 %v178, %v177
      %v185 = vpack.c.bf16 %v180, %v179
      %v186 = vpack.c.bf16 %v182, %v181
      %v187 = vld [vmem:[%s1] sm:$0xf]
      %v188 = vld [vmem:[%s2] sm:$0x1]
      %v190 = vlaneseq
      %v191 = vshrl.u32 %v190, 7
      %v192 = vsub.s32 0, %v191
      %v193 = vrot.slane %v188, %v192
      %vm195 = vcmask 64512
      %v197 = vsel %vm195, %v183, 0
      %v200 = vsel %vm195, %v184, 0
      %v203 = vsel %vm195, %v185, 0
      %v206 = vsel %vm195, %v186, 0
      %vm208 = vcmask 1043456
      %v210 = vsel %vm208, %v187, 0
      %212 = vmatprep.subr.bf16.mxu0 0
      %213 = vmatpush1.bf16.msra.mxu0 0
      %214 = vmatprep.subr.bf16.mxu0 0
      %215 = vmatpush1.bf16.msra.mxu0 0
      %216 = vmatprep.subr.bf16.mxu0 0
      %217 = vmatpush1.bf16.msra.mxu0 0
      %218 = vmatprep.subr.bf16.mxu0 0
      %219 = vmatpush1.bf16.msra.mxu0 0
      %220 = vmatprep.subr.bf16.mxu0 0
      %221 = vmatpush1.bf16.msra.mxu0 0
      %222 = vmatprep.subr.bf16.mxu0 0
      %223 = vmatpush1.bf16.msra.mxu0 0
      %224 = vmatprep.subr.bf16.mxu0 0
      %225 = vmatpush1.bf16.msra.mxu0 0
      %226 = vmatprep.subr.bf16.mxu0 0
      %227 = vmatpush1.bf16.msra.mxu0 %v210
      %228 = vmatprep.subr.bf16.mxu0 0
      %229 = vmatpush2.bf16.msra.mxu0 0
      %230 = vmatprep.subr.bf16.mxu0 0
      %231 = vmatpush2.bf16.msra.mxu0 0
      %232 = vmatprep.subr.bf16.mxu0 0
      %233 = vmatpush2.bf16.msra.mxu0 0
      %234 = vmatprep.subr.bf16.mxu0 0
      %235 = vmatpush2.bf16.msra.mxu0 0
      %236 = vmatprep.subr.bf16.mxu0 0
      %237 = vmatpush2.bf16.msra.mxu0 0
      %238 = vmatprep.subr.bf16.mxu0 0
      %239 = vmatpush2.bf16.msra.mxu0 0
      %240 = vmatprep.subr.bf16.mxu0 0
      %241 = vmatpush2.bf16.msra.mxu0 0
      %242 = vmatprep.subr.bf16.mxu0 0
      %243 = vmatpush2.bf16.msra.mxu0 0
      %244 = vmatprep.mubr.bf16.mxu0 0
      %245 = vmatmul.mubr.bf16.gmra.mxu0 %v197
      %v246 = vpop.f32.mrf.mxu0
      %v247 = vadd.f32 %v193, %v246
      %v248 = vpop.f32.mrf.mxu0
      %v249 = vpop.f32.mrf.mxu0
      %v250 = vadd.f32 %v193, %v249
      %v251 = vpop.f32.mrf.mxu0
      %252 = vmatprep.mubr.bf16.mxu0 0
      %253 = vmatmul.mubr.bf16.gmra.mxu0 %v200
      %v254 = vpop.f32.mrf.mxu0
      %v255 = vadd.f32 %v193, %v254
      %v256 = vpop.f32.mrf.mxu0
      %v257 = vpop.f32.mrf.mxu0
      %v258 = vadd.f32 %v193, %v257
      %v259 = vpop.f32.mrf.mxu0
      %260 = vmatprep.mubr.bf16.mxu0 0
      %261 = vmatmul.mubr.bf16.gmra.mxu0 %v203
      %v262 = vpop.f32.mrf.mxu0
      %v263 = vadd.f32 %v193, %v262
      %v264 = vpop.f32.mrf.mxu0
      %v265 = vpop.f32.mrf.mxu0
      %v266 = vadd.f32 %v193, %v265
      %v267 = vpop.f32.mrf.mxu0
      %268 = vmatprep.mubr.bf16.mxu0 0
      %269 = vmatmul.mubr.bf16.gmra.mxu0 %v206
      %v270 = vpop.f32.mrf.mxu0
      %v271 = vadd.f32 %v193, %v270
      %v272 = vpop.f32.mrf.mxu0
      %v273 = vpop.f32.mrf.mxu0
      %v274 = vadd.f32 %v193, %v273
      %v275 = vpop.f32.mrf.mxu0
      %276 = vdwg.mxu0
      %v277 = vmax.f32 %v247, 0.0
      %v278 = vmax.f32 %v250, 0.0
      %v279 = vmax.f32 %v255, 0.0
      %v280 = vmax.f32 %v258, 0.0
      %v281 = vmax.f32 %v263, 0.0
      %v282 = vmax.f32 %v266, 0.0
      %v283 = vmax.f32 %v271, 0.0
      %v284 = vmax.f32 %v274, 0.0
      %v285 = vpack.c.bf16 %v278, %v277
      %v286 = vpack.c.bf16 %v280, %v279
      %v287 = vpack.c.bf16 %v282, %v281
      %v288 = vpack.c.bf16 %v284, %v283
      %v293 = vunpack.c.l.b16 %v285
      %v294 = vunpack.c.h.b16 %v285
      %v295 = vunpack.c.l.b16 %v286
      %v296 = vunpack.c.h.b16 %v286
      %v297 = vunpack.c.l.b16 %v287
      %v298 = vunpack.c.h.b16 %v287
      %v299 = vunpack.c.l.b16 %v288
      %v300 = vunpack.c.h.b16 %v288
      %v301 = vpack.c.b16 %v293, %v293
      %v302 = vpack.c.b16 %v294, %v294
      %v303 = vpack.c.b16 %v295, %v295
      %v304 = vpack.c.b16 %v296, %v296
      %v305 = vpack.c.b16 %v297, %v297
      %v306 = vpack.c.b16 %v298, %v298
      %v307 = vpack.c.b16 %v299, %v299
      %v308 = vpack.c.b16 %v300, %v300
      %317 = vst [vmem:[%s172] sm:$0xf] %v301
      %318 = vst [vmem:[%s172 + $0x4] sm:$0xf] %v302
      %319 = vst [vmem:[%s172 + $0x8] sm:$0xf] %v303
      %320 = vst [vmem:[%s172 + $0xc] sm:$0xf] %v304
      %321 = vst [vmem:[%s172 + $0x10] sm:$0xf] %v305
      %322 = vst [vmem:[%s172 + $0x14] sm:$0xf] %v306
      %323 = vst [vmem:[%s172 + $0x18] sm:$0xf] %v307
      %324 = vst [vmem:[%s172 + $0x1c] sm:$0xf] %v308
      %s325 = smul.u32 8, %s14
      %p326 = scmp.lt.s32.totalorder %s325, 63
      %s327 = scalar_select %p326, %s325, 63
      %s328 = smul.addr %s327, 4
      %s329 = scalar_lea.vmem %s3, %s328
      // Predicated region
      $region33: #{frc_forward.4} parent=31 // pred_check
        %p330 = pneg %p100
      $region34: #{frc_forward.4} parent=31 // pred_check_branch
        %332 = sbr.rel (%p330) target = $region36
      $region35: #{frc_forward.4} parent=31 // pred_region
        %s333 = smul.u32 8, %s14
      $region36: #{frc_forward.4} parent=31 // pred_fallthru
        _
    $region32: #{frc_forward.4} parent=5 // pred_fallthru
      _
    %p334 = scmp.le.s32.totalorder 2, %s9
    // Predicated region
    $region37: #{frc_forward.4} parent=5 // pred_check
      %p335 = pneg %p334
    $region38: #{frc_forward.4} parent=5 // pred_check_branch
      %337 = sbr.rel (%p335) target = $region40
    $region39: #{frc_forward.4} parent=5 // pred_region
      %s338 = ssub.s32 %s9, 2
      // Predicated region
      $region41: #{frc_forward.4} parent=39 // pred_check
        %p339 = pneg %p106
      $region42: #{frc_forward.4} parent=39 // pred_check_branch
        %341 = sbr.rel (%p339) target = $region44
      $region43: #{frc_forward.4} parent=39 // pred_region
        %s342 = smul.u32 8, %s15
        %p343 = scmp.lt.s32.totalorder %s342, 63
        %s344 = scalar_select %p343, %s342, 63
        %s345 = smul.addr %s344, 4
        %s346 = scalar_lea.vmem %s3, %s345
      $region44: #{frc_forward.4} parent=39 // pred_fallthru
        _
    $region40: #{frc_forward.4} parent=5 // pred_fallthru
      _
  $region6: #{frc_forward.4} parent=0 // loop_footer
    %s13 = sadd.s32 1, %s9
  $region7: #{frc_forward.4} parent=0 // loop_footer_branch
    %8 = sbr.rel target = $region3
  $region8: #{frc_forward.4} parent=0 // loop_exit
    _

// kernel: frc_forward.5
$region0: #{frc_forward.5}
  #allocation0 [shape = 'u32[]', space=smem, size = 0x4, offset = 0x4, fixed_abs, tag = 'smem constant byte address 0x4 - core index']
  #allocation1 [shape = 'u32[144,128]{1,0:T(1,128)}', space=vmem, size = 0x12000, scoped, tag = 'internal scratch']
  #allocation2 [shape = 'f32[18,32,128]{2,1,0:T(8,128)}', space=vmem, size = 0x48000, scoped, tag = 'scratch operand']
  #allocation3 [shape = 'f32[18,32,128]{2,1,0:T(8,128)}', space=vmem, size = 0x48000, scoped, tag = 'scratch operand']
  %s0 = inlined_call_operand.vmem [shape: f32[2,16,16,128], index: 0, kind: input, shape index: {}]
  %s1 = inlined_call_operand.vmem [shape: bf16[2,16,16,128], index: 1, kind: input, shape index: {}]
  %s2 = inlined_call_operand.vmem [shape: bf16[2,16,16,128], index: 2, kind: input, shape index: {}]
  %s3 = inlined_call_operand.vmem [shape: f32[2,16,16,128], index: 3, kind: output, shape index: {}]
  %s4 = sld [smem:[#allocation0]]
  $region45: #{frc_forward.5} parent=0
    _
  %s6 = ssub.s32 1, %s4
  %s7 = scalar_select 0, %s6, %s4
  loop: start=0, step=1, limit=4
  $region2: #{frc_forward.5} parent=0 // loop_pre_header
    _
  $region3: #{frc_forward.5} parent=0 // loop_header
    %s9 = sphi 0, %s13
    %p10 = scmp.ge.s32.totalorder %s9, 4
    %s16 = sphi 0, %s28
    %s17 = sphi 0, %s24
    %s18 = sphi 0, %s16
    %s19 = sphi 0, %s17
    %s20 = sphi 0, %s18
    %s21 = sphi 0, %s19
    %s33 = sphi 0, %s35
    %s36 = sphi 0, %s33
    %s37 = sphi 0, %s36
    %s53 = sphi 0, %s37
    %s61 = sphi 0, %s63
    %s64 = sphi 0, %s61
    %s65 = sphi 0, %s64
    %s81 = sphi 0, %s65
    %s89 = sphi 0, %s91
    %s92 = sphi 0, %s89
    %s93 = sphi 0, %s92
    %s109 = sphi 0, %s93
    %s117 = sphi 0, %s119
    %s120 = sphi 0, %s117
    %s121 = sphi 0, %s120
    %s137 = sphi 0, %s121
  $region4: #{frc_forward.5} parent=0 // loop_header_branch
    %12 = sbr.rel (%p10) target = $region8
  $region5: #{frc_forward.5} parent=0 // loop_body
    %s14 = ssub.s32 %s9, 1
    %s15 = ssub.s32 %s9, 2
    %s22 = sadd.s32 1, %s17
    %p23 = scmp.ge.s32.totalorder %s22, 1
    %s24 = scalar_select %p23, 0, %s22
    %s25 = sadd.s32 1, %s16
    %s26 = scalar_select %p23, %s25, %s16
    %p27 = scmp.ge.s32.totalorder %s26, 2
    %s28 = scalar_select %p27, 0, %s26
    %s29 = ssub.s32 %s16, %s28
    %s30 = ssub.s32 %s17, %s24
    %s31 = sor.u32 %s29, %s30
    %p32 = scmp.eq.s32.totalorder %s31, 0
    %s34 = sadd.s32 %s33, 1
    %s35 = scalar_select %p32, %s33, %s34
    %p38 = pneg %p32
    %p39 = scmp.eq.s32.totalorder %s9, 1
    %p40 = por %p38, %p39
    %p41 = scmp.ne.s32.totalorder %s33, %s36
    %p42 = scmp.eq.s32.totalorder %s9, 0
    %p43 = por %p41, %p42
    %p44 = scmp.ne.s32.totalorder %s33, %s36
    %p45 = scmp.eq.s32.totalorder %s14, 1
    %p46 = por %p44, %p45
    %p47 = scmp.ne.s32.totalorder %s36, %s37
    %p48 = scmp.eq.s32.totalorder %s14, 0
    %p49 = por %p47, %p48
    %p50 = scmp.ne.s32.totalorder %s36, %s37
    %p51 = scmp.eq.s32.totalorder %s15, 1
    %p52 = por %p50, %p51
    %p54 = scmp.ne.s32.totalorder %s37, %s53
    %p55 = scmp.eq.s32.totalorder %s15, 0
    %p56 = por %p54, %p55
    %s57 = ssub.s32 %s16, %s28
    %s58 = ssub.s32 %s17, %s24
    %s59 = sor.u32 %s57, %s58
    %p60 = scmp.eq.s32.totalorder %s59, 0
    %s62 = sadd.s32 %s61, 1
    %s63 = scalar_select %p60, %s61, %s62
    %p66 = pneg %p60
    %p67 = scmp.eq.s32.totalorder %s9, 1
    %p68 = por %p66, %p67
    %p69 = scmp.ne.s32.totalorder %s61, %s64
    %p70 = scmp.eq.s32.totalorder %s9, 0
    %p71 = por %p69, %p70
    %p72 = scmp.ne.s32.totalorder %s61, %s64
    %p73 = scmp.eq.s32.totalorder %s14, 1
    %p74 = por %p72, %p73
    %p75 = scmp.ne.s32.totalorder %s64, %s65
    %p76 = scmp.eq.s32.totalorder %s14, 0
    %p77 = por %p75, %p76
    %p78 = scmp.ne.s32.totalorder %s64, %s65
    %p79 = scmp.eq.s32.totalorder %s15, 1
    %p80 = por %p78, %p79
    %p82 = scmp.ne.s32.totalorder %s65, %s81
    %p83 = scmp.eq.s32.totalorder %s15, 0
    %p84 = por %p82, %p83
    %s85 = ssub.s32 %s16, %s28
    %s86 = ssub.s32 %s17, %s24
    %s87 = sor.u32 %s85, %s86
    %p88 = scmp.eq.s32.totalorder %s87, 0
    %s90 = sadd.s32 %s89, 1
    %s91 = scalar_select %p88, %s89, %s90
    %p94 = pneg %p88
    %p95 = scmp.eq.s32.totalorder %s9, 1
    %p96 = por %p94, %p95
    %p97 = scmp.ne.s32.totalorder %s89, %s92
    %p98 = scmp.eq.s32.totalorder %s9, 0
    %p99 = por %p97, %p98
    %p100 = scmp.ne.s32.totalorder %s89, %s92
    %p101 = scmp.eq.s32.totalorder %s14, 1
    %p102 = por %p100, %p101
    %p103 = scmp.ne.s32.totalorder %s92, %s93
    %p104 = scmp.eq.s32.totalorder %s14, 0
    %p105 = por %p103, %p104
    %p106 = scmp.ne.s32.totalorder %s92, %s93
    %p107 = scmp.eq.s32.totalorder %s15, 1
    %p108 = por %p106, %p107
    %p110 = scmp.ne.s32.totalorder %s93, %s109
    %p111 = scmp.eq.s32.totalorder %s15, 0
    %p112 = por %p110, %p111
    %s113 = ssub.s32 %s16, %s28
    %s114 = ssub.s32 %s17, %s24
    %s115 = sor.u32 %s113, %s114
    %p116 = scmp.eq.s32.totalorder %s115, 0
    %s118 = sadd.s32 %s117, 1
    %s119 = scalar_select %p116, %s117, %s118
    %p122 = pneg %p116
    %p123 = scmp.eq.s32.totalorder %s9, 1
    %p124 = por %p122, %p123
    %p125 = scmp.ne.s32.totalorder %s117, %s120
    %p126 = scmp.eq.s32.totalorder %s9, 0
    %p127 = por %p125, %p126
    %p128 = scmp.ne.s32.totalorder %s117, %s120
    %p129 = scmp.eq.s32.totalorder %s14, 1
    %p130 = por %p128, %p129
    %p131 = scmp.ne.s32.totalorder %s120, %s121
    %p132 = scmp.eq.s32.totalorder %s14, 0
    %p133 = por %p131, %p132
    %p134 = scmp.ne.s32.totalorder %s120, %s121
    %p135 = scmp.eq.s32.totalorder %s15, 1
    %p136 = por %p134, %p135
    %p138 = scmp.ne.s32.totalorder %s121, %s137
    %p139 = scmp.eq.s32.totalorder %s15, 0
    %p140 = por %p138, %p139
    %p141 = scmp.le.s32.totalorder 1, %s9
    %p142 = scmp.lt.s32.totalorder %s9, 3
    %p143 = pnand %p141, %p142
    %p144 = pneg %p143
    // Predicated region
    $region9: #{frc_forward.5} parent=5 // pred_check
      _
    $region10: #{frc_forward.5} parent=5 // pred_check_branch
      %146 = sbr.rel (%p143) target = $region12
    $region11: #{frc_forward.5} parent=5 // pred_region
      %s147 = ssub.s32 %s9, 1
    $region12: #{frc_forward.5} parent=5 // pred_fallthru
      _
    %p148 = scmp.lt.s32.totalorder %s9, 2
    // Predicated region
    $region13: #{frc_forward.5} parent=5 // pred_check
      %p149 = pneg %p148
    $region14: #{frc_forward.5} parent=5 // pred_check_branch
      %151 = sbr.rel (%p149) target = $region16
    $region15: #{frc_forward.5} parent=5 // pred_region
      // Predicated region
      $region17: #{frc_forward.5} parent=15 // pred_check
        %p152 = pneg %p43
      $region18: #{frc_forward.5} parent=15 // pred_check_branch
        %154 = sbr.rel (%p152) target = $region20
      $region19: #{frc_forward.5} parent=15 // pred_region
        %p155 = scmp.lt.s32.totalorder %s16, 1
        %s156 = scalar_select %p155, %s16, 1
        %p157 = scmp.lt.s32.totalorder %s17, 0
        %s158 = scalar_select %p157, %s17, 0
        %s159 = smul.addr %s156, 32
        %s160 = sadd.s32 %s158, %s159
        %s161 = smul.addr %s160, 8
        %s162 = scalar_lea.vmem %s0, %s161
      $region20: #{frc_forward.5} parent=15 // pred_fallthru
        _
      // Predicated region
      $region21: #{frc_forward.5} parent=15 // pred_check
        %p163 = pneg %p71
      $region22: #{frc_forward.5} parent=15 // pred_check_branch
        %165 = sbr.rel (%p163) target = $region24
      $region23: #{frc_forward.5} parent=15 // pred_region
        %p166 = scmp.lt.s32.totalorder %s16, 1
        %s167 = scalar_select %p166, %s16, 1
        %p168 = scmp.lt.s32.totalorder %s17, 0
        %s169 = scalar_select %p168, %s17, 0
        %s170 = smul.addr %s167, 32
        %s171 = sadd.s32 %s169, %s170
        %s172 = smul.addr %s171, 4
        %s173 = scalar_lea.vmem %s1, %s172
      $region24: #{frc_forward.5} parent=15 // pred_fallthru
        _
      // Predicated region
      $region25: #{frc_forward.5} parent=15 // pred_check
        %p174 = pneg %p99
      $region26: #{frc_forward.5} parent=15 // pred_check_branch
        %176 = sbr.rel (%p174) target = $region28
      $region27: #{frc_forward.5} parent=15 // pred_region
        %p177 = scmp.lt.s32.totalorder %s16, 1
        %s178 = scalar_select %p177, %s16, 1
        %p179 = scmp.lt.s32.totalorder %s17, 0
        %s180 = scalar_select %p179, %s17, 0
        %s181 = smul.addr %s178, 32
        %s182 = sadd.s32 %s180, %s181
        %s183 = smul.addr %s182, 4
        %s184 = scalar_lea.vmem %s2, %s183
      $region28: #{frc_forward.5} parent=15 // pred_fallthru
        _
    $region16: #{frc_forward.5} parent=5 // pred_fallthru
      _
    %p185 = scmp.le.s32.totalorder 1, %s9
    %p186 = scmp.lt.s32.totalorder %s9, 3
    %p187 = pnand %p185, %p186
    %p188 = pneg %p187
    // Predicated region
    $region29: #{frc_forward.5} parent=5 // pred_check
      _
    $region30: #{frc_forward.5} parent=5 // pred_check_branch
      %190 = sbr.rel (%p187) target = $region32
    $region31: #{frc_forward.5} parent=5 // pred_region
      %s191 = ssub.s32 %s9, 1
      %p192 = scmp.lt.s32.totalorder %s18, 1
      %s193 = scalar_select %p192, %s18, 1
      %p194 = scmp.lt.s32.totalorder %s19, 0
      %s195 = scalar_select %p194, %s19, 0
      %s196 = smul.addr %s193, 32
      %s197 = sadd.s32 %s195, %s196
      %s198 = smul.addr %s197, 8
      %s199 = scalar_lea.vmem %s0, %s198
      %p200 = pneg %p49
      %p201 = pneg %p46
      %p202 = scmp.lt.s32.totalorder %s18, 1
      %s203 = scalar_select %p202, %s18, 1
      %p204 = scmp.lt.s32.totalorder %s19, 0
      %s205 = scalar_select %p204, %s19, 0
      %s206 = smul.addr %s203, 32
      %s207 = sadd.s32 %s205, %s206
      %s208 = smul.addr %s207, 4
      %s209 = scalar_lea.vmem %s1, %s208
      %p210 = pneg %p77
      %p211 = pneg %p74
      %p212 = scmp.lt.s32.totalorder %s18, 1
      %s213 = scalar_select %p212, %s18, 1
      %p214 = scmp.lt.s32.totalorder %s19, 0
      %s215 = scalar_select %p214, %s19, 0
      %s216 = smul.addr %s213, 32
      %s217 = sadd.s32 %s215, %s216
      %s218 = smul.addr %s217, 4
      %s219 = scalar_lea.vmem %s2, %s218
      %p220 = pneg %p105
      %p221 = pneg %p102
      %p222 = pneg %p133
      %p223 = pneg %p130
      %p224 = scmp.lt.s32.totalorder %s18, 1
      %s225 = scalar_select %p224, %s18, 1
      %p226 = scmp.lt.s32.totalorder %s19, 0
      %s227 = scalar_select %p226, %s19, 0
      %s228 = smul.addr %s225, 32
      %s229 = sadd.s32 %s227, %s228
      %s230 = smul.addr %s229, 8
      %s231 = scalar_lea.vmem %s3, %s230
      %p232 = scmp.lt.s32.totalorder %s18, 1
      %s233 = scalar_select %p232, %s18, 1
      %p234 = scmp.lt.s32.totalorder %s19, 0
      %s235 = scalar_select %p234, %s19, 0
      %s236 = smul.addr %s233, 32
      %s237 = sadd.s32 %s235, %s236
      %s238 = smul.addr %s237, 8
      %s239 = scalar_lea.vmem %s0, %s238
      %p240 = scmp.lt.s32.totalorder %s18, 1
      %s241 = scalar_select %p240, %s18, 1
      %p242 = scmp.lt.s32.totalorder %s19, 0
      %s243 = scalar_select %p242, %s19, 0
      %s244 = smul.addr %s241, 32
      %s245 = sadd.s32 %s243, %s244
      %s246 = smul.addr %s245, 4
      %s247 = scalar_lea.vmem %s1, %s246
      %p248 = scmp.lt.s32.totalorder %s18, 1
      %s249 = scalar_select %p248, %s18, 1
      %p250 = scmp.lt.s32.totalorder %s19, 0
      %s251 = scalar_select %p250, %s19, 0
      %s252 = smul.addr %s249, 32
      %s253 = sadd.s32 %s251, %s252
      %s254 = smul.addr %s253, 4
      %s255 = scalar_lea.vmem %s2, %s254
      %p256 = scmp.lt.s32.totalorder %s18, 1
      %s257 = scalar_select %p256, %s18, 1
      %p258 = scmp.lt.s32.totalorder %s19, 0
      %s259 = scalar_select %p258, %s19, 0
      %s260 = smul.addr %s257, 32
      %s261 = sadd.s32 %s259, %s260
      %s262 = smul.addr %s261, 8
      %s263 = scalar_lea.vmem %s3, %s262
      %264 = vst [vmem:[#allocation2] sm:$0xff] 0.0
      %265 = vst [vmem:[#allocation2 + $0x8] sm:$0xff] 0.0
      %266 = vst [vmem:[#allocation2 + $0x10] sm:$0xff] 0.0
      %267 = vst [vmem:[#allocation2 + $0x18] sm:$0xff] 0.0
      %268 = vst [vmem:[#allocation2 + $0x20] sm:$0xff] 0.0
      %269 = vst [vmem:[#allocation2 + $0x28] sm:$0xff] 0.0
      %270 = vst [vmem:[#allocation2 + $0x30] sm:$0xff] 0.0
      %271 = vst [vmem:[#allocation2 + $0x38] sm:$0xff] 0.0
      %272 = vst [vmem:[#allocation2 + $0x40] sm:$0xff] 0.0
      %273 = vst [vmem:[#allocation2 + $0x48] sm:$0xff] 0.0
      %274 = vst [vmem:[#allocation2 + $0x50] sm:$0xff] 0.0
      %275 = vst [vmem:[#allocation2 + $0x58] sm:$0xff] 0.0
      %276 = vst [vmem:[#allocation2 + $0x60] sm:$0xff] 0.0
      %277 = vst [vmem:[#allocation2 + $0x68] sm:$0xff] 0.0
      %278 = vst [vmem:[#allocation2 + $0x70] sm:$0xff] 0.0
      %279 = vst [vmem:[#allocation2 + $0x78] sm:$0xff] 0.0
      %280 = vst [vmem:[#allocation2 + $0x80] sm:$0xff] 0.0
      %281 = vst [vmem:[#allocation2 + $0x88] sm:$0xff] 0.0
      %282 = vst [vmem:[#allocation2 + $0x90] sm:$0xff] 0.0
      %283 = vst [vmem:[#allocation2 + $0x98] sm:$0xff] 0.0
      %284 = vst [vmem:[#allocation2 + $0xa0] sm:$0xff] 0.0
      %285 = vst [vmem:[#allocation2 + $0xa8] sm:$0xff] 0.0
      %286 = vst [vmem:[#allocation2 + $0xb0] sm:$0xff] 0.0
      %287 = vst [vmem:[#allocation2 + $0xb8] sm:$0xff] 0.0
      %288 = vst [vmem:[#allocation2 + $0xc0] sm:$0xff] 0.0
      %289 = vst [vmem:[#allocation2 + $0xc8] sm:$0xff] 0.0
      %290 = vst [vmem:[#allocation2 + $0xd0] sm:$0xff] 0.0
      %291 = vst [vmem:[#allocation2 + $0xd8] sm:$0xff] 0.0
      %292 = vst [vmem:[#allocation2 + $0xe0] sm:$0xff] 0.0
      %293 = vst [vmem:[#allocation2 + $0xe8] sm:$0xff] 0.0
      %294 = vst [vmem:[#allocation2 + $0xf0] sm:$0xff] 0.0
      %295 = vst [vmem:[#allocation2 + $0xf8] sm:$0xff] 0.0
      %296 = vst [vmem:[#allocation2 + $0x100] sm:$0xff] 0.0
      %297 = vst [vmem:[#allocation2 + $0x108] sm:$0xff] 0.0
      %298 = vst [vmem:[#allocation2 + $0x110] sm:$0xff] 0.0
      %299 = vst [vmem:[#allocation2 + $0x118] sm:$0xff] 0.0
      %300 = vst [vmem:[#allocation2 + $0x120] sm:$0xff] 0.0
      %301 = vst [vmem:[#allocation2 + $0x128] sm:$0xff] 0.0
      %302 = vst [vmem:[#allocation2 + $0x130] sm:$0xff] 0.0
      %303 = vst [vmem:[#allocation2 + $0x138] sm:$0xff] 0.0
      %304 = vst [vmem:[#allocation2 + $0x140] sm:$0xff] 0.0
      %305 = vst [vmem:[#allocation2 + $0x148] sm:$0xff] 0.0
      %306 = vst [vmem:[#allocation2 + $0x150] sm:$0xff] 0.0
      %307 = vst [vmem:[#allocation2 + $0x158] sm:$0xff] 0.0
      %308 = vst [vmem:[#allocation2 + $0x160] sm:$0xff] 0.0
      %309 = vst [vmem:[#allocation2 + $0x168] sm:$0xff] 0.0
      %310 = vst [vmem:[#allocation2 + $0x170] sm:$0xff] 0.0
      %311 = vst [vmem:[#allocation2 + $0x178] sm:$0xff] 0.0
      %312 = vst [vmem:[#allocation2 + $0x180] sm:$0xff] 0.0
      %313 = vst [vmem:[#allocation2 + $0x188] sm:$0xff] 0.0
      %314 = vst [vmem:[#allocation2 + $0x190] sm:$0xff] 0.0
      %315 = vst [vmem:[#allocation2 + $0x198] sm:$0xff] 0.0
      %316 = vst [vmem:[#allocation2 + $0x1a0] sm:$0xff] 0.0
      %317 = vst [vmem:[#allocation2 + $0x1a8] sm:$0xff] 0.0
      %318 = vst [vmem:[#allocation2 + $0x1b0] sm:$0xff] 0.0
      %319 = vst [vmem:[#allocation2 + $0x1b8] sm:$0xff] 0.0
      %320 = vst [vmem:[#allocation2 + $0x1c0] sm:$0xff] 0.0
      %321 = vst [vmem:[#allocation2 + $0x1c8] sm:$0xff] 0.0
      %322 = vst [vmem:[#allocation2 + $0x1d0] sm:$0xff] 0.0
      %323 = vst [vmem:[#allocation2 + $0x1d8] sm:$0xff] 0.0
      %324 = vst [vmem:[#allocation2 + $0x1e0] sm:$0xff] 0.0
      %325 = vst [vmem:[#allocation2 + $0x1e8] sm:$0xff] 0.0
      %326 = vst [vmem:[#allocation2 + $0x1f0] sm:$0xff] 0.0
      %327 = vst [vmem:[#allocation2 + $0x1f8] sm:$0xff] 0.0
      %328 = vst [vmem:[#allocation2 + $0x200] sm:$0xff] 0.0
      %329 = vst [vmem:[#allocation2 + $0x208] sm:$0xff] 0.0
      %330 = vst [vmem:[#allocation2 + $0x210] sm:$0xff] 0.0
      %331 = vst [vmem:[#allocation2 + $0x218] sm:$0xff] 0.0
      %332 = vst [vmem:[#allocation2 + $0x220] sm:$0xff] 0.0
      %333 = vst [vmem:[#allocation2 + $0x228] sm:$0xff] 0.0
      %334 = vst [vmem:[#allocation2 + $0x230] sm:$0xff] 0.0
      %335 = vst [vmem:[#allocation2 + $0x238] sm:$0xff] 0.0
      %336 = vst [vmem:[#allocation3] sm:$0xff] 0.0
      %337 = vst [vmem:[#allocation3 + $0x8] sm:$0xff] 0.0
      %338 = vst [vmem:[#allocation3 + $0x10] sm:$0xff] 0.0
      %339 = vst [vmem:[#allocation3 + $0x18] sm:$0xff] 0.0
      %340 = vst [vmem:[#allocation3 + $0x20] sm:$0xff] 0.0
      %341 = vst [vmem:[#allocation3 + $0x28] sm:$0xff] 0.0
      %342 = vst [vmem:[#allocation3 + $0x30] sm:$0xff] 0.0
      %343 = vst [vmem:[#allocation3 + $0x38] sm:$0xff] 0.0
      %344 = vst [vmem:[#allocation3 + $0x40] sm:$0xff] 0.0
      %345 = vst [vmem:[#allocation3 + $0x48] sm:$0xff] 0.0
      %346 = vst [vmem:[#allocation3 + $0x50] sm:$0xff] 0.0
      %347 = vst [vmem:[#allocation3 + $0x58] sm:$0xff] 0.0
      %348 = vst [vmem:[#allocation3 + $0x60] sm:$0xff] 0.0
      %349 = vst [vmem:[#allocation3 + $0x68] sm:$0xff] 0.0
      %350 = vst [vmem:[#allocation3 + $0x70] sm:$0xff] 0.0
      %351 = vst [vmem:[#allocation3 + $0x78] sm:$0xff] 0.0
      %352 = vst [vmem:[#allocation3 + $0x80] sm:$0xff] 0.0
      %353 = vst [vmem:[#allocation3 + $0x88] sm:$0xff] 0.0
      %354 = vst [vmem:[#allocation3 + $0x90] sm:$0xff] 0.0
      %355 = vst [vmem:[#allocation3 + $0x98] sm:$0xff] 0.0
      %356 = vst [vmem:[#allocation3 + $0xa0] sm:$0xff] 0.0
      %357 = vst [vmem:[#allocation3 + $0xa8] sm:$0xff] 0.0
      %358 = vst [vmem:[#allocation3 + $0xb0] sm:$0xff] 0.0
      %359 = vst [vmem:[#allocation3 + $0xb8] sm:$0xff] 0.0
      %360 = vst [vmem:[#allocation3 + $0xc0] sm:$0xff] 0.0
      %361 = vst [vmem:[#allocation3 + $0xc8] sm:$0xff] 0.0
      %362 = vst [vmem:[#allocation3 + $0xd0] sm:$0xff] 0.0
      %363 = vst [vmem:[#allocation3 + $0xd8] sm:$0xff] 0.0
      %364 = vst [vmem:[#allocation3 + $0xe0] sm:$0xff] 0.0
      %365 = vst [vmem:[#allocation3 + $0xe8] sm:$0xff] 0.0
      %366 = vst [vmem:[#allocation3 + $0xf0] sm:$0xff] 0.0
      %367 = vst [vmem:[#allocation3 + $0xf8] sm:$0xff] 0.0
      %368 = vst [vmem:[#allocation3 + $0x100] sm:$0xff] 0.0
      %369 = vst [vmem:[#allocation3 + $0x108] sm:$0xff] 0.0
      %370 = vst [vmem:[#allocation3 + $0x110] sm:$0xff] 0.0
      %371 = vst [vmem:[#allocation3 + $0x118] sm:$0xff] 0.0
      %372 = vst [vmem:[#allocation3 + $0x120] sm:$0xff] 0.0
      %373 = vst [vmem:[#allocation3 + $0x128] sm:$0xff] 0.0
      %374 = vst [vmem:[#allocation3 + $0x130] sm:$0xff] 0.0
      %375 = vst [vmem:[#allocation3 + $0x138] sm:$0xff] 0.0
      %376 = vst [vmem:[#allocation3 + $0x140] sm:$0xff] 0.0
      %377 = vst [vmem:[#allocation3 + $0x148] sm:$0xff] 0.0
      %378 = vst [vmem:[#allocation3 + $0x150] sm:$0xff] 0.0
      %379 = vst [vmem:[#allocation3 + $0x158] sm:$0xff] 0.0
      %380 = vst [vmem:[#allocation3 + $0x160] sm:$0xff] 0.0
      %381 = vst [vmem:[#allocation3 + $0x168] sm:$0xff] 0.0
      %382 = vst [vmem:[#allocation3 + $0x170] sm:$0xff] 0.0
      %383 = vst [vmem:[#allocation3 + $0x178] sm:$0xff] 0.0
      %384 = vst [vmem:[#allocation3 + $0x180] sm:$0xff] 0.0
      %385 = vst [vmem:[#allocation3 + $0x188] sm:$0xff] 0.0
      %386 = vst [vmem:[#allocation3 + $0x190] sm:$0xff] 0.0
      %387 = vst [vmem:[#allocation3 + $0x198] sm:$0xff] 0.0
      %388 = vst [vmem:[#allocation3 + $0x1a0] sm:$0xff] 0.0
      %389 = vst [vmem:[#allocation3 + $0x1a8] sm:$0xff] 0.0
      %390 = vst [vmem:[#allocation3 + $0x1b0] sm:$0xff] 0.0
      %391 = vst [vmem:[#allocation3 + $0x1b8] sm:$0xff] 0.0
      %392 = vst [vmem:[#allocation3 + $0x1c0] sm:$0xff] 0.0
      %393 = vst [vmem:[#allocation3 + $0x1c8] sm:$0xff] 0.0
      %394 = vst [vmem:[#allocation3 + $0x1d0] sm:$0xff] 0.0
      %395 = vst [vmem:[#allocation3 + $0x1d8] sm:$0xff] 0.0
      %396 = vst [vmem:[#allocation3 + $0x1e0] sm:$0xff] 0.0
      %397 = vst [vmem:[#allocation3 + $0x1e8] sm:$0xff] 0.0
      %398 = vst [vmem:[#allocation3 + $0x1f0] sm:$0xff] 0.0
      %399 = vst [vmem:[#allocation3 + $0x1f8] sm:$0xff] 0.0
      %400 = vst [vmem:[#allocation3 + $0x200] sm:$0xff] 0.0
      %401 = vst [vmem:[#allocation3 + $0x208] sm:$0xff] 0.0
      %402 = vst [vmem:[#allocation3 + $0x210] sm:$0xff] 0.0
      %403 = vst [vmem:[#allocation3 + $0x218] sm:$0xff] 0.0
      %404 = vst [vmem:[#allocation3 + $0x220] sm:$0xff] 0.0
      %405 = vst [vmem:[#allocation3 + $0x228] sm:$0xff] 0.0
      %406 = vst [vmem:[#allocation3 + $0x230] sm:$0xff] 0.0
      %407 = vst [vmem:[#allocation3 + $0x238] sm:$0xff] 0.0
      %v408 = vld [vmem:[%s239] sm:$0xff]
      %v409 = vld [vmem:[%s239 + $0x8] sm:$0xff]
      %v410 = vld [vmem:[%s239 + $0x10] sm:$0xff]
      %v411 = vld [vmem:[%s239 + $0x18] sm:$0xff]
      %v412 = vld [vmem:[%s239 + $0x20] sm:$0xff]
      %v413 = vld [vmem:[%s239 + $0x28] sm:$0xff]
      %v414 = vld [vmem:[%s239 + $0x30] sm:$0xff]
      %v415 = vld [vmem:[%s239 + $0x38] sm:$0xff]
      %v416 = vld [vmem:[%s239 + $0x40] sm:$0xff]
      %v417 = vld [vmem:[%s239 + $0x48] sm:$0xff]
      %v418 = vld [vmem:[%s239 + $0x50] sm:$0xff]
      %v419 = vld [vmem:[%s239 + $0x58] sm:$0xff]
      %v420 = vld [vmem:[%s239 + $0x60] sm:$0xff]
      %v421 = vld [vmem:[%s239 + $0x68] sm:$0xff]
      %v422 = vld [vmem:[%s239 + $0x70] sm:$0xff]
      %v423 = vld [vmem:[%s239 + $0x78] sm:$0xff]
      %v424 = vld [vmem:[%s239 + $0x80] sm:$0xff]
      %v425 = vld [vmem:[%s239 + $0x88] sm:$0xff]
      %v426 = vld [vmem:[%s239 + $0x90] sm:$0xff]
      %v427 = vld [vmem:[%s239 + $0x98] sm:$0xff]
      %v428 = vld [vmem:[%s239 + $0xa0] sm:$0xff]
      %v429 = vld [vmem:[%s239 + $0xa8] sm:$0xff]
      %v430 = vld [vmem:[%s239 + $0xb0] sm:$0xff]
      %v431 = vld [vmem:[%s239 + $0xb8] sm:$0xff]
      %v432 = vld [vmem:[%s239 + $0xc0] sm:$0xff]
      %v433 = vld [vmem:[%s239 + $0xc8] sm:$0xff]
      %v434 = vld [vmem:[%s239 + $0xd0] sm:$0xff]
      %v435 = vld [vmem:[%s239 + $0xd8] sm:$0xff]
      %v436 = vld [vmem:[%s239 + $0xe0] sm:$0xff]
      %v437 = vld [vmem:[%s239 + $0xe8] sm:$0xff]
      %v438 = vld [vmem:[%s239 + $0xf0] sm:$0xff]
      %v439 = vld [vmem:[%s239 + $0xf8] sm:$0xff]
      %s440 = scalar_lea.vmem [#allocation2], 32
      %441 = vst [vmem:[%s440 + $0x8] sm:$0xff] %v408
      %442 = vst [vmem:[%s440 + $0x10] sm:$0xff] %v409
      %443 = vst [vmem:[%s440 + $0x28] sm:$0xff] %v410
      %444 = vst [vmem:[%s440 + $0x30] sm:$0xff] %v411
      %445 = vst [vmem:[%s440 + $0x48] sm:$0xff] %v412
      %446 = vst [vmem:[%s440 + $0x50] sm:$0xff] %v413
      %447 = vst [vmem:[%s440 + $0x68] sm:$0xff] %v414
      %448 = vst [vmem:[%s440 + $0x70] sm:$0xff] %v415
      %449 = vst [vmem:[%s440 + $0x88] sm:$0xff] %v416
      %450 = vst [vmem:[%s440 + $0x90] sm:$0xff] %v417
      %451 = vst [vmem:[%s440 + $0xa8] sm:$0xff] %v418
      %452 = vst [vmem:[%s440 + $0xb0] sm:$0xff] %v419
      %453 = vst [vmem:[%s440 + $0xc8] sm:$0xff] %v420
      %454 = vst [vmem:[%s440 + $0xd0] sm:$0xff] %v421
      %455 = vst [vmem:[%s440 + $0xe8] sm:$0xff] %v422
      %456 = vst [vmem:[%s440 + $0xf0] sm:$0xff] %v423
      %457 = vst [vmem:[%s440 + $0x108] sm:$0xff] %v424
      %458 = vst [vmem:[%s440 + $0x110] sm:$0xff] %v425
      %459 = vst [vmem:[%s440 + $0x128] sm:$0xff] %v426
      %460 = vst [vmem:[%s440 + $0x130] sm:$0xff] %v427
      %461 = vst [vmem:[%s440 + $0x148] sm:$0xff] %v428
      %462 = vst [vmem:[%s440 + $0x150] sm:$0xff] %v429
      %463 = vst [vmem:[%s440 + $0x168] sm:$0xff] %v430
      %464 = vst [vmem:[%s440 + $0x170] sm:$0xff] %v431
      %465 = vst [vmem:[%s440 + $0x188] sm:$0xff] %v432
      %466 = vst [vmem:[%s440 + $0x190] sm:$0xff] %v433
      %467 = vst [vmem:[%s440 + $0x1a8] sm:$0xff] %v434
      %468 = vst [vmem:[%s440 + $0x1b0] sm:$0xff] %v435
      %469 = vst [vmem:[%s440 + $0x1c8] sm:$0xff] %v436
      %470 = vst [vmem:[%s440 + $0x1d0] sm:$0xff] %v437
      %471 = vst [vmem:[%s440 + $0x1e8] sm:$0xff] %v438
      %472 = vst [vmem:[%s440 + $0x1f0] sm:$0xff] %v439
      %v473 = vld [vmem:[%s247] sm:$0xf]
      %v474 = vld [vmem:[%s247 + $0x4] sm:$0xf]
      %v475 = vld [vmem:[%s247 + $0x8] sm:$0xf]
      %v476 = vld [vmem:[%s247 + $0xc] sm:$0xf]
      %v477 = vld [vmem:[%s247 + $0x10] sm:$0xf]
      %v478 = vld [vmem:[%s247 + $0x14] sm:$0xf]
      %v479 = vld [vmem:[%s247 + $0x18] sm:$0xf]
      %v480 = vld [vmem:[%s247 + $0x1c] sm:$0xf]
      %v481 = vld [vmem:[%s247 + $0x20] sm:$0xf]
      %v482 = vld [vmem:[%s247 + $0x24] sm:$0xf]
      %v483 = vld [vmem:[%s247 + $0x28] sm:$0xf]
      %v484 = vld [vmem:[%s247 + $0x2c] sm:$0xf]
      %v485 = vld [vmem:[%s247 + $0x30] sm:$0xf]
      %v486 = vld [vmem:[%s247 + $0x34] sm:$0xf]
      %v487 = vld [vmem:[%s247 + $0x38] sm:$0xf]
      %v488 = vld [vmem:[%s247 + $0x3c] sm:$0xf]
      %v489 = vld [vmem:[%s247 + $0x40] sm:$0xf]
      %v490 = vld [vmem:[%s247 + $0x44] sm:$0xf]
      %v491 = vld [vmem:[%s247 + $0x48] sm:$0xf]
      %v492 = vld [vmem:[%s247 + $0x4c] sm:$0xf]
      %v493 = vld [vmem:[%s247 + $0x50] sm:$0xf]
      %v494 = vld [vmem:[%s247 + $0x54] sm:$0xf]
      %v495 = vld [vmem:[%s247 + $0x58] sm:$0xf]
      %v496 = vld [vmem:[%s247 + $0x5c] sm:$0xf]
      %v497 = vld [vmem:[%s247 + $0x60] sm:$0xf]
      %v498 = vld [vmem:[%s247 + $0x64] sm:$0xf]
      %v499 = vld [vmem:[%s247 + $0x68] sm:$0xf]
      %v500 = vld [vmem:[%s247 + $0x6c] sm:$0xf]
      %v501 = vld [vmem:[%s247 + $0x70] sm:$0xf]
      %v502 = vld [vmem:[%s247 + $0x74] sm:$0xf]
      %v503 = vld [vmem:[%s247 + $0x78] sm:$0xf]
      %v504 = vld [vmem:[%s247 + $0x7c] sm:$0xf]
      %v505 = vunpack.c.l.bf16 %v473
      %v506 = vunpack.c.l.bf16 %v474
      %v507 = vunpack.c.l.bf16 %v475
      %v508 = vunpack.c.l.bf16 %v476
      %v509 = vunpack.c.l.bf16 %v477
      %v510 = vunpack.c.l.bf16 %v478
      %v511 = vunpack.c.l.bf16 %v479
      %v512 = vunpack.c.l.bf16 %v480
      %v513 = vunpack.c.l.bf16 %v481
      %v514 = vunpack.c.l.bf16 %v482
      %v515 = vunpack.c.l.bf16 %v483
      %v516 = vunpack.c.l.bf16 %v484
      %v517 = vunpack.c.l.bf16 %v485
      %v518 = vunpack.c.l.bf16 %v486
      %v519 = vunpack.c.l.bf16 %v487
      %v520 = vunpack.c.l.bf16 %v488
      %v521 = vunpack.c.l.bf16 %v489
      %v522 = vunpack.c.l.bf16 %v490
      %v523 = vunpack.c.l.bf16 %v491
      %v524 = vunpack.c.l.bf16 %v492
      %v525 = vunpack.c.l.bf16 %v493
      %v526 = vunpack.c.l.bf16 %v494
      %v527 = vunpack.c.l.bf16 %v495
      %v528 = vunpack.c.l.bf16 %v496
      %v529 = vunpack.c.l.bf16 %v497
      %v530 = vunpack.c.l.bf16 %v498
      %v531 = vunpack.c.l.bf16 %v499
      %v532 = vunpack.c.l.bf16 %v500
      %v533 = vunpack.c.l.bf16 %v501
      %v534 = vunpack.c.l.bf16 %v502
      %v535 = vunpack.c.l.bf16 %v503
      %v536 = vunpack.c.l.bf16 %v504
      %s537 = scalar_lea.vmem [#allocation3], 32
      %538 = vst [vmem:[%s537 + $0x8] sm:$0xff] %v505
      %539 = vst [vmem:[%s537 + $0x10] sm:$0xff] %v506
      %540 = vst [vmem:[%s537 + $0x28] sm:$0xff] %v507
      %541 = vst [vmem:[%s537 + $0x30] sm:$0xff] %v508
      %542 = vst [vmem:[%s537 + $0x48] sm:$0xff] %v509
      %543 = vst [vmem:[%s537 + $0x50] sm:$0xff] %v510
      %544 = vst [vmem:[%s537 + $0x68] sm:$0xff] %v511
      %545 = vst [vmem:[%s537 + $0x70] sm:$0xff] %v512
      %546 = vst [vmem:[%s537 + $0x88] sm:$0xff] %v513
      %547 = vst [vmem:[%s537 + $0x90] sm:$0xff] %v514
      %548 = vst [vmem:[%s537 + $0xa8] sm:$0xff] %v515
      %549 = vst [vmem:[%s537 + $0xb0] sm:$0xff] %v516
      %550 = vst [vmem:[%s537 + $0xc8] sm:$0xff] %v517
      %551 = vst [vmem:[%s537 + $0xd0] sm:$0xff] %v518
      %552 = vst [vmem:[%s537 + $0xe8] sm:$0xff] %v519
      %553 = vst [vmem:[%s537 + $0xf0] sm:$0xff] %v520
      %554 = vst [vmem:[%s537 + $0x108] sm:$0xff] %v521
      %555 = vst [vmem:[%s537 + $0x110] sm:$0xff] %v522
      %556 = vst [vmem:[%s537 + $0x128] sm:$0xff] %v523
      %557 = vst [vmem:[%s537 + $0x130] sm:$0xff] %v524
      %558 = vst [vmem:[%s537 + $0x148] sm:$0xff] %v525
      %559 = vst [vmem:[%s537 + $0x150] sm:$0xff] %v526
      %560 = vst [vmem:[%s537 + $0x168] sm:$0xff] %v527
      %561 = vst [vmem:[%s537 + $0x170] sm:$0xff] %v528
      %562 = vst [vmem:[%s537 + $0x188] sm:$0xff] %v529
      %563 = vst [vmem:[%s537 + $0x190] sm:$0xff] %v530
      %564 = vst [vmem:[%s537 + $0x1a8] sm:$0xff] %v531
      %565 = vst [vmem:[%s537 + $0x1b0] sm:$0xff] %v532
      %566 = vst [vmem:[%s537 + $0x1c8] sm:$0xff] %v533
      %567 = vst [vmem:[%s537 + $0x1d0] sm:$0xff] %v534
      %568 = vst [vmem:[%s537 + $0x1e8] sm:$0xff] %v535
      %569 = vst [vmem:[%s537 + $0x1f0] sm:$0xff] %v536
      %v570 = vld [vmem:[#allocation2] sm:$0xff]
      %v571 = vld [vmem:[#allocation2 + $0x8] sm:$0xff]
      %v572 = vld [vmem:[#allocation2 + $0x10] sm:$0xff]
      %v573 = vld [vmem:[#allocation2 + $0x18] sm:$0xff]
      %v574 = vld [vmem:[#allocation2 + $0x20] sm:$0xff]
      %v575 = vld [vmem:[#allocation2 + $0x28] sm:$0xff]
      %v576 = vld [vmem:[#allocation2 + $0x30] sm:$0xff]
      %v577 = vld [vmem:[#allocation2 + $0x38] sm:$0xff]
      %v578 = vld [vmem:[#allocation2 + $0x40] sm:$0xff]
      %v579 = vld [vmem:[#allocation2 + $0x48] sm:$0xff]
      %v580 = vld [vmem:[#allocation2 + $0x50] sm:$0xff]
      %v581 = vld [vmem:[#allocation2 + $0x58] sm:$0xff]
      %v582 = vld [vmem:[#allocation2 + $0x60] sm:$0xff]
      %v583 = vld [vmem:[#allocation2 + $0x68] sm:$0xff]
      %v584 = vld [vmem:[#allocation2 + $0x70] sm:$0xff]
      %v585 = vld [vmem:[#allocation2 + $0x78] sm:$0xff]
      %v586 = vld [vmem:[#allocation2 + $0x80] sm:$0xff]
      %v587 = vld [vmem:[#allocation2 + $0x88] sm:$0xff]
      %v588 = vld [vmem:[#allocation2 + $0x90] sm:$0xff]
      %v589 = vld [vmem:[#allocation2 + $0x98] sm:$0xff]
      %v590 = vld [vmem:[#allocation2 + $0xa0] sm:$0xff]
      %v591 = vld [vmem:[#allocation2 + $0xa8] sm:$0xff]
      %v592 = vld [vmem:[#allocation2 + $0xb0] sm:$0xff]
      %v593 = vld [vmem:[#allocation2 + $0xb8] sm:$0xff]
      %v594 = vld [vmem:[#allocation2 + $0xc0] sm:$0xff]
      %v595 = vld [vmem:[#allocation2 + $0xc8] sm:$0xff]
      %v596 = vld [vmem:[#allocation2 + $0xd0] sm:$0xff]
      %v597 = vld [vmem:[#allocation2 + $0xd8] sm:$0xff]
      %v598 = vld [vmem:[#allocation2 + $0xe0] sm:$0xff]
      %v599 = vld [vmem:[#allocation2 + $0xe8] sm:$0xff]
      %v600 = vld [vmem:[#allocation2 + $0xf0] sm:$0xff]
      %v601 = vld [vmem:[#allocation2 + $0xf8] sm:$0xff]
      %v602 = vld [vmem:[#allocation2 + $0x100] sm:$0xff]
      %v603 = vld [vmem:[#allocation2 + $0x108] sm:$0xff]
      %v604 = vld [vmem:[#allocation2 + $0x110] sm:$0xff]
      %v605 = vld [vmem:[#allocation2 + $0x118] sm:$0xff]
      %v606 = vld [vmem:[#allocation2 + $0x120] sm:$0xff]
      %v607 = vld [vmem:[#allocation2 + $0x128] sm:$0xff]
      %v608 = vld [vmem:[#allocation2 + $0x130] sm:$0xff]
      %v609 = vld [vmem:[#allocation2 + $0x138] sm:$0xff]
      %v610 = vld [vmem:[#allocation2 + $0x140] sm:$0xff]
      %v611 = vld [vmem:[#allocation2 + $0x148] sm:$0xff]
      %v612 = vld [vmem:[#allocation2 + $0x150] sm:$0xff]
      %v613 = vld [vmem:[#allocation2 + $0x158] sm:$0xff]
      %v614 = vld [vmem:[#allocation2 + $0x160] sm:$0xff]
      %v615 = vld [vmem:[#allocation2 + $0x168] sm:$0xff]
      %v616 = vld [vmem:[#allocation2 + $0x170] sm:$0xff]
      %v617 = vld [vmem:[#allocation2 + $0x178] sm:$0xff]
      %v618 = vld [vmem:[#allocation2 + $0x180] sm:$0xff]
      %v619 = vld [vmem:[#allocation2 + $0x188] sm:$0xff]
      %v620 = vld [vmem:[#allocation2 + $0x190] sm:$0xff]
      %v621 = vld [vmem:[#allocation2 + $0x198] sm:$0xff]
      %v622 = vld [vmem:[#allocation2 + $0x1a0] sm:$0xff]
      %v623 = vld [vmem:[#allocation2 + $0x1a8] sm:$0xff]
      %v624 = vld [vmem:[#allocation2 + $0x1b0] sm:$0xff]
      %v625 = vld [vmem:[#allocation2 + $0x1b8] sm:$0xff]
      %v626 = vld [vmem:[#allocation2 + $0x1c0] sm:$0xff]
      %v627 = vld [vmem:[#allocation2 + $0x1c8] sm:$0xff]
      %v628 = vld [vmem:[#allocation2 + $0x1d0] sm:$0xff]
      %v629 = vld [vmem:[#allocation2 + $0x1d8] sm:$0xff]
      %v630 = vld [vmem:[#allocation2 + $0x1e0] sm:$0xff]
      %v631 = vld [vmem:[#allocation2 + $0x1e8] sm:$0xff]
      %v632 = vld [vmem:[#allocation2 + $0x1f0] sm:$0xff]
      %v633 = vld [vmem:[#allocation2 + $0x1f8] sm:$0xff]
      %v634 = vld [vmem:[#allocation2 + $0x200] sm:$0xff]
      %v635 = vld [vmem:[#allocation2 + $0x208] sm:$0xff]
      %v636 = vld [vmem:[#allocation2 + $0x210] sm:$0xff]
      %v637 = vld [vmem:[#allocation2 + $0x218] sm:$0xff]
      %v638 = vld [vmem:[#allocation2 + $0x220] sm:$0xff]
      %v639 = vld [vmem:[#allocation2 + $0x228] sm:$0xff]
      %v640 = vld [vmem:[#allocation2 + $0x230] sm:$0xff]
      %v641 = vld [vmem:[#allocation2 + $0x238] sm:$0xff]
      %v642 = vld [vmem:[#allocation3] sm:$0xff]
      %v643 = vld [vmem:[#allocation3 + $0x8] sm:$0xff]
      %v644 = vld [vmem:[#allocation3 + $0x10] sm:$0xff]
      %v645 = vld [vmem:[#allocation3 + $0x18] sm:$0xff]
      %v646 = vld [vmem:[#allocation3 + $0x20] sm:$0xff]
      %v647 = vld [vmem:[#allocation3 + $0x28] sm:$0xff]
      %v648 = vld [vmem:[#allocation3 + $0x30] sm:$0xff]
      %v649 = vld [vmem:[#allocation3 + $0x38] sm:$0xff]
      %v650 = vld [vmem:[#allocation3 + $0x40] sm:$0xff]
      %v651 = vld [vmem:[#allocation3 + $0x48] sm:$0xff]
      %v652 = vld [vmem:[#allocation3 + $0x50] sm:$0xff]
      %v653 = vld [vmem:[#allocation3 + $0x58] sm:$0xff]
      %v654 = vld [vmem:[#allocation3 + $0x60] sm:$0xff]
      %v655 = vld [vmem:[#allocation3 + $0x68] sm:$0xff]
      %v656 = vld [vmem:[#allocation3 + $0x70] sm:$0xff]
      %v657 = vld [vmem:[#allocation3 + $0x78] sm:$0xff]
      %v658 = vld [vmem:[#allocation3 + $0x80] sm:$0xff]
      %v659 = vld [vmem:[#allocation3 + $0x88] sm:$0xff]
      %v660 = vld [vmem:[#allocation3 + $0x90] sm:$0xff]
      %v661 = vld [vmem:[#allocation3 + $0x98] sm:$0xff]
      %v662 = vld [vmem:[#allocation3 + $0xa0] sm:$0xff]
      %v663 = vld [vmem:[#allocation3 + $0xa8] sm:$0xff]
      %v664 = vld [vmem:[#allocation3 + $0xb0] sm:$0xff]
      %v665 = vld [vmem:[#allocation3 + $0xb8] sm:$0xff]
      %v666 = vld [vmem:[#allocation3 + $0xc0] sm:$0xff]
      %v667 = vld [vmem:[#allocation3 + $0xc8] sm:$0xff]
      %v668 = vld [vmem:[#allocation3 + $0xd0] sm:$0xff]
      %v669 = vld [vmem:[#allocation3 + $0xd8] sm:$0xff]
      %v670 = vld [vmem:[#allocation3 + $0xe0] sm:$0xff]
      %v671 = vld [vmem:[#allocation3 + $0xe8] sm:$0xff]
      %v672 = vld [vmem:[#allocation3 + $0xf0] sm:$0xff]
      %v673 = vld [vmem:[#allocation3 + $0xf8] sm:$0xff]
      %v674 = vld [vmem:[#allocation3 + $0x100] sm:$0xff]
      %v675 = vld [vmem:[#allocation3 + $0x108] sm:$0xff]
      %v676 = vld [vmem:[#allocation3 + $0x110] sm:$0xff]
      %v677 = vld [vmem:[#allocation3 + $0x118] sm:$0xff]
      %v678 = vld [vmem:[#allocation3 + $0x120] sm:$0xff]
      %v679 = vld [vmem:[#allocation3 + $0x128] sm:$0xff]
      %v680 = vld [vmem:[#allocation3 + $0x130] sm:$0xff]
      %v681 = vld [vmem:[#allocation3 + $0x138] sm:$0xff]
      %v682 = vld [vmem:[#allocation3 + $0x140] sm:$0xff]
      %v683 = vld [vmem:[#allocation3 + $0x148] sm:$0xff]
      %v684 = vld [vmem:[#allocation3 + $0x150] sm:$0xff]
      %v685 = vld [vmem:[#allocation3 + $0x158] sm:$0xff]
      %v686 = vld [vmem:[#allocation3 + $0x160] sm:$0xff]
      %v687 = vld [vmem:[#allocation3 + $0x168] sm:$0xff]
      %v688 = vld [vmem:[#allocation3 + $0x170] sm:$0xff]
      %v689 = vld [vmem:[#allocation3 + $0x178] sm:$0xff]
      %v690 = vld [vmem:[#allocation3 + $0x180] sm:$0xff]
      %v691 = vld [vmem:[#allocation3 + $0x188] sm:$0xff]
      %v692 = vld [vmem:[#allocation3 + $0x190] sm:$0xff]
      %v693 = vld [vmem:[#allocation3 + $0x198] sm:$0xff]
      %v694 = vld [vmem:[#allocation3 + $0x1a0] sm:$0xff]
      %v695 = vld [vmem:[#allocation3 + $0x1a8] sm:$0xff]
      %v696 = vld [vmem:[#allocation3 + $0x1b0] sm:$0xff]
      %v697 = vld [vmem:[#allocation3 + $0x1b8] sm:$0xff]
      %v698 = vld [vmem:[#allocation3 + $0x1c0] sm:$0xff]
      %v699 = vld [vmem:[#allocation3 + $0x1c8] sm:$0xff]
      %v700 = vld [vmem:[#allocation3 + $0x1d0] sm:$0xff]
      %v701 = vld [vmem:[#allocation3 + $0x1d8] sm:$0xff]
      %v702 = vld [vmem:[#allocation3 + $0x1e0] sm:$0xff]
      %v703 = vld [vmem:[#allocation3 + $0x1e8] sm:$0xff]
      %v704 = vld [vmem:[#allocation3 + $0x1f0] sm:$0xff]
      %v705 = vld [vmem:[#allocation3 + $0x1f8] sm:$0xff]
      %v706 = vld [vmem:[#allocation3 + $0x200] sm:$0xff]
      %v707 = vld [vmem:[#allocation3 + $0x208] sm:$0xff]
      %v708 = vld [vmem:[#allocation3 + $0x210] sm:$0xff]
      %v709 = vld [vmem:[#allocation3 + $0x218] sm:$0xff]
      %v710 = vld [vmem:[#allocation3 + $0x220] sm:$0xff]
      %v711 = vld [vmem:[#allocation3 + $0x228] sm:$0xff]
      %v712 = vld [vmem:[#allocation3 + $0x230] sm:$0xff]
      %v713 = vld [vmem:[#allocation3 + $0x238] sm:$0xff]
      %vm750 = vcmask 1046528
      %v751 = vrot.slane %v571, 1
      %v752 = vrot.slane %v572, 1
      %v753 = vsel %vm750, %v751, %v752
      %v754 = vrot.slane %v575, 1
      %v755 = vrot.slane %v576, 1
      %v756 = vsel %vm750, %v754, %v755
      %v757 = vrot.slane %v579, 1
      %v758 = vrot.slane %v580, 1
      %v759 = vsel %vm750, %v757, %v758
      %v760 = vrot.slane %v583, 1
      %v761 = vrot.slane %v584, 1
      %v762 = vsel %vm750, %v760, %v761
      %v763 = vrot.slane %v587, 1
      %v764 = vrot.slane %v588, 1
      %v765 = vsel %vm750, %v763, %v764
      %v766 = vrot.slane %v591, 1
      %v767 = vrot.slane %v592, 1
      %v768 = vsel %vm750, %v766, %v767
      %v769 = vrot.slane %v595, 1
      %v770 = vrot.slane %v596, 1
      %v771 = vsel %vm750, %v769, %v770
      %v772 = vrot.slane %v599, 1
      %v773 = vrot.slane %v600, 1
      %v774 = vsel %vm750, %v772, %v773
      %v775 = vrot.slane %v603, 1
      %v776 = vrot.slane %v604, 1
      %v777 = vsel %vm750, %v775, %v776
      %v778 = vrot.slane %v607, 1
      %v779 = vrot.slane %v608, 1
      %v780 = vsel %vm750, %v778, %v779
      %v781 = vrot.slane %v611, 1
      %v782 = vrot.slane %v612, 1
      %v783 = vsel %vm750, %v781, %v782
      %v784 = vrot.slane %v615, 1
      %v785 = vrot.slane %v616, 1
      %v786 = vsel %vm750, %v784, %v785
      %v787 = vrot.slane %v619, 1
      %v788 = vrot.slane %v620, 1
      %v789 = vsel %vm750, %v787, %v788
      %v790 = vrot.slane %v623, 1
      %v791 = vrot.slane %v624, 1
      %v792 = vsel %vm750, %v790, %v791
      %v793 = vrot.slane %v627, 1
      %v794 = vrot.slane %v628, 1
      %v795 = vsel %vm750, %v793, %v794
      %v796 = vrot.slane %v631, 1
      %v797 = vrot.slane %v632, 1
      %v798 = vsel %vm750, %v796, %v797
      %v799 = vrot.slane %v635, 1
      %v800 = vrot.slane %v636, 1
      %v801 = vsel %vm750, %v799, %v800
      %v802 = vrot.slane %v639, 1
      %v803 = vrot.slane %v640, 1
      %v804 = vsel %vm750, %v802, %v803
      %v859 = vadd.f32 %v570, %v751
      %v860 = vadd.f32 %v571, %v753
      %v861 = vadd.f32 %v572, %v752
      %v862 = vadd.f32 %v574, %v754
      %v863 = vadd.f32 %v575, %v756
      %v864 = vadd.f32 %v576, %v755
      %v865 = vadd.f32 %v578, %v757
      %v866 = vadd.f32 %v579, %v759
      %v867 = vadd.f32 %v580, %v758
      %v868 = vadd.f32 %v582, %v760
      %v869 = vadd.f32 %v583, %v762
      %v870 = vadd.f32 %v584, %v761
      %v871 = vadd.f32 %v586, %v763
      %v872 = vadd.f32 %v587, %v765
      %v873 = vadd.f32 %v588, %v764
      %v874 = vadd.f32 %v590, %v766
      %v875 = vadd.f32 %v591, %v768
      %v876 = vadd.f32 %v592, %v767
      %v877 = vadd.f32 %v594, %v769
      %v878 = vadd.f32 %v595, %v771
      %v879 = vadd.f32 %v596, %v770
      %v880 = vadd.f32 %v598, %v772
      %v881 = vadd.f32 %v599, %v774
      %v882 = vadd.f32 %v600, %v773
      %v883 = vadd.f32 %v602, %v775
      %v884 = vadd.f32 %v603, %v777
      %v885 = vadd.f32 %v604, %v776
      %v886 = vadd.f32 %v606, %v778
      %v887 = vadd.f32 %v607, %v780
      %v888 = vadd.f32 %v608, %v779
      %v889 = vadd.f32 %v610, %v781
      %v890 = vadd.f32 %v611, %v783
      %v891 = vadd.f32 %v612, %v782
      %v892 = vadd.f32 %v614, %v784
      %v893 = vadd.f32 %v615, %v786
      %v894 = vadd.f32 %v616, %v785
      %v895 = vadd.f32 %v618, %v787
      %v896 = vadd.f32 %v619, %v789
      %v897 = vadd.f32 %v620, %v788
      %v898 = vadd.f32 %v622, %v790
      %v899 = vadd.f32 %v623, %v792
      %v900 = vadd.f32 %v624, %v791
      %v901 = vadd.f32 %v626, %v793
      %v902 = vadd.f32 %v627, %v795
      %v903 = vadd.f32 %v628, %v794
      %v904 = vadd.f32 %v630, %v796
      %v905 = vadd.f32 %v631, %v798
      %v906 = vadd.f32 %v632, %v797
      %v907 = vadd.f32 %v634, %v799
      %v908 = vadd.f32 %v635, %v801
      %v909 = vadd.f32 %v636, %v800
      %v910 = vadd.f32 %v638, %v802
      %v911 = vadd.f32 %v639, %v804
      %v912 = vadd.f32 %v640, %v803
      %vm931 = vcmask 1045504
      %v932 = vrot.slane %v571, 2
      %v933 = vrot.slane %v572, 2
      %v934 = vsel %vm931, %v932, %v933
      %v935 = vrot.slane %v573, 2
      %v936 = vsel %vm931, %v933, %v935
      %v937 = vrot.slane %v575, 2
      %v938 = vrot.slane %v576, 2
      %v939 = vsel %vm931, %v937, %v938
      %v940 = vrot.slane %v577, 2
      %v941 = vsel %vm931, %v938, %v940
      %v942 = vrot.slane %v579, 2
      %v943 = vrot.slane %v580, 2
      %v944 = vsel %vm931, %v942, %v943
      %v945 = vrot.slane %v581, 2
      %v946 = vsel %vm931, %v943, %v945
      %v947 = vrot.slane %v583, 2
      %v948 = vrot.slane %v584, 2
      %v949 = vsel %vm931, %v947, %v948
      %v950 = vrot.slane %v585, 2
      %v951 = vsel %vm931, %v948, %v950
      %v952 = vrot.slane %v587, 2
      %v953 = vrot.slane %v588, 2
      %v954 = vsel %vm931, %v952, %v953
      %v955 = vrot.slane %v589, 2
      %v956 = vsel %vm931, %v953, %v955
      %v957 = vrot.slane %v591, 2
      %v958 = vrot.slane %v592, 2
      %v959 = vsel %vm931, %v957, %v958
      %v960 = vrot.slane %v593, 2
      %v961 = vsel %vm931, %v958, %v960
      %v962 = vrot.slane %v595, 2
      %v963 = vrot.slane %v596, 2
      %v964 = vsel %vm931, %v962, %v963
      %v965 = vrot.slane %v597, 2
      %v966 = vsel %vm931, %v963, %v965
      %v967 = vrot.slane %v599, 2
      %v968 = vrot.slane %v600, 2
      %v969 = vsel %vm931, %v967, %v968
      %v970 = vrot.slane %v601, 2
      %v971 = vsel %vm931, %v968, %v970
      %v972 = vrot.slane %v603, 2
      %v973 = vrot.slane %v604, 2
      %v974 = vsel %vm931, %v972, %v973
      %v975 = vrot.slane %v605, 2
      %v976 = vsel %vm931, %v973, %v975
      %v977 = vrot.slane %v607, 2
      %v978 = vrot.slane %v608, 2
      %v979 = vsel %vm931, %v977, %v978
      %v980 = vrot.slane %v609, 2
      %v981 = vsel %vm931, %v978, %v980
      %v982 = vrot.slane %v611, 2
      %v983 = vrot.slane %v612, 2
      %v984 = vsel %vm931, %v982, %v983
      %v985 = vrot.slane %v613, 2
      %v986 = vsel %vm931, %v983, %v985
      %v987 = vrot.slane %v615, 2
      %v988 = vrot.slane %v616, 2
      %v989 = vsel %vm931, %v987, %v988
      %v990 = vrot.slane %v617, 2
      %v991 = vsel %vm931, %v988, %v990
      %v992 = vrot.slane %v619, 2
      %v993 = vrot.slane %v620, 2
      %v994 = vsel %vm931, %v992, %v993
      %v995 = vrot.slane %v621, 2
      %v996 = vsel %vm931, %v993, %v995
      %v997 = vrot.slane %v623, 2
      %v998 = vrot.slane %v624, 2
      %v999 = vsel %vm931, %v997, %v998
      %v1000 = vrot.slane %v625, 2
      %v1001 = vsel %vm931, %v998, %v1000
      %v1002 = vrot.slane %v627, 2
      %v1003 = vrot.slane %v628, 2
      %v1004 = vsel %vm931, %v1002, %v1003
      %v1005 = vrot.slane %v629, 2
      %v1006 = vsel %vm931, %v1003, %v1005
      %v1007 = vrot.slane %v631, 2
      %v1008 = vrot.slane %v632, 2
      %v1009 = vsel %vm931, %v1007, %v1008
      %v1010 = vrot.slane %v633, 2
      %v1011 = vsel %vm931, %v1008, %v1010
      %v1012 = vrot.slane %v635, 2
      %v1013 = vrot.slane %v636, 2
      %v1014 = vsel %vm931, %v1012, %v1013
      %v1015 = vrot.slane %v637, 2
      %v1016 = vsel %vm931, %v1013, %v1015
      %v1017 = vrot.slane %v639, 2
      %v1018 = vrot.slane %v640, 2
      %v1019 = vsel %vm931, %v1017, %v1018
      %v1020 = vrot.slane %v641, 2
      %v1021 = vsel %vm931, %v1018, %v1020
      %v1076 = vadd.f32 %v859, %v932
      %v1077 = vadd.f32 %v860, %v934
      %v1078 = vadd.f32 %v861, %v936
      %v1079 = vadd.f32 %v862, %v937
      %v1080 = vadd.f32 %v863, %v939
      %v1081 = vadd.f32 %v864, %v941
      %v1082 = vadd.f32 %v865, %v942
      %v1083 = vadd.f32 %v866, %v944
      %v1084 = vadd.f32 %v867, %v946
      %v1085 = vadd.f32 %v868, %v947
      %v1086 = vadd.f32 %v869, %v949
      %v1087 = vadd.f32 %v870, %v951
      %v1088 = vadd.f32 %v871, %v952
      %v1089 = vadd.f32 %v872, %v954
      %v1090 = vadd.f32 %v873, %v956
      %v1091 = vadd.f32 %v874, %v957
      %v1092 = vadd.f32 %v875, %v959
      %v1093 = vadd.f32 %v876, %v961
      %v1094 = vadd.f32 %v877, %v962
      %v1095 = vadd.f32 %v878, %v964
      %v1096 = vadd.f32 %v879, %v966
      %v1097 = vadd.f32 %v880, %v967
      %v1098 = vadd.f32 %v881, %v969
      %v1099 = vadd.f32 %v882, %v971
      %v1100 = vadd.f32 %v883, %v972
      %v1101 = vadd.f32 %v884, %v974
      %v1102 = vadd.f32 %v885, %v976
      %v1103 = vadd.f32 %v886, %v977
      %v1104 = vadd.f32 %v887, %v979
      %v1105 = vadd.f32 %v888, %v981
      %v1106 = vadd.f32 %v889, %v982
      %v1107 = vadd.f32 %v890, %v984
      %v1108 = vadd.f32 %v891, %v986
      %v1109 = vadd.f32 %v892, %v987
      %v1110 = vadd.f32 %v893, %v989
      %v1111 = vadd.f32 %v894, %v991
      %v1112 = vadd.f32 %v895, %v992
      %v1113 = vadd.f32 %v896, %v994
      %v1114 = vadd.f32 %v897, %v996
      %v1115 = vadd.f32 %v898, %v997
      %v1116 = vadd.f32 %v899, %v999
      %v1117 = vadd.f32 %v900, %v1001
      %v1118 = vadd.f32 %v901, %v1002
      %v1119 = vadd.f32 %v902, %v1004
      %v1120 = vadd.f32 %v903, %v1006
      %v1121 = vadd.f32 %v904, %v1007
      %v1122 = vadd.f32 %v905, %v1009
      %v1123 = vadd.f32 %v906, %v1011
      %v1124 = vadd.f32 %v907, %v1012
      %v1125 = vadd.f32 %v908, %v1014
      %v1126 = vadd.f32 %v909, %v1016
      %v1127 = vadd.f32 %v910, %v1017
      %v1128 = vadd.f32 %v911, %v1019
      %v1129 = vadd.f32 %v912, %v1021
      %v1130 = vadd.f32 %v1076, %v1079
      %v1131 = vadd.f32 %v1077, %v1080
      %v1132 = vadd.f32 %v1078, %v1081
      %v1133 = vadd.f32 %v1079, %v1082
      %v1134 = vadd.f32 %v1080, %v1083
      %v1135 = vadd.f32 %v1081, %v1084
      %v1136 = vadd.f32 %v1082, %v1085
      %v1137 = vadd.f32 %v1083, %v1086
      %v1138 = vadd.f32 %v1084, %v1087
      %v1139 = vadd.f32 %v1085, %v1088
      %v1140 = vadd.f32 %v1086, %v1089
      %v1141 = vadd.f32 %v1087, %v1090
      %v1142 = vadd.f32 %v1088, %v1091
      %v1143 = vadd.f32 %v1089, %v1092
      %v1144 = vadd.f32 %v1090, %v1093
      %v1145 = vadd.f32 %v1091, %v1094
      %v1146 = vadd.f32 %v1092, %v1095
      %v1147 = vadd.f32 %v1093, %v1096
      %v1148 = vadd.f32 %v1094, %v1097
      %v1149 = vadd.f32 %v1095, %v1098
      %v1150 = vadd.f32 %v1096, %v1099
      %v1151 = vadd.f32 %v1097, %v1100
      %v1152 = vadd.f32 %v1098, %v1101
      %v1153 = vadd.f32 %v1099, %v1102
      %v1154 = vadd.f32 %v1100, %v1103
      %v1155 = vadd.f32 %v1101, %v1104
      %v1156 = vadd.f32 %v1102, %v1105
      %v1157 = vadd.f32 %v1103, %v1106
      %v1158 = vadd.f32 %v1104, %v1107
      %v1159 = vadd.f32 %v1105, %v1108
      %v1160 = vadd.f32 %v1106, %v1109
      %v1161 = vadd.f32 %v1107, %v1110
      %v1162 = vadd.f32 %v1108, %v1111
      %v1163 = vadd.f32 %v1109, %v1112
      %v1164 = vadd.f32 %v1110, %v1113
      %v1165 = vadd.f32 %v1111, %v1114
      %v1166 = vadd.f32 %v1112, %v1115
      %v1167 = vadd.f32 %v1113, %v1116
      %v1168 = vadd.f32 %v1114, %v1117
      %v1169 = vadd.f32 %v1115, %v1118
      %v1170 = vadd.f32 %v1116, %v1119
      %v1171 = vadd.f32 %v1117, %v1120
      %v1172 = vadd.f32 %v1118, %v1121
      %v1173 = vadd.f32 %v1119, %v1122
      %v1174 = vadd.f32 %v1120, %v1123
      %v1175 = vadd.f32 %v1121, %v1124
      %v1176 = vadd.f32 %v1122, %v1125
      %v1177 = vadd.f32 %v1123, %v1126
      %v1178 = vadd.f32 %v1130, %v1082
      %v1179 = vadd.f32 %v1131, %v1083
      %v1180 = vadd.f32 %v1132, %v1084
      %v1181 = vadd.f32 %v1133, %v1085
      %v1182 = vadd.f32 %v1134, %v1086
      %v1183 = vadd.f32 %v1135, %v1087
      %v1184 = vadd.f32 %v1136, %v1088
      %v1185 = vadd.f32 %v1137, %v1089
      %v1186 = vadd.f32 %v1138, %v1090
      %v1187 = vadd.f32 %v1139, %v1091
      %v1188 = vadd.f32 %v1140, %v1092
      %v1189 = vadd.f32 %v1141, %v1093
      %v1190 = vadd.f32 %v1142, %v1094
      %v1191 = vadd.f32 %v1143, %v1095
      %v1192 = vadd.f32 %v1144, %v1096
      %v1193 = vadd.f32 %v1145, %v1097
      %v1194 = vadd.f32 %v1146, %v1098
      %v1195 = vadd.f32 %v1147, %v1099
      %v1196 = vadd.f32 %v1148, %v1100
      %v1197 = vadd.f32 %v1149, %v1101
      %v1198 = vadd.f32 %v1150, %v1102
      %v1199 = vadd.f32 %v1151, %v1103
      %v1200 = vadd.f32 %v1152, %v1104
      %v1201 = vadd.f32 %v1153, %v1105
      %v1202 = vadd.f32 %v1154, %v1106
      %v1203 = vadd.f32 %v1155, %v1107
      %v1204 = vadd.f32 %v1156, %v1108
      %v1205 = vadd.f32 %v1157, %v1109
      %v1206 = vadd.f32 %v1158, %v1110
      %v1207 = vadd.f32 %v1159, %v1111
      %v1208 = vadd.f32 %v1160, %v1112
      %v1209 = vadd.f32 %v1161, %v1113
      %v1210 = vadd.f32 %v1162, %v1114
      %v1211 = vadd.f32 %v1163, %v1115
      %v1212 = vadd.f32 %v1164, %v1116
      %v1213 = vadd.f32 %v1165, %v1117
      %v1214 = vadd.f32 %v1166, %v1118
      %v1215 = vadd.f32 %v1167, %v1119
      %v1216 = vadd.f32 %v1168, %v1120
      %v1217 = vadd.f32 %v1169, %v1121
      %v1218 = vadd.f32 %v1170, %v1122
      %v1219 = vadd.f32 %v1171, %v1123
      %v1220 = vadd.f32 %v1172, %v1124
      %v1221 = vadd.f32 %v1173, %v1125
      %v1222 = vadd.f32 %v1174, %v1126
      %v1223 = vadd.f32 %v1175, %v1127
      %v1224 = vadd.f32 %v1176, %v1128
      %v1225 = vadd.f32 %v1177, %v1129
      %v1226 = vmul.f32 %v1178, 0.11111111
      %v1227 = vmul.f32 %v1179, 0.11111111
      %v1228 = vmul.f32 %v1180, 0.11111111
      %v1229 = vmul.f32 %v1181, 0.11111111
      %v1230 = vmul.f32 %v1182, 0.11111111
      %v1231 = vmul.f32 %v1183, 0.11111111
      %v1232 = vmul.f32 %v1184, 0.11111111
      %v1233 = vmul.f32 %v1185, 0.11111111
      %v1234 = vmul.f32 %v1186, 0.11111111
      %v1235 = vmul.f32 %v1187, 0.11111111
      %v1236 = vmul.f32 %v1188, 0.11111111
      %v1237 = vmul.f32 %v1189, 0.11111111
      %v1238 = vmul.f32 %v1190, 0.11111111
      %v1239 = vmul.f32 %v1191, 0.11111111
      %v1240 = vmul.f32 %v1192, 0.11111111
      %v1241 = vmul.f32 %v1193, 0.11111111
      %v1242 = vmul.f32 %v1194, 0.11111111
      %v1243 = vmul.f32 %v1195, 0.11111111
      %v1244 = vmul.f32 %v1196, 0.11111111
      %v1245 = vmul.f32 %v1197, 0.11111111
      %v1246 = vmul.f32 %v1198, 0.11111111
      %v1247 = vmul.f32 %v1199, 0.11111111
      %v1248 = vmul.f32 %v1200, 0.11111111
      %v1249 = vmul.f32 %v1201, 0.11111111
      %v1250 = vmul.f32 %v1202, 0.11111111
      %v1251 = vmul.f32 %v1203, 0.11111111
      %v1252 = vmul.f32 %v1204, 0.11111111
      %v1253 = vmul.f32 %v1205, 0.11111111
      %v1254 = vmul.f32 %v1206, 0.11111111
      %v1255 = vmul.f32 %v1207, 0.11111111
      %v1256 = vmul.f32 %v1208, 0.11111111
      %v1257 = vmul.f32 %v1209, 0.11111111
      %v1258 = vmul.f32 %v1210, 0.11111111
      %v1259 = vmul.f32 %v1211, 0.11111111
      %v1260 = vmul.f32 %v1212, 0.11111111
      %v1261 = vmul.f32 %v1213, 0.11111111
      %v1262 = vmul.f32 %v1214, 0.11111111
      %v1263 = vmul.f32 %v1215, 0.11111111
      %v1264 = vmul.f32 %v1216, 0.11111111
      %v1265 = vmul.f32 %v1217, 0.11111111
      %v1266 = vmul.f32 %v1218, 0.11111111
      %v1267 = vmul.f32 %v1219, 0.11111111
      %v1268 = vmul.f32 %v1220, 0.11111111
      %v1269 = vmul.f32 %v1221, 0.11111111
      %v1270 = vmul.f32 %v1222, 0.11111111
      %v1271 = vmul.f32 %v1223, 0.11111111
      %v1272 = vmul.f32 %v1224, 0.11111111
      %v1273 = vmul.f32 %v1225, 0.11111111
      %vm1322 = vcmask 1040384
      %v1323 = vrot.slane %v1226, 7
      %v1324 = vrot.slane %v1227, 7
      %v1325 = vsel %vm1322, %v1323, %v1324
      %v1326 = vrot.slane %v1228, 7
      %v1327 = vsel %vm1322, %v1324, %v1326
      %v1328 = vrot.slane %v1229, 7
      %v1329 = vrot.slane %v1230, 7
      %v1330 = vsel %vm1322, %v1328, %v1329
      %v1331 = vrot.slane %v1231, 7
      %v1332 = vsel %vm1322, %v1329, %v1331
      %v1333 = vrot.slane %v1232, 7
      %v1334 = vrot.slane %v1233, 7
      %v1335 = vsel %vm1322, %v1333, %v1334
      %v1336 = vrot.slane %v1234, 7
      %v1337 = vsel %vm1322, %v1334, %v1336
      %v1338 = vrot.slane %v1235, 7
      %v1339 = vrot.slane %v1236, 7
      %v1340 = vsel %vm1322, %v1338, %v1339
      %v1341 = vrot.slane %v1237, 7
      %v1342 = vsel %vm1322, %v1339, %v1341
      %v1343 = vrot.slane %v1238, 7
      %v1344 = vrot.slane %v1239, 7
      %v1345 = vsel %vm1322, %v1343, %v1344
      %v1346 = vrot.slane %v1240, 7
      %v1347 = vsel %vm1322, %v1344, %v1346
      %v1348 = vrot.slane %v1241, 7
      %v1349 = vrot.slane %v1242, 7
      %v1350 = vsel %vm1322, %v1348, %v1349
      %v1351 = vrot.slane %v1243, 7
      %v1352 = vsel %vm1322, %v1349, %v1351
      %v1353 = vrot.slane %v1244, 7
      %v1354 = vrot.slane %v1245, 7
      %v1355 = vsel %vm1322, %v1353, %v1354
      %v1356 = vrot.slane %v1246, 7
      %v1357 = vsel %vm1322, %v1354, %v1356
      %v1358 = vrot.slane %v1247, 7
      %v1359 = vrot.slane %v1248, 7
      %v1360 = vsel %vm1322, %v1358, %v1359
      %v1361 = vrot.slane %v1249, 7
      %v1362 = vsel %vm1322, %v1359, %v1361
      %v1363 = vrot.slane %v1250, 7
      %v1364 = vrot.slane %v1251, 7
      %v1365 = vsel %vm1322, %v1363, %v1364
      %v1366 = vrot.slane %v1252, 7
      %v1367 = vsel %vm1322, %v1364, %v1366
      %v1368 = vrot.slane %v1253, 7
      %v1369 = vrot.slane %v1254, 7
      %v1370 = vsel %vm1322, %v1368, %v1369
      %v1371 = vrot.slane %v1255, 7
      %v1372 = vsel %vm1322, %v1369, %v1371
      %v1373 = vrot.slane %v1256, 7
      %v1374 = vrot.slane %v1257, 7
      %v1375 = vsel %vm1322, %v1373, %v1374
      %v1376 = vrot.slane %v1258, 7
      %v1377 = vsel %vm1322, %v1374, %v1376
      %v1378 = vrot.slane %v1259, 7
      %v1379 = vrot.slane %v1260, 7
      %v1380 = vsel %vm1322, %v1378, %v1379
      %v1381 = vrot.slane %v1261, 7
      %v1382 = vsel %vm1322, %v1379, %v1381
      %v1383 = vrot.slane %v1262, 7
      %v1384 = vrot.slane %v1263, 7
      %v1385 = vsel %vm1322, %v1383, %v1384
      %v1386 = vrot.slane %v1264, 7
      %v1387 = vsel %vm1322, %v1384, %v1386
      %v1388 = vrot.slane %v1265, 7
      %v1389 = vrot.slane %v1266, 7
      %v1390 = vsel %vm1322, %v1388, %v1389
      %v1391 = vrot.slane %v1267, 7
      %v1392 = vsel %vm1322, %v1389, %v1391
      %v1393 = vrot.slane %v1268, 7
      %v1394 = vrot.slane %v1269, 7
      %v1395 = vsel %vm1322, %v1393, %v1394
      %v1396 = vrot.slane %v1270, 7
      %v1397 = vsel %vm1322, %v1394, %v1396
      %v1398 = vrot.slane %v1271, 7
      %v1399 = vrot.slane %v1272, 7
      %v1400 = vsel %vm1322, %v1398, %v1399
      %v1401 = vrot.slane %v1273, 7
      %v1402 = vsel %vm1322, %v1399, %v1401
      %vm1435 = vcmp.gt.f32.partialorder %v575, %v1325
      %vm1436 = vcmp.gt.f32.partialorder %v576, %v1327
      %vm1437 = vcmp.gt.f32.partialorder %v579, %v1330
      %vm1438 = vcmp.gt.f32.partialorder %v580, %v1332
      %vm1439 = vcmp.gt.f32.partialorder %v583, %v1335
      %vm1440 = vcmp.gt.f32.partialorder %v584, %v1337
      %vm1441 = vcmp.gt.f32.partialorder %v587, %v1340
      %vm1442 = vcmp.gt.f32.partialorder %v588, %v1342
      %vm1443 = vcmp.gt.f32.partialorder %v591, %v1345
      %vm1444 = vcmp.gt.f32.partialorder %v592, %v1347
      %vm1445 = vcmp.gt.f32.partialorder %v595, %v1350
      %vm1446 = vcmp.gt.f32.partialorder %v596, %v1352
      %vm1447 = vcmp.gt.f32.partialorder %v599, %v1355
      %vm1448 = vcmp.gt.f32.partialorder %v600, %v1357
      %vm1449 = vcmp.gt.f32.partialorder %v603, %v1360
      %vm1450 = vcmp.gt.f32.partialorder %v604, %v1362
      %vm1451 = vcmp.gt.f32.partialorder %v607, %v1365
      %vm1452 = vcmp.gt.f32.partialorder %v608, %v1367
      %vm1453 = vcmp.gt.f32.partialorder %v611, %v1370
      %vm1454 = vcmp.gt.f32.partialorder %v612, %v1372
      %vm1455 = vcmp.gt.f32.partialorder %v615, %v1375
      %vm1456 = vcmp.gt.f32.partialorder %v616, %v1377
      %vm1457 = vcmp.gt.f32.partialorder %v619, %v1380
      %vm1458 = vcmp.gt.f32.partialorder %v620, %v1382
      %vm1459 = vcmp.gt.f32.partialorder %v623, %v1385
      %vm1460 = vcmp.gt.f32.partialorder %v624, %v1387
      %vm1461 = vcmp.gt.f32.partialorder %v627, %v1390
      %vm1462 = vcmp.gt.f32.partialorder %v628, %v1392
      %vm1463 = vcmp.gt.f32.partialorder %v631, %v1395
      %vm1464 = vcmp.gt.f32.partialorder %v632, %v1397
      %vm1465 = vcmp.gt.f32.partialorder %v635, %v1400
      %vm1466 = vcmp.gt.f32.partialorder %v636, %v1402
      %vm1467 = vcmp.gt.f32.partialorder %v570, %v1226
      %vm1468 = vcmp.gt.f32.partialorder %v571, %v1227
      %vm1469 = vcmp.gt.f32.partialorder %v572, %v1228
      %vm1470 = vcmp.gt.f32.partialorder %v574, %v1229
      %vm1471 = vcmp.gt.f32.partialorder %v575, %v1230
      %vm1472 = vcmp.gt.f32.partialorder %v576, %v1231
      %vm1473 = vcmp.gt.f32.partialorder %v578, %v1232
      %vm1474 = vcmp.gt.f32.partialorder %v579, %v1233
      %vm1475 = vcmp.gt.f32.partialorder %v580, %v1234
      %vm1476 = vcmp.gt.f32.partialorder %v582, %v1235
      %vm1477 = vcmp.gt.f32.partialorder %v583, %v1236
      %vm1478 = vcmp.gt.f32.partialorder %v584, %v1237
      %vm1479 = vcmp.gt.f32.partialorder %v586, %v1238
      %vm1480 = vcmp.gt.f32.partialorder %v587, %v1239
      %vm1481 = vcmp.gt.f32.partialorder %v588, %v1240
      %vm1482 = vcmp.gt.f32.partialorder %v590, %v1241
      %vm1483 = vcmp.gt.f32.partialorder %v591, %v1242
      %vm1484 = vcmp.gt.f32.partialorder %v592, %v1243
      %vm1485 = vcmp.gt.f32.partialorder %v594, %v1244
      %vm1486 = vcmp.gt.f32.partialorder %v595, %v1245
      %vm1487 = vcmp.gt.f32.partialorder %v596, %v1246
      %vm1488 = vcmp.gt.f32.partialorder %v598, %v1247
      %vm1489 = vcmp.gt.f32.partialorder %v599, %v1248
      %vm1490 = vcmp.gt.f32.partialorder %v600, %v1249
      %vm1491 = vcmp.gt.f32.partialorder %v602, %v1250
      %vm1492 = vcmp.gt.f32.partialorder %v603, %v1251
      %vm1493 = vcmp.gt.f32.partialorder %v604, %v1252
      %vm1494 = vcmp.gt.f32.partialorder %v606, %v1253
      %vm1495 = vcmp.gt.f32.partialorder %v607, %v1254
      %vm1496 = vcmp.gt.f32.partialorder %v608, %v1255
      %vm1497 = vcmp.gt.f32.partialorder %v610, %v1256
      %vm1498 = vcmp.gt.f32.partialorder %v611, %v1257
      %vm1499 = vcmp.gt.f32.partialorder %v612, %v1258
      %vm1500 = vcmp.gt.f32.partialorder %v614, %v1259
      %vm1501 = vcmp.gt.f32.partialorder %v615, %v1260
      %vm1502 = vcmp.gt.f32.partialorder %v616, %v1261
      %vm1503 = vcmp.gt.f32.partialorder %v618, %v1262
      %vm1504 = vcmp.gt.f32.partialorder %v619, %v1263
      %vm1505 = vcmp.gt.f32.partialorder %v620, %v1264
      %vm1506 = vcmp.gt.f32.partialorder %v622, %v1265
      %vm1507 = vcmp.gt.f32.partialorder %v623, %v1266
      %vm1508 = vcmp.gt.f32.partialorder %v624, %v1267
      %vm1509 = vcmp.gt.f32.partialorder %v626, %v1268
      %vm1510 = vcmp.gt.f32.partialorder %v627, %v1269
      %vm1511 = vcmp.gt.f32.partialorder %v628, %v1270
      %vm1512 = vcmp.gt.f32.partialorder %v630, %v1271
      %vm1513 = vcmp.gt.f32.partialorder %v631, %v1272
      %vm1514 = vcmp.gt.f32.partialorder %v632, %v1273
      %v1515 = vsel %vm1435, 1, 0
      %v1516 = vsel %vm1436, 1, 0
      %v1517 = vsel %vm1437, 1, 0
      %v1518 = vsel %vm1438, 1, 0
      %v1519 = vsel %vm1439, 1, 0
      %v1520 = vsel %vm1440, 1, 0
      %v1521 = vsel %vm1441, 1, 0
      %v1522 = vsel %vm1442, 1, 0
      %v1523 = vsel %vm1443, 1, 0
      %v1524 = vsel %vm1444, 1, 0
      %v1525 = vsel %vm1445, 1, 0
      %v1526 = vsel %vm1446, 1, 0
      %v1527 = vsel %vm1447, 1, 0
      %v1528 = vsel %vm1448, 1, 0
      %v1529 = vsel %vm1449, 1, 0
      %v1530 = vsel %vm1450, 1, 0
      %v1531 = vsel %vm1451, 1, 0
      %v1532 = vsel %vm1452, 1, 0
      %v1533 = vsel %vm1453, 1, 0
      %v1534 = vsel %vm1454, 1, 0
      %v1535 = vsel %vm1455, 1, 0
      %v1536 = vsel %vm1456, 1, 0
      %v1537 = vsel %vm1457, 1, 0
      %v1538 = vsel %vm1458, 1, 0
      %v1539 = vsel %vm1459, 1, 0
      %v1540 = vsel %vm1460, 1, 0
      %v1541 = vsel %vm1461, 1, 0
      %v1542 = vsel %vm1462, 1, 0
      %v1543 = vsel %vm1463, 1, 0
      %v1544 = vsel %vm1464, 1, 0
      %v1545 = vsel %vm1465, 1, 0
      %v1546 = vsel %vm1466, 1, 0
      %v1547 = vrot.slane %v1515, 1
      %v1548 = vrot.slane %v1516, 1
      %v1549 = vsel %vm750, %v1547, %v1548
      %v1550 = vrot.slane %v1517, 1
      %v1551 = vrot.slane %v1518, 1
      %v1552 = vsel %vm750, %v1550, %v1551
      %v1553 = vrot.slane %v1519, 1
      %v1554 = vrot.slane %v1520, 1
      %v1555 = vsel %vm750, %v1553, %v1554
      %v1556 = vrot.slane %v1521, 1
      %v1557 = vrot.slane %v1522, 1
      %v1558 = vsel %vm750, %v1556, %v1557
      %v1559 = vrot.slane %v1523, 1
      %v1560 = vrot.slane %v1524, 1
      %v1561 = vsel %vm750, %v1559, %v1560
      %v1562 = vrot.slane %v1525, 1
      %v1563 = vrot.slane %v1526, 1
      %v1564 = vsel %vm750, %v1562, %v1563
      %v1565 = vrot.slane %v1527, 1
      %v1566 = vrot.slane %v1528, 1
      %v1567 = vsel %vm750, %v1565, %v1566
      %v1568 = vrot.slane %v1529, 1
      %v1569 = vrot.slane %v1530, 1
      %v1570 = vsel %vm750, %v1568, %v1569
      %v1571 = vrot.slane %v1531, 1
      %v1572 = vrot.slane %v1532, 1
      %v1573 = vsel %vm750, %v1571, %v1572
      %v1574 = vrot.slane %v1533, 1
      %v1575 = vrot.slane %v1534, 1
      %v1576 = vsel %vm750, %v1574, %v1575
      %v1577 = vrot.slane %v1535, 1
      %v1578 = vrot.slane %v1536, 1
      %v1579 = vsel %vm750, %v1577, %v1578
      %v1580 = vrot.slane %v1537, 1
      %v1581 = vrot.slane %v1538, 1
      %v1582 = vsel %vm750, %v1580, %v1581
      %v1583 = vrot.slane %v1539, 1
      %v1584 = vrot.slane %v1540, 1
      %v1585 = vsel %vm750, %v1583, %v1584
      %v1586 = vrot.slane %v1541, 1
      %v1587 = vrot.slane %v1542, 1
      %v1588 = vsel %vm750, %v1586, %v1587
      %v1589 = vrot.slane %v1543, 1
      %v1590 = vrot.slane %v1544, 1
      %v1591 = vsel %vm750, %v1589, %v1590
      %v1592 = vrot.slane %v1545, 1
      %v1593 = vrot.slane %v1546, 1
      %v1594 = vsel %vm750, %v1592, %v1593
      %vm1595 = vcmp.ne.s32.totalorder %v1547, 0
      %vm1596 = vcmp.ne.s32.totalorder %v1549, 0
      %vm1597 = vcmp.ne.s32.totalorder %v1548, 0
      %vm1598 = vcmp.ne.s32.totalorder %v1550, 0
      %vm1599 = vcmp.ne.s32.totalorder %v1552, 0
      %vm1600 = vcmp.ne.s32.totalorder %v1551, 0
      %vm1601 = vcmp.ne.s32.totalorder %v1553, 0
      %vm1602 = vcmp.ne.s32.totalorder %v1555, 0
      %vm1603 = vcmp.ne.s32.totalorder %v1554, 0
      %vm1604 = vcmp.ne.s32.totalorder %v1556, 0
      %vm1605 = vcmp.ne.s32.totalorder %v1558, 0
      %vm1606 = vcmp.ne.s32.totalorder %v1557, 0
      %vm1607 = vcmp.ne.s32.totalorder %v1559, 0
      %vm1608 = vcmp.ne.s32.totalorder %v1561, 0
      %vm1609 = vcmp.ne.s32.totalorder %v1560, 0
      %vm1610 = vcmp.ne.s32.totalorder %v1562, 0
      %vm1611 = vcmp.ne.s32.totalorder %v1564, 0
      %vm1612 = vcmp.ne.s32.totalorder %v1563, 0
      %vm1613 = vcmp.ne.s32.totalorder %v1565, 0
      %vm1614 = vcmp.ne.s32.totalorder %v1567, 0
      %vm1615 = vcmp.ne.s32.totalorder %v1566, 0
      %vm1616 = vcmp.ne.s32.totalorder %v1568, 0
      %vm1617 = vcmp.ne.s32.totalorder %v1570, 0
      %vm1618 = vcmp.ne.s32.totalorder %v1569, 0
      %vm1619 = vcmp.ne.s32.totalorder %v1571, 0
      %vm1620 = vcmp.ne.s32.totalorder %v1573, 0
      %vm1621 = vcmp.ne.s32.totalorder %v1572, 0
      %vm1622 = vcmp.ne.s32.totalorder %v1574, 0
      %vm1623 = vcmp.ne.s32.totalorder %v1576, 0
      %vm1624 = vcmp.ne.s32.totalorder %v1575, 0
      %vm1625 = vcmp.ne.s32.totalorder %v1577, 0
      %vm1626 = vcmp.ne.s32.totalorder %v1579, 0
      %vm1627 = vcmp.ne.s32.totalorder %v1578, 0
      %vm1628 = vcmp.ne.s32.totalorder %v1580, 0
      %vm1629 = vcmp.ne.s32.totalorder %v1582, 0
      %vm1630 = vcmp.ne.s32.totalorder %v1581, 0
      %vm1631 = vcmp.ne.s32.totalorder %v1583, 0
      %vm1632 = vcmp.ne.s32.totalorder %v1585, 0
      %vm1633 = vcmp.ne.s32.totalorder %v1584, 0
      %vm1634 = vcmp.ne.s32.totalorder %v1586, 0
      %vm1635 = vcmp.ne.s32.totalorder %v1588, 0
      %vm1636 = vcmp.ne.s32.totalorder %v1587, 0
      %vm1637 = vcmp.ne.s32.totalorder %v1589, 0
      %vm1638 = vcmp.ne.s32.totalorder %v1591, 0
      %vm1639 = vcmp.ne.s32.totalorder %v1590, 0
      %vm1640 = vcmp.ne.s32.totalorder %v1592, 0
      %vm1641 = vcmp.ne.s32.totalorder %v1594, 0
      %vm1642 = vcmp.ne.s32.totalorder %v1593, 0
      %vm1643 = vmxor %vm1467, %vm1595
      %vm1644 = vmxor %vm1468, %vm1596
      %vm1645 = vmxor %vm1469, %vm1597
      %vm1646 = vmxor %vm1470, %vm1598
      %vm1647 = vmxor %vm1471, %vm1599
      %vm1648 = vmxor %vm1472, %vm1600
      %vm1649 = vmxor %vm1473, %vm1601
      %vm1650 = vmxor %vm1474, %vm1602
      %vm1651 = vmxor %vm1475, %vm1603
      %vm1652 = vmxor %vm1476, %vm1604
      %vm1653 = vmxor %vm1477, %vm1605
      %vm1654 = vmxor %vm1478, %vm1606
      %vm1655 = vmxor %vm1479, %vm1607
      %vm1656 = vmxor %vm1480, %vm1608
      %vm1657 = vmxor %vm1481, %vm1609
      %vm1658 = vmxor %vm1482, %vm1610
      %vm1659 = vmxor %vm1483, %vm1611
      %vm1660 = vmxor %vm1484, %vm1612
      %vm1661 = vmxor %vm1485, %vm1613
      %vm1662 = vmxor %vm1486, %vm1614
      %vm1663 = vmxor %vm1487, %vm1615
      %vm1664 = vmxor %vm1488, %vm1616
      %vm1665 = vmxor %vm1489, %vm1617
      %vm1666 = vmxor %vm1490, %vm1618
      %vm1667 = vmxor %vm1491, %vm1619
      %vm1668 = vmxor %vm1492, %vm1620
      %vm1669 = vmxor %vm1493, %vm1621
      %vm1670 = vmxor %vm1494, %vm1622
      %vm1671 = vmxor %vm1495, %vm1623
      %vm1672 = vmxor %vm1496, %vm1624
      %vm1673 = vmxor %vm1497, %vm1625
      %vm1674 = vmxor %vm1498, %vm1626
      %vm1675 = vmxor %vm1499, %vm1627
      %vm1676 = vmxor %vm1500, %vm1628
      %vm1677 = vmxor %vm1501, %vm1629
      %vm1678 = vmxor %vm1502, %vm1630
      %vm1679 = vmxor %vm1503, %vm1631
      %vm1680 = vmxor %vm1504, %vm1632
      %vm1681 = vmxor %vm1505, %vm1633
      %vm1682 = vmxor %vm1506, %vm1634
      %vm1683 = vmxor %vm1507, %vm1635
      %vm1684 = vmxor %vm1508, %vm1636
      %vm1685 = vmxor %vm1509, %vm1637
      %vm1686 = vmxor %vm1510, %vm1638
      %vm1687 = vmxor %vm1511, %vm1639
      %vm1688 = vmxor %vm1512, %vm1640
      %vm1689 = vmxor %vm1513, %vm1641
      %vm1690 = vmxor %vm1514, %vm1642
      %vm1691 = vmxor %vm1643, 1
      %vm1692 = vmxor %vm1644, 1
      %vm1693 = vmxor %vm1645, 1
      %vm1694 = vmxor %vm1646, 1
      %vm1695 = vmxor %vm1647, 1
      %vm1696 = vmxor %vm1648, 1
      %vm1697 = vmxor %vm1649, 1
      %vm1698 = vmxor %vm1650, 1
      %vm1699 = vmxor %vm1651, 1
      %vm1700 = vmxor %vm1652, 1
      %vm1701 = vmxor %vm1653, 1
      %vm1702 = vmxor %vm1654, 1
      %vm1703 = vmxor %vm1655, 1
      %vm1704 = vmxor %vm1656, 1
      %vm1705 = vmxor %vm1657, 1
      %vm1706 = vmxor %vm1658, 1
      %vm1707 = vmxor %vm1659, 1
      %vm1708 = vmxor %vm1660, 1
      %vm1709 = vmxor %vm1661, 1
      %vm1710 = vmxor %vm1662, 1
      %vm1711 = vmxor %vm1663, 1
      %vm1712 = vmxor %vm1664, 1
      %vm1713 = vmxor %vm1665, 1
      %vm1714 = vmxor %vm1666, 1
      %vm1715 = vmxor %vm1667, 1
      %vm1716 = vmxor %vm1668, 1
      %vm1717 = vmxor %vm1669, 1
      %vm1718 = vmxor %vm1670, 1
      %vm1719 = vmxor %vm1671, 1
      %vm1720 = vmxor %vm1672, 1
      %vm1721 = vmxor %vm1673, 1
      %vm1722 = vmxor %vm1674, 1
      %vm1723 = vmxor %vm1675, 1
      %vm1724 = vmxor %vm1676, 1
      %vm1725 = vmxor %vm1677, 1
      %vm1726 = vmxor %vm1678, 1
      %vm1727 = vmxor %vm1679, 1
      %vm1728 = vmxor %vm1680, 1
      %vm1729 = vmxor %vm1681, 1
      %vm1730 = vmxor %vm1682, 1
      %vm1731 = vmxor %vm1683, 1
      %vm1732 = vmxor %vm1684, 1
      %vm1733 = vmxor %vm1685, 1
      %vm1734 = vmxor %vm1686, 1
      %vm1735 = vmxor %vm1687, 1
      %vm1736 = vmxor %vm1688, 1
      %vm1737 = vmxor %vm1689, 1
      %vm1738 = vmxor %vm1690, 1
      %v1739 = vsel %vm1691, %v642, 0.0
      %v1740 = vsel %vm1692, %v643, 0.0
      %v1741 = vsel %vm1693, %v644, 0.0
      %v1742 = vsel %vm1694, %v646, 0.0
      %v1743 = vsel %vm1695, %v647, 0.0
      %v1744 = vsel %vm1696, %v648, 0.0
      %v1745 = vsel %vm1697, %v650, 0.0
      %v1746 = vsel %vm1698, %v651, 0.0
      %v1747 = vsel %vm1699, %v652, 0.0
      %v1748 = vsel %vm1700, %v654, 0.0
      %v1749 = vsel %vm1701, %v655, 0.0
      %v1750 = vsel %vm1702, %v656, 0.0
      %v1751 = vsel %vm1703, %v658, 0.0
      %v1752 = vsel %vm1704, %v659, 0.0
      %v1753 = vsel %vm1705, %v660, 0.0
      %v1754 = vsel %vm1706, %v662, 0.0
      %v1755 = vsel %vm1707, %v663, 0.0
      %v1756 = vsel %vm1708, %v664, 0.0
      %v1757 = vsel %vm1709, %v666, 0.0
      %v1758 = vsel %vm1710, %v667, 0.0
      %v1759 = vsel %vm1711, %v668, 0.0
      %v1760 = vsel %vm1712, %v670, 0.0
      %v1761 = vsel %vm1713, %v671, 0.0
      %v1762 = vsel %vm1714, %v672, 0.0
      %v1763 = vsel %vm1715, %v674, 0.0
      %v1764 = vsel %vm1716, %v675, 0.0
      %v1765 = vsel %vm1717, %v676, 0.0
      %v1766 = vsel %vm1718, %v678, 0.0
      %v1767 = vsel %vm1719, %v679, 0.0
      %v1768 = vsel %vm1720, %v680, 0.0
      %v1769 = vsel %vm1721, %v682, 0.0
      %v1770 = vsel %vm1722, %v683, 0.0
      %v1771 = vsel %vm1723, %v684, 0.0
      %v1772 = vsel %vm1724, %v686, 0.0
      %v1773 = vsel %vm1725, %v687, 0.0
      %v1774 = vsel %vm1726, %v688, 0.0
      %v1775 = vsel %vm1727, %v690, 0.0
      %v1776 = vsel %vm1728, %v691, 0.0
      %v1777 = vsel %vm1729, %v692, 0.0
      %v1778 = vsel %vm1730, %v694, 0.0
      %v1779 = vsel %vm1731, %v695, 0.0
      %v1780 = vsel %vm1732, %v696, 0.0
      %v1781 = vsel %vm1733, %v698, 0.0
      %v1782 = vsel %vm1734, %v699, 0.0
      %v1783 = vsel %vm1735, %v700, 0.0
      %v1784 = vsel %vm1736, %v702, 0.0
      %v1785 = vsel %vm1737, %v703, 0.0
      %v1786 = vsel %vm1738, %v704, 0.0
      %v1787 = vadd.f32 %v1739, 0.0
      %v1788 = vadd.f32 %v1740, 0.0
      %v1789 = vadd.f32 %v1741, 0.0
      %v1790 = vadd.f32 %v1742, 0.0
      %v1791 = vadd.f32 %v1743, 0.0
      %v1792 = vadd.f32 %v1744, 0.0
      %v1793 = vadd.f32 %v1745, 0.0
      %v1794 = vadd.f32 %v1746, 0.0
      %v1795 = vadd.f32 %v1747, 0.0
      %v1796 = vadd.f32 %v1748, 0.0
      %v1797 = vadd.f32 %v1749, 0.0
      %v1798 = vadd.f32 %v1750, 0.0
      %v1799 = vadd.f32 %v1751, 0.0
      %v1800 = vadd.f32 %v1752, 0.0
      %v1801 = vadd.f32 %v1753, 0.0
      %v1802 = vadd.f32 %v1754, 0.0
      %v1803 = vadd.f32 %v1755, 0.0
      %v1804 = vadd.f32 %v1756, 0.0
      %v1805 = vadd.f32 %v1757, 0.0
      %v1806 = vadd.f32 %v1758, 0.0
      %v1807 = vadd.f32 %v1759, 0.0
      %v1808 = vadd.f32 %v1760, 0.0
      %v1809 = vadd.f32 %v1761, 0.0
      %v1810 = vadd.f32 %v1762, 0.0
      %v1811 = vadd.f32 %v1763, 0.0
      %v1812 = vadd.f32 %v1764, 0.0
      %v1813 = vadd.f32 %v1765, 0.0
      %v1814 = vadd.f32 %v1766, 0.0
      %v1815 = vadd.f32 %v1767, 0.0
      %v1816 = vadd.f32 %v1768, 0.0
      %v1817 = vadd.f32 %v1769, 0.0
      %v1818 = vadd.f32 %v1770, 0.0
      %v1819 = vadd.f32 %v1771, 0.0
      %v1820 = vadd.f32 %v1772, 0.0
      %v1821 = vadd.f32 %v1773, 0.0
      %v1822 = vadd.f32 %v1774, 0.0
      %v1823 = vadd.f32 %v1775, 0.0
      %v1824 = vadd.f32 %v1776, 0.0
      %v1825 = vadd.f32 %v1777, 0.0
      %v1826 = vadd.f32 %v1778, 0.0
      %v1827 = vadd.f32 %v1779, 0.0
      %v1828 = vadd.f32 %v1780, 0.0
      %v1829 = vadd.f32 %v1781, 0.0
      %v1830 = vadd.f32 %v1782, 0.0
      %v1831 = vadd.f32 %v1783, 0.0
      %v1832 = vadd.f32 %v1784, 0.0
      %v1833 = vadd.f32 %v1785, 0.0
      %v1834 = vadd.f32 %v1786, 0.0
      %v1835 = vsel %vm1691, 1.0, 0.0
      %v1836 = vsel %vm1692, 1.0, 0.0
      %v1837 = vsel %vm1693, 1.0, 0.0
      %v1838 = vsel %vm1694, 1.0, 0.0
      %v1839 = vsel %vm1695, 1.0, 0.0
      %v1840 = vsel %vm1696, 1.0, 0.0
      %v1841 = vsel %vm1697, 1.0, 0.0
      %v1842 = vsel %vm1698, 1.0, 0.0
      %v1843 = vsel %vm1699, 1.0, 0.0
      %v1844 = vsel %vm1700, 1.0, 0.0
      %v1845 = vsel %vm1701, 1.0, 0.0
      %v1846 = vsel %vm1702, 1.0, 0.0
      %v1847 = vsel %vm1703, 1.0, 0.0
      %v1848 = vsel %vm1704, 1.0, 0.0
      %v1849 = vsel %vm1705, 1.0, 0.0
      %v1850 = vsel %vm1706, 1.0, 0.0
      %v1851 = vsel %vm1707, 1.0, 0.0
      %v1852 = vsel %vm1708, 1.0, 0.0
      %v1853 = vsel %vm1709, 1.0, 0.0
      %v1854 = vsel %vm1710, 1.0, 0.0
      %v1855 = vsel %vm1711, 1.0, 0.0
      %v1856 = vsel %vm1712, 1.0, 0.0
      %v1857 = vsel %vm1713, 1.0, 0.0
      %v1858 = vsel %vm1714, 1.0, 0.0
      %v1859 = vsel %vm1715, 1.0, 0.0
      %v1860 = vsel %vm1716, 1.0, 0.0
      %v1861 = vsel %vm1717, 1.0, 0.0
      %v1862 = vsel %vm1718, 1.0, 0.0
      %v1863 = vsel %vm1719, 1.0, 0.0
      %v1864 = vsel %vm1720, 1.0, 0.0
      %v1865 = vsel %vm1721, 1.0, 0.0
      %v1866 = vsel %vm1722, 1.0, 0.0
      %v1867 = vsel %vm1723, 1.0, 0.0
      %v1868 = vsel %vm1724, 1.0, 0.0
      %v1869 = vsel %vm1725, 1.0, 0.0
      %v1870 = vsel %vm1726, 1.0, 0.0
      %v1871 = vsel %vm1727, 1.0, 0.0
      %v1872 = vsel %vm1728, 1.0, 0.0
      %v1873 = vsel %vm1729, 1.0, 0.0
      %v1874 = vsel %vm1730, 1.0, 0.0
      %v1875 = vsel %vm1731, 1.0, 0.0
      %v1876 = vsel %vm1732, 1.0, 0.0
      %v1877 = vsel %vm1733, 1.0, 0.0
      %v1878 = vsel %vm1734, 1.0, 0.0
      %v1879 = vsel %vm1735, 1.0, 0.0
      %v1880 = vsel %vm1736, 1.0, 0.0
      %v1881 = vsel %vm1737, 1.0, 0.0
      %v1882 = vsel %vm1738, 1.0, 0.0
      %v1883 = vadd.f32 %v1835, 0.0
      %v1884 = vadd.f32 %v1836, 0.0
      %v1885 = vadd.f32 %v1837, 0.0
      %v1886 = vadd.f32 %v1838, 0.0
      %v1887 = vadd.f32 %v1839, 0.0
      %v1888 = vadd.f32 %v1840, 0.0
      %v1889 = vadd.f32 %v1841, 0.0
      %v1890 = vadd.f32 %v1842, 0.0
      %v1891 = vadd.f32 %v1843, 0.0
      %v1892 = vadd.f32 %v1844, 0.0
      %v1893 = vadd.f32 %v1845, 0.0
      %v1894 = vadd.f32 %v1846, 0.0
      %v1895 = vadd.f32 %v1847, 0.0
      %v1896 = vadd.f32 %v1848, 0.0
      %v1897 = vadd.f32 %v1849, 0.0
      %v1898 = vadd.f32 %v1850, 0.0
      %v1899 = vadd.f32 %v1851, 0.0
      %v1900 = vadd.f32 %v1852, 0.0
      %v1901 = vadd.f32 %v1853, 0.0
      %v1902 = vadd.f32 %v1854, 0.0
      %v1903 = vadd.f32 %v1855, 0.0
      %v1904 = vadd.f32 %v1856, 0.0
      %v1905 = vadd.f32 %v1857, 0.0
      %v1906 = vadd.f32 %v1858, 0.0
      %v1907 = vadd.f32 %v1859, 0.0
      %v1908 = vadd.f32 %v1860, 0.0
      %v1909 = vadd.f32 %v1861, 0.0
      %v1910 = vadd.f32 %v1862, 0.0
      %v1911 = vadd.f32 %v1863, 0.0
      %v1912 = vadd.f32 %v1864, 0.0
      %v1913 = vadd.f32 %v1865, 0.0
      %v1914 = vadd.f32 %v1866, 0.0
      %v1915 = vadd.f32 %v1867, 0.0
      %v1916 = vadd.f32 %v1868, 0.0
      %v1917 = vadd.f32 %v1869, 0.0
      %v1918 = vadd.f32 %v1870, 0.0
      %v1919 = vadd.f32 %v1871, 0.0
      %v1920 = vadd.f32 %v1872, 0.0
      %v1921 = vadd.f32 %v1873, 0.0
      %v1922 = vadd.f32 %v1874, 0.0
      %v1923 = vadd.f32 %v1875, 0.0
      %v1924 = vadd.f32 %v1876, 0.0
      %v1925 = vadd.f32 %v1877, 0.0
      %v1926 = vadd.f32 %v1878, 0.0
      %v1927 = vadd.f32 %v1879, 0.0
      %v1928 = vadd.f32 %v1880, 0.0
      %v1929 = vadd.f32 %v1881, 0.0
      %v1930 = vadd.f32 %v1882, 0.0
      %vm1931 = vcmp.gt.f32.partialorder %v574, %v1226
      %vm1932 = vcmp.gt.f32.partialorder %v575, %v1227
      %vm1933 = vcmp.gt.f32.partialorder %v576, %v1228
      %vm1934 = vcmp.gt.f32.partialorder %v578, %v1229
      %vm1935 = vcmp.gt.f32.partialorder %v579, %v1230
      %vm1936 = vcmp.gt.f32.partialorder %v580, %v1231
      %vm1937 = vcmp.gt.f32.partialorder %v582, %v1232
      %vm1938 = vcmp.gt.f32.partialorder %v583, %v1233
      %vm1939 = vcmp.gt.f32.partialorder %v584, %v1234
      %vm1940 = vcmp.gt.f32.partialorder %v586, %v1235
      %vm1941 = vcmp.gt.f32.partialorder %v587, %v1236
      %vm1942 = vcmp.gt.f32.partialorder %v588, %v1237
      %vm1943 = vcmp.gt.f32.partialorder %v590, %v1238
      %vm1944 = vcmp.gt.f32.partialorder %v591, %v1239
      %vm1945 = vcmp.gt.f32.partialorder %v592, %v1240
      %vm1946 = vcmp.gt.f32.partialorder %v594, %v1241
      %vm1947 = vcmp.gt.f32.partialorder %v595, %v1242
      %vm1948 = vcmp.gt.f32.partialorder %v596, %v1243
      %vm1949 = vcmp.gt.f32.partialorder %v598, %v1244
      %vm1950 = vcmp.gt.f32.partialorder %v599, %v1245
      %vm1951 = vcmp.gt.f32.partialorder %v600, %v1246
      %vm1952 = vcmp.gt.f32.partialorder %v602, %v1247
      %vm1953 = vcmp.gt.f32.partialorder %v603, %v1248
      %vm1954 = vcmp.gt.f32.partialorder %v604, %v1249
      %vm1955 = vcmp.gt.f32.partialorder %v606, %v1250
      %vm1956 = vcmp.gt.f32.partialorder %v607, %v1251
      %vm1957 = vcmp.gt.f32.partialorder %v608, %v1252
      %vm1958 = vcmp.gt.f32.partialorder %v610, %v1253
      %vm1959 = vcmp.gt.f32.partialorder %v611, %v1254
      %vm1960 = vcmp.gt.f32.partialorder %v612, %v1255
      %vm1961 = vcmp.gt.f32.partialorder %v614, %v1256
      %vm1962 = vcmp.gt.f32.partialorder %v615, %v1257
      %vm1963 = vcmp.gt.f32.partialorder %v616, %v1258
      %vm1964 = vcmp.gt.f32.partialorder %v618, %v1259
      %vm1965 = vcmp.gt.f32.partialorder %v619, %v1260
      %vm1966 = vcmp.gt.f32.partialorder %v620, %v1261
      %vm1967 = vcmp.gt.f32.partialorder %v622, %v1262
      %vm1968 = vcmp.gt.f32.partialorder %v623, %v1263
      %vm1969 = vcmp.gt.f32.partialorder %v624, %v1264
      %vm1970 = vcmp.gt.f32.partialorder %v626, %v1265
      %vm1971 = vcmp.gt.f32.partialorder %v627, %v1266
      %vm1972 = vcmp.gt.f32.partialorder %v628, %v1267
      %vm1973 = vcmp.gt.f32.partialorder %v630, %v1268
      %vm1974 = vcmp.gt.f32.partialorder %v631, %v1269
      %vm1975 = vcmp.gt.f32.partialorder %v632, %v1270
      %vm1976 = vcmp.gt.f32.partialorder %v634, %v1271
      %vm1977 = vcmp.gt.f32.partialorder %v635, %v1272
      %vm1978 = vcmp.gt.f32.partialorder %v636, %v1273
      %vm1979 = vmxor %vm1931, %vm1595
      %vm1980 = vmxor %vm1932, %vm1596
      %vm1981 = vmxor %vm1933, %vm1597
      %vm1982 = vmxor %vm1934, %vm1598
      %vm1983 = vmxor %vm1935, %vm1599
      %vm1984 = vmxor %vm1936, %vm1600
      %vm1985 = vmxor %vm1937, %vm1601
      %vm1986 = vmxor %vm1938, %vm1602
      %vm1987 = vmxor %vm1939, %vm1603
      %vm1988 = vmxor %vm1940, %vm1604
      %vm1989 = vmxor %vm1941, %vm1605
      %vm1990 = vmxor %vm1942, %vm1606
      %vm1991 = vmxor %vm1943, %vm1607
      %vm1992 = vmxor %vm1944, %vm1608
      %vm1993 = vmxor %vm1945, %vm1609
      %vm1994 = vmxor %vm1946, %vm1610
      %vm1995 = vmxor %vm1947, %vm1611
      %vm1996 = vmxor %vm1948, %vm1612
      %vm1997 = vmxor %vm1949, %vm1613
      %vm1998 = vmxor %vm1950, %vm1614
      %vm1999 = vmxor %vm1951, %vm1615
      %vm2000 = vmxor %vm1952, %vm1616
      %vm2001 = vmxor %vm1953, %vm1617
      %vm2002 = vmxor %vm1954, %vm1618
      %vm2003 = vmxor %vm1955, %vm1619
      %vm2004 = vmxor %vm1956, %vm1620
      %vm2005 = vmxor %vm1957, %vm1621
      %vm2006 = vmxor %vm1958, %vm1622
      %vm2007 = vmxor %vm1959, %vm1623
      %vm2008 = vmxor %vm1960, %vm1624
      %vm2009 = vmxor %vm1961, %vm1625
      %vm2010 = vmxor %vm1962, %vm1626
      %vm2011 = vmxor %vm1963, %vm1627
      %vm2012 = vmxor %vm1964, %vm1628
      %vm2013 = vmxor %vm1965, %vm1629
      %vm2014 = vmxor %vm1966, %vm1630
      %vm2015 = vmxor %vm1967, %vm1631
      %vm2016 = vmxor %vm1968, %vm1632
      %vm2017 = vmxor %vm1969, %vm1633
      %vm2018 = vmxor %vm1970, %vm1634
      %vm2019 = vmxor %vm1971, %vm1635
      %vm2020 = vmxor %vm1972, %vm1636
      %vm2021 = vmxor %vm1973, %vm1637
      %vm2022 = vmxor %vm1974, %vm1638
      %vm2023 = vmxor %vm1975, %vm1639
      %vm2024 = vmxor %vm1976, %vm1640
      %vm2025 = vmxor %vm1977, %vm1641
      %vm2026 = vmxor %vm1978, %vm1642
      %vm2027 = vmxor %vm1979, 1
      %vm2028 = vmxor %vm1980, 1
      %vm2029 = vmxor %vm1981, 1
      %vm2030 = vmxor %vm1982, 1
      %vm2031 = vmxor %vm1983, 1
      %vm2032 = vmxor %vm1984, 1
      %vm2033 = vmxor %vm1985, 1
      %vm2034 = vmxor %vm1986, 1
      %vm2035 = vmxor %vm1987, 1
      %vm2036 = vmxor %vm1988, 1
      %vm2037 = vmxor %vm1989, 1
      %vm2038 = vmxor %vm1990, 1
      %vm2039 = vmxor %vm1991, 1
      %vm2040 = vmxor %vm1992, 1
      %vm2041 = vmxor %vm1993, 1
      %vm2042 = vmxor %vm1994, 1
      %vm2043 = vmxor %vm1995, 1
      %vm2044 = vmxor %vm1996, 1
      %vm2045 = vmxor %vm1997, 1
      %vm2046 = vmxor %vm1998, 1
      %vm2047 = vmxor %vm1999, 1
      %vm2048 = vmxor %vm2000, 1
      %vm2049 = vmxor %vm2001, 1
      %vm2050 = vmxor %vm2002, 1
      %vm2051 = vmxor %vm2003, 1
      %vm2052 = vmxor %vm2004, 1
      %vm2053 = vmxor %vm2005, 1
      %vm2054 = vmxor %vm2006, 1
      %vm2055 = vmxor %vm2007, 1
      %vm2056 = vmxor %vm2008, 1
      %vm2057 = vmxor %vm2009, 1
      %vm2058 = vmxor %vm2010, 1
      %vm2059 = vmxor %vm2011, 1
      %vm2060 = vmxor %vm2012, 1
      %vm2061 = vmxor %vm2013, 1
      %vm2062 = vmxor %vm2014, 1
      %vm2063 = vmxor %vm2015, 1
      %vm2064 = vmxor %vm2016, 1
      %vm2065 = vmxor %vm2017, 1
      %vm2066 = vmxor %vm2018, 1
      %vm2067 = vmxor %vm2019, 1
      %vm2068 = vmxor %vm2020, 1
      %vm2069 = vmxor %vm2021, 1
      %vm2070 = vmxor %vm2022, 1
      %vm2071 = vmxor %vm2023, 1
      %vm2072 = vmxor %vm2024, 1
      %vm2073 = vmxor %vm2025, 1
      %vm2074 = vmxor %vm2026, 1
      %v2075 = vsel %vm2027, %v646, 0.0
      %v2076 = vsel %vm2028, %v647, 0.0
      %v2077 = vsel %vm2029, %v648, 0.0
      %v2078 = vsel %vm2030, %v650, 0.0
      %v2079 = vsel %vm2031, %v651, 0.0
      %v2080 = vsel %vm2032, %v652, 0.0
      %v2081 = vsel %vm2033, %v654, 0.0
      %v2082 = vsel %vm2034, %v655, 0.0
      %v2083 = vsel %vm2035, %v656, 0.0
      %v2084 = vsel %vm2036, %v658, 0.0
      %v2085 = vsel %vm2037, %v659, 0.0
      %v2086 = vsel %vm2038, %v660, 0.0
      %v2087 = vsel %vm2039, %v662, 0.0
      %v2088 = vsel %vm2040, %v663, 0.0
      %v2089 = vsel %vm2041, %v664, 0.0
      %v2090 = vsel %vm2042, %v666, 0.0
      %v2091 = vsel %vm2043, %v667, 0.0
      %v2092 = vsel %vm2044, %v668, 0.0
      %v2093 = vsel %vm2045, %v670, 0.0
      %v2094 = vsel %vm2046, %v671, 0.0
      %v2095 = vsel %vm2047, %v672, 0.0
      %v2096 = vsel %vm2048, %v674, 0.0
      %v2097 = vsel %vm2049, %v675, 0.0
      %v2098 = vsel %vm2050, %v676, 0.0
      %v2099 = vsel %vm2051, %v678, 0.0
      %v2100 = vsel %vm2052, %v679, 0.0
      %v2101 = vsel %vm2053, %v680, 0.0
      %v2102 = vsel %vm2054, %v682, 0.0
      %v2103 = vsel %vm2055, %v683, 0.0
      %v2104 = vsel %vm2056, %v684, 0.0
      %v2105 = vsel %vm2057, %v686, 0.0
      %v2106 = vsel %vm2058, %v687, 0.0
      %v2107 = vsel %vm2059, %v688, 0.0
      %v2108 = vsel %vm2060, %v690, 0.0
      %v2109 = vsel %vm2061, %v691, 0.0
      %v2110 = vsel %vm2062, %v692, 0.0
      %v2111 = vsel %vm2063, %v694, 0.0
      %v2112 = vsel %vm2064, %v695, 0.0
      %v2113 = vsel %vm2065, %v696, 0.0
      %v2114 = vsel %vm2066, %v698, 0.0
      %v2115 = vsel %vm2067, %v699, 0.0
      %v2116 = vsel %vm2068, %v700, 0.0
      %v2117 = vsel %vm2069, %v702, 0.0
      %v2118 = vsel %vm2070, %v703, 0.0
      %v2119 = vsel %vm2071, %v704, 0.0
      %v2120 = vsel %vm2072, %v706, 0.0
      %v2121 = vsel %vm2073, %v707, 0.0
      %v2122 = vsel %vm2074, %v708, 0.0
      %v2123 = vadd.f32 %v1787, %v2075
      %v2124 = vadd.f32 %v1788, %v2076
      %v2125 = vadd.f32 %v1789, %v2077
      %v2126 = vadd.f32 %v1790, %v2078
      %v2127 = vadd.f32 %v1791, %v2079
      %v2128 = vadd.f32 %v1792, %v2080
      %v2129 = vadd.f32 %v1793, %v2081
      %v2130 = vadd.f32 %v1794, %v2082
      %v2131 = vadd.f32 %v1795, %v2083
      %v2132 = vadd.f32 %v1796, %v2084
      %v2133 = vadd.f32 %v1797, %v2085
      %v2134 = vadd.f32 %v1798, %v2086
      %v2135 = vadd.f32 %v1799, %v2087
      %v2136 = vadd.f32 %v1800, %v2088
      %v2137 = vadd.f32 %v1801, %v2089
      %v2138 = vadd.f32 %v1802, %v2090
      %v2139 = vadd.f32 %v1803, %v2091
      %v2140 = vadd.f32 %v1804, %v2092
      %v2141 = vadd.f32 %v1805, %v2093
      %v2142 = vadd.f32 %v1806, %v2094
      %v2143 = vadd.f32 %v1807, %v2095
      %v2144 = vadd.f32 %v1808, %v2096
      %v2145 = vadd.f32 %v1809, %v2097
      %v2146 = vadd.f32 %v1810, %v2098
      %v2147 = vadd.f32 %v1811, %v2099
      %v2148 = vadd.f32 %v1812, %v2100
      %v2149 = vadd.f32 %v1813, %v2101
      %v2150 = vadd.f32 %v1814, %v2102
      %v2151 = vadd.f32 %v1815, %v2103
      %v2152 = vadd.f32 %v1816, %v2104
      %v2153 = vadd.f32 %v1817, %v2105
      %v2154 = vadd.f32 %v1818, %v2106
      %v2155 = vadd.f32 %v1819, %v2107
      %v2156 = vadd.f32 %v1820, %v2108
      %v2157 = vadd.f32 %v1821, %v2109
      %v2158 = vadd.f32 %v1822, %v2110
      %v2159 = vadd.f32 %v1823, %v2111
      %v2160 = vadd.f32 %v1824, %v2112
      %v2161 = vadd.f32 %v1825, %v2113
      %v2162 = vadd.f32 %v1826, %v2114
      %v2163 = vadd.f32 %v1827, %v2115
      %v2164 = vadd.f32 %v1828, %v2116
      %v2165 = vadd.f32 %v1829, %v2117
      %v2166 = vadd.f32 %v1830, %v2118
      %v2167 = vadd.f32 %v1831, %v2119
      %v2168 = vadd.f32 %v1832, %v2120
      %v2169 = vadd.f32 %v1833, %v2121
      %v2170 = vadd.f32 %v1834, %v2122
      %v2171 = vsel %vm2027, 1.0, 0.0
      %v2172 = vsel %vm2028, 1.0, 0.0
      %v2173 = vsel %vm2029, 1.0, 0.0
      %v2174 = vsel %vm2030, 1.0, 0.0
      %v2175 = vsel %vm2031, 1.0, 0.0
      %v2176 = vsel %vm2032, 1.0, 0.0
      %v2177 = vsel %vm2033, 1.0, 0.0
      %v2178 = vsel %vm2034, 1.0, 0.0
      %v2179 = vsel %vm2035, 1.0, 0.0
      %v2180 = vsel %vm2036, 1.0, 0.0
      %v2181 = vsel %vm2037, 1.0, 0.0
      %v2182 = vsel %vm2038, 1.0, 0.0
      %v2183 = vsel %vm2039, 1.0, 0.0
      %v2184 = vsel %vm2040, 1.0, 0.0
      %v2185 = vsel %vm2041, 1.0, 0.0
      %v2186 = vsel %vm2042, 1.0, 0.0
      %v2187 = vsel %vm2043, 1.0, 0.0
      %v2188 = vsel %vm2044, 1.0, 0.0
      %v2189 = vsel %vm2045, 1.0, 0.0
      %v2190 = vsel %vm2046, 1.0, 0.0
      %v2191 = vsel %vm2047, 1.0, 0.0
      %v2192 = vsel %vm2048, 1.0, 0.0
      %v2193 = vsel %vm2049, 1.0, 0.0
      %v2194 = vsel %vm2050, 1.0, 0.0
      %v2195 = vsel %vm2051, 1.0, 0.0
      %v2196 = vsel %vm2052, 1.0, 0.0
      %v2197 = vsel %vm2053, 1.0, 0.0
      %v2198 = vsel %vm2054, 1.0, 0.0
      %v2199 = vsel %vm2055, 1.0, 0.0
      %v2200 = vsel %vm2056, 1.0, 0.0
      %v2201 = vsel %vm2057, 1.0, 0.0
      %v2202 = vsel %vm2058, 1.0, 0.0
      %v2203 = vsel %vm2059, 1.0, 0.0
      %v2204 = vsel %vm2060, 1.0, 0.0
      %v2205 = vsel %vm2061, 1.0, 0.0
      %v2206 = vsel %vm2062, 1.0, 0.0
      %v2207 = vsel %vm2063, 1.0, 0.0
      %v2208 = vsel %vm2064, 1.0, 0.0
      %v2209 = vsel %vm2065, 1.0, 0.0
      %v2210 = vsel %vm2066, 1.0, 0.0
      %v2211 = vsel %vm2067, 1.0, 0.0
      %v2212 = vsel %vm2068, 1.0, 0.0
      %v2213 = vsel %vm2069, 1.0, 0.0
      %v2214 = vsel %vm2070, 1.0, 0.0
      %v2215 = vsel %vm2071, 1.0, 0.0
      %v2216 = vsel %vm2072, 1.0, 0.0
      %v2217 = vsel %vm2073, 1.0, 0.0
      %v2218 = vsel %vm2074, 1.0, 0.0
      %v2219 = vadd.f32 %v1883, %v2171
      %v2220 = vadd.f32 %v1884, %v2172
      %v2221 = vadd.f32 %v1885, %v2173
      %v2222 = vadd.f32 %v1886, %v2174
      %v2223 = vadd.f32 %v1887, %v2175
      %v2224 = vadd.f32 %v1888, %v2176
      %v2225 = vadd.f32 %v1889, %v2177
      %v2226 = vadd.f32 %v1890, %v2178
      %v2227 = vadd.f32 %v1891, %v2179
      %v2228 = vadd.f32 %v1892, %v2180
      %v2229 = vadd.f32 %v1893, %v2181
      %v2230 = vadd.f32 %v1894, %v2182
      %v2231 = vadd.f32 %v1895, %v2183
      %v2232 = vadd.f32 %v1896, %v2184
      %v2233 = vadd.f32 %v1897, %v2185
      %v2234 = vadd.f32 %v1898, %v2186
      %v2235 = vadd.f32 %v1899, %v2187
      %v2236 = vadd.f32 %v1900, %v2188
      %v2237 = vadd.f32 %v1901, %v2189
      %v2238 = vadd.f32 %v1902, %v2190
      %v2239 = vadd.f32 %v1903, %v2191
      %v2240 = vadd.f32 %v1904, %v2192
      %v2241 = vadd.f32 %v1905, %v2193
      %v2242 = vadd.f32 %v1906, %v2194
      %v2243 = vadd.f32 %v1907, %v2195
      %v2244 = vadd.f32 %v1908, %v2196
      %v2245 = vadd.f32 %v1909, %v2197
      %v2246 = vadd.f32 %v1910, %v2198
      %v2247 = vadd.f32 %v1911, %v2199
      %v2248 = vadd.f32 %v1912, %v2200
      %v2249 = vadd.f32 %v1913, %v2201
      %v2250 = vadd.f32 %v1914, %v2202
      %v2251 = vadd.f32 %v1915, %v2203
      %v2252 = vadd.f32 %v1916, %v2204
      %v2253 = vadd.f32 %v1917, %v2205
      %v2254 = vadd.f32 %v1918, %v2206
      %v2255 = vadd.f32 %v1919, %v2207
      %v2256 = vadd.f32 %v1920, %v2208
      %v2257 = vadd.f32 %v1921, %v2209
      %v2258 = vadd.f32 %v1922, %v2210
      %v2259 = vadd.f32 %v1923, %v2211
      %v2260 = vadd.f32 %v1924, %v2212
      %v2261 = vadd.f32 %v1925, %v2213
      %v2262 = vadd.f32 %v1926, %v2214
      %v2263 = vadd.f32 %v1927, %v2215
      %v2264 = vadd.f32 %v1928, %v2216
      %v2265 = vadd.f32 %v1929, %v2217
      %v2266 = vadd.f32 %v1930, %v2218
      %vm2267 = vcmp.gt.f32.partialorder %v578, %v1226
      %vm2268 = vcmp.gt.f32.partialorder %v579, %v1227
      %vm2269 = vcmp.gt.f32.partialorder %v580, %v1228
      %vm2270 = vcmp.gt.f32.partialorder %v582, %v1229
      %vm2271 = vcmp.gt.f32.partialorder %v583, %v1230
      %vm2272 = vcmp.gt.f32.partialorder %v584, %v1231
      %vm2273 = vcmp.gt.f32.partialorder %v586, %v1232
      %vm2274 = vcmp.gt.f32.partialorder %v587, %v1233
      %vm2275 = vcmp.gt.f32.partialorder %v588, %v1234
      %vm2276 = vcmp.gt.f32.partialorder %v590, %v1235
      %vm2277 = vcmp.gt.f32.partialorder %v591, %v1236
      %vm2278 = vcmp.gt.f32.partialorder %v592, %v1237
      %vm2279 = vcmp.gt.f32.partialorder %v594, %v1238
      %vm2280 = vcmp.gt.f32.partialorder %v595, %v1239
      %vm2281 = vcmp.gt.f32.partialorder %v596, %v1240
      %vm2282 = vcmp.gt.f32.partialorder %v598, %v1241
      %vm2283 = vcmp.gt.f32.partialorder %v599, %v1242
      %vm2284 = vcmp.gt.f32.partialorder %v600, %v1243
      %vm2285 = vcmp.gt.f32.partialorder %v602, %v1244
      %vm2286 = vcmp.gt.f32.partialorder %v603, %v1245
      %vm2287 = vcmp.gt.f32.partialorder %v604, %v1246
      %vm2288 = vcmp.gt.f32.partialorder %v606, %v1247
      %vm2289 = vcmp.gt.f32.partialorder %v607, %v1248
      %vm2290 = vcmp.gt.f32.partialorder %v608, %v1249
      %vm2291 = vcmp.gt.f32.partialorder %v610, %v1250
      %vm2292 = vcmp.gt.f32.partialorder %v611, %v1251
      %vm2293 = vcmp.gt.f32.partialorder %v612, %v1252
      %vm2294 = vcmp.gt.f32.partialorder %v614, %v1253
      %vm2295 = vcmp.gt.f32.partialorder %v615, %v1254
      %vm2296 = vcmp.gt.f32.partialorder %v616, %v1255
      %vm2297 = vcmp.gt.f32.partialorder %v618, %v1256
      %vm2298 = vcmp.gt.f32.partialorder %v619, %v1257
      %vm2299 = vcmp.gt.f32.partialorder %v620, %v1258
      %vm2300 = vcmp.gt.f32.partialorder %v622, %v1259
      %vm2301 = vcmp.gt.f32.partialorder %v623, %v1260
      %vm2302 = vcmp.gt.f32.partialorder %v624, %v1261
      %vm2303 = vcmp.gt.f32.partialorder %v626, %v1262
      %vm2304 = vcmp.gt.f32.partialorder %v627, %v1263
      %vm2305 = vcmp.gt.f32.partialorder %v628, %v1264
      %vm2306 = vcmp.gt.f32.partialorder %v630, %v1265
      %vm2307 = vcmp.gt.f32.partialorder %v631, %v1266
      %vm2308 = vcmp.gt.f32.partialorder %v632, %v1267
      %vm2309 = vcmp.gt.f32.partialorder %v634, %v1268
      %vm2310 = vcmp.gt.f32.partialorder %v635, %v1269
      %vm2311 = vcmp.gt.f32.partialorder %v636, %v1270
      %vm2312 = vcmp.gt.f32.partialorder %v638, %v1271
      %vm2313 = vcmp.gt.f32.partialorder %v639, %v1272
      %vm2314 = vcmp.gt.f32.partialorder %v640, %v1273
      %vm2315 = vmxor %vm2267, %vm1595
      %vm2316 = vmxor %vm2268, %vm1596
      %vm2317 = vmxor %vm2269, %vm1597
      %vm2318 = vmxor %vm2270, %vm1598
      %vm2319 = vmxor %vm2271, %vm1599
      %vm2320 = vmxor %vm2272, %vm1600
      %vm2321 = vmxor %vm2273, %vm1601
      %vm2322 = vmxor %vm2274, %vm1602
      %vm2323 = vmxor %vm2275, %vm1603
      %vm2324 = vmxor %vm2276, %vm1604
      %vm2325 = vmxor %vm2277, %vm1605
      %vm2326 = vmxor %vm2278, %vm1606
      %vm2327 = vmxor %vm2279, %vm1607
      %vm2328 = vmxor %vm2280, %vm1608
      %vm2329 = vmxor %vm2281, %vm1609
      %vm2330 = vmxor %vm2282, %vm1610
      %vm2331 = vmxor %vm2283, %vm1611
      %vm2332 = vmxor %vm2284, %vm1612
      %vm2333 = vmxor %vm2285, %vm1613
      %vm2334 = vmxor %vm2286, %vm1614
      %vm2335 = vmxor %vm2287, %vm1615
      %vm2336 = vmxor %vm2288, %vm1616
      %vm2337 = vmxor %vm2289, %vm1617
      %vm2338 = vmxor %vm2290, %vm1618
      %vm2339 = vmxor %vm2291, %vm1619
      %vm2340 = vmxor %vm2292, %vm1620
      %vm2341 = vmxor %vm2293, %vm1621
      %vm2342 = vmxor %vm2294, %vm1622
      %vm2343 = vmxor %vm2295, %vm1623
      %vm2344 = vmxor %vm2296, %vm1624
      %vm2345 = vmxor %vm2297, %vm1625
      %vm2346 = vmxor %vm2298, %vm1626
      %vm2347 = vmxor %vm2299, %vm1627
      %vm2348 = vmxor %vm2300, %vm1628
      %vm2349 = vmxor %vm2301, %vm1629
      %vm2350 = vmxor %vm2302, %vm1630
      %vm2351 = vmxor %vm2303, %vm1631
      %vm2352 = vmxor %vm2304, %vm1632
      %vm2353 = vmxor %vm2305, %vm1633
      %vm2354 = vmxor %vm2306, %vm1634
      %vm2355 = vmxor %vm2307, %vm1635
      %vm2356 = vmxor %vm2308, %vm1636
      %vm2357 = vmxor %vm2309, %vm1637
      %vm2358 = vmxor %vm2310, %vm1638
      %vm2359 = vmxor %vm2311, %vm1639
      %vm2360 = vmxor %vm2312, %vm1640
      %vm2361 = vmxor %vm2313, %vm1641
      %vm2362 = vmxor %vm2314, %vm1642
      %vm2363 = vmxor %vm2315, 1
      %vm2364 = vmxor %vm2316, 1
      %vm2365 = vmxor %vm2317, 1
      %vm2366 = vmxor %vm2318, 1
      %vm2367 = vmxor %vm2319, 1
      %vm2368 = vmxor %vm2320, 1
      %vm2369 = vmxor %vm2321, 1
      %vm2370 = vmxor %vm2322, 1
      %vm2371 = vmxor %vm2323, 1
      %vm2372 = vmxor %vm2324, 1
      %vm2373 = vmxor %vm2325, 1
      %vm2374 = vmxor %vm2326, 1
      %vm2375 = vmxor %vm2327, 1
      %vm2376 = vmxor %vm2328, 1
      %vm2377 = vmxor %vm2329, 1
      %vm2378 = vmxor %vm2330, 1
      %vm2379 = vmxor %vm2331, 1
      %vm2380 = vmxor %vm2332, 1
      %vm2381 = vmxor %vm2333, 1
      %vm2382 = vmxor %vm2334, 1
      %vm2383 = vmxor %vm2335, 1
      %vm2384 = vmxor %vm2336, 1
      %vm2385 = vmxor %vm2337, 1
      %vm2386 = vmxor %vm2338, 1
      %vm2387 = vmxor %vm2339, 1
      %vm2388 = vmxor %vm2340, 1
      %vm2389 = vmxor %vm2341, 1
      %vm2390 = vmxor %vm2342, 1
      %vm2391 = vmxor %vm2343, 1
      %vm2392 = vmxor %vm2344, 1
      %vm2393 = vmxor %vm2345, 1
      %vm2394 = vmxor %vm2346, 1
      %vm2395 = vmxor %vm2347, 1
      %vm2396 = vmxor %vm2348, 1
      %vm2397 = vmxor %vm2349, 1
      %vm2398 = vmxor %vm2350, 1
      %vm2399 = vmxor %vm2351, 1
      %vm2400 = vmxor %vm2352, 1
      %vm2401 = vmxor %vm2353, 1
      %vm2402 = vmxor %vm2354, 1
      %vm2403 = vmxor %vm2355, 1
      %vm2404 = vmxor %vm2356, 1
      %vm2405 = vmxor %vm2357, 1
      %vm2406 = vmxor %vm2358, 1
      %vm2407 = vmxor %vm2359, 1
      %vm2408 = vmxor %vm2360, 1
      %vm2409 = vmxor %vm2361, 1
      %vm2410 = vmxor %vm2362, 1
      %v2411 = vsel %vm2363, %v650, 0.0
      %v2412 = vsel %vm2364, %v651, 0.0
      %v2413 = vsel %vm2365, %v652, 0.0
      %v2414 = vsel %vm2366, %v654, 0.0
      %v2415 = vsel %vm2367, %v655, 0.0
      %v2416 = vsel %vm2368, %v656, 0.0
      %v2417 = vsel %vm2369, %v658, 0.0
      %v2418 = vsel %vm2370, %v659, 0.0
      %v2419 = vsel %vm2371, %v660, 0.0
      %v2420 = vsel %vm2372, %v662, 0.0
      %v2421 = vsel %vm2373, %v663, 0.0
      %v2422 = vsel %vm2374, %v664, 0.0
      %v2423 = vsel %vm2375, %v666, 0.0
      %v2424 = vsel %vm2376, %v667, 0.0
      %v2425 = vsel %vm2377, %v668, 0.0
      %v2426 = vsel %vm2378, %v670, 0.0
      %v2427 = vsel %vm2379, %v671, 0.0
      %v2428 = vsel %vm2380, %v672, 0.0
      %v2429 = vsel %vm2381, %v674, 0.0
      %v2430 = vsel %vm2382, %v675, 0.0
      %v2431 = vsel %vm2383, %v676, 0.0
      %v2432 = vsel %vm2384, %v678, 0.0
      %v2433 = vsel %vm2385, %v679, 0.0
      %v2434 = vsel %vm2386, %v680, 0.0
      %v2435 = vsel %vm2387, %v682, 0.0
      %v2436 = vsel %vm2388, %v683, 0.0
      %v2437 = vsel %vm2389, %v684, 0.0
      %v2438 = vsel %vm2390, %v686, 0.0
      %v2439 = vsel %vm2391, %v687, 0.0
      %v2440 = vsel %vm2392, %v688, 0.0
      %v2441 = vsel %vm2393, %v690, 0.0
      %v2442 = vsel %vm2394, %v691, 0.0
      %v2443 = vsel %vm2395, %v692, 0.0
      %v2444 = vsel %vm2396, %v694, 0.0
      %v2445 = vsel %vm2397, %v695, 0.0
      %v2446 = vsel %vm2398, %v696, 0.0
      %v2447 = vsel %vm2399, %v698, 0.0
      %v2448 = vsel %vm2400, %v699, 0.0
      %v2449 = vsel %vm2401, %v700, 0.0
      %v2450 = vsel %vm2402, %v702, 0.0
      %v2451 = vsel %vm2403, %v703, 0.0
      %v2452 = vsel %vm2404, %v704, 0.0
      %v2453 = vsel %vm2405, %v706, 0.0
      %v2454 = vsel %vm2406, %v707, 0.0
      %v2455 = vsel %vm2407, %v708, 0.0
      %v2456 = vsel %vm2408, %v710, 0.0
      %v2457 = vsel %vm2409, %v711, 0.0
      %v2458 = vsel %vm2410, %v712, 0.0
      %v2459 = vadd.f32 %v2123, %v2411
      %v2460 = vadd.f32 %v2124, %v2412
      %v2461 = vadd.f32 %v2125, %v2413
      %v2462 = vadd.f32 %v2126, %v2414
      %v2463 = vadd.f32 %v2127, %v2415
      %v2464 = vadd.f32 %v2128, %v2416
      %v2465 = vadd.f32 %v2129, %v2417
      %v2466 = vadd.f32 %v2130, %v2418
      %v2467 = vadd.f32 %v2131, %v2419
      %v2468 = vadd.f32 %v2132, %v2420
      %v2469 = vadd.f32 %v2133, %v2421
      %v2470 = vadd.f32 %v2134, %v2422
      %v2471 = vadd.f32 %v2135, %v2423
      %v2472 = vadd.f32 %v2136, %v2424
      %v2473 = vadd.f32 %v2137, %v2425
      %v2474 = vadd.f32 %v2138, %v2426
      %v2475 = vadd.f32 %v2139, %v2427
      %v2476 = vadd.f32 %v2140, %v2428
      %v2477 = vadd.f32 %v2141, %v2429
      %v2478 = vadd.f32 %v2142, %v2430
      %v2479 = vadd.f32 %v2143, %v2431
      %v2480 = vadd.f32 %v2144, %v2432
      %v2481 = vadd.f32 %v2145, %v2433
      %v2482 = vadd.f32 %v2146, %v2434
      %v2483 = vadd.f32 %v2147, %v2435
      %v2484 = vadd.f32 %v2148, %v2436
      %v2485 = vadd.f32 %v2149, %v2437
      %v2486 = vadd.f32 %v2150, %v2438
      %v2487 = vadd.f32 %v2151, %v2439
      %v2488 = vadd.f32 %v2152, %v2440
      %v2489 = vadd.f32 %v2153, %v2441
      %v2490 = vadd.f32 %v2154, %v2442
      %v2491 = vadd.f32 %v2155, %v2443
      %v2492 = vadd.f32 %v2156, %v2444
      %v2493 = vadd.f32 %v2157, %v2445
      %v2494 = vadd.f32 %v2158, %v2446
      %v2495 = vadd.f32 %v2159, %v2447
      %v2496 = vadd.f32 %v2160, %v2448
      %v2497 = vadd.f32 %v2161, %v2449
      %v2498 = vadd.f32 %v2162, %v2450
      %v2499 = vadd.f32 %v2163, %v2451
      %v2500 = vadd.f32 %v2164, %v2452
      %v2501 = vadd.f32 %v2165, %v2453
      %v2502 = vadd.f32 %v2166, %v2454
      %v2503 = vadd.f32 %v2167, %v2455
      %v2504 = vadd.f32 %v2168, %v2456
      %v2505 = vadd.f32 %v2169, %v2457
      %v2506 = vadd.f32 %v2170, %v2458
      %v2507 = vsel %vm2363, 1.0, 0.0
      %v2508 = vsel %vm2364, 1.0, 0.0
      %v2509 = vsel %vm2365, 1.0, 0.0
      %v2510 = vsel %vm2366, 1.0, 0.0
      %v2511 = vsel %vm2367, 1.0, 0.0
      %v2512 = vsel %vm2368, 1.0, 0.0
      %v2513 = vsel %vm2369, 1.0, 0.0
      %v2514 = vsel %vm2370, 1.0, 0.0
      %v2515 = vsel %vm2371, 1.0, 0.0
      %v2516 = vsel %vm2372, 1.0, 0.0
      %v2517 = vsel %vm2373, 1.0, 0.0
      %v2518 = vsel %vm2374, 1.0, 0.0
      %v2519 = vsel %vm2375, 1.0, 0.0
      %v2520 = vsel %vm2376, 1.0, 0.0
      %v2521 = vsel %vm2377, 1.0, 0.0
      %v2522 = vsel %vm2378, 1.0, 0.0
      %v2523 = vsel %vm2379, 1.0, 0.0
      %v2524 = vsel %vm2380, 1.0, 0.0
      %v2525 = vsel %vm2381, 1.0, 0.0
      %v2526 = vsel %vm2382, 1.0, 0.0
      %v2527 = vsel %vm2383, 1.0, 0.0
      %v2528 = vsel %vm2384, 1.0, 0.0
      %v2529 = vsel %vm2385, 1.0, 0.0
      %v2530 = vsel %vm2386, 1.0, 0.0
      %v2531 = vsel %vm2387, 1.0, 0.0
      %v2532 = vsel %vm2388, 1.0, 0.0
      %v2533 = vsel %vm2389, 1.0, 0.0
      %v2534 = vsel %vm2390, 1.0, 0.0
      %v2535 = vsel %vm2391, 1.0, 0.0
      %v2536 = vsel %vm2392, 1.0, 0.0
      %v2537 = vsel %vm2393, 1.0, 0.0
      %v2538 = vsel %vm2394, 1.0, 0.0
      %v2539 = vsel %vm2395, 1.0, 0.0
      %v2540 = vsel %vm2396, 1.0, 0.0
      %v2541 = vsel %vm2397, 1.0, 0.0
      %v2542 = vsel %vm2398, 1.0, 0.0
      %v2543 = vsel %vm2399, 1.0, 0.0
      %v2544 = vsel %vm2400, 1.0, 0.0
      %v2545 = vsel %vm2401, 1.0, 0.0
      %v2546 = vsel %vm2402, 1.0, 0.0
      %v2547 = vsel %vm2403, 1.0, 0.0
      %v2548 = vsel %vm2404, 1.0, 0.0
      %v2549 = vsel %vm2405, 1.0, 0.0
      %v2550 = vsel %vm2406, 1.0, 0.0
      %v2551 = vsel %vm2407, 1.0, 0.0
      %v2552 = vsel %vm2408, 1.0, 0.0
      %v2553 = vsel %vm2409, 1.0, 0.0
      %v2554 = vsel %vm2410, 1.0, 0.0
      %v2555 = vadd.f32 %v2219, %v2507
      %v2556 = vadd.f32 %v2220, %v2508
      %v2557 = vadd.f32 %v2221, %v2509
      %v2558 = vadd.f32 %v2222, %v2510
      %v2559 = vadd.f32 %v2223, %v2511
      %v2560 = vadd.f32 %v2224, %v2512
      %v2561 = vadd.f32 %v2225, %v2513
      %v2562 = vadd.f32 %v2226, %v2514
      %v2563 = vadd.f32 %v2227, %v2515
      %v2564 = vadd.f32 %v2228, %v2516
      %v2565 = vadd.f32 %v2229, %v2517
      %v2566 = vadd.f32 %v2230, %v2518
      %v2567 = vadd.f32 %v2231, %v2519
      %v2568 = vadd.f32 %v2232, %v2520
      %v2569 = vadd.f32 %v2233, %v2521
      %v2570 = vadd.f32 %v2234, %v2522
      %v2571 = vadd.f32 %v2235, %v2523
      %v2572 = vadd.f32 %v2236, %v2524
      %v2573 = vadd.f32 %v2237, %v2525
      %v2574 = vadd.f32 %v2238, %v2526
      %v2575 = vadd.f32 %v2239, %v2527
      %v2576 = vadd.f32 %v2240, %v2528
      %v2577 = vadd.f32 %v2241, %v2529
      %v2578 = vadd.f32 %v2242, %v2530
      %v2579 = vadd.f32 %v2243, %v2531
      %v2580 = vadd.f32 %v2244, %v2532
      %v2581 = vadd.f32 %v2245, %v2533
      %v2582 = vadd.f32 %v2246, %v2534
      %v2583 = vadd.f32 %v2247, %v2535
      %v2584 = vadd.f32 %v2248, %v2536
      %v2585 = vadd.f32 %v2249, %v2537
      %v2586 = vadd.f32 %v2250, %v2538
      %v2587 = vadd.f32 %v2251, %v2539
      %v2588 = vadd.f32 %v2252, %v2540
      %v2589 = vadd.f32 %v2253, %v2541
      %v2590 = vadd.f32 %v2254, %v2542
      %v2591 = vadd.f32 %v2255, %v2543
      %v2592 = vadd.f32 %v2256, %v2544
      %v2593 = vadd.f32 %v2257, %v2545
      %v2594 = vadd.f32 %v2258, %v2546
      %v2595 = vadd.f32 %v2259, %v2547
      %v2596 = vadd.f32 %v2260, %v2548
      %v2597 = vadd.f32 %v2261, %v2549
      %v2598 = vadd.f32 %v2262, %v2550
      %v2599 = vadd.f32 %v2263, %v2551
      %v2600 = vadd.f32 %v2264, %v2552
      %v2601 = vadd.f32 %v2265, %v2553
      %v2602 = vadd.f32 %v2266, %v2554
      %vm2603 = vcmp.gt.f32.partialorder %v571, %v1325
      %vm2604 = vcmp.gt.f32.partialorder %v572, %v1327
      %vm2605 = vcmp.gt.f32.partialorder %v575, %v1330
      %vm2606 = vcmp.gt.f32.partialorder %v576, %v1332
      %vm2607 = vcmp.gt.f32.partialorder %v579, %v1335
      %vm2608 = vcmp.gt.f32.partialorder %v580, %v1337
      %vm2609 = vcmp.gt.f32.partialorder %v583, %v1340
      %vm2610 = vcmp.gt.f32.partialorder %v584, %v1342
      %vm2611 = vcmp.gt.f32.partialorder %v587, %v1345
      %vm2612 = vcmp.gt.f32.partialorder %v588, %v1347
      %vm2613 = vcmp.gt.f32.partialorder %v591, %v1350
      %vm2614 = vcmp.gt.f32.partialorder %v592, %v1352
      %vm2615 = vcmp.gt.f32.partialorder %v595, %v1355
      %vm2616 = vcmp.gt.f32.partialorder %v596, %v1357
      %vm2617 = vcmp.gt.f32.partialorder %v599, %v1360
      %vm2618 = vcmp.gt.f32.partialorder %v600, %v1362
      %vm2619 = vcmp.gt.f32.partialorder %v603, %v1365
      %vm2620 = vcmp.gt.f32.partialorder %v604, %v1367
      %vm2621 = vcmp.gt.f32.partialorder %v607, %v1370
      %vm2622 = vcmp.gt.f32.partialorder %v608, %v1372
      %vm2623 = vcmp.gt.f32.partialorder %v611, %v1375
      %vm2624 = vcmp.gt.f32.partialorder %v612, %v1377
      %vm2625 = vcmp.gt.f32.partialorder %v615, %v1380
      %vm2626 = vcmp.gt.f32.partialorder %v616, %v1382
      %vm2627 = vcmp.gt.f32.partialorder %v619, %v1385
      %vm2628 = vcmp.gt.f32.partialorder %v620, %v1387
      %vm2629 = vcmp.gt.f32.partialorder %v623, %v1390
      %vm2630 = vcmp.gt.f32.partialorder %v624, %v1392
      %vm2631 = vcmp.gt.f32.partialorder %v627, %v1395
      %vm2632 = vcmp.gt.f32.partialorder %v628, %v1397
      %vm2633 = vcmp.gt.f32.partialorder %v631, %v1400
      %vm2634 = vcmp.gt.f32.partialorder %v632, %v1402
      %vm2635 = vmxor %vm2603, %vm1435
      %vm2636 = vmxor %vm2604, %vm1436
      %vm2637 = vmxor %vm2605, %vm1437
      %vm2638 = vmxor %vm2606, %vm1438
      %vm2639 = vmxor %vm2607, %vm1439
      %vm2640 = vmxor %vm2608, %vm1440
      %vm2641 = vmxor %vm2609, %vm1441
      %vm2642 = vmxor %vm2610, %vm1442
      %vm2643 = vmxor %vm2611, %vm1443
      %vm2644 = vmxor %vm2612, %vm1444
      %vm2645 = vmxor %vm2613, %vm1445
      %vm2646 = vmxor %vm2614, %vm1446
      %vm2647 = vmxor %vm2615, %vm1447
      %vm2648 = vmxor %vm2616, %vm1448
      %vm2649 = vmxor %vm2617, %vm1449
      %vm2650 = vmxor %vm2618, %vm1450
      %vm2651 = vmxor %vm2619, %vm1451
      %vm2652 = vmxor %vm2620, %vm1452
      %vm2653 = vmxor %vm2621, %vm1453
      %vm2654 = vmxor %vm2622, %vm1454
      %vm2655 = vmxor %vm2623, %vm1455
      %vm2656 = vmxor %vm2624, %vm1456
      %vm2657 = vmxor %vm2625, %vm1457
      %vm2658 = vmxor %vm2626, %vm1458
      %vm2659 = vmxor %vm2627, %vm1459
      %vm2660 = vmxor %vm2628, %vm1460
      %vm2661 = vmxor %vm2629, %vm1461
      %vm2662 = vmxor %vm2630, %vm1462
      %vm2663 = vmxor %vm2631, %vm1463
      %vm2664 = vmxor %vm2632, %vm1464
      %vm2665 = vmxor %vm2633, %vm1465
      %vm2666 = vmxor %vm2634, %vm1466
      %vm2667 = vmxor %vm2635, 1
      %vm2668 = vmxor %vm2636, 1
      %vm2669 = vmxor %vm2637, 1
      %vm2670 = vmxor %vm2638, 1
      %vm2671 = vmxor %vm2639, 1
      %vm2672 = vmxor %vm2640, 1
      %vm2673 = vmxor %vm2641, 1
      %vm2674 = vmxor %vm2642, 1
      %vm2675 = vmxor %vm2643, 1
      %vm2676 = vmxor %vm2644, 1
      %vm2677 = vmxor %vm2645, 1
      %vm2678 = vmxor %vm2646, 1
      %vm2679 = vmxor %vm2647, 1
      %vm2680 = vmxor %vm2648, 1
      %vm2681 = vmxor %vm2649, 1
      %vm2682 = vmxor %vm2650, 1
      %vm2683 = vmxor %vm2651, 1
      %vm2684 = vmxor %vm2652, 1
      %vm2685 = vmxor %vm2653, 1
      %vm2686 = vmxor %vm2654, 1
      %vm2687 = vmxor %vm2655, 1
      %vm2688 = vmxor %vm2656, 1
      %vm2689 = vmxor %vm2657, 1
      %vm2690 = vmxor %vm2658, 1
      %vm2691 = vmxor %vm2659, 1
      %vm2692 = vmxor %vm2660, 1
      %vm2693 = vmxor %vm2661, 1
      %vm2694 = vmxor %vm2662, 1
      %vm2695 = vmxor %vm2663, 1
      %vm2696 = vmxor %vm2664, 1
      %vm2697 = vmxor %vm2665, 1
      %vm2698 = vmxor %vm2666, 1
      %v2699 = vsel %vm2667, %v643, 0.0
      %v2700 = vsel %vm2668, %v644, 0.0
      %v2701 = vsel %vm2669, %v647, 0.0
      %v2702 = vsel %vm2670, %v648, 0.0
      %v2703 = vsel %vm2671, %v651, 0.0
      %v2704 = vsel %vm2672, %v652, 0.0
      %v2705 = vsel %vm2673, %v655, 0.0
      %v2706 = vsel %vm2674, %v656, 0.0
      %v2707 = vsel %vm2675, %v659, 0.0
      %v2708 = vsel %vm2676, %v660, 0.0
      %v2709 = vsel %vm2677, %v663, 0.0
      %v2710 = vsel %vm2678, %v664, 0.0
      %v2711 = vsel %vm2679, %v667, 0.0
      %v2712 = vsel %vm2680, %v668, 0.0
      %v2713 = vsel %vm2681, %v671, 0.0
      %v2714 = vsel %vm2682, %v672, 0.0
      %v2715 = vsel %vm2683, %v675, 0.0
      %v2716 = vsel %vm2684, %v676, 0.0
      %v2717 = vsel %vm2685, %v679, 0.0
      %v2718 = vsel %vm2686, %v680, 0.0
      %v2719 = vsel %vm2687, %v683, 0.0
      %v2720 = vsel %vm2688, %v684, 0.0
      %v2721 = vsel %vm2689, %v687, 0.0
      %v2722 = vsel %vm2690, %v688, 0.0
      %v2723 = vsel %vm2691, %v691, 0.0
      %v2724 = vsel %vm2692, %v692, 0.0
      %v2725 = vsel %vm2693, %v695, 0.0
      %v2726 = vsel %vm2694, %v696, 0.0
      %v2727 = vsel %vm2695, %v699, 0.0
      %v2728 = vsel %vm2696, %v700, 0.0
      %v2729 = vsel %vm2697, %v703, 0.0
      %v2730 = vsel %vm2698, %v704, 0.0
      %v2763 = vrot.slane %v2699, 1
      %v2764 = vrot.slane %v2700, 1
      %v2765 = vsel %vm750, %v2763, %v2764
      %v2766 = vrot.slane %v2701, 1
      %v2767 = vrot.slane %v2702, 1
      %v2768 = vsel %vm750, %v2766, %v2767
      %v2769 = vrot.slane %v2703, 1
      %v2770 = vrot.slane %v2704, 1
      %v2771 = vsel %vm750, %v2769, %v2770
      %v2772 = vrot.slane %v2705, 1
      %v2773 = vrot.slane %v2706, 1
      %v2774 = vsel %vm750, %v2772, %v2773
      %v2775 = vrot.slane %v2707, 1
      %v2776 = vrot.slane %v2708, 1
      %v2777 = vsel %vm750, %v2775, %v2776
      %v2778 = vrot.slane %v2709, 1
      %v2779 = vrot.slane %v2710, 1
      %v2780 = vsel %vm750, %v2778, %v2779
      %v2781 = vrot.slane %v2711, 1
      %v2782 = vrot.slane %v2712, 1
      %v2783 = vsel %vm750, %v2781, %v2782
      %v2784 = vrot.slane %v2713, 1
      %v2785 = vrot.slane %v2714, 1
      %v2786 = vsel %vm750, %v2784, %v2785
      %v2787 = vrot.slane %v2715, 1
      %v2788 = vrot.slane %v2716, 1
      %v2789 = vsel %vm750, %v2787, %v2788
      %v2790 = vrot.slane %v2717, 1
      %v2791 = vrot.slane %v2718, 1
      %v2792 = vsel %vm750, %v2790, %v2791
      %v2793 = vrot.slane %v2719, 1
      %v2794 = vrot.slane %v2720, 1
      %v2795 = vsel %vm750, %v2793, %v2794
      %v2796 = vrot.slane %v2721, 1
      %v2797 = vrot.slane %v2722, 1
      %v2798 = vsel %vm750, %v2796, %v2797
      %v2799 = vrot.slane %v2723, 1
      %v2800 = vrot.slane %v2724, 1
      %v2801 = vsel %vm750, %v2799, %v2800
      %v2802 = vrot.slane %v2725, 1
      %v2803 = vrot.slane %v2726, 1
      %v2804 = vsel %vm750, %v2802, %v2803
      %v2805 = vrot.slane %v2727, 1
      %v2806 = vrot.slane %v2728, 1
      %v2807 = vsel %vm750, %v2805, %v2806
      %v2808 = vrot.slane %v2729, 1
      %v2809 = vrot.slane %v2730, 1
      %v2810 = vsel %vm750, %v2808, %v2809
      %v2859 = vadd.f32 %v2459, %v2763
      %v2860 = vadd.f32 %v2460, %v2765
      %v2861 = vadd.f32 %v2461, %v2764
      %v2862 = vadd.f32 %v2462, %v2766
      %v2863 = vadd.f32 %v2463, %v2768
      %v2864 = vadd.f32 %v2464, %v2767
      %v2865 = vadd.f32 %v2465, %v2769
      %v2866 = vadd.f32 %v2466, %v2771
      %v2867 = vadd.f32 %v2467, %v2770
      %v2868 = vadd.f32 %v2468, %v2772
      %v2869 = vadd.f32 %v2469, %v2774
      %v2870 = vadd.f32 %v2470, %v2773
      %v2871 = vadd.f32 %v2471, %v2775
      %v2872 = vadd.f32 %v2472, %v2777
      %v2873 = vadd.f32 %v2473, %v2776
      %v2874 = vadd.f32 %v2474, %v2778
      %v2875 = vadd.f32 %v2475, %v2780
      %v2876 = vadd.f32 %v2476, %v2779
      %v2877 = vadd.f32 %v2477, %v2781
      %v2878 = vadd.f32 %v2478, %v2783
      %v2879 = vadd.f32 %v2479, %v2782
      %v2880 = vadd.f32 %v2480, %v2784
      %v2881 = vadd.f32 %v2481, %v2786
      %v2882 = vadd.f32 %v2482, %v2785
      %v2883 = vadd.f32 %v2483, %v2787
      %v2884 = vadd.f32 %v2484, %v2789
      %v2885 = vadd.f32 %v2485, %v2788
      %v2886 = vadd.f32 %v2486, %v2790
      %v2887 = vadd.f32 %v2487, %v2792
      %v2888 = vadd.f32 %v2488, %v2791
      %v2889 = vadd.f32 %v2489, %v2793
      %v2890 = vadd.f32 %v2490, %v2795
      %v2891 = vadd.f32 %v2491, %v2794
      %v2892 = vadd.f32 %v2492, %v2796
      %v2893 = vadd.f32 %v2493, %v2798
      %v2894 = vadd.f32 %v2494, %v2797
      %v2895 = vadd.f32 %v2495, %v2799
      %v2896 = vadd.f32 %v2496, %v2801
      %v2897 = vadd.f32 %v2497, %v2800
      %v2898 = vadd.f32 %v2498, %v2802
      %v2899 = vadd.f32 %v2499, %v2804
      %v2900 = vadd.f32 %v2500, %v2803
      %v2901 = vadd.f32 %v2501, %v2805
      %v2902 = vadd.f32 %v2502, %v2807
      %v2903 = vadd.f32 %v2503, %v2806
      %v2904 = vadd.f32 %v2504, %v2808
      %v2905 = vadd.f32 %v2505, %v2810
      %v2906 = vadd.f32 %v2506, %v2809
      %v2907 = vsel %vm2667, 1.0, 0.0
      %v2908 = vsel %vm2668, 1.0, 0.0
      %v2909 = vsel %vm2669, 1.0, 0.0
      %v2910 = vsel %vm2670, 1.0, 0.0
      %v2911 = vsel %vm2671, 1.0, 0.0
      %v2912 = vsel %vm2672, 1.0, 0.0
      %v2913 = vsel %vm2673, 1.0, 0.0
      %v2914 = vsel %vm2674, 1.0, 0.0
      %v2915 = vsel %vm2675, 1.0, 0.0
      %v2916 = vsel %vm2676, 1.0, 0.0
      %v2917 = vsel %vm2677, 1.0, 0.0
      %v2918 = vsel %vm2678, 1.0, 0.0
      %v2919 = vsel %vm2679, 1.0, 0.0
      %v2920 = vsel %vm2680, 1.0, 0.0
      %v2921 = vsel %vm2681, 1.0, 0.0
      %v2922 = vsel %vm2682, 1.0, 0.0
      %v2923 = vsel %vm2683, 1.0, 0.0
      %v2924 = vsel %vm2684, 1.0, 0.0
      %v2925 = vsel %vm2685, 1.0, 0.0
      %v2926 = vsel %vm2686, 1.0, 0.0
      %v2927 = vsel %vm2687, 1.0, 0.0
      %v2928 = vsel %vm2688, 1.0, 0.0
      %v2929 = vsel %vm2689, 1.0, 0.0
      %v2930 = vsel %vm2690, 1.0, 0.0
      %v2931 = vsel %vm2691, 1.0, 0.0
      %v2932 = vsel %vm2692, 1.0, 0.0
      %v2933 = vsel %vm2693, 1.0, 0.0
      %v2934 = vsel %vm2694, 1.0, 0.0
      %v2935 = vsel %vm2695, 1.0, 0.0
      %v2936 = vsel %vm2696, 1.0, 0.0
      %v2937 = vsel %vm2697, 1.0, 0.0
      %v2938 = vsel %vm2698, 1.0, 0.0
      %v2971 = vrot.slane %v2907, 1
      %v2972 = vrot.slane %v2908, 1
      %v2973 = vsel %vm750, %v2971, %v2972
      %v2974 = vrot.slane %v2909, 1
      %v2975 = vrot.slane %v2910, 1
      %v2976 = vsel %vm750, %v2974, %v2975
      %v2977 = vrot.slane %v2911, 1
      %v2978 = vrot.slane %v2912, 1
      %v2979 = vsel %vm750, %v2977, %v2978
      %v2980 = vrot.slane %v2913, 1
      %v2981 = vrot.slane %v2914, 1
      %v2982 = vsel %vm750, %v2980, %v2981
      %v2983 = vrot.slane %v2915, 1
      %v2984 = vrot.slane %v2916, 1
      %v2985 = vsel %vm750, %v2983, %v2984
      %v2986 = vrot.slane %v2917, 1
      %v2987 = vrot.slane %v2918, 1
      %v2988 = vsel %vm750, %v2986, %v2987
      %v2989 = vrot.slane %v2919, 1
      %v2990 = vrot.slane %v2920, 1
      %v2991 = vsel %vm750, %v2989, %v2990
      %v2992 = vrot.slane %v2921, 1
      %v2993 = vrot.slane %v2922, 1
      %v2994 = vsel %vm750, %v2992, %v2993
      %v2995 = vrot.slane %v2923, 1
      %v2996 = vrot.slane %v2924, 1
      %v2997 = vsel %vm750, %v2995, %v2996
      %v2998 = vrot.slane %v2925, 1
      %v2999 = vrot.slane %v2926, 1
      %v3000 = vsel %vm750, %v2998, %v2999
      %v3001 = vrot.slane %v2927, 1
      %v3002 = vrot.slane %v2928, 1
      %v3003 = vsel %vm750, %v3001, %v3002
      %v3004 = vrot.slane %v2929, 1
      %v3005 = vrot.slane %v2930, 1
      %v3006 = vsel %vm750, %v3004, %v3005
      %v3007 = vrot.slane %v2931, 1
      %v3008 = vrot.slane %v2932, 1
      %v3009 = vsel %vm750, %v3007, %v3008
      %v3010 = vrot.slane %v2933, 1
      %v3011 = vrot.slane %v2934, 1
      %v3012 = vsel %vm750, %v3010, %v3011
      %v3013 = vrot.slane %v2935, 1
      %v3014 = vrot.slane %v2936, 1
      %v3015 = vsel %vm750, %v3013, %v3014
      %v3016 = vrot.slane %v2937, 1
      %v3017 = vrot.slane %v2938, 1
      %v3018 = vsel %vm750, %v3016, %v3017
      %v3067 = vadd.f32 %v2555, %v2971
      %v3068 = vadd.f32 %v2556, %v2973
      %v3069 = vadd.f32 %v2557, %v2972
      %v3070 = vadd.f32 %v2558, %v2974
      %v3071 = vadd.f32 %v2559, %v2976
      %v3072 = vadd.f32 %v2560, %v2975
      %v3073 = vadd.f32 %v2561, %v2977
      %v3074 = vadd.f32 %v2562, %v2979
      %v3075 = vadd.f32 %v2563, %v2978
      %v3076 = vadd.f32 %v2564, %v2980
      %v3077 = vadd.f32 %v2565, %v2982
      %v3078 = vadd.f32 %v2566, %v2981
      %v3079 = vadd.f32 %v2567, %v2983
      %v3080 = vadd.f32 %v2568, %v2985
      %v3081 = vadd.f32 %v2569, %v2984
      %v3082 = vadd.f32 %v2570, %v2986
      %v3083 = vadd.f32 %v2571, %v2988
      %v3084 = vadd.f32 %v2572, %v2987
      %v3085 = vadd.f32 %v2573, %v2989
      %v3086 = vadd.f32 %v2574, %v2991
      %v3087 = vadd.f32 %v2575, %v2990
      %v3088 = vadd.f32 %v2576, %v2992
      %v3089 = vadd.f32 %v2577, %v2994
      %v3090 = vadd.f32 %v2578, %v2993
      %v3091 = vadd.f32 %v2579, %v2995
      %v3092 = vadd.f32 %v2580, %v2997
      %v3093 = vadd.f32 %v2581, %v2996
      %v3094 = vadd.f32 %v2582, %v2998
      %v3095 = vadd.f32 %v2583, %v3000
      %v3096 = vadd.f32 %v2584, %v2999
      %v3097 = vadd.f32 %v2585, %v3001
      %v3098 = vadd.f32 %v2586, %v3003
      %v3099 = vadd.f32 %v2587, %v3002
      %v3100 = vadd.f32 %v2588, %v3004
      %v3101 = vadd.f32 %v2589, %v3006
      %v3102 = vadd.f32 %v2590, %v3005
      %v3103 = vadd.f32 %v2591, %v3007
      %v3104 = vadd.f32 %v2592, %v3009
      %v3105 = vadd.f32 %v2593, %v3008
      %v3106 = vadd.f32 %v2594, %v3010
      %v3107 = vadd.f32 %v2595, %v3012
      %v3108 = vadd.f32 %v2596, %v3011
      %v3109 = vadd.f32 %v2597, %v3013
      %v3110 = vadd.f32 %v2598, %v3015
      %v3111 = vadd.f32 %v2599, %v3014
      %v3112 = vadd.f32 %v2600, %v3016
      %v3113 = vadd.f32 %v2601, %v3018
      %v3114 = vadd.f32 %v2602, %v3017
      %v3147 = vrot.slane %v647, 1
      %v3148 = vrot.slane %v648, 1
      %v3149 = vsel %vm750, %v3147, %v3148
      %v3150 = vrot.slane %v651, 1
      %v3151 = vrot.slane %v652, 1
      %v3152 = vsel %vm750, %v3150, %v3151
      %v3153 = vrot.slane %v655, 1
      %v3154 = vrot.slane %v656, 1
      %v3155 = vsel %vm750, %v3153, %v3154
      %v3156 = vrot.slane %v659, 1
      %v3157 = vrot.slane %v660, 1
      %v3158 = vsel %vm750, %v3156, %v3157
      %v3159 = vrot.slane %v663, 1
      %v3160 = vrot.slane %v664, 1
      %v3161 = vsel %vm750, %v3159, %v3160
      %v3162 = vrot.slane %v667, 1
      %v3163 = vrot.slane %v668, 1
      %v3164 = vsel %vm750, %v3162, %v3163
      %v3165 = vrot.slane %v671, 1
      %v3166 = vrot.slane %v672, 1
      %v3167 = vsel %vm750, %v3165, %v3166
      %v3168 = vrot.slane %v675, 1
      %v3169 = vrot.slane %v676, 1
      %v3170 = vsel %vm750, %v3168, %v3169
      %v3171 = vrot.slane %v679, 1
      %v3172 = vrot.slane %v680, 1
      %v3173 = vsel %vm750, %v3171, %v3172
      %v3174 = vrot.slane %v683, 1
      %v3175 = vrot.slane %v684, 1
      %v3176 = vsel %vm750, %v3174, %v3175
      %v3177 = vrot.slane %v687, 1
      %v3178 = vrot.slane %v688, 1
      %v3179 = vsel %vm750, %v3177, %v3178
      %v3180 = vrot.slane %v691, 1
      %v3181 = vrot.slane %v692, 1
      %v3182 = vsel %vm750, %v3180, %v3181
      %v3183 = vrot.slane %v695, 1
      %v3184 = vrot.slane %v696, 1
      %v3185 = vsel %vm750, %v3183, %v3184
      %v3186 = vrot.slane %v699, 1
      %v3187 = vrot.slane %v700, 1
      %v3188 = vsel %vm750, %v3186, %v3187
      %v3189 = vrot.slane %v703, 1
      %v3190 = vrot.slane %v704, 1
      %v3191 = vsel %vm750, %v3189, %v3190
      %v3192 = vrot.slane %v707, 1
      %v3193 = vrot.slane %v708, 1
      %v3194 = vsel %vm750, %v3192, %v3193
      %v3243 = vadd.f32 %v2859, %v3147
      %v3244 = vadd.f32 %v2860, %v3149
      %v3245 = vadd.f32 %v2861, %v3148
      %v3246 = vadd.f32 %v2862, %v3150
      %v3247 = vadd.f32 %v2863, %v3152
      %v3248 = vadd.f32 %v2864, %v3151
      %v3249 = vadd.f32 %v2865, %v3153
      %v3250 = vadd.f32 %v2866, %v3155
      %v3251 = vadd.f32 %v2867, %v3154
      %v3252 = vadd.f32 %v2868, %v3156
      %v3253 = vadd.f32 %v2869, %v3158
      %v3254 = vadd.f32 %v2870, %v3157
      %v3255 = vadd.f32 %v2871, %v3159
      %v3256 = vadd.f32 %v2872, %v3161
      %v3257 = vadd.f32 %v2873, %v3160
      %v3258 = vadd.f32 %v2874, %v3162
      %v3259 = vadd.f32 %v2875, %v3164
      %v3260 = vadd.f32 %v2876, %v3163
      %v3261 = vadd.f32 %v2877, %v3165
      %v3262 = vadd.f32 %v2878, %v3167
      %v3263 = vadd.f32 %v2879, %v3166
      %v3264 = vadd.f32 %v2880, %v3168
      %v3265 = vadd.f32 %v2881, %v3170
      %v3266 = vadd.f32 %v2882, %v3169
      %v3267 = vadd.f32 %v2883, %v3171
      %v3268 = vadd.f32 %v2884, %v3173
      %v3269 = vadd.f32 %v2885, %v3172
      %v3270 = vadd.f32 %v2886, %v3174
      %v3271 = vadd.f32 %v2887, %v3176
      %v3272 = vadd.f32 %v2888, %v3175
      %v3273 = vadd.f32 %v2889, %v3177
      %v3274 = vadd.f32 %v2890, %v3179
      %v3275 = vadd.f32 %v2891, %v3178
      %v3276 = vadd.f32 %v2892, %v3180
      %v3277 = vadd.f32 %v2893, %v3182
      %v3278 = vadd.f32 %v2894, %v3181
      %v3279 = vadd.f32 %v2895, %v3183
      %v3280 = vadd.f32 %v2896, %v3185
      %v3281 = vadd.f32 %v2897, %v3184
      %v3282 = vadd.f32 %v2898, %v3186
      %v3283 = vadd.f32 %v2899, %v3188
      %v3284 = vadd.f32 %v2900, %v3187
      %v3285 = vadd.f32 %v2901, %v3189
      %v3286 = vadd.f32 %v2902, %v3191
      %v3287 = vadd.f32 %v2903, %v3190
      %v3288 = vadd.f32 %v2904, %v3192
      %v3289 = vadd.f32 %v2905, %v3194
      %v3290 = vadd.f32 %v2906, %v3193
      %v3291 = vadd.f32 %v3067, 1.0
      %v3292 = vadd.f32 %v3068, 1.0
      %v3293 = vadd.f32 %v3069, 1.0
      %v3294 = vadd.f32 %v3070, 1.0
      %v3295 = vadd.f32 %v3071, 1.0
      %v3296 = vadd.f32 %v3072, 1.0
      %v3297 = vadd.f32 %v3073, 1.0
      %v3298 = vadd.f32 %v3074, 1.0
      %v3299 = vadd.f32 %v3075, 1.0
      %v3300 = vadd.f32 %v3076, 1.0
      %v3301 = vadd.f32 %v3077, 1.0
      %v3302 = vadd.f32 %v3078, 1.0
      %v3303 = vadd.f32 %v3079, 1.0
      %v3304 = vadd.f32 %v3080, 1.0
      %v3305 = vadd.f32 %v3081, 1.0
      %v3306 = vadd.f32 %v3082, 1.0
      %v3307 = vadd.f32 %v3083, 1.0
      %v3308 = vadd.f32 %v3084, 1.0
      %v3309 = vadd.f32 %v3085, 1.0
      %v3310 = vadd.f32 %v3086, 1.0
      %v3311 = vadd.f32 %v3087, 1.0
      %v3312 = vadd.f32 %v3088, 1.0
      %v3313 = vadd.f32 %v3089, 1.0
      %v3314 = vadd.f32 %v3090, 1.0
      %v3315 = vadd.f32 %v3091, 1.0
      %v3316 = vadd.f32 %v3092, 1.0
      %v3317 = vadd.f32 %v3093, 1.0
      %v3318 = vadd.f32 %v3094, 1.0
      %v3319 = vadd.f32 %v3095, 1.0
      %v3320 = vadd.f32 %v3096, 1.0
      %v3321 = vadd.f32 %v3097, 1.0
      %v3322 = vadd.f32 %v3098, 1.0
      %v3323 = vadd.f32 %v3099, 1.0
      %v3324 = vadd.f32 %v3100, 1.0
      %v3325 = vadd.f32 %v3101, 1.0
      %v3326 = vadd.f32 %v3102, 1.0
      %v3327 = vadd.f32 %v3103, 1.0
      %v3328 = vadd.f32 %v3104, 1.0
      %v3329 = vadd.f32 %v3105, 1.0
      %v3330 = vadd.f32 %v3106, 1.0
      %v3331 = vadd.f32 %v3107, 1.0
      %v3332 = vadd.f32 %v3108, 1.0
      %v3333 = vadd.f32 %v3109, 1.0
      %v3334 = vadd.f32 %v3110, 1.0
      %v3335 = vadd.f32 %v3111, 1.0
      %v3336 = vadd.f32 %v3112, 1.0
      %v3337 = vadd.f32 %v3113, 1.0
      %v3338 = vadd.f32 %v3114, 1.0
      %vm3339 = vcmp.gt.f32.partialorder %v579, %v1325
      %vm3340 = vcmp.gt.f32.partialorder %v580, %v1327
      %vm3341 = vcmp.gt.f32.partialorder %v583, %v1330
      %vm3342 = vcmp.gt.f32.partialorder %v584, %v1332
      %vm3343 = vcmp.gt.f32.partialorder %v587, %v1335
      %vm3344 = vcmp.gt.f32.partialorder %v588, %v1337
      %vm3345 = vcmp.gt.f32.partialorder %v591, %v1340
      %vm3346 = vcmp.gt.f32.partialorder %v592, %v1342
      %vm3347 = vcmp.gt.f32.partialorder %v595, %v1345
      %vm3348 = vcmp.gt.f32.partialorder %v596, %v1347
      %vm3349 = vcmp.gt.f32.partialorder %v599, %v1350
      %vm3350 = vcmp.gt.f32.partialorder %v600, %v1352
      %vm3351 = vcmp.gt.f32.partialorder %v603, %v1355
      %vm3352 = vcmp.gt.f32.partialorder %v604, %v1357
      %vm3353 = vcmp.gt.f32.partialorder %v607, %v1360
      %vm3354 = vcmp.gt.f32.partialorder %v608, %v1362
      %vm3355 = vcmp.gt.f32.partialorder %v611, %v1365
      %vm3356 = vcmp.gt.f32.partialorder %v612, %v1367
      %vm3357 = vcmp.gt.f32.partialorder %v615, %v1370
      %vm3358 = vcmp.gt.f32.partialorder %v616, %v1372
      %vm3359 = vcmp.gt.f32.partialorder %v619, %v1375
      %vm3360 = vcmp.gt.f32.partialorder %v620, %v1377
      %vm3361 = vcmp.gt.f32.partialorder %v623, %v1380
      %vm3362 = vcmp.gt.f32.partialorder %v624, %v1382
      %vm3363 = vcmp.gt.f32.partialorder %v627, %v1385
      %vm3364 = vcmp.gt.f32.partialorder %v628, %v1387
      %vm3365 = vcmp.gt.f32.partialorder %v631, %v1390
      %vm3366 = vcmp.gt.f32.partialorder %v632, %v1392
      %vm3367 = vcmp.gt.f32.partialorder %v635, %v1395
      %vm3368 = vcmp.gt.f32.partialorder %v636, %v1397
      %vm3369 = vcmp.gt.f32.partialorder %v639, %v1400
      %vm3370 = vcmp.gt.f32.partialorder %v640, %v1402
      %vm3371 = vmxor %vm3339, %vm1435
      %vm3372 = vmxor %vm3340, %vm1436
      %vm3373 = vmxor %vm3341, %vm1437
      %vm3374 = vmxor %vm3342, %vm1438
      %vm3375 = vmxor %vm3343, %vm1439
      %vm3376 = vmxor %vm3344, %vm1440
      %vm3377 = vmxor %vm3345, %vm1441
      %vm3378 = vmxor %vm3346, %vm1442
      %vm3379 = vmxor %vm3347, %vm1443
      %vm3380 = vmxor %vm3348, %vm1444
      %vm3381 = vmxor %vm3349, %vm1445
      %vm3382 = vmxor %vm3350, %vm1446
      %vm3383 = vmxor %vm3351, %vm1447
      %vm3384 = vmxor %vm3352, %vm1448
      %vm3385 = vmxor %vm3353, %vm1449
      %vm3386 = vmxor %vm3354, %vm1450
      %vm3387 = vmxor %vm3355, %vm1451
      %vm3388 = vmxor %vm3356, %vm1452
      %vm3389 = vmxor %vm3357, %vm1453
      %vm3390 = vmxor %vm3358, %vm1454
      %vm3391 = vmxor %vm3359, %vm1455
      %vm3392 = vmxor %vm3360, %vm1456
      %vm3393 = vmxor %vm3361, %vm1457
      %vm3394 = vmxor %vm3362, %vm1458
      %vm3395 = vmxor %vm3363, %vm1459
      %vm3396 = vmxor %vm3364, %vm1460
      %vm3397 = vmxor %vm3365, %vm1461
      %vm3398 = vmxor %vm3366, %vm1462
      %vm3399 = vmxor %vm3367, %vm1463
      %vm3400 = vmxor %vm3368, %vm1464
      %vm3401 = vmxor %vm3369, %vm1465
      %vm3402 = vmxor %vm3370, %vm1466
      %vm3403 = vmxor %vm3371, 1
      %vm3404 = vmxor %vm3372, 1
      %vm3405 = vmxor %vm3373, 1
      %vm3406 = vmxor %vm3374, 1
      %vm3407 = vmxor %vm3375, 1
      %vm3408 = vmxor %vm3376, 1
      %vm3409 = vmxor %vm3377, 1
      %vm3410 = vmxor %vm3378, 1
      %vm3411 = vmxor %vm3379, 1
      %vm3412 = vmxor %vm3380, 1
      %vm3413 = vmxor %vm3381, 1
      %vm3414 = vmxor %vm3382, 1
      %vm3415 = vmxor %vm3383, 1
      %vm3416 = vmxor %vm3384, 1
      %vm3417 = vmxor %vm3385, 1
      %vm3418 = vmxor %vm3386, 1
      %vm3419 = vmxor %vm3387, 1
      %vm3420 = vmxor %vm3388, 1
      %vm3421 = vmxor %vm3389, 1
      %vm3422 = vmxor %vm3390, 1
      %vm3423 = vmxor %vm3391, 1
      %vm3424 = vmxor %vm3392, 1
      %vm3425 = vmxor %vm3393, 1
      %vm3426 = vmxor %vm3394, 1
      %vm3427 = vmxor %vm3395, 1
      %vm3428 = vmxor %vm3396, 1
      %vm3429 = vmxor %vm3397, 1
      %vm3430 = vmxor %vm3398, 1
      %vm3431 = vmxor %vm3399, 1
      %vm3432 = vmxor %vm3400, 1
      %vm3433 = vmxor %vm3401, 1
      %vm3434 = vmxor %vm3402, 1
      %v3435 = vsel %vm3403, %v651, 0.0
      %v3436 = vsel %vm3404, %v652, 0.0
      %v3437 = vsel %vm3405, %v655, 0.0
      %v3438 = vsel %vm3406, %v656, 0.0
      %v3439 = vsel %vm3407, %v659, 0.0
      %v3440 = vsel %vm3408, %v660, 0.0
      %v3441 = vsel %vm3409, %v663, 0.0
      %v3442 = vsel %vm3410, %v664, 0.0
      %v3443 = vsel %vm3411, %v667, 0.0
      %v3444 = vsel %vm3412, %v668, 0.0
      %v3445 = vsel %vm3413, %v671, 0.0
      %v3446 = vsel %vm3414, %v672, 0.0
      %v3447 = vsel %vm3415, %v675, 0.0
      %v3448 = vsel %vm3416, %v676, 0.0
      %v3449 = vsel %vm3417, %v679, 0.0
      %v3450 = vsel %vm3418, %v680, 0.0
      %v3451 = vsel %vm3419, %v683, 0.0
      %v3452 = vsel %vm3420, %v684, 0.0
      %v3453 = vsel %vm3421, %v687, 0.0
      %v3454 = vsel %vm3422, %v688, 0.0
      %v3455 = vsel %vm3423, %v691, 0.0
      %v3456 = vsel %vm3424, %v692, 0.0
      %v3457 = vsel %vm3425, %v695, 0.0
      %v3458 = vsel %vm3426, %v696, 0.0
      %v3459 = vsel %vm3427, %v699, 0.0
      %v3460 = vsel %vm3428, %v700, 0.0
      %v3461 = vsel %vm3429, %v703, 0.0
      %v3462 = vsel %vm3430, %v704, 0.0
      %v3463 = vsel %vm3431, %v707, 0.0
      %v3464 = vsel %vm3432, %v708, 0.0
      %v3465 = vsel %vm3433, %v711, 0.0
      %v3466 = vsel %vm3434, %v712, 0.0
      %v3499 = vrot.slane %v3435, 1
      %v3500 = vrot.slane %v3436, 1
      %v3501 = vsel %vm750, %v3499, %v3500
      %v3502 = vrot.slane %v3437, 1
      %v3503 = vrot.slane %v3438, 1
      %v3504 = vsel %vm750, %v3502, %v3503
      %v3505 = vrot.slane %v3439, 1
      %v3506 = vrot.slane %v3440, 1
      %v3507 = vsel %vm750, %v3505, %v3506
      %v3508 = vrot.slane %v3441, 1
      %v3509 = vrot.slane %v3442, 1
      %v3510 = vsel %vm750, %v3508, %v3509
      %v3511 = vrot.slane %v3443, 1
      %v3512 = vrot.slane %v3444, 1
      %v3513 = vsel %vm750, %v3511, %v3512
      %v3514 = vrot.slane %v3445, 1
      %v3515 = vrot.slane %v3446, 1
      %v3516 = vsel %vm750, %v3514, %v3515
      %v3517 = vrot.slane %v3447, 1
      %v3518 = vrot.slane %v3448, 1
      %v3519 = vsel %vm750, %v3517, %v3518
      %v3520 = vrot.slane %v3449, 1
      %v3521 = vrot.slane %v3450, 1
      %v3522 = vsel %vm750, %v3520, %v3521
      %v3523 = vrot.slane %v3451, 1
      %v3524 = vrot.slane %v3452, 1
      %v3525 = vsel %vm750, %v3523, %v3524
      %v3526 = vrot.slane %v3453, 1
      %v3527 = vrot.slane %v3454, 1
      %v3528 = vsel %vm750, %v3526, %v3527
      %v3529 = vrot.slane %v3455, 1
      %v3530 = vrot.slane %v3456, 1
      %v3531 = vsel %vm750, %v3529, %v3530
      %v3532 = vrot.slane %v3457, 1
      %v3533 = vrot.slane %v3458, 1
      %v3534 = vsel %vm750, %v3532, %v3533
      %v3535 = vrot.slane %v3459, 1
      %v3536 = vrot.slane %v3460, 1
      %v3537 = vsel %vm750, %v3535, %v3536
      %v3538 = vrot.slane %v3461, 1
      %v3539 = vrot.slane %v3462, 1
      %v3540 = vsel %vm750, %v3538, %v3539
      %v3541 = vrot.slane %v3463, 1
      %v3542 = vrot.slane %v3464, 1
      %v3543 = vsel %vm750, %v3541, %v3542
      %v3544 = vrot.slane %v3465, 1
      %v3545 = vrot.slane %v3466, 1
      %v3546 = vsel %vm750, %v3544, %v3545
      %v3595 = vadd.f32 %v3243, %v3499
      %v3596 = vadd.f32 %v3244, %v3501
      %v3597 = vadd.f32 %v3245, %v3500
      %v3598 = vadd.f32 %v3246, %v3502
      %v3599 = vadd.f32 %v3247, %v3504
      %v3600 = vadd.f32 %v3248, %v3503
      %v3601 = vadd.f32 %v3249, %v3505
      %v3602 = vadd.f32 %v3250, %v3507
      %v3603 = vadd.f32 %v3251, %v3506
      %v3604 = vadd.f32 %v3252, %v3508
      %v3605 = vadd.f32 %v3253, %v3510
      %v3606 = vadd.f32 %v3254, %v3509
      %v3607 = vadd.f32 %v3255, %v3511
      %v3608 = vadd.f32 %v3256, %v3513
      %v3609 = vadd.f32 %v3257, %v3512
      %v3610 = vadd.f32 %v3258, %v3514
      %v3611 = vadd.f32 %v3259, %v3516
      %v3612 = vadd.f32 %v3260, %v3515
      %v3613 = vadd.f32 %v3261, %v3517
      %v3614 = vadd.f32 %v3262, %v3519
      %v3615 = vadd.f32 %v3263, %v3518
      %v3616 = vadd.f32 %v3264, %v3520
      %v3617 = vadd.f32 %v3265, %v3522
      %v3618 = vadd.f32 %v3266, %v3521
      %v3619 = vadd.f32 %v3267, %v3523
      %v3620 = vadd.f32 %v3268, %v3525
      %v3621 = vadd.f32 %v3269, %v3524
      %v3622 = vadd.f32 %v3270, %v3526
      %v3623 = vadd.f32 %v3271, %v3528
      %v3624 = vadd.f32 %v3272, %v3527
      %v3625 = vadd.f32 %v3273, %v3529
      %v3626 = vadd.f32 %v3274, %v3531
      %v3627 = vadd.f32 %v3275, %v3530
      %v3628 = vadd.f32 %v3276, %v3532
      %v3629 = vadd.f32 %v3277, %v3534
      %v3630 = vadd.f32 %v3278, %v3533
      %v3631 = vadd.f32 %v3279, %v3535
      %v3632 = vadd.f32 %v3280, %v3537
      %v3633 = vadd.f32 %v3281, %v3536
      %v3634 = vadd.f32 %v3282, %v3538
      %v3635 = vadd.f32 %v3283, %v3540
      %v3636 = vadd.f32 %v3284, %v3539
      %v3637 = vadd.f32 %v3285, %v3541
      %v3638 = vadd.f32 %v3286, %v3543
      %v3639 = vadd.f32 %v3287, %v3542
      %v3640 = vadd.f32 %v3288, %v3544
      %v3641 = vadd.f32 %v3289, %v3546
      %v3642 = vadd.f32 %v3290, %v3545
      %v3643 = vsel %vm3403, 1.0, 0.0
      %v3644 = vsel %vm3404, 1.0, 0.0
      %v3645 = vsel %vm3405, 1.0, 0.0
      %v3646 = vsel %vm3406, 1.0, 0.0
      %v3647 = vsel %vm3407, 1.0, 0.0
      %v3648 = vsel %vm3408, 1.0, 0.0
      %v3649 = vsel %vm3409, 1.0, 0.0
      %v3650 = vsel %vm3410, 1.0, 0.0
      %v3651 = vsel %vm3411, 1.0, 0.0
      %v3652 = vsel %vm3412, 1.0, 0.0
      %v3653 = vsel %vm3413, 1.0, 0.0
      %v3654 = vsel %vm3414, 1.0, 0.0
      %v3655 = vsel %vm3415, 1.0, 0.0
      %v3656 = vsel %vm3416, 1.0, 0.0
      %v3657 = vsel %vm3417, 1.0, 0.0
      %v3658 = vsel %vm3418, 1.0, 0.0
      %v3659 = vsel %vm3419, 1.0, 0.0
      %v3660 = vsel %vm3420, 1.0, 0.0
      %v3661 = vsel %vm3421, 1.0, 0.0
      %v3662 = vsel %vm3422, 1.0, 0.0
      %v3663 = vsel %vm3423, 1.0, 0.0
      %v3664 = vsel %vm3424, 1.0, 0.0
      %v3665 = vsel %vm3425, 1.0, 0.0
      %v3666 = vsel %vm3426, 1.0, 0.0
      %v3667 = vsel %vm3427, 1.0, 0.0
      %v3668 = vsel %vm3428, 1.0, 0.0
      %v3669 = vsel %vm3429, 1.0, 0.0
      %v3670 = vsel %vm3430, 1.0, 0.0
      %v3671 = vsel %vm3431, 1.0, 0.0
      %v3672 = vsel %vm3432, 1.0, 0.0
      %v3673 = vsel %vm3433, 1.0, 0.0
      %v3674 = vsel %vm3434, 1.0, 0.0
      %v3707 = vrot.slane %v3643, 1
      %v3708 = vrot.slane %v3644, 1
      %v3709 = vsel %vm750, %v3707, %v3708
      %v3710 = vrot.slane %v3645, 1
      %v3711 = vrot.slane %v3646, 1
      %v3712 = vsel %vm750, %v3710, %v3711
      %v3713 = vrot.slane %v3647, 1
      %v3714 = vrot.slane %v3648, 1
      %v3715 = vsel %vm750, %v3713, %v3714
      %v3716 = vrot.slane %v3649, 1
      %v3717 = vrot.slane %v3650, 1
      %v3718 = vsel %vm750, %v3716, %v3717
      %v3719 = vrot.slane %v3651, 1
      %v3720 = vrot.slane %v3652, 1
      %v3721 = vsel %vm750, %v3719, %v3720
      %v3722 = vrot.slane %v3653, 1
      %v3723 = vrot.slane %v3654, 1
      %v3724 = vsel %vm750, %v3722, %v3723
      %v3725 = vrot.slane %v3655, 1
      %v3726 = vrot.slane %v3656, 1
      %v3727 = vsel %vm750, %v3725, %v3726
      %v3728 = vrot.slane %v3657, 1
      %v3729 = vrot.slane %v3658, 1
      %v3730 = vsel %vm750, %v3728, %v3729
      %v3731 = vrot.slane %v3659, 1
      %v3732 = vrot.slane %v3660, 1
      %v3733 = vsel %vm750, %v3731, %v3732
      %v3734 = vrot.slane %v3661, 1
      %v3735 = vrot.slane %v3662, 1
      %v3736 = vsel %vm750, %v3734, %v3735
      %v3737 = vrot.slane %v3663, 1
      %v3738 = vrot.slane %v3664, 1
      %v3739 = vsel %vm750, %v3737, %v3738
      %v3740 = vrot.slane %v3665, 1
      %v3741 = vrot.slane %v3666, 1
      %v3742 = vsel %vm750, %v3740, %v3741
      %v3743 = vrot.slane %v3667, 1
      %v3744 = vrot.slane %v3668, 1
      %v3745 = vsel %vm750, %v3743, %v3744
      %v3746 = vrot.slane %v3669, 1
      %v3747 = vrot.slane %v3670, 1
      %v3748 = vsel %vm750, %v3746, %v3747
      %v3749 = vrot.slane %v3671, 1
      %v3750 = vrot.slane %v3672, 1
      %v3751 = vsel %vm750, %v3749, %v3750
      %v3752 = vrot.slane %v3673, 1
      %v3753 = vrot.slane %v3674, 1
      %v3754 = vsel %vm750, %v3752, %v3753
      %v3803 = vadd.f32 %v3291, %v3707
      %v3804 = vadd.f32 %v3292, %v3709
      %v3805 = vadd.f32 %v3293, %v3708
      %v3806 = vadd.f32 %v3294, %v3710
      %v3807 = vadd.f32 %v3295, %v3712
      %v3808 = vadd.f32 %v3296, %v3711
      %v3809 = vadd.f32 %v3297, %v3713
      %v3810 = vadd.f32 %v3298, %v3715
      %v3811 = vadd.f32 %v3299, %v3714
      %v3812 = vadd.f32 %v3300, %v3716
      %v3813 = vadd.f32 %v3301, %v3718
      %v3814 = vadd.f32 %v3302, %v3717
      %v3815 = vadd.f32 %v3303, %v3719
      %v3816 = vadd.f32 %v3304, %v3721
      %v3817 = vadd.f32 %v3305, %v3720
      %v3818 = vadd.f32 %v3306, %v3722
      %v3819 = vadd.f32 %v3307, %v3724
      %v3820 = vadd.f32 %v3308, %v3723
      %v3821 = vadd.f32 %v3309, %v3725
      %v3822 = vadd.f32 %v3310, %v3727
      %v3823 = vadd.f32 %v3311, %v3726
      %v3824 = vadd.f32 %v3312, %v3728
      %v3825 = vadd.f32 %v3313, %v3730
      %v3826 = vadd.f32 %v3314, %v3729
      %v3827 = vadd.f32 %v3315, %v3731
      %v3828 = vadd.f32 %v3316, %v3733
      %v3829 = vadd.f32 %v3317, %v3732
      %v3830 = vadd.f32 %v3318, %v3734
      %v3831 = vadd.f32 %v3319, %v3736
      %v3832 = vadd.f32 %v3320, %v3735
      %v3833 = vadd.f32 %v3321, %v3737
      %v3834 = vadd.f32 %v3322, %v3739
      %v3835 = vadd.f32 %v3323, %v3738
      %v3836 = vadd.f32 %v3324, %v3740
      %v3837 = vadd.f32 %v3325, %v3742
      %v3838 = vadd.f32 %v3326, %v3741
      %v3839 = vadd.f32 %v3327, %v3743
      %v3840 = vadd.f32 %v3328, %v3745
      %v3841 = vadd.f32 %v3329, %v3744
      %v3842 = vadd.f32 %v3330, %v3746
      %v3843 = vadd.f32 %v3331, %v3748
      %v3844 = vadd.f32 %v3332, %v3747
      %v3845 = vadd.f32 %v3333, %v3749
      %v3846 = vadd.f32 %v3334, %v3751
      %v3847 = vadd.f32 %v3335, %v3750
      %v3848 = vadd.f32 %v3336, %v3752
      %v3849 = vadd.f32 %v3337, %v3754
      %v3850 = vadd.f32 %v3338, %v3753
      %vm3851 = vcmask 1041408
      %v3852 = vrot.slane %v1226, 6
      %v3853 = vrot.slane %v1227, 6
      %v3854 = vsel %vm3851, %v3852, %v3853
      %v3855 = vrot.slane %v1228, 6
      %v3856 = vsel %vm3851, %v3853, %v3855
      %v3857 = vrot.slane %v1229, 6
      %v3858 = vrot.slane %v1230, 6
      %v3859 = vsel %vm3851, %v3857, %v3858
      %v3860 = vrot.slane %v1231, 6
      %v3861 = vsel %vm3851, %v3858, %v3860
      %v3862 = vrot.slane %v1232, 6
      %v3863 = vrot.slane %v1233, 6
      %v3864 = vsel %vm3851, %v3862, %v3863
      %v3865 = vrot.slane %v1234, 6
      %v3866 = vsel %vm3851, %v3863, %v3865
      %v3867 = vrot.slane %v1235, 6
      %v3868 = vrot.slane %v1236, 6
      %v3869 = vsel %vm3851, %v3867, %v3868
      %v3870 = vrot.slane %v1237, 6
      %v3871 = vsel %vm3851, %v3868, %v3870
      %v3872 = vrot.slane %v1238, 6
      %v3873 = vrot.slane %v1239, 6
      %v3874 = vsel %vm3851, %v3872, %v3873
      %v3875 = vrot.slane %v1240, 6
      %v3876 = vsel %vm3851, %v3873, %v3875
      %v3877 = vrot.slane %v1241, 6
      %v3878 = vrot.slane %v1242, 6
      %v3879 = vsel %vm3851, %v3877, %v3878
      %v3880 = vrot.slane %v1243, 6
      %v3881 = vsel %vm3851, %v3878, %v3880
      %v3882 = vrot.slane %v1244, 6
      %v3883 = vrot.slane %v1245, 6
      %v3884 = vsel %vm3851, %v3882, %v3883
      %v3885 = vrot.slane %v1246, 6
      %v3886 = vsel %vm3851, %v3883, %v3885
      %v3887 = vrot.slane %v1247, 6
      %v3888 = vrot.slane %v1248, 6
      %v3889 = vsel %vm3851, %v3887, %v3888
      %v3890 = vrot.slane %v1249, 6
      %v3891 = vsel %vm3851, %v3888, %v3890
      %v3892 = vrot.slane %v1250, 6
      %v3893 = vrot.slane %v1251, 6
      %v3894 = vsel %vm3851, %v3892, %v3893
      %v3895 = vrot.slane %v1252, 6
      %v3896 = vsel %vm3851, %v3893, %v3895
      %v3897 = vrot.slane %v1253, 6
      %v3898 = vrot.slane %v1254, 6
      %v3899 = vsel %vm3851, %v3897, %v3898
      %v3900 = vrot.slane %v1255, 6
      %v3901 = vsel %vm3851, %v3898, %v3900
      %v3902 = vrot.slane %v1256, 6
      %v3903 = vrot.slane %v1257, 6
      %v3904 = vsel %vm3851, %v3902, %v3903
      %v3905 = vrot.slane %v1258, 6
      %v3906 = vsel %vm3851, %v3903, %v3905
      %v3907 = vrot.slane %v1259, 6
      %v3908 = vrot.slane %v1260, 6
      %v3909 = vsel %vm3851, %v3907, %v3908
      %v3910 = vrot.slane %v1261, 6
      %v3911 = vsel %vm3851, %v3908, %v3910
      %v3912 = vrot.slane %v1262, 6
      %v3913 = vrot.slane %v1263, 6
      %v3914 = vsel %vm3851, %v3912, %v3913
      %v3915 = vrot.slane %v1264, 6
      %v3916 = vsel %vm3851, %v3913, %v3915
      %v3917 = vrot.slane %v1265, 6
      %v3918 = vrot.slane %v1266, 6
      %v3919 = vsel %vm3851, %v3917, %v3918
      %v3920 = vrot.slane %v1267, 6
      %v3921 = vsel %vm3851, %v3918, %v3920
      %v3922 = vrot.slane %v1268, 6
      %v3923 = vrot.slane %v1269, 6
      %v3924 = vsel %vm3851, %v3922, %v3923
      %v3925 = vrot.slane %v1270, 6
      %v3926 = vsel %vm3851, %v3923, %v3925
      %v3927 = vrot.slane %v1271, 6
      %v3928 = vrot.slane %v1272, 6
      %v3929 = vsel %vm3851, %v3927, %v3928
      %v3930 = vrot.slane %v1273, 6
      %v3931 = vsel %vm3851, %v3928, %v3930
      %vm3980 = vcmp.gt.f32.partialorder %v571, %v3854
      %vm3981 = vcmp.gt.f32.partialorder %v572, %v3856
      %vm3982 = vcmp.gt.f32.partialorder %v573, %v3855
      %vm3983 = vcmp.gt.f32.partialorder %v575, %v3859
      %vm3984 = vcmp.gt.f32.partialorder %v576, %v3861
      %vm3985 = vcmp.gt.f32.partialorder %v577, %v3860
      %vm3986 = vcmp.gt.f32.partialorder %v579, %v3864
      %vm3987 = vcmp.gt.f32.partialorder %v580, %v3866
      %vm3988 = vcmp.gt.f32.partialorder %v581, %v3865
      %vm3989 = vcmp.gt.f32.partialorder %v583, %v3869
      %vm3990 = vcmp.gt.f32.partialorder %v584, %v3871
      %vm3991 = vcmp.gt.f32.partialorder %v585, %v3870
      %vm3992 = vcmp.gt.f32.partialorder %v587, %v3874
      %vm3993 = vcmp.gt.f32.partialorder %v588, %v3876
      %vm3994 = vcmp.gt.f32.partialorder %v589, %v3875
      %vm3995 = vcmp.gt.f32.partialorder %v591, %v3879
      %vm3996 = vcmp.gt.f32.partialorder %v592, %v3881
      %vm3997 = vcmp.gt.f32.partialorder %v593, %v3880
      %vm3998 = vcmp.gt.f32.partialorder %v595, %v3884
      %vm3999 = vcmp.gt.f32.partialorder %v596, %v3886
      %vm4000 = vcmp.gt.f32.partialorder %v597, %v3885
      %vm4001 = vcmp.gt.f32.partialorder %v599, %v3889
      %vm4002 = vcmp.gt.f32.partialorder %v600, %v3891
      %vm4003 = vcmp.gt.f32.partialorder %v601, %v3890
      %vm4004 = vcmp.gt.f32.partialorder %v603, %v3894
      %vm4005 = vcmp.gt.f32.partialorder %v604, %v3896
      %vm4006 = vcmp.gt.f32.partialorder %v605, %v3895
      %vm4007 = vcmp.gt.f32.partialorder %v607, %v3899
      %vm4008 = vcmp.gt.f32.partialorder %v608, %v3901
      %vm4009 = vcmp.gt.f32.partialorder %v609, %v3900
      %vm4010 = vcmp.gt.f32.partialorder %v611, %v3904
      %vm4011 = vcmp.gt.f32.partialorder %v612, %v3906
      %vm4012 = vcmp.gt.f32.partialorder %v613, %v3905
      %vm4013 = vcmp.gt.f32.partialorder %v615, %v3909
      %vm4014 = vcmp.gt.f32.partialorder %v616, %v3911
      %vm4015 = vcmp.gt.f32.partialorder %v617, %v3910
      %vm4016 = vcmp.gt.f32.partialorder %v619, %v3914
      %vm4017 = vcmp.gt.f32.partialorder %v620, %v3916
      %vm4018 = vcmp.gt.f32.partialorder %v621, %v3915
      %vm4019 = vcmp.gt.f32.partialorder %v623, %v3919
      %vm4020 = vcmp.gt.f32.partialorder %v624, %v3921
      %vm4021 = vcmp.gt.f32.partialorder %v625, %v3920
      %vm4022 = vcmp.gt.f32.partialorder %v627, %v3924
      %vm4023 = vcmp.gt.f32.partialorder %v628, %v3926
      %vm4024 = vcmp.gt.f32.partialorder %v629, %v3925
      %vm4025 = vcmp.gt.f32.partialorder %v631, %v3929
      %vm4026 = vcmp.gt.f32.partialorder %v632, %v3931
      %vm4027 = vcmp.gt.f32.partialorder %v633, %v3930
      %v4028 = vrot.slane %v1515, 7
      %v4029 = vrot.slane %v1516, 7
      %v4030 = vsel %vm1322, %v4028, %v4029
      %v4031 = vrot.slane %v1517, 7
      %v4032 = vrot.slane %v1518, 7
      %v4033 = vsel %vm1322, %v4031, %v4032
      %v4034 = vrot.slane %v1519, 7
      %v4035 = vrot.slane %v1520, 7
      %v4036 = vsel %vm1322, %v4034, %v4035
      %v4037 = vrot.slane %v1521, 7
      %v4038 = vrot.slane %v1522, 7
      %v4039 = vsel %vm1322, %v4037, %v4038
      %v4040 = vrot.slane %v1523, 7
      %v4041 = vrot.slane %v1524, 7
      %v4042 = vsel %vm1322, %v4040, %v4041
      %v4043 = vrot.slane %v1525, 7
      %v4044 = vrot.slane %v1526, 7
      %v4045 = vsel %vm1322, %v4043, %v4044
      %v4046 = vrot.slane %v1527, 7
      %v4047 = vrot.slane %v1528, 7
      %v4048 = vsel %vm1322, %v4046, %v4047
      %v4049 = vrot.slane %v1529, 7
      %v4050 = vrot.slane %v1530, 7
      %v4051 = vsel %vm1322, %v4049, %v4050
      %v4052 = vrot.slane %v1531, 7
      %v4053 = vrot.slane %v1532, 7
      %v4054 = vsel %vm1322, %v4052, %v4053
      %v4055 = vrot.slane %v1533, 7
      %v4056 = vrot.slane %v1534, 7
      %v4057 = vsel %vm1322, %v4055, %v4056
      %v4058 = vrot.slane %v1535, 7
      %v4059 = vrot.slane %v1536, 7
      %v4060 = vsel %vm1322, %v4058, %v4059
      %v4061 = vrot.slane %v1537, 7
      %v4062 = vrot.slane %v1538, 7
      %v4063 = vsel %vm1322, %v4061, %v4062
      %v4064 = vrot.slane %v1539, 7
      %v4065 = vrot.slane %v1540, 7
      %v4066 = vsel %vm1322, %v4064, %v4065
      %v4067 = vrot.slane %v1541, 7
      %v4068 = vrot.slane %v1542, 7
      %v4069 = vsel %vm1322, %v4067, %v4068
      %v4070 = vrot.slane %v1543, 7
      %v4071 = vrot.slane %v1544, 7
      %v4072 = vsel %vm1322, %v4070, %v4071
      %v4073 = vrot.slane %v1545, 7
      %v4074 = vrot.slane %v1546, 7
      %v4075 = vsel %vm1322, %v4073, %v4074
      %vm4076 = vcmp.ne.s32.totalorder %v4028, 0
      %vm4077 = vcmp.ne.s32.totalorder %v4030, 0
      %vm4078 = vcmp.ne.s32.totalorder %v4029, 0
      %vm4079 = vcmp.ne.s32.totalorder %v4031, 0
      %vm4080 = vcmp.ne.s32.totalorder %v4033, 0
      %vm4081 = vcmp.ne.s32.totalorder %v4032, 0
      %vm4082 = vcmp.ne.s32.totalorder %v4034, 0
      %vm4083 = vcmp.ne.s32.totalorder %v4036, 0
      %vm4084 = vcmp.ne.s32.totalorder %v4035, 0
      %vm4085 = vcmp.ne.s32.totalorder %v4037, 0
      %vm4086 = vcmp.ne.s32.totalorder %v4039, 0
      %vm4087 = vcmp.ne.s32.totalorder %v4038, 0
      %vm4088 = vcmp.ne.s32.totalorder %v4040, 0
      %vm4089 = vcmp.ne.s32.totalorder %v4042, 0
      %vm4090 = vcmp.ne.s32.totalorder %v4041, 0
      %vm4091 = vcmp.ne.s32.totalorder %v4043, 0
      %vm4092 = vcmp.ne.s32.totalorder %v4045, 0
      %vm4093 = vcmp.ne.s32.totalorder %v4044, 0
      %vm4094 = vcmp.ne.s32.totalorder %v4046, 0
      %vm4095 = vcmp.ne.s32.totalorder %v4048, 0
      %vm4096 = vcmp.ne.s32.totalorder %v4047, 0
      %vm4097 = vcmp.ne.s32.totalorder %v4049, 0
      %vm4098 = vcmp.ne.s32.totalorder %v4051, 0
      %vm4099 = vcmp.ne.s32.totalorder %v4050, 0
      %vm4100 = vcmp.ne.s32.totalorder %v4052, 0
      %vm4101 = vcmp.ne.s32.totalorder %v4054, 0
      %vm4102 = vcmp.ne.s32.totalorder %v4053, 0
      %vm4103 = vcmp.ne.s32.totalorder %v4055, 0
      %vm4104 = vcmp.ne.s32.totalorder %v4057, 0
      %vm4105 = vcmp.ne.s32.totalorder %v4056, 0
      %vm4106 = vcmp.ne.s32.totalorder %v4058, 0
      %vm4107 = vcmp.ne.s32.totalorder %v4060, 0
      %vm4108 = vcmp.ne.s32.totalorder %v4059, 0
      %vm4109 = vcmp.ne.s32.totalorder %v4061, 0
      %vm4110 = vcmp.ne.s32.totalorder %v4063, 0
      %vm4111 = vcmp.ne.s32.totalorder %v4062, 0
      %vm4112 = vcmp.ne.s32.totalorder %v4064, 0
      %vm4113 = vcmp.ne.s32.totalorder %v4066, 0
      %vm4114 = vcmp.ne.s32.totalorder %v4065, 0
      %vm4115 = vcmp.ne.s32.totalorder %v4067, 0
      %vm4116 = vcmp.ne.s32.totalorder %v4069, 0
      %vm4117 = vcmp.ne.s32.totalorder %v4068, 0
      %vm4118 = vcmp.ne.s32.totalorder %v4070, 0
      %vm4119 = vcmp.ne.s32.totalorder %v4072, 0
      %vm4120 = vcmp.ne.s32.totalorder %v4071, 0
      %vm4121 = vcmp.ne.s32.totalorder %v4073, 0
      %vm4122 = vcmp.ne.s32.totalorder %v4075, 0
      %vm4123 = vcmp.ne.s32.totalorder %v4074, 0
      %vm4124 = vmxor %vm3980, %vm4076
      %vm4125 = vmxor %vm3981, %vm4077
      %vm4126 = vmxor %vm3982, %vm4078
      %vm4127 = vmxor %vm3983, %vm4079
      %vm4128 = vmxor %vm3984, %vm4080
      %vm4129 = vmxor %vm3985, %vm4081
      %vm4130 = vmxor %vm3986, %vm4082
      %vm4131 = vmxor %vm3987, %vm4083
      %vm4132 = vmxor %vm3988, %vm4084
      %vm4133 = vmxor %vm3989, %vm4085
      %vm4134 = vmxor %vm3990, %vm4086
      %vm4135 = vmxor %vm3991, %vm4087
      %vm4136 = vmxor %vm3992, %vm4088
      %vm4137 = vmxor %vm3993, %vm4089
      %vm4138 = vmxor %vm3994, %vm4090
      %vm4139 = vmxor %vm3995, %vm4091
      %vm4140 = vmxor %vm3996, %vm4092
      %vm4141 = vmxor %vm3997, %vm4093
      %vm4142 = vmxor %vm3998, %vm4094
      %vm4143 = vmxor %vm3999, %vm4095
      %vm4144 = vmxor %vm4000, %vm4096
      %vm4145 = vmxor %vm4001, %vm4097
      %vm4146 = vmxor %vm4002, %vm4098
      %vm4147 = vmxor %vm4003, %vm4099
      %vm4148 = vmxor %vm4004, %vm4100
      %vm4149 = vmxor %vm4005, %vm4101
      %vm4150 = vmxor %vm4006, %vm4102
      %vm4151 = vmxor %vm4007, %vm4103
      %vm4152 = vmxor %vm4008, %vm4104
      %vm4153 = vmxor %vm4009, %vm4105
      %vm4154 = vmxor %vm4010, %vm4106
      %vm4155 = vmxor %vm4011, %vm4107
      %vm4156 = vmxor %vm4012, %vm4108
      %vm4157 = vmxor %vm4013, %vm4109
      %vm4158 = vmxor %vm4014, %vm4110
      %vm4159 = vmxor %vm4015, %vm4111
      %vm4160 = vmxor %vm4016, %vm4112
      %vm4161 = vmxor %vm4017, %vm4113
      %vm4162 = vmxor %vm4018, %vm4114
      %vm4163 = vmxor %vm4019, %vm4115
      %vm4164 = vmxor %vm4020, %vm4116
      %vm4165 = vmxor %vm4021, %vm4117
      %vm4166 = vmxor %vm4022, %vm4118
      %vm4167 = vmxor %vm4023, %vm4119
      %vm4168 = vmxor %vm4024, %vm4120
      %vm4169 = vmxor %vm4025, %vm4121
      %vm4170 = vmxor %vm4026, %vm4122
      %vm4171 = vmxor %vm4027, %vm4123
      %vm4172 = vmxor %vm4124, 1
      %vm4173 = vmxor %vm4125, 1
      %vm4174 = vmxor %vm4126, 1
      %vm4175 = vmxor %vm4127, 1
      %vm4176 = vmxor %vm4128, 1
      %vm4177 = vmxor %vm4129, 1
      %vm4178 = vmxor %vm4130, 1
      %vm4179 = vmxor %vm4131, 1
      %vm4180 = vmxor %vm4132, 1
      %vm4181 = vmxor %vm4133, 1
      %vm4182 = vmxor %vm4134, 1
      %vm4183 = vmxor %vm4135, 1
      %vm4184 = vmxor %vm4136, 1
      %vm4185 = vmxor %vm4137, 1
      %vm4186 = vmxor %vm4138, 1
      %vm4187 = vmxor %vm4139, 1
      %vm4188 = vmxor %vm4140, 1
      %vm4189 = vmxor %vm4141, 1
      %vm4190 = vmxor %vm4142, 1
      %vm4191 = vmxor %vm4143, 1
      %vm4192 = vmxor %vm4144, 1
      %vm4193 = vmxor %vm4145, 1
      %vm4194 = vmxor %vm4146, 1
      %vm4195 = vmxor %vm4147, 1
      %vm4196 = vmxor %vm4148, 1
      %vm4197 = vmxor %vm4149, 1
      %vm4198 = vmxor %vm4150, 1
      %vm4199 = vmxor %vm4151, 1
      %vm4200 = vmxor %vm4152, 1
      %vm4201 = vmxor %vm4153, 1
      %vm4202 = vmxor %vm4154, 1
      %vm4203 = vmxor %vm4155, 1
      %vm4204 = vmxor %vm4156, 1
      %vm4205 = vmxor %vm4157, 1
      %vm4206 = vmxor %vm4158, 1
      %vm4207 = vmxor %vm4159, 1
      %vm4208 = vmxor %vm4160, 1
      %vm4209 = vmxor %vm4161, 1
      %vm4210 = vmxor %vm4162, 1
      %vm4211 = vmxor %vm4163, 1
      %vm4212 = vmxor %vm4164, 1
      %vm4213 = vmxor %vm4165, 1
      %vm4214 = vmxor %vm4166, 1
      %vm4215 = vmxor %vm4167, 1
      %vm4216 = vmxor %vm4168, 1
      %vm4217 = vmxor %vm4169, 1
      %vm4218 = vmxor %vm4170, 1
      %vm4219 = vmxor %vm4171, 1
      %v4220 = vsel %vm4172, %v643, 0.0
      %v4221 = vsel %vm4173, %v644, 0.0
      %v4222 = vsel %vm4174, %v645, 0.0
      %v4223 = vsel %vm4175, %v647, 0.0
      %v4224 = vsel %vm4176, %v648, 0.0
      %v4225 = vsel %vm4177, %v649, 0.0
      %v4226 = vsel %vm4178, %v651, 0.0
      %v4227 = vsel %vm4179, %v652, 0.0
      %v4228 = vsel %vm4180, %v653, 0.0
      %v4229 = vsel %vm4181, %v655, 0.0
      %v4230 = vsel %vm4182, %v656, 0.0
      %v4231 = vsel %vm4183, %v657, 0.0
      %v4232 = vsel %vm4184, %v659, 0.0
      %v4233 = vsel %vm4185, %v660, 0.0
      %v4234 = vsel %vm4186, %v661, 0.0
      %v4235 = vsel %vm4187, %v663, 0.0
      %v4236 = vsel %vm4188, %v664, 0.0
      %v4237 = vsel %vm4189, %v665, 0.0
      %v4238 = vsel %vm4190, %v667, 0.0
      %v4239 = vsel %vm4191, %v668, 0.0
      %v4240 = vsel %vm4192, %v669, 0.0
      %v4241 = vsel %vm4193, %v671, 0.0
      %v4242 = vsel %vm4194, %v672, 0.0
      %v4243 = vsel %vm4195, %v673, 0.0
      %v4244 = vsel %vm4196, %v675, 0.0
      %v4245 = vsel %vm4197, %v676, 0.0
      %v4246 = vsel %vm4198, %v677, 0.0
      %v4247 = vsel %vm4199, %v679, 0.0
      %v4248 = vsel %vm4200, %v680, 0.0
      %v4249 = vsel %vm4201, %v681, 0.0
      %v4250 = vsel %vm4202, %v683, 0.0
      %v4251 = vsel %vm4203, %v684, 0.0
      %v4252 = vsel %vm4204, %v685, 0.0
      %v4253 = vsel %vm4205, %v687, 0.0
      %v4254 = vsel %vm4206, %v688, 0.0
      %v4255 = vsel %vm4207, %v689, 0.0
      %v4256 = vsel %vm4208, %v691, 0.0
      %v4257 = vsel %vm4209, %v692, 0.0
      %v4258 = vsel %vm4210, %v693, 0.0
      %v4259 = vsel %vm4211, %v695, 0.0
      %v4260 = vsel %vm4212, %v696, 0.0
      %v4261 = vsel %vm4213, %v697, 0.0
      %v4262 = vsel %vm4214, %v699, 0.0
      %v4263 = vsel %vm4215, %v700, 0.0
      %v4264 = vsel %vm4216, %v701, 0.0
      %v4265 = vsel %vm4217, %v703, 0.0
      %v4266 = vsel %vm4218, %v704, 0.0
      %v4267 = vsel %vm4219, %v705, 0.0
      %v4316 = vrot.slane %v4220, 2
      %v4317 = vrot.slane %v4221, 2
      %v4318 = vsel %vm931, %v4316, %v4317
      %v4319 = vrot.slane %v4222, 2
      %v4320 = vsel %vm931, %v4317, %v4319
      %v4321 = vrot.slane %v4223, 2
      %v4322 = vrot.slane %v4224, 2
      %v4323 = vsel %vm931, %v4321, %v4322
      %v4324 = vrot.slane %v4225, 2
      %v4325 = vsel %vm931, %v4322, %v4324
      %v4326 = vrot.slane %v4226, 2
      %v4327 = vrot.slane %v4227, 2
      %v4328 = vsel %vm931, %v4326, %v4327
      %v4329 = vrot.slane %v4228, 2
      %v4330 = vsel %vm931, %v4327, %v4329
      %v4331 = vrot.slane %v4229, 2
      %v4332 = vrot.slane %v4230, 2
      %v4333 = vsel %vm931, %v4331, %v4332
      %v4334 = vrot.slane %v4231, 2
      %v4335 = vsel %vm931, %v4332, %v4334
      %v4336 = vrot.slane %v4232, 2
      %v4337 = vrot.slane %v4233, 2
      %v4338 = vsel %vm931, %v4336, %v4337
      %v4339 = vrot.slane %v4234, 2
      %v4340 = vsel %vm931, %v4337, %v4339
      %v4341 = vrot.slane %v4235, 2
      %v4342 = vrot.slane %v4236, 2
      %v4343 = vsel %vm931, %v4341, %v4342
      %v4344 = vrot.slane %v4237, 2
      %v4345 = vsel %vm931, %v4342, %v4344
      %v4346 = vrot.slane %v4238, 2
      %v4347 = vrot.slane %v4239, 2
      %v4348 = vsel %vm931, %v4346, %v4347
      %v4349 = vrot.slane %v4240, 2
      %v4350 = vsel %vm931, %v4347, %v4349
      %v4351 = vrot.slane %v4241, 2
      %v4352 = vrot.slane %v4242, 2
      %v4353 = vsel %vm931, %v4351, %v4352
      %v4354 = vrot.slane %v4243, 2
      %v4355 = vsel %vm931, %v4352, %v4354
      %v4356 = vrot.slane %v4244, 2
      %v4357 = vrot.slane %v4245, 2
      %v4358 = vsel %vm931, %v4356, %v4357
      %v4359 = vrot.slane %v4246, 2
      %v4360 = vsel %vm931, %v4357, %v4359
      %v4361 = vrot.slane %v4247, 2
      %v4362 = vrot.slane %v4248, 2
      %v4363 = vsel %vm931, %v4361, %v4362
      %v4364 = vrot.slane %v4249, 2
      %v4365 = vsel %vm931, %v4362, %v4364
      %v4366 = vrot.slane %v4250, 2
      %v4367 = vrot.slane %v4251, 2
      %v4368 = vsel %vm931, %v4366, %v4367
      %v4369 = vrot.slane %v4252, 2
      %v4370 = vsel %vm931, %v4367, %v4369
      %v4371 = vrot.slane %v4253, 2
      %v4372 = vrot.slane %v4254, 2
      %v4373 = vsel %vm931, %v4371, %v4372
      %v4374 = vrot.slane %v4255, 2
      %v4375 = vsel %vm931, %v4372, %v4374
      %v4376 = vrot.slane %v4256, 2
      %v4377 = vrot.slane %v4257, 2
      %v4378 = vsel %vm931, %v4376, %v4377
      %v4379 = vrot.slane %v4258, 2
      %v4380 = vsel %vm931, %v4377, %v4379
      %v4381 = vrot.slane %v4259, 2
      %v4382 = vrot.slane %v4260, 2
      %v4383 = vsel %vm931, %v4381, %v4382
      %v4384 = vrot.slane %v4261, 2
      %v4385 = vsel %vm931, %v4382, %v4384
      %v4386 = vrot.slane %v4262, 2
      %v4387 = vrot.slane %v4263, 2
      %v4388 = vsel %vm931, %v4386, %v4387
      %v4389 = vrot.slane %v4264, 2
      %v4390 = vsel %vm931, %v4387, %v4389
      %v4391 = vrot.slane %v4265, 2
      %v4392 = vrot.slane %v4266, 2
      %v4393 = vsel %vm931, %v4391, %v4392
      %v4394 = vrot.slane %v4267, 2
      %v4395 = vsel %vm931, %v4392, %v4394
      %v4444 = vadd.f32 %v3595, %v4316
      %v4445 = vadd.f32 %v3596, %v4318
      %v4446 = vadd.f32 %v3597, %v4320
      %v4447 = vadd.f32 %v3598, %v4321
      %v4448 = vadd.f32 %v3599, %v4323
      %v4449 = vadd.f32 %v3600, %v4325
      %v4450 = vadd.f32 %v3601, %v4326
      %v4451 = vadd.f32 %v3602, %v4328
      %v4452 = vadd.f32 %v3603, %v4330
      %v4453 = vadd.f32 %v3604, %v4331
      %v4454 = vadd.f32 %v3605, %v4333
      %v4455 = vadd.f32 %v3606, %v4335
      %v4456 = vadd.f32 %v3607, %v4336
      %v4457 = vadd.f32 %v3608, %v4338
      %v4458 = vadd.f32 %v3609, %v4340
      %v4459 = vadd.f32 %v3610, %v4341
      %v4460 = vadd.f32 %v3611, %v4343
      %v4461 = vadd.f32 %v3612, %v4345
      %v4462 = vadd.f32 %v3613, %v4346
      %v4463 = vadd.f32 %v3614, %v4348
      %v4464 = vadd.f32 %v3615, %v4350
      %v4465 = vadd.f32 %v3616, %v4351
      %v4466 = vadd.f32 %v3617, %v4353
      %v4467 = vadd.f32 %v3618, %v4355
      %v4468 = vadd.f32 %v3619, %v4356
      %v4469 = vadd.f32 %v3620, %v4358
      %v4470 = vadd.f32 %v3621, %v4360
      %v4471 = vadd.f32 %v3622, %v4361
      %v4472 = vadd.f32 %v3623, %v4363
      %v4473 = vadd.f32 %v3624, %v4365
      %v4474 = vadd.f32 %v3625, %v4366
      %v4475 = vadd.f32 %v3626, %v4368
      %v4476 = vadd.f32 %v3627, %v4370
      %v4477 = vadd.f32 %v3628, %v4371
      %v4478 = vadd.f32 %v3629, %v4373
      %v4479 = vadd.f32 %v3630, %v4375
      %v4480 = vadd.f32 %v3631, %v4376
      %v4481 = vadd.f32 %v3632, %v4378
      %v4482 = vadd.f32 %v3633, %v4380
      %v4483 = vadd.f32 %v3634, %v4381
      %v4484 = vadd.f32 %v3635, %v4383
      %v4485 = vadd.f32 %v3636, %v4385
      %v4486 = vadd.f32 %v3637, %v4386
      %v4487 = vadd.f32 %v3638, %v4388
      %v4488 = vadd.f32 %v3639, %v4390
      %v4489 = vadd.f32 %v3640, %v4391
      %v4490 = vadd.f32 %v3641, %v4393
      %v4491 = vadd.f32 %v3642, %v4395
      %v4492 = vsel %vm4172, 1.0, 0.0
      %v4493 = vsel %vm4173, 1.0, 0.0
      %v4494 = vsel %vm4174, 1.0, 0.0
      %v4495 = vsel %vm4175, 1.0, 0.0
      %v4496 = vsel %vm4176, 1.0, 0.0
      %v4497 = vsel %vm4177, 1.0, 0.0
      %v4498 = vsel %vm4178, 1.0, 0.0
      %v4499 = vsel %vm4179, 1.0, 0.0
      %v4500 = vsel %vm4180, 1.0, 0.0
      %v4501 = vsel %vm4181, 1.0, 0.0
      %v4502 = vsel %vm4182, 1.0, 0.0
      %v4503 = vsel %vm4183, 1.0, 0.0
      %v4504 = vsel %vm4184, 1.0, 0.0
      %v4505 = vsel %vm4185, 1.0, 0.0
      %v4506 = vsel %vm4186, 1.0, 0.0
      %v4507 = vsel %vm4187, 1.0, 0.0
      %v4508 = vsel %vm4188, 1.0, 0.0
      %v4509 = vsel %vm4189, 1.0, 0.0
      %v4510 = vsel %vm4190, 1.0, 0.0
      %v4511 = vsel %vm4191, 1.0, 0.0
      %v4512 = vsel %vm4192, 1.0, 0.0
      %v4513 = vsel %vm4193, 1.0, 0.0
      %v4514 = vsel %vm4194, 1.0, 0.0
      %v4515 = vsel %vm4195, 1.0, 0.0
      %v4516 = vsel %vm4196, 1.0, 0.0
      %v4517 = vsel %vm4197, 1.0, 0.0
      %v4518 = vsel %vm4198, 1.0, 0.0
      %v4519 = vsel %vm4199, 1.0, 0.0
      %v4520 = vsel %vm4200, 1.0, 0.0
      %v4521 = vsel %vm4201, 1.0, 0.0
      %v4522 = vsel %vm4202, 1.0, 0.0
      %v4523 = vsel %vm4203, 1.0, 0.0
      %v4524 = vsel %vm4204, 1.0, 0.0
      %v4525 = vsel %vm4205, 1.0, 0.0
      %v4526 = vsel %vm4206, 1.0, 0.0
      %v4527 = vsel %vm4207, 1.0, 0.0
      %v4528 = vsel %vm4208, 1.0, 0.0
      %v4529 = vsel %vm4209, 1.0, 0.0
      %v4530 = vsel %vm4210, 1.0, 0.0
      %v4531 = vsel %vm4211, 1.0, 0.0
      %v4532 = vsel %vm4212, 1.0, 0.0
      %v4533 = vsel %vm4213, 1.0, 0.0
      %v4534 = vsel %vm4214, 1.0, 0.0
      %v4535 = vsel %vm4215, 1.0, 0.0
      %v4536 = vsel %vm4216, 1.0, 0.0
      %v4537 = vsel %vm4217, 1.0, 0.0
      %v4538 = vsel %vm4218, 1.0, 0.0
      %v4539 = vsel %vm4219, 1.0, 0.0
      %v4588 = vrot.slane %v4492, 2
      %v4589 = vrot.slane %v4493, 2
      %v4590 = vsel %vm931, %v4588, %v4589
      %v4591 = vrot.slane %v4494, 2
      %v4592 = vsel %vm931, %v4589, %v4591
      %v4593 = vrot.slane %v4495, 2
      %v4594 = vrot.slane %v4496, 2
      %v4595 = vsel %vm931, %v4593, %v4594
      %v4596 = vrot.slane %v4497, 2
      %v4597 = vsel %vm931, %v4594, %v4596
      %v4598 = vrot.slane %v4498, 2
      %v4599 = vrot.slane %v4499, 2
      %v4600 = vsel %vm931, %v4598, %v4599
      %v4601 = vrot.slane %v4500, 2
      %v4602 = vsel %vm931, %v4599, %v4601
      %v4603 = vrot.slane %v4501, 2
      %v4604 = vrot.slane %v4502, 2
      %v4605 = vsel %vm931, %v4603, %v4604
      %v4606 = vrot.slane %v4503, 2
      %v4607 = vsel %vm931, %v4604, %v4606
      %v4608 = vrot.slane %v4504, 2
      %v4609 = vrot.slane %v4505, 2
      %v4610 = vsel %vm931, %v4608, %v4609
      %v4611 = vrot.slane %v4506, 2
      %v4612 = vsel %vm931, %v4609, %v4611
      %v4613 = vrot.slane %v4507, 2
      %v4614 = vrot.slane %v4508, 2
      %v4615 = vsel %vm931, %v4613, %v4614
      %v4616 = vrot.slane %v4509, 2
      %v4617 = vsel %vm931, %v4614, %v4616
      %v4618 = vrot.slane %v4510, 2
      %v4619 = vrot.slane %v4511, 2
      %v4620 = vsel %vm931, %v4618, %v4619
      %v4621 = vrot.slane %v4512, 2
      %v4622 = vsel %vm931, %v4619, %v4621
      %v4623 = vrot.slane %v4513, 2
      %v4624 = vrot.slane %v4514, 2
      %v4625 = vsel %vm931, %v4623, %v4624
      %v4626 = vrot.slane %v4515, 2
      %v4627 = vsel %vm931, %v4624, %v4626
      %v4628 = vrot.slane %v4516, 2
      %v4629 = vrot.slane %v4517, 2
      %v4630 = vsel %vm931, %v4628, %v4629
      %v4631 = vrot.slane %v4518, 2
      %v4632 = vsel %vm931, %v4629, %v4631
      %v4633 = vrot.slane %v4519, 2
      %v4634 = vrot.slane %v4520, 2
      %v4635 = vsel %vm931, %v4633, %v4634
      %v4636 = vrot.slane %v4521, 2
      %v4637 = vsel %vm931, %v4634, %v4636
      %v4638 = vrot.slane %v4522, 2
      %v4639 = vrot.slane %v4523, 2
      %v4640 = vsel %vm931, %v4638, %v4639
      %v4641 = vrot.slane %v4524, 2
      %v4642 = vsel %vm931, %v4639, %v4641
      %v4643 = vrot.slane %v4525, 2
      %v4644 = vrot.slane %v4526, 2
      %v4645 = vsel %vm931, %v4643, %v4644
      %v4646 = vrot.slane %v4527, 2
      %v4647 = vsel %vm931, %v4644, %v4646
      %v4648 = vrot.slane %v4528, 2
      %v4649 = vrot.slane %v4529, 2
      %v4650 = vsel %vm931, %v4648, %v4649
      %v4651 = vrot.slane %v4530, 2
      %v4652 = vsel %vm931, %v4649, %v4651
      %v4653 = vrot.slane %v4531, 2
      %v4654 = vrot.slane %v4532, 2
      %v4655 = vsel %vm931, %v4653, %v4654
      %v4656 = vrot.slane %v4533, 2
      %v4657 = vsel %vm931, %v4654, %v4656
      %v4658 = vrot.slane %v4534, 2
      %v4659 = vrot.slane %v4535, 2
      %v4660 = vsel %vm931, %v4658, %v4659
      %v4661 = vrot.slane %v4536, 2
      %v4662 = vsel %vm931, %v4659, %v4661
      %v4663 = vrot.slane %v4537, 2
      %v4664 = vrot.slane %v4538, 2
      %v4665 = vsel %vm931, %v4663, %v4664
      %v4666 = vrot.slane %v4539, 2
      %v4667 = vsel %vm931, %v4664, %v4666
      %v4716 = vadd.f32 %v3803, %v4588
      %v4717 = vadd.f32 %v3804, %v4590
      %v4718 = vadd.f32 %v3805, %v4592
      %v4719 = vadd.f32 %v3806, %v4593
      %v4720 = vadd.f32 %v3807, %v4595
      %v4721 = vadd.f32 %v3808, %v4597
      %v4722 = vadd.f32 %v3809, %v4598
      %v4723 = vadd.f32 %v3810, %v4600
      %v4724 = vadd.f32 %v3811, %v4602
      %v4725 = vadd.f32 %v3812, %v4603
      %v4726 = vadd.f32 %v3813, %v4605
      %v4727 = vadd.f32 %v3814, %v4607
      %v4728 = vadd.f32 %v3815, %v4608
      %v4729 = vadd.f32 %v3816, %v4610
      %v4730 = vadd.f32 %v3817, %v4612
      %v4731 = vadd.f32 %v3818, %v4613
      %v4732 = vadd.f32 %v3819, %v4615
      %v4733 = vadd.f32 %v3820, %v4617
      %v4734 = vadd.f32 %v3821, %v4618
      %v4735 = vadd.f32 %v3822, %v4620
      %v4736 = vadd.f32 %v3823, %v4622
      %v4737 = vadd.f32 %v3824, %v4623
      %v4738 = vadd.f32 %v3825, %v4625
      %v4739 = vadd.f32 %v3826, %v4627
      %v4740 = vadd.f32 %v3827, %v4628
      %v4741 = vadd.f32 %v3828, %v4630
      %v4742 = vadd.f32 %v3829, %v4632
      %v4743 = vadd.f32 %v3830, %v4633
      %v4744 = vadd.f32 %v3831, %v4635
      %v4745 = vadd.f32 %v3832, %v4637
      %v4746 = vadd.f32 %v3833, %v4638
      %v4747 = vadd.f32 %v3834, %v4640
      %v4748 = vadd.f32 %v3835, %v4642
      %v4749 = vadd.f32 %v3836, %v4643
      %v4750 = vadd.f32 %v3837, %v4645
      %v4751 = vadd.f32 %v3838, %v4647
      %v4752 = vadd.f32 %v3839, %v4648
      %v4753 = vadd.f32 %v3840, %v4650
      %v4754 = vadd.f32 %v3841, %v4652
      %v4755 = vadd.f32 %v3842, %v4653
      %v4756 = vadd.f32 %v3843, %v4655
      %v4757 = vadd.f32 %v3844, %v4657
      %v4758 = vadd.f32 %v3845, %v4658
      %v4759 = vadd.f32 %v3846, %v4660
      %v4760 = vadd.f32 %v3847, %v4662
      %v4761 = vadd.f32 %v3848, %v4663
      %v4762 = vadd.f32 %v3849, %v4665
      %v4763 = vadd.f32 %v3850, %v4667
      %vm4764 = vcmp.gt.f32.partialorder %v575, %v3854
      %vm4765 = vcmp.gt.f32.partialorder %v576, %v3856
      %vm4766 = vcmp.gt.f32.partialorder %v577, %v3855
      %vm4767 = vcmp.gt.f32.partialorder %v579, %v3859
      %vm4768 = vcmp.gt.f32.partialorder %v580, %v3861
      %vm4769 = vcmp.gt.f32.partialorder %v581, %v3860
      %vm4770 = vcmp.gt.f32.partialorder %v583, %v3864
      %vm4771 = vcmp.gt.f32.partialorder %v584, %v3866
      %vm4772 = vcmp.gt.f32.partialorder %v585, %v3865
      %vm4773 = vcmp.gt.f32.partialorder %v587, %v3869
      %vm4774 = vcmp.gt.f32.partialorder %v588, %v3871
      %vm4775 = vcmp.gt.f32.partialorder %v589, %v3870
      %vm4776 = vcmp.gt.f32.partialorder %v591, %v3874
      %vm4777 = vcmp.gt.f32.partialorder %v592, %v3876
      %vm4778 = vcmp.gt.f32.partialorder %v593, %v3875
      %vm4779 = vcmp.gt.f32.partialorder %v595, %v3879
      %vm4780 = vcmp.gt.f32.partialorder %v596, %v3881
      %vm4781 = vcmp.gt.f32.partialorder %v597, %v3880
      %vm4782 = vcmp.gt.f32.partialorder %v599, %v3884
      %vm4783 = vcmp.gt.f32.partialorder %v600, %v3886
      %vm4784 = vcmp.gt.f32.partialorder %v601, %v3885
      %vm4785 = vcmp.gt.f32.partialorder %v603, %v3889
      %vm4786 = vcmp.gt.f32.partialorder %v604, %v3891
      %vm4787 = vcmp.gt.f32.partialorder %v605, %v3890
      %vm4788 = vcmp.gt.f32.partialorder %v607, %v3894
      %vm4789 = vcmp.gt.f32.partialorder %v608, %v3896
      %vm4790 = vcmp.gt.f32.partialorder %v609, %v3895
      %vm4791 = vcmp.gt.f32.partialorder %v611, %v3899
      %vm4792 = vcmp.gt.f32.partialorder %v612, %v3901
      %vm4793 = vcmp.gt.f32.partialorder %v613, %v3900
      %vm4794 = vcmp.gt.f32.partialorder %v615, %v3904
      %vm4795 = vcmp.gt.f32.partialorder %v616, %v3906
      %vm4796 = vcmp.gt.f32.partialorder %v617, %v3905
      %vm4797 = vcmp.gt.f32.partialorder %v619, %v3909
      %vm4798 = vcmp.gt.f32.partialorder %v620, %v3911
      %vm4799 = vcmp.gt.f32.partialorder %v621, %v3910
      %vm4800 = vcmp.gt.f32.partialorder %v623, %v3914
      %vm4801 = vcmp.gt.f32.partialorder %v624, %v3916
      %vm4802 = vcmp.gt.f32.partialorder %v625, %v3915
      %vm4803 = vcmp.gt.f32.partialorder %v627, %v3919
      %vm4804 = vcmp.gt.f32.partialorder %v628, %v3921
      %vm4805 = vcmp.gt.f32.partialorder %v629, %v3920
      %vm4806 = vcmp.gt.f32.partialorder %v631, %v3924
      %vm4807 = vcmp.gt.f32.partialorder %v632, %v3926
      %vm4808 = vcmp.gt.f32.partialorder %v633, %v3925
      %vm4809 = vcmp.gt.f32.partialorder %v635, %v3929
      %vm4810 = vcmp.gt.f32.partialorder %v636, %v3931
      %vm4811 = vcmp.gt.f32.partialorder %v637, %v3930
      %vm4812 = vmxor %vm4764, %vm4076
      %vm4813 = vmxor %vm4765, %vm4077
      %vm4814 = vmxor %vm4766, %vm4078
      %vm4815 = vmxor %vm4767, %vm4079
      %vm4816 = vmxor %vm4768, %vm4080
      %vm4817 = vmxor %vm4769, %vm4081
      %vm4818 = vmxor %vm4770, %vm4082
      %vm4819 = vmxor %vm4771, %vm4083
      %vm4820 = vmxor %vm4772, %vm4084
      %vm4821 = vmxor %vm4773, %vm4085
      %vm4822 = vmxor %vm4774, %vm4086
      %vm4823 = vmxor %vm4775, %vm4087
      %vm4824 = vmxor %vm4776, %vm4088
      %vm4825 = vmxor %vm4777, %vm4089
      %vm4826 = vmxor %vm4778, %vm4090
      %vm4827 = vmxor %vm4779, %vm4091
      %vm4828 = vmxor %vm4780, %vm4092
      %vm4829 = vmxor %vm4781, %vm4093
      %vm4830 = vmxor %vm4782, %vm4094
      %vm4831 = vmxor %vm4783, %vm4095
      %vm4832 = vmxor %vm4784, %vm4096
      %vm4833 = vmxor %vm4785, %vm4097
      %vm4834 = vmxor %vm4786, %vm4098
      %vm4835 = vmxor %vm4787, %vm4099
      %vm4836 = vmxor %vm4788, %vm4100
      %vm4837 = vmxor %vm4789, %vm4101
      %vm4838 = vmxor %vm4790, %vm4102
      %vm4839 = vmxor %vm4791, %vm4103
      %vm4840 = vmxor %vm4792, %vm4104
      %vm4841 = vmxor %vm4793, %vm4105
      %vm4842 = vmxor %vm4794, %vm4106
      %vm4843 = vmxor %vm4795, %vm4107
      %vm4844 = vmxor %vm4796, %vm4108
      %vm4845 = vmxor %vm4797, %vm4109
      %vm4846 = vmxor %vm4798, %vm4110
      %vm4847 = vmxor %vm4799, %vm4111
      %vm4848 = vmxor %vm4800, %vm4112
      %vm4849 = vmxor %vm4801, %vm4113
      %vm4850 = vmxor %vm4802, %vm4114
      %vm4851 = vmxor %vm4803, %vm4115
      %vm4852 = vmxor %vm4804, %vm4116
      %vm4853 = vmxor %vm4805, %vm4117
      %vm4854 = vmxor %vm4806, %vm4118
      %vm4855 = vmxor %vm4807, %vm4119
      %vm4856 = vmxor %vm4808, %vm4120
      %vm4857 = vmxor %vm4809, %vm4121
      %vm4858 = vmxor %vm4810, %vm4122
      %vm4859 = vmxor %vm4811, %vm4123
      %vm4860 = vmxor %vm4812, 1
      %vm4861 = vmxor %vm4813, 1
      %vm4862 = vmxor %vm4814, 1
      %vm4863 = vmxor %vm4815, 1
      %vm4864 = vmxor %vm4816, 1
      %vm4865 = vmxor %vm4817, 1
      %vm4866 = vmxor %vm4818, 1
      %vm4867 = vmxor %vm4819, 1
      %vm4868 = vmxor %vm4820, 1
      %vm4869 = vmxor %vm4821, 1
      %vm4870 = vmxor %vm4822, 1
      %vm4871 = vmxor %vm4823, 1
      %vm4872 = vmxor %vm4824, 1
      %vm4873 = vmxor %vm4825, 1
      %vm4874 = vmxor %vm4826, 1
      %vm4875 = vmxor %vm4827, 1
      %vm4876 = vmxor %vm4828, 1
      %vm4877 = vmxor %vm4829, 1
      %vm4878 = vmxor %vm4830, 1
      %vm4879 = vmxor %vm4831, 1
      %vm4880 = vmxor %vm4832, 1
      %vm4881 = vmxor %vm4833, 1
      %vm4882 = vmxor %vm4834, 1
      %vm4883 = vmxor %vm4835, 1
      %vm4884 = vmxor %vm4836, 1
      %vm4885 = vmxor %vm4837, 1
      %vm4886 = vmxor %vm4838, 1
      %vm4887 = vmxor %vm4839, 1
      %vm4888 = vmxor %vm4840, 1
      %vm4889 = vmxor %vm4841, 1
      %vm4890 = vmxor %vm4842, 1
      %vm4891 = vmxor %vm4843, 1
      %vm4892 = vmxor %vm4844, 1
      %vm4893 = vmxor %vm4845, 1
      %vm4894 = vmxor %vm4846, 1
      %vm4895 = vmxor %vm4847, 1
      %vm4896 = vmxor %vm4848, 1
      %vm4897 = vmxor %vm4849, 1
      %vm4898 = vmxor %vm4850, 1
      %vm4899 = vmxor %vm4851, 1
      %vm4900 = vmxor %vm4852, 1
      %vm4901 = vmxor %vm4853, 1
      %vm4902 = vmxor %vm4854, 1
      %vm4903 = vmxor %vm4855, 1
      %vm4904 = vmxor %vm4856, 1
      %vm4905 = vmxor %vm4857, 1
      %vm4906 = vmxor %vm4858, 1
      %vm4907 = vmxor %vm4859, 1
      %v4908 = vsel %vm4860, %v647, 0.0
      %v4909 = vsel %vm4861, %v648, 0.0
      %v4910 = vsel %vm4862, %v649, 0.0
      %v4911 = vsel %vm4863, %v651, 0.0
      %v4912 = vsel %vm4864, %v652, 0.0
      %v4913 = vsel %vm4865, %v653, 0.0
      %v4914 = vsel %vm4866, %v655, 0.0
      %v4915 = vsel %vm4867, %v656, 0.0
      %v4916 = vsel %vm4868, %v657, 0.0
      %v4917 = vsel %vm4869, %v659, 0.0
      %v4918 = vsel %vm4870, %v660, 0.0
      %v4919 = vsel %vm4871, %v661, 0.0
      %v4920 = vsel %vm4872, %v663, 0.0
      %v4921 = vsel %vm4873, %v664, 0.0
      %v4922 = vsel %vm4874, %v665, 0.0
      %v4923 = vsel %vm4875, %v667, 0.0
      %v4924 = vsel %vm4876, %v668, 0.0
      %v4925 = vsel %vm4877, %v669, 0.0
      %v4926 = vsel %vm4878, %v671, 0.0
      %v4927 = vsel %vm4879, %v672, 0.0
      %v4928 = vsel %vm4880, %v673, 0.0
      %v4929 = vsel %vm4881, %v675, 0.0
      %v4930 = vsel %vm4882, %v676, 0.0
      %v4931 = vsel %vm4883, %v677, 0.0
      %v4932 = vsel %vm4884, %v679, 0.0
      %v4933 = vsel %vm4885, %v680, 0.0
      %v4934 = vsel %vm4886, %v681, 0.0
      %v4935 = vsel %vm4887, %v683, 0.0
      %v4936 = vsel %vm4888, %v684, 0.0
      %v4937 = vsel %vm4889, %v685, 0.0
      %v4938 = vsel %vm4890, %v687, 0.0
      %v4939 = vsel %vm4891, %v688, 0.0
      %v4940 = vsel %vm4892, %v689, 0.0
      %v4941 = vsel %vm4893, %v691, 0.0
      %v4942 = vsel %vm4894, %v692, 0.0
      %v4943 = vsel %vm4895, %v693, 0.0
      %v4944 = vsel %vm4896, %v695, 0.0
      %v4945 = vsel %vm4897, %v696, 0.0
      %v4946 = vsel %vm4898, %v697, 0.0
      %v4947 = vsel %vm4899, %v699, 0.0
      %v4948 = vsel %vm4900, %v700, 0.0
      %v4949 = vsel %vm4901, %v701, 0.0
      %v4950 = vsel %vm4902, %v703, 0.0
      %v4951 = vsel %vm4903, %v704, 0.0
      %v4952 = vsel %vm4904, %v705, 0.0
      %v4953 = vsel %vm4905, %v707, 0.0
      %v4954 = vsel %vm4906, %v708, 0.0
      %v4955 = vsel %vm4907, %v709, 0.0
      %v5004 = vrot.slane %v4908, 2
      %v5005 = vrot.slane %v4909, 2
      %v5006 = vsel %vm931, %v5004, %v5005
      %v5007 = vrot.slane %v4910, 2
      %v5008 = vsel %vm931, %v5005, %v5007
      %v5009 = vrot.slane %v4911, 2
      %v5010 = vrot.slane %v4912, 2
      %v5011 = vsel %vm931, %v5009, %v5010
      %v5012 = vrot.slane %v4913, 2
      %v5013 = vsel %vm931, %v5010, %v5012
      %v5014 = vrot.slane %v4914, 2
      %v5015 = vrot.slane %v4915, 2
      %v5016 = vsel %vm931, %v5014, %v5015
      %v5017 = vrot.slane %v4916, 2
      %v5018 = vsel %vm931, %v5015, %v5017
      %v5019 = vrot.slane %v4917, 2
      %v5020 = vrot.slane %v4918, 2
      %v5021 = vsel %vm931, %v5019, %v5020
      %v5022 = vrot.slane %v4919, 2
      %v5023 = vsel %vm931, %v5020, %v5022
      %v5024 = vrot.slane %v4920, 2
      %v5025 = vrot.slane %v4921, 2
      %v5026 = vsel %vm931, %v5024, %v5025
      %v5027 = vrot.slane %v4922, 2
      %v5028 = vsel %vm931, %v5025, %v5027
      %v5029 = vrot.slane %v4923, 2
      %v5030 = vrot.slane %v4924, 2
      %v5031 = vsel %vm931, %v5029, %v5030
      %v5032 = vrot.slane %v4925, 2
      %v5033 = vsel %vm931, %v5030, %v5032
      %v5034 = vrot.slane %v4926, 2
      %v5035 = vrot.slane %v4927, 2
      %v5036 = vsel %vm931, %v5034, %v5035
      %v5037 = vrot.slane %v4928, 2
      %v5038 = vsel %vm931, %v5035, %v5037
      %v5039 = vrot.slane %v4929, 2
      %v5040 = vrot.slane %v4930, 2
      %v5041 = vsel %vm931, %v5039, %v5040
      %v5042 = vrot.slane %v4931, 2
      %v5043 = vsel %vm931, %v5040, %v5042
      %v5044 = vrot.slane %v4932, 2
      %v5045 = vrot.slane %v4933, 2
      %v5046 = vsel %vm931, %v5044, %v5045
      %v5047 = vrot.slane %v4934, 2
      %v5048 = vsel %vm931, %v5045, %v5047
      %v5049 = vrot.slane %v4935, 2
      %v5050 = vrot.slane %v4936, 2
      %v5051 = vsel %vm931, %v5049, %v5050
      %v5052 = vrot.slane %v4937, 2
      %v5053 = vsel %vm931, %v5050, %v5052
      %v5054 = vrot.slane %v4938, 2
      %v5055 = vrot.slane %v4939, 2
      %v5056 = vsel %vm931, %v5054, %v5055
      %v5057 = vrot.slane %v4940, 2
      %v5058 = vsel %vm931, %v5055, %v5057
      %v5059 = vrot.slane %v4941, 2
      %v5060 = vrot.slane %v4942, 2
      %v5061 = vsel %vm931, %v5059, %v5060
      %v5062 = vrot.slane %v4943, 2
      %v5063 = vsel %vm931, %v5060, %v5062
      %v5064 = vrot.slane %v4944, 2
      %v5065 = vrot.slane %v4945, 2
      %v5066 = vsel %vm931, %v5064, %v5065
      %v5067 = vrot.slane %v4946, 2
      %v5068 = vsel %vm931, %v5065, %v5067
      %v5069 = vrot.slane %v4947, 2
      %v5070 = vrot.slane %v4948, 2
      %v5071 = vsel %vm931, %v5069, %v5070
      %v5072 = vrot.slane %v4949, 2
      %v5073 = vsel %vm931, %v5070, %v5072
      %v5074 = vrot.slane %v4950, 2
      %v5075 = vrot.slane %v4951, 2
      %v5076 = vsel %vm931, %v5074, %v5075
      %v5077 = vrot.slane %v4952, 2
      %v5078 = vsel %vm931, %v5075, %v5077
      %v5079 = vrot.slane %v4953, 2
      %v5080 = vrot.slane %v4954, 2
      %v5081 = vsel %vm931, %v5079, %v5080
      %v5082 = vrot.slane %v4955, 2
      %v5083 = vsel %vm931, %v5080, %v5082
      %v5132 = vadd.f32 %v4444, %v5004
      %v5133 = vadd.f32 %v4445, %v5006
      %v5134 = vadd.f32 %v4446, %v5008
      %v5135 = vadd.f32 %v4447, %v5009
      %v5136 = vadd.f32 %v4448, %v5011
      %v5137 = vadd.f32 %v4449, %v5013
      %v5138 = vadd.f32 %v4450, %v5014
      %v5139 = vadd.f32 %v4451, %v5016
      %v5140 = vadd.f32 %v4452, %v5018
      %v5141 = vadd.f32 %v4453, %v5019
      %v5142 = vadd.f32 %v4454, %v5021
      %v5143 = vadd.f32 %v4455, %v5023
      %v5144 = vadd.f32 %v4456, %v5024
      %v5145 = vadd.f32 %v4457, %v5026
      %v5146 = vadd.f32 %v4458, %v5028
      %v5147 = vadd.f32 %v4459, %v5029
      %v5148 = vadd.f32 %v4460, %v5031
      %v5149 = vadd.f32 %v4461, %v5033
      %v5150 = vadd.f32 %v4462, %v5034
      %v5151 = vadd.f32 %v4463, %v5036
      %v5152 = vadd.f32 %v4464, %v5038
      %v5153 = vadd.f32 %v4465, %v5039
      %v5154 = vadd.f32 %v4466, %v5041
      %v5155 = vadd.f32 %v4467, %v5043
      %v5156 = vadd.f32 %v4468, %v5044
      %v5157 = vadd.f32 %v4469, %v5046
      %v5158 = vadd.f32 %v4470, %v5048
      %v5159 = vadd.f32 %v4471, %v5049
      %v5160 = vadd.f32 %v4472, %v5051
      %v5161 = vadd.f32 %v4473, %v5053
      %v5162 = vadd.f32 %v4474, %v5054
      %v5163 = vadd.f32 %v4475, %v5056
      %v5164 = vadd.f32 %v4476, %v5058
      %v5165 = vadd.f32 %v4477, %v5059
      %v5166 = vadd.f32 %v4478, %v5061
      %v5167 = vadd.f32 %v4479, %v5063
      %v5168 = vadd.f32 %v4480, %v5064
      %v5169 = vadd.f32 %v4481, %v5066
      %v5170 = vadd.f32 %v4482, %v5068
      %v5171 = vadd.f32 %v4483, %v5069
      %v5172 = vadd.f32 %v4484, %v5071
      %v5173 = vadd.f32 %v4485, %v5073
      %v5174 = vadd.f32 %v4486, %v5074
      %v5175 = vadd.f32 %v4487, %v5076
      %v5176 = vadd.f32 %v4488, %v5078
      %v5177 = vadd.f32 %v4489, %v5079
      %v5178 = vadd.f32 %v4490, %v5081
      %v5179 = vadd.f32 %v4491, %v5083
      %v5180 = vsel %vm4860, 1.0, 0.0
      %v5181 = vsel %vm4861, 1.0, 0.0
      %v5182 = vsel %vm4862, 1.0, 0.0
      %v5183 = vsel %vm4863, 1.0, 0.0
      %v5184 = vsel %vm4864, 1.0, 0.0
      %v5185 = vsel %vm4865, 1.0, 0.0
      %v5186 = vsel %vm4866, 1.0, 0.0
      %v5187 = vsel %vm4867, 1.0, 0.0
      %v5188 = vsel %vm4868, 1.0, 0.0
      %v5189 = vsel %vm4869, 1.0, 0.0
      %v5190 = vsel %vm4870, 1.0, 0.0
      %v5191 = vsel %vm4871, 1.0, 0.0
      %v5192 = vsel %vm4872, 1.0, 0.0
      %v5193 = vsel %vm4873, 1.0, 0.0
      %v5194 = vsel %vm4874, 1.0, 0.0
      %v5195 = vsel %vm4875, 1.0, 0.0
      %v5196 = vsel %vm4876, 1.0, 0.0
      %v5197 = vsel %vm4877, 1.0, 0.0
      %v5198 = vsel %vm4878, 1.0, 0.0
      %v5199 = vsel %vm4879, 1.0, 0.0
      %v5200 = vsel %vm4880, 1.0, 0.0
      %v5201 = vsel %vm4881, 1.0, 0.0
      %v5202 = vsel %vm4882, 1.0, 0.0
      %v5203 = vsel %vm4883, 1.0, 0.0
      %v5204 = vsel %vm4884, 1.0, 0.0
      %v5205 = vsel %vm4885, 1.0, 0.0
      %v5206 = vsel %vm4886, 1.0, 0.0
      %v5207 = vsel %vm4887, 1.0, 0.0
      %v5208 = vsel %vm4888, 1.0, 0.0
      %v5209 = vsel %vm4889, 1.0, 0.0
      %v5210 = vsel %vm4890, 1.0, 0.0
      %v5211 = vsel %vm4891, 1.0, 0.0
      %v5212 = vsel %vm4892, 1.0, 0.0
      %v5213 = vsel %vm4893, 1.0, 0.0
      %v5214 = vsel %vm4894, 1.0, 0.0
      %v5215 = vsel %vm4895, 1.0, 0.0
      %v5216 = vsel %vm4896, 1.0, 0.0
      %v5217 = vsel %vm4897, 1.0, 0.0
      %v5218 = vsel %vm4898, 1.0, 0.0
      %v5219 = vsel %vm4899, 1.0, 0.0
      %v5220 = vsel %vm4900, 1.0, 0.0
      %v5221 = vsel %vm4901, 1.0, 0.0
      %v5222 = vsel %vm4902, 1.0, 0.0
      %v5223 = vsel %vm4903, 1.0, 0.0
      %v5224 = vsel %vm4904, 1.0, 0.0
      %v5225 = vsel %vm4905, 1.0, 0.0
      %v5226 = vsel %vm4906, 1.0, 0.0
      %v5227 = vsel %vm4907, 1.0, 0.0
      %v5276 = vrot.slane %v5180, 2
      %v5277 = vrot.slane %v5181, 2
      %v5278 = vsel %vm931, %v5276, %v5277
      %v5279 = vrot.slane %v5182, 2
      %v5280 = vsel %vm931, %v5277, %v5279
      %v5281 = vrot.slane %v5183, 2
      %v5282 = vrot.slane %v5184, 2
      %v5283 = vsel %vm931, %v5281, %v5282
      %v5284 = vrot.slane %v5185, 2
      %v5285 = vsel %vm931, %v5282, %v5284
      %v5286 = vrot.slane %v5186, 2
      %v5287 = vrot.slane %v5187, 2
      %v5288 = vsel %vm931, %v5286, %v5287
      %v5289 = vrot.slane %v5188, 2
      %v5290 = vsel %vm931, %v5287, %v5289
      %v5291 = vrot.slane %v5189, 2
      %v5292 = vrot.slane %v5190, 2
      %v5293 = vsel %vm931, %v5291, %v5292
      %v5294 = vrot.slane %v5191, 2
      %v5295 = vsel %vm931, %v5292, %v5294
      %v5296 = vrot.slane %v5192, 2
      %v5297 = vrot.slane %v5193, 2
      %v5298 = vsel %vm931, %v5296, %v5297
      %v5299 = vrot.slane %v5194, 2
      %v5300 = vsel %vm931, %v5297, %v5299
      %v5301 = vrot.slane %v5195, 2
      %v5302 = vrot.slane %v5196, 2
      %v5303 = vsel %vm931, %v5301, %v5302
      %v5304 = vrot.slane %v5197, 2
      %v5305 = vsel %vm931, %v5302, %v5304
      %v5306 = vrot.slane %v5198, 2
      %v5307 = vrot.slane %v5199, 2
      %v5308 = vsel %vm931, %v5306, %v5307
      %v5309 = vrot.slane %v5200, 2
      %v5310 = vsel %vm931, %v5307, %v5309
      %v5311 = vrot.slane %v5201, 2
      %v5312 = vrot.slane %v5202, 2
      %v5313 = vsel %vm931, %v5311, %v5312
      %v5314 = vrot.slane %v5203, 2
      %v5315 = vsel %vm931, %v5312, %v5314
      %v5316 = vrot.slane %v5204, 2
      %v5317 = vrot.slane %v5205, 2
      %v5318 = vsel %vm931, %v5316, %v5317
      %v5319 = vrot.slane %v5206, 2
      %v5320 = vsel %vm931, %v5317, %v5319
      %v5321 = vrot.slane %v5207, 2
      %v5322 = vrot.slane %v5208, 2
      %v5323 = vsel %vm931, %v5321, %v5322
      %v5324 = vrot.slane %v5209, 2
      %v5325 = vsel %vm931, %v5322, %v5324
      %v5326 = vrot.slane %v5210, 2
      %v5327 = vrot.slane %v5211, 2
      %v5328 = vsel %vm931, %v5326, %v5327
      %v5329 = vrot.slane %v5212, 2
      %v5330 = vsel %vm931, %v5327, %v5329
      %v5331 = vrot.slane %v5213, 2
      %v5332 = vrot.slane %v5214, 2
      %v5333 = vsel %vm931, %v5331, %v5332
      %v5334 = vrot.slane %v5215, 2
      %v5335 = vsel %vm931, %v5332, %v5334
      %v5336 = vrot.slane %v5216, 2
      %v5337 = vrot.slane %v5217, 2
      %v5338 = vsel %vm931, %v5336, %v5337
      %v5339 = vrot.slane %v5218, 2
      %v5340 = vsel %vm931, %v5337, %v5339
      %v5341 = vrot.slane %v5219, 2
      %v5342 = vrot.slane %v5220, 2
      %v5343 = vsel %vm931, %v5341, %v5342
      %v5344 = vrot.slane %v5221, 2
      %v5345 = vsel %vm931, %v5342, %v5344
      %v5346 = vrot.slane %v5222, 2
      %v5347 = vrot.slane %v5223, 2
      %v5348 = vsel %vm931, %v5346, %v5347
      %v5349 = vrot.slane %v5224, 2
      %v5350 = vsel %vm931, %v5347, %v5349
      %v5351 = vrot.slane %v5225, 2
      %v5352 = vrot.slane %v5226, 2
      %v5353 = vsel %vm931, %v5351, %v5352
      %v5354 = vrot.slane %v5227, 2
      %v5355 = vsel %vm931, %v5352, %v5354
      %v5404 = vadd.f32 %v4716, %v5276
      %v5405 = vadd.f32 %v4717, %v5278
      %v5406 = vadd.f32 %v4718, %v5280
      %v5407 = vadd.f32 %v4719, %v5281
      %v5408 = vadd.f32 %v4720, %v5283
      %v5409 = vadd.f32 %v4721, %v5285
      %v5410 = vadd.f32 %v4722, %v5286
      %v5411 = vadd.f32 %v4723, %v5288
      %v5412 = vadd.f32 %v4724, %v5290
      %v5413 = vadd.f32 %v4725, %v5291
      %v5414 = vadd.f32 %v4726, %v5293
      %v5415 = vadd.f32 %v4727, %v5295
      %v5416 = vadd.f32 %v4728, %v5296
      %v5417 = vadd.f32 %v4729, %v5298
      %v5418 = vadd.f32 %v4730, %v5300
      %v5419 = vadd.f32 %v4731, %v5301
      %v5420 = vadd.f32 %v4732, %v5303
      %v5421 = vadd.f32 %v4733, %v5305
      %v5422 = vadd.f32 %v4734, %v5306
      %v5423 = vadd.f32 %v4735, %v5308
      %v5424 = vadd.f32 %v4736, %v5310
      %v5425 = vadd.f32 %v4737, %v5311
      %v5426 = vadd.f32 %v4738, %v5313
      %v5427 = vadd.f32 %v4739, %v5315
      %v5428 = vadd.f32 %v4740, %v5316
      %v5429 = vadd.f32 %v4741, %v5318
      %v5430 = vadd.f32 %v4742, %v5320
      %v5431 = vadd.f32 %v4743, %v5321
      %v5432 = vadd.f32 %v4744, %v5323
      %v5433 = vadd.f32 %v4745, %v5325
      %v5434 = vadd.f32 %v4746, %v5326
      %v5435 = vadd.f32 %v4747, %v5328
      %v5436 = vadd.f32 %v4748, %v5330
      %v5437 = vadd.f32 %v4749, %v5331
      %v5438 = vadd.f32 %v4750, %v5333
      %v5439 = vadd.f32 %v4751, %v5335
      %v5440 = vadd.f32 %v4752, %v5336
      %v5441 = vadd.f32 %v4753, %v5338
      %v5442 = vadd.f32 %v4754, %v5340
      %v5443 = vadd.f32 %v4755, %v5341
      %v5444 = vadd.f32 %v4756, %v5343
      %v5445 = vadd.f32 %v4757, %v5345
      %v5446 = vadd.f32 %v4758, %v5346
      %v5447 = vadd.f32 %v4759, %v5348
      %v5448 = vadd.f32 %v4760, %v5350
      %v5449 = vadd.f32 %v4761, %v5351
      %v5450 = vadd.f32 %v4762, %v5353
      %v5451 = vadd.f32 %v4763, %v5355
      %vm5452 = vcmp.gt.f32.partialorder %v579, %v3854
      %vm5453 = vcmp.gt.f32.partialorder %v580, %v3856
      %vm5454 = vcmp.gt.f32.partialorder %v581, %v3855
      %vm5455 = vcmp.gt.f32.partialorder %v583, %v3859
      %vm5456 = vcmp.gt.f32.partialorder %v584, %v3861
      %vm5457 = vcmp.gt.f32.partialorder %v585, %v3860
      %vm5458 = vcmp.gt.f32.partialorder %v587, %v3864
      %vm5459 = vcmp.gt.f32.partialorder %v588, %v3866
      %vm5460 = vcmp.gt.f32.partialorder %v589, %v3865
      %vm5461 = vcmp.gt.f32.partialorder %v591, %v3869
      %vm5462 = vcmp.gt.f32.partialorder %v592, %v3871
      %vm5463 = vcmp.gt.f32.partialorder %v593, %v3870
      %vm5464 = vcmp.gt.f32.partialorder %v595, %v3874
      %vm5465 = vcmp.gt.f32.partialorder %v596, %v3876
      %vm5466 = vcmp.gt.f32.partialorder %v597, %v3875
      %vm5467 = vcmp.gt.f32.partialorder %v599, %v3879
      %vm5468 = vcmp.gt.f32.partialorder %v600, %v3881
      %vm5469 = vcmp.gt.f32.partialorder %v601, %v3880
      %vm5470 = vcmp.gt.f32.partialorder %v603, %v3884
      %vm5471 = vcmp.gt.f32.partialorder %v604, %v3886
      %vm5472 = vcmp.gt.f32.partialorder %v605, %v3885
      %vm5473 = vcmp.gt.f32.partialorder %v607, %v3889
      %vm5474 = vcmp.gt.f32.partialorder %v608, %v3891
      %vm5475 = vcmp.gt.f32.partialorder %v609, %v3890
      %vm5476 = vcmp.gt.f32.partialorder %v611, %v3894
      %vm5477 = vcmp.gt.f32.partialorder %v612, %v3896
      %vm5478 = vcmp.gt.f32.partialorder %v613, %v3895
      %vm5479 = vcmp.gt.f32.partialorder %v615, %v3899
      %vm5480 = vcmp.gt.f32.partialorder %v616, %v3901
      %vm5481 = vcmp.gt.f32.partialorder %v617, %v3900
      %vm5482 = vcmp.gt.f32.partialorder %v619, %v3904
      %vm5483 = vcmp.gt.f32.partialorder %v620, %v3906
      %vm5484 = vcmp.gt.f32.partialorder %v621, %v3905
      %vm5485 = vcmp.gt.f32.partialorder %v623, %v3909
      %vm5486 = vcmp.gt.f32.partialorder %v624, %v3911
      %vm5487 = vcmp.gt.f32.partialorder %v625, %v3910
      %vm5488 = vcmp.gt.f32.partialorder %v627, %v3914
      %vm5489 = vcmp.gt.f32.partialorder %v628, %v3916
      %vm5490 = vcmp.gt.f32.partialorder %v629, %v3915
      %vm5491 = vcmp.gt.f32.partialorder %v631, %v3919
      %vm5492 = vcmp.gt.f32.partialorder %v632, %v3921
      %vm5493 = vcmp.gt.f32.partialorder %v633, %v3920
      %vm5494 = vcmp.gt.f32.partialorder %v635, %v3924
      %vm5495 = vcmp.gt.f32.partialorder %v636, %v3926
      %vm5496 = vcmp.gt.f32.partialorder %v637, %v3925
      %vm5497 = vcmp.gt.f32.partialorder %v639, %v3929
      %vm5498 = vcmp.gt.f32.partialorder %v640, %v3931
      %vm5499 = vcmp.gt.f32.partialorder %v641, %v3930
      %vm5500 = vmxor %vm5452, %vm4076
      %vm5501 = vmxor %vm5453, %vm4077
      %vm5502 = vmxor %vm5454, %vm4078
      %vm5503 = vmxor %vm5455, %vm4079
      %vm5504 = vmxor %vm5456, %vm4080
      %vm5505 = vmxor %vm5457, %vm4081
      %vm5506 = vmxor %vm5458, %vm4082
      %vm5507 = vmxor %vm5459, %vm4083
      %vm5508 = vmxor %vm5460, %vm4084
      %vm5509 = vmxor %vm5461, %vm4085
      %vm5510 = vmxor %vm5462, %vm4086
      %vm5511 = vmxor %vm5463, %vm4087
      %vm5512 = vmxor %vm5464, %vm4088
      %vm5513 = vmxor %vm5465, %vm4089
      %vm5514 = vmxor %vm5466, %vm4090
      %vm5515 = vmxor %vm5467, %vm4091
      %vm5516 = vmxor %vm5468, %vm4092
      %vm5517 = vmxor %vm5469, %vm4093
      %vm5518 = vmxor %vm5470, %vm4094
      %vm5519 = vmxor %vm5471, %vm4095
      %vm5520 = vmxor %vm5472, %vm4096
      %vm5521 = vmxor %vm5473, %vm4097
      %vm5522 = vmxor %vm5474, %vm4098
      %vm5523 = vmxor %vm5475, %vm4099
      %vm5524 = vmxor %vm5476, %vm4100
      %vm5525 = vmxor %vm5477, %vm4101
      %vm5526 = vmxor %vm5478, %vm4102
      %vm5527 = vmxor %vm5479, %vm4103
      %vm5528 = vmxor %vm5480, %vm4104
      %vm5529 = vmxor %vm5481, %vm4105
      %vm5530 = vmxor %vm5482, %vm4106
      %vm5531 = vmxor %vm5483, %vm4107
      %vm5532 = vmxor %vm5484, %vm4108
      %vm5533 = vmxor %vm5485, %vm4109
      %vm5534 = vmxor %vm5486, %vm4110
      %vm5535 = vmxor %vm5487, %vm4111
      %vm5536 = vmxor %vm5488, %vm4112
      %vm5537 = vmxor %vm5489, %vm4113
      %vm5538 = vmxor %vm5490, %vm4114
      %vm5539 = vmxor %vm5491, %vm4115
      %vm5540 = vmxor %vm5492, %vm4116
      %vm5541 = vmxor %vm5493, %vm4117
      %vm5542 = vmxor %vm5494, %vm4118
      %vm5543 = vmxor %vm5495, %vm4119
      %vm5544 = vmxor %vm5496, %vm4120
      %vm5545 = vmxor %vm5497, %vm4121
      %vm5546 = vmxor %vm5498, %vm4122
      %vm5547 = vmxor %vm5499, %vm4123
      %vm5548 = vmxor %vm5500, 1
      %vm5549 = vmxor %vm5501, 1
      %vm5550 = vmxor %vm5502, 1
      %vm5551 = vmxor %vm5503, 1
      %vm5552 = vmxor %vm5504, 1
      %vm5553 = vmxor %vm5505, 1
      %vm5554 = vmxor %vm5506, 1
      %vm5555 = vmxor %vm5507, 1
      %vm5556 = vmxor %vm5508, 1
      %vm5557 = vmxor %vm5509, 1
      %vm5558 = vmxor %vm5510, 1
      %vm5559 = vmxor %vm5511, 1
      %vm5560 = vmxor %vm5512, 1
      %vm5561 = vmxor %vm5513, 1
      %vm5562 = vmxor %vm5514, 1
      %vm5563 = vmxor %vm5515, 1
      %vm5564 = vmxor %vm5516, 1
      %vm5565 = vmxor %vm5517, 1
      %vm5566 = vmxor %vm5518, 1
      %vm5567 = vmxor %vm5519, 1
      %vm5568 = vmxor %vm5520, 1
      %vm5569 = vmxor %vm5521, 1
      %vm5570 = vmxor %vm5522, 1
      %vm5571 = vmxor %vm5523, 1
      %vm5572 = vmxor %vm5524, 1
      %vm5573 = vmxor %vm5525, 1
      %vm5574 = vmxor %vm5526, 1
      %vm5575 = vmxor %vm5527, 1
      %vm5576 = vmxor %vm5528, 1
      %vm5577 = vmxor %vm5529, 1
      %vm5578 = vmxor %vm5530, 1
      %vm5579 = vmxor %vm5531, 1
      %vm5580 = vmxor %vm5532, 1
      %vm5581 = vmxor %vm5533, 1
      %vm5582 = vmxor %vm5534, 1
      %vm5583 = vmxor %vm5535, 1
      %vm5584 = vmxor %vm5536, 1
      %vm5585 = vmxor %vm5537, 1
      %vm5586 = vmxor %vm5538, 1
      %vm5587 = vmxor %vm5539, 1
      %vm5588 = vmxor %vm5540, 1
      %vm5589 = vmxor %vm5541, 1
      %vm5590 = vmxor %vm5542, 1
      %vm5591 = vmxor %vm5543, 1
      %vm5592 = vmxor %vm5544, 1
      %vm5593 = vmxor %vm5545, 1
      %vm5594 = vmxor %vm5546, 1
      %vm5595 = vmxor %vm5547, 1
      %v5596 = vsel %vm5548, %v651, 0.0
      %v5597 = vsel %vm5549, %v652, 0.0
      %v5598 = vsel %vm5550, %v653, 0.0
      %v5599 = vsel %vm5551, %v655, 0.0
      %v5600 = vsel %vm5552, %v656, 0.0
      %v5601 = vsel %vm5553, %v657, 0.0
      %v5602 = vsel %vm5554, %v659, 0.0
      %v5603 = vsel %vm5555, %v660, 0.0
      %v5604 = vsel %vm5556, %v661, 0.0
      %v5605 = vsel %vm5557, %v663, 0.0
      %v5606 = vsel %vm5558, %v664, 0.0
      %v5607 = vsel %vm5559, %v665, 0.0
      %v5608 = vsel %vm5560, %v667, 0.0
      %v5609 = vsel %vm5561, %v668, 0.0
      %v5610 = vsel %vm5562, %v669, 0.0
      %v5611 = vsel %vm5563, %v671, 0.0
      %v5612 = vsel %vm5564, %v672, 0.0
      %v5613 = vsel %vm5565, %v673, 0.0
      %v5614 = vsel %vm5566, %v675, 0.0
      %v5615 = vsel %vm5567, %v676, 0.0
      %v5616 = vsel %vm5568, %v677, 0.0
      %v5617 = vsel %vm5569, %v679, 0.0
      %v5618 = vsel %vm5570, %v680, 0.0
      %v5619 = vsel %vm5571, %v681, 0.0
      %v5620 = vsel %vm5572, %v683, 0.0
      %v5621 = vsel %vm5573, %v684, 0.0
      %v5622 = vsel %vm5574, %v685, 0.0
      %v5623 = vsel %vm5575, %v687, 0.0
      %v5624 = vsel %vm5576, %v688, 0.0
      %v5625 = vsel %vm5577, %v689, 0.0
      %v5626 = vsel %vm5578, %v691, 0.0
      %v5627 = vsel %vm5579, %v692, 0.0
      %v5628 = vsel %vm5580, %v693, 0.0
      %v5629 = vsel %vm5581, %v695, 0.0
      %v5630 = vsel %vm5582, %v696, 0.0
      %v5631 = vsel %vm5583, %v697, 0.0
      %v5632 = vsel %vm5584, %v699, 0.0
      %v5633 = vsel %vm5585, %v700, 0.0
      %v5634 = vsel %vm5586, %v701, 0.0
      %v5635 = vsel %vm5587, %v703, 0.0
      %v5636 = vsel %vm5588, %v704, 0.0
      %v5637 = vsel %vm5589, %v705, 0.0
      %v5638 = vsel %vm5590, %v707, 0.0
      %v5639 = vsel %vm5591, %v708, 0.0
      %v5640 = vsel %vm5592, %v709, 0.0
      %v5641 = vsel %vm5593, %v711, 0.0
      %v5642 = vsel %vm5594, %v712, 0.0
      %v5643 = vsel %vm5595, %v713, 0.0
      %v5692 = vrot.slane %v5596, 2
      %v5693 = vrot.slane %v5597, 2
      %v5694 = vsel %vm931, %v5692, %v5693
      %v5695 = vrot.slane %v5598, 2
      %v5696 = vsel %vm931, %v5693, %v5695
      %v5697 = vrot.slane %v5599, 2
      %v5698 = vrot.slane %v5600, 2
      %v5699 = vsel %vm931, %v5697, %v5698
      %v5700 = vrot.slane %v5601, 2
      %v5701 = vsel %vm931, %v5698, %v5700
      %v5702 = vrot.slane %v5602, 2
      %v5703 = vrot.slane %v5603, 2
      %v5704 = vsel %vm931, %v5702, %v5703
      %v5705 = vrot.slane %v5604, 2
      %v5706 = vsel %vm931, %v5703, %v5705
      %v5707 = vrot.slane %v5605, 2
      %v5708 = vrot.slane %v5606, 2
      %v5709 = vsel %vm931, %v5707, %v5708
      %v5710 = vrot.slane %v5607, 2
      %v5711 = vsel %vm931, %v5708, %v5710
      %v5712 = vrot.slane %v5608, 2
      %v5713 = vrot.slane %v5609, 2
      %v5714 = vsel %vm931, %v5712, %v5713
      %v5715 = vrot.slane %v5610, 2
      %v5716 = vsel %vm931, %v5713, %v5715
      %v5717 = vrot.slane %v5611, 2
      %v5718 = vrot.slane %v5612, 2
      %v5719 = vsel %vm931, %v5717, %v5718
      %v5720 = vrot.slane %v5613, 2
      %v5721 = vsel %vm931, %v5718, %v5720
      %v5722 = vrot.slane %v5614, 2
      %v5723 = vrot.slane %v5615, 2
      %v5724 = vsel %vm931, %v5722, %v5723
      %v5725 = vrot.slane %v5616, 2
      %v5726 = vsel %vm931, %v5723, %v5725
      %v5727 = vrot.slane %v5617, 2
      %v5728 = vrot.slane %v5618, 2
      %v5729 = vsel %vm931, %v5727, %v5728
      %v5730 = vrot.slane %v5619, 2
      %v5731 = vsel %vm931, %v5728, %v5730
      %v5732 = vrot.slane %v5620, 2
      %v5733 = vrot.slane %v5621, 2
      %v5734 = vsel %vm931, %v5732, %v5733
      %v5735 = vrot.slane %v5622, 2
      %v5736 = vsel %vm931, %v5733, %v5735
      %v5737 = vrot.slane %v5623, 2
      %v5738 = vrot.slane %v5624, 2
      %v5739 = vsel %vm931, %v5737, %v5738
      %v5740 = vrot.slane %v5625, 2
      %v5741 = vsel %vm931, %v5738, %v5740
      %v5742 = vrot.slane %v5626, 2
      %v5743 = vrot.slane %v5627, 2
      %v5744 = vsel %vm931, %v5742, %v5743
      %v5745 = vrot.slane %v5628, 2
      %v5746 = vsel %vm931, %v5743, %v5745
      %v5747 = vrot.slane %v5629, 2
      %v5748 = vrot.slane %v5630, 2
      %v5749 = vsel %vm931, %v5747, %v5748
      %v5750 = vrot.slane %v5631, 2
      %v5751 = vsel %vm931, %v5748, %v5750
      %v5752 = vrot.slane %v5632, 2
      %v5753 = vrot.slane %v5633, 2
      %v5754 = vsel %vm931, %v5752, %v5753
      %v5755 = vrot.slane %v5634, 2
      %v5756 = vsel %vm931, %v5753, %v5755
      %v5757 = vrot.slane %v5635, 2
      %v5758 = vrot.slane %v5636, 2
      %v5759 = vsel %vm931, %v5757, %v5758
      %v5760 = vrot.slane %v5637, 2
      %v5761 = vsel %vm931, %v5758, %v5760
      %v5762 = vrot.slane %v5638, 2
      %v5763 = vrot.slane %v5639, 2
      %v5764 = vsel %vm931, %v5762, %v5763
      %v5765 = vrot.slane %v5640, 2
      %v5766 = vsel %vm931, %v5763, %v5765
      %v5767 = vrot.slane %v5641, 2
      %v5768 = vrot.slane %v5642, 2
      %v5769 = vsel %vm931, %v5767, %v5768
      %v5770 = vrot.slane %v5643, 2
      %v5771 = vsel %vm931, %v5768, %v5770
      %v5820 = vadd.f32 %v5132, %v5692
      %v5821 = vadd.f32 %v5133, %v5694
      %v5822 = vadd.f32 %v5134, %v5696
      %v5823 = vadd.f32 %v5135, %v5697
      %v5824 = vadd.f32 %v5136, %v5699
      %v5825 = vadd.f32 %v5137, %v5701
      %v5826 = vadd.f32 %v5138, %v5702
      %v5827 = vadd.f32 %v5139, %v5704
      %v5828 = vadd.f32 %v5140, %v5706
      %v5829 = vadd.f32 %v5141, %v5707
      %v5830 = vadd.f32 %v5142, %v5709
      %v5831 = vadd.f32 %v5143, %v5711
      %v5832 = vadd.f32 %v5144, %v5712
      %v5833 = vadd.f32 %v5145, %v5714
      %v5834 = vadd.f32 %v5146, %v5716
      %v5835 = vadd.f32 %v5147, %v5717
      %v5836 = vadd.f32 %v5148, %v5719
      %v5837 = vadd.f32 %v5149, %v5721
      %v5838 = vadd.f32 %v5150, %v5722
      %v5839 = vadd.f32 %v5151, %v5724
      %v5840 = vadd.f32 %v5152, %v5726
      %v5841 = vadd.f32 %v5153, %v5727
      %v5842 = vadd.f32 %v5154, %v5729
      %v5843 = vadd.f32 %v5155, %v5731
      %v5844 = vadd.f32 %v5156, %v5732
      %v5845 = vadd.f32 %v5157, %v5734
      %v5846 = vadd.f32 %v5158, %v5736
      %v5847 = vadd.f32 %v5159, %v5737
      %v5848 = vadd.f32 %v5160, %v5739
      %v5849 = vadd.f32 %v5161, %v5741
      %v5850 = vadd.f32 %v5162, %v5742
      %v5851 = vadd.f32 %v5163, %v5744
      %v5852 = vadd.f32 %v5164, %v5746
      %v5853 = vadd.f32 %v5165, %v5747
      %v5854 = vadd.f32 %v5166, %v5749
      %v5855 = vadd.f32 %v5167, %v5751
      %v5856 = vadd.f32 %v5168, %v5752
      %v5857 = vadd.f32 %v5169, %v5754
      %v5858 = vadd.f32 %v5170, %v5756
      %v5859 = vadd.f32 %v5171, %v5757
      %v5860 = vadd.f32 %v5172, %v5759
      %v5861 = vadd.f32 %v5173, %v5761
      %v5862 = vadd.f32 %v5174, %v5762
      %v5863 = vadd.f32 %v5175, %v5764
      %v5864 = vadd.f32 %v5176, %v5766
      %v5865 = vadd.f32 %v5177, %v5767
      %v5866 = vadd.f32 %v5178, %v5769
      %v5867 = vadd.f32 %v5179, %v5771
      %v5868 = vsel %vm5548, 1.0, 0.0
      %v5869 = vsel %vm5549, 1.0, 0.0
      %v5870 = vsel %vm5550, 1.0, 0.0
      %v5871 = vsel %vm5551, 1.0, 0.0
      %v5872 = vsel %vm5552, 1.0, 0.0
      %v5873 = vsel %vm5553, 1.0, 0.0
      %v5874 = vsel %vm5554, 1.0, 0.0
      %v5875 = vsel %vm5555, 1.0, 0.0
      %v5876 = vsel %vm5556, 1.0, 0.0
      %v5877 = vsel %vm5557, 1.0, 0.0
      %v5878 = vsel %vm5558, 1.0, 0.0
      %v5879 = vsel %vm5559, 1.0, 0.0
      %v5880 = vsel %vm5560, 1.0, 0.0
      %v5881 = vsel %vm5561, 1.0, 0.0
      %v5882 = vsel %vm5562, 1.0, 0.0
      %v5883 = vsel %vm5563, 1.0, 0.0
      %v5884 = vsel %vm5564, 1.0, 0.0
      %v5885 = vsel %vm5565, 1.0, 0.0
      %v5886 = vsel %vm5566, 1.0, 0.0
      %v5887 = vsel %vm5567, 1.0, 0.0
      %v5888 = vsel %vm5568, 1.0, 0.0
      %v5889 = vsel %vm5569, 1.0, 0.0
      %v5890 = vsel %vm5570, 1.0, 0.0
      %v5891 = vsel %vm5571, 1.0, 0.0
      %v5892 = vsel %vm5572, 1.0, 0.0
      %v5893 = vsel %vm5573, 1.0, 0.0
      %v5894 = vsel %vm5574, 1.0, 0.0
      %v5895 = vsel %vm5575, 1.0, 0.0
      %v5896 = vsel %vm5576, 1.0, 0.0
      %v5897 = vsel %vm5577, 1.0, 0.0
      %v5898 = vsel %vm5578, 1.0, 0.0
      %v5899 = vsel %vm5579, 1.0, 0.0
      %v5900 = vsel %vm5580, 1.0, 0.0
      %v5901 = vsel %vm5581, 1.0, 0.0
      %v5902 = vsel %vm5582, 1.0, 0.0
      %v5903 = vsel %vm5583, 1.0, 0.0
      %v5904 = vsel %vm5584, 1.0, 0.0
      %v5905 = vsel %vm5585, 1.0, 0.0
      %v5906 = vsel %vm5586, 1.0, 0.0
      %v5907 = vsel %vm5587, 1.0, 0.0
      %v5908 = vsel %vm5588, 1.0, 0.0
      %v5909 = vsel %vm5589, 1.0, 0.0
      %v5910 = vsel %vm5590, 1.0, 0.0
      %v5911 = vsel %vm5591, 1.0, 0.0
      %v5912 = vsel %vm5592, 1.0, 0.0
      %v5913 = vsel %vm5593, 1.0, 0.0
      %v5914 = vsel %vm5594, 1.0, 0.0
      %v5915 = vsel %vm5595, 1.0, 0.0
      %v5964 = vrot.slane %v5868, 2
      %v5965 = vrot.slane %v5869, 2
      %v5966 = vsel %vm931, %v5964, %v5965
      %v5967 = vrot.slane %v5870, 2
      %v5968 = vsel %vm931, %v5965, %v5967
      %v5969 = vrot.slane %v5871, 2
      %v5970 = vrot.slane %v5872, 2
      %v5971 = vsel %vm931, %v5969, %v5970
      %v5972 = vrot.slane %v5873, 2
      %v5973 = vsel %vm931, %v5970, %v5972
      %v5974 = vrot.slane %v5874, 2
      %v5975 = vrot.slane %v5875, 2
      %v5976 = vsel %vm931, %v5974, %v5975
      %v5977 = vrot.slane %v5876, 2
      %v5978 = vsel %vm931, %v5975, %v5977
      %v5979 = vrot.slane %v5877, 2
      %v5980 = vrot.slane %v5878, 2
      %v5981 = vsel %vm931, %v5979, %v5980
      %v5982 = vrot.slane %v5879, 2
      %v5983 = vsel %vm931, %v5980, %v5982
      %v5984 = vrot.slane %v5880, 2
      %v5985 = vrot.slane %v5881, 2
      %v5986 = vsel %vm931, %v5984, %v5985
      %v5987 = vrot.slane %v5882, 2
      %v5988 = vsel %vm931, %v5985, %v5987
      %v5989 = vrot.slane %v5883, 2
      %v5990 = vrot.slane %v5884, 2
      %v5991 = vsel %vm931, %v5989, %v5990
      %v5992 = vrot.slane %v5885, 2
      %v5993 = vsel %vm931, %v5990, %v5992
      %v5994 = vrot.slane %v5886, 2
      %v5995 = vrot.slane %v5887, 2
      %v5996 = vsel %vm931, %v5994, %v5995
      %v5997 = vrot.slane %v5888, 2
      %v5998 = vsel %vm931, %v5995, %v5997
      %v5999 = vrot.slane %v5889, 2
      %v6000 = vrot.slane %v5890, 2
      %v6001 = vsel %vm931, %v5999, %v6000
      %v6002 = vrot.slane %v5891, 2
      %v6003 = vsel %vm931, %v6000, %v6002
      %v6004 = vrot.slane %v5892, 2
      %v6005 = vrot.slane %v5893, 2
      %v6006 = vsel %vm931, %v6004, %v6005
      %v6007 = vrot.slane %v5894, 2
      %v6008 = vsel %vm931, %v6005, %v6007
      %v6009 = vrot.slane %v5895, 2
      %v6010 = vrot.slane %v5896, 2
      %v6011 = vsel %vm931, %v6009, %v6010
      %v6012 = vrot.slane %v5897, 2
      %v6013 = vsel %vm931, %v6010, %v6012
      %v6014 = vrot.slane %v5898, 2
      %v6015 = vrot.slane %v5899, 2
      %v6016 = vsel %vm931, %v6014, %v6015
      %v6017 = vrot.slane %v5900, 2
      %v6018 = vsel %vm931, %v6015, %v6017
      %v6019 = vrot.slane %v5901, 2
      %v6020 = vrot.slane %v5902, 2
      %v6021 = vsel %vm931, %v6019, %v6020
      %v6022 = vrot.slane %v5903, 2
      %v6023 = vsel %vm931, %v6020, %v6022
      %v6024 = vrot.slane %v5904, 2
      %v6025 = vrot.slane %v5905, 2
      %v6026 = vsel %vm931, %v6024, %v6025
      %v6027 = vrot.slane %v5906, 2
      %v6028 = vsel %vm931, %v6025, %v6027
      %v6029 = vrot.slane %v5907, 2
      %v6030 = vrot.slane %v5908, 2
      %v6031 = vsel %vm931, %v6029, %v6030
      %v6032 = vrot.slane %v5909, 2
      %v6033 = vsel %vm931, %v6030, %v6032
      %v6034 = vrot.slane %v5910, 2
      %v6035 = vrot.slane %v5911, 2
      %v6036 = vsel %vm931, %v6034, %v6035
      %v6037 = vrot.slane %v5912, 2
      %v6038 = vsel %vm931, %v6035, %v6037
      %v6039 = vrot.slane %v5913, 2
      %v6040 = vrot.slane %v5914, 2
      %v6041 = vsel %vm931, %v6039, %v6040
      %v6042 = vrot.slane %v5915, 2
      %v6043 = vsel %vm931, %v6040, %v6042
      %v6092 = vadd.f32 %v5404, %v5964
      %v6093 = vadd.f32 %v5405, %v5966
      %v6094 = vadd.f32 %v5406, %v5968
      %v6095 = vadd.f32 %v5407, %v5969
      %v6096 = vadd.f32 %v5408, %v5971
      %v6097 = vadd.f32 %v5409, %v5973
      %v6098 = vadd.f32 %v5410, %v5974
      %v6099 = vadd.f32 %v5411, %v5976
      %v6100 = vadd.f32 %v5412, %v5978
      %v6101 = vadd.f32 %v5413, %v5979
      %v6102 = vadd.f32 %v5414, %v5981
      %v6103 = vadd.f32 %v5415, %v5983
      %v6104 = vadd.f32 %v5416, %v5984
      %v6105 = vadd.f32 %v5417, %v5986
      %v6106 = vadd.f32 %v5418, %v5988
      %v6107 = vadd.f32 %v5419, %v5989
      %v6108 = vadd.f32 %v5420, %v5991
      %v6109 = vadd.f32 %v5421, %v5993
      %v6110 = vadd.f32 %v5422, %v5994
      %v6111 = vadd.f32 %v5423, %v5996
      %v6112 = vadd.f32 %v5424, %v5998
      %v6113 = vadd.f32 %v5425, %v5999
      %v6114 = vadd.f32 %v5426, %v6001
      %v6115 = vadd.f32 %v5427, %v6003
      %v6116 = vadd.f32 %v5428, %v6004
      %v6117 = vadd.f32 %v5429, %v6006
      %v6118 = vadd.f32 %v5430, %v6008
      %v6119 = vadd.f32 %v5431, %v6009
      %v6120 = vadd.f32 %v5432, %v6011
      %v6121 = vadd.f32 %v5433, %v6013
      %v6122 = vadd.f32 %v5434, %v6014
      %v6123 = vadd.f32 %v5435, %v6016
      %v6124 = vadd.f32 %v5436, %v6018
      %v6125 = vadd.f32 %v5437, %v6019
      %v6126 = vadd.f32 %v5438, %v6021
      %v6127 = vadd.f32 %v5439, %v6023
      %v6128 = vadd.f32 %v5440, %v6024
      %v6129 = vadd.f32 %v5441, %v6026
      %v6130 = vadd.f32 %v5442, %v6028
      %v6131 = vadd.f32 %v5443, %v6029
      %v6132 = vadd.f32 %v5444, %v6031
      %v6133 = vadd.f32 %v5445, %v6033
      %v6134 = vadd.f32 %v5446, %v6034
      %v6135 = vadd.f32 %v5447, %v6036
      %v6136 = vadd.f32 %v5448, %v6038
      %v6137 = vadd.f32 %v5449, %v6039
      %v6138 = vadd.f32 %v5450, %v6041
      %v6139 = vadd.f32 %v5451, %v6043
      %v6140 = vadd.f32 %v6092, 1e-06
      %v6141 = vadd.f32 %v6093, 1e-06
      %v6142 = vadd.f32 %v6094, 1e-06
      %v6143 = vadd.f32 %v6095, 1e-06
      %v6144 = vadd.f32 %v6096, 1e-06
      %v6145 = vadd.f32 %v6097, 1e-06
      %v6146 = vadd.f32 %v6098, 1e-06
      %v6147 = vadd.f32 %v6099, 1e-06
      %v6148 = vadd.f32 %v6100, 1e-06
      %v6149 = vadd.f32 %v6101, 1e-06
      %v6150 = vadd.f32 %v6102, 1e-06
      %v6151 = vadd.f32 %v6103, 1e-06
      %v6152 = vadd.f32 %v6104, 1e-06
      %v6153 = vadd.f32 %v6105, 1e-06
      %v6154 = vadd.f32 %v6106, 1e-06
      %v6155 = vadd.f32 %v6107, 1e-06
      %v6156 = vadd.f32 %v6108, 1e-06
      %v6157 = vadd.f32 %v6109, 1e-06
      %v6158 = vadd.f32 %v6110, 1e-06
      %v6159 = vadd.f32 %v6111, 1e-06
      %v6160 = vadd.f32 %v6112, 1e-06
      %v6161 = vadd.f32 %v6113, 1e-06
      %v6162 = vadd.f32 %v6114, 1e-06
      %v6163 = vadd.f32 %v6115, 1e-06
      %v6164 = vadd.f32 %v6116, 1e-06
      %v6165 = vadd.f32 %v6117, 1e-06
      %v6166 = vadd.f32 %v6118, 1e-06
      %v6167 = vadd.f32 %v6119, 1e-06
      %v6168 = vadd.f32 %v6120, 1e-06
      %v6169 = vadd.f32 %v6121, 1e-06
      %v6170 = vadd.f32 %v6122, 1e-06
      %v6171 = vadd.f32 %v6123, 1e-06
      %v6172 = vadd.f32 %v6124, 1e-06
      %v6173 = vadd.f32 %v6125, 1e-06
      %v6174 = vadd.f32 %v6126, 1e-06
      %v6175 = vadd.f32 %v6127, 1e-06
      %v6176 = vadd.f32 %v6128, 1e-06
      %v6177 = vadd.f32 %v6129, 1e-06
      %v6178 = vadd.f32 %v6130, 1e-06
      %v6179 = vadd.f32 %v6131, 1e-06
      %v6180 = vadd.f32 %v6132, 1e-06
      %v6181 = vadd.f32 %v6133, 1e-06
      %v6182 = vadd.f32 %v6134, 1e-06
      %v6183 = vadd.f32 %v6135, 1e-06
      %v6184 = vadd.f32 %v6136, 1e-06
      %v6185 = vadd.f32 %v6137, 1e-06
      %v6186 = vadd.f32 %v6138, 1e-06
      %v6187 = vadd.f32 %v6139, 1e-06
      %v6188 = vrcp.pop %v6140
      %v6189 = vmul.f32 %v5820, %v6188
      %v6190 = vrcp.pop %v6141
      %v6191 = vmul.f32 %v5821, %v6190
      %v6192 = vrcp.pop %v6142
      %v6193 = vmul.f32 %v5822, %v6192
      %v6194 = vrcp.pop %v6143
      %v6195 = vmul.f32 %v5823, %v6194
      %v6196 = vrcp.pop %v6144
      %v6197 = vmul.f32 %v5824, %v6196
      %v6198 = vrcp.pop %v6145
      %v6199 = vmul.f32 %v5825, %v6198
      %v6200 = vrcp.pop %v6146
      %v6201 = vmul.f32 %v5826, %v6200
      %v6202 = vrcp.pop %v6147
      %v6203 = vmul.f32 %v5827, %v6202
      %v6204 = vrcp.pop %v6148
      %v6205 = vmul.f32 %v5828, %v6204
      %v6206 = vrcp.pop %v6149
      %v6207 = vmul.f32 %v5829, %v6206
      %v6208 = vrcp.pop %v6150
      %v6209 = vmul.f32 %v5830, %v6208
      %v6210 = vrcp.pop %v6151
      %v6211 = vmul.f32 %v5831, %v6210
      %v6212 = vrcp.pop %v6152
      %v6213 = vmul.f32 %v5832, %v6212
      %v6214 = vrcp.pop %v6153
      %v6215 = vmul.f32 %v5833, %v6214
      %v6216 = vrcp.pop %v6154
      %v6217 = vmul.f32 %v5834, %v6216
      %v6218 = vrcp.pop %v6155
      %v6219 = vmul.f32 %v5835, %v6218
      %v6220 = vrcp.pop %v6156
      %v6221 = vmul.f32 %v5836, %v6220
      %v6222 = vrcp.pop %v6157
      %v6223 = vmul.f32 %v5837, %v6222
      %v6224 = vrcp.pop %v6158
      %v6225 = vmul.f32 %v5838, %v6224
      %v6226 = vrcp.pop %v6159
      %v6227 = vmul.f32 %v5839, %v6226
      %v6228 = vrcp.pop %v6160
      %v6229 = vmul.f32 %v5840, %v6228
      %v6230 = vrcp.pop %v6161
      %v6231 = vmul.f32 %v5841, %v6230
      %v6232 = vrcp.pop %v6162
      %v6233 = vmul.f32 %v5842, %v6232
      %v6234 = vrcp.pop %v6163
      %v6235 = vmul.f32 %v5843, %v6234
      %v6236 = vrcp.pop %v6164
      %v6237 = vmul.f32 %v5844, %v6236
      %v6238 = vrcp.pop %v6165
      %v6239 = vmul.f32 %v5845, %v6238
      %v6240 = vrcp.pop %v6166
      %v6241 = vmul.f32 %v5846, %v6240
      %v6242 = vrcp.pop %v6167
      %v6243 = vmul.f32 %v5847, %v6242
      %v6244 = vrcp.pop %v6168
      %v6245 = vmul.f32 %v5848, %v6244
      %v6246 = vrcp.pop %v6169
      %v6247 = vmul.f32 %v5849, %v6246
      %v6248 = vrcp.pop %v6170
      %v6249 = vmul.f32 %v5850, %v6248
      %v6250 = vrcp.pop %v6171
      %v6251 = vmul.f32 %v5851, %v6250
      %v6252 = vrcp.pop %v6172
      %v6253 = vmul.f32 %v5852, %v6252
      %v6254 = vrcp.pop %v6173
      %v6255 = vmul.f32 %v5853, %v6254
      %v6256 = vrcp.pop %v6174
      %v6257 = vmul.f32 %v5854, %v6256
      %v6258 = vrcp.pop %v6175
      %v6259 = vmul.f32 %v5855, %v6258
      %v6260 = vrcp.pop %v6176
      %v6261 = vmul.f32 %v5856, %v6260
      %v6262 = vrcp.pop %v6177
      %v6263 = vmul.f32 %v5857, %v6262
      %v6264 = vrcp.pop %v6178
      %v6265 = vmul.f32 %v5858, %v6264
      %v6266 = vrcp.pop %v6179
      %v6267 = vmul.f32 %v5859, %v6266
      %v6268 = vrcp.pop %v6180
      %v6269 = vmul.f32 %v5860, %v6268
      %v6270 = vrcp.pop %v6181
      %v6271 = vmul.f32 %v5861, %v6270
      %v6272 = vrcp.pop %v6182
      %v6273 = vmul.f32 %v5862, %v6272
      %v6274 = vrcp.pop %v6183
      %v6275 = vmul.f32 %v5863, %v6274
      %v6276 = vrcp.pop %v6184
      %v6277 = vmul.f32 %v5864, %v6276
      %v6278 = vrcp.pop %v6185
      %v6279 = vmul.f32 %v5865, %v6278
      %v6280 = vrcp.pop %v6186
      %v6281 = vmul.f32 %v5866, %v6280
      %v6282 = vrcp.pop %v6187
      %v6283 = vmul.f32 %v5867, %v6282
      %v6284 = vld [vmem:[%s255] sm:$0xf]
      %v6285 = vld [vmem:[%s255 + $0x4] sm:$0xf]
      %v6286 = vld [vmem:[%s255 + $0x8] sm:$0xf]
      %v6287 = vld [vmem:[%s255 + $0xc] sm:$0xf]
      %v6288 = vld [vmem:[%s255 + $0x10] sm:$0xf]
      %v6289 = vld [vmem:[%s255 + $0x14] sm:$0xf]
      %v6290 = vld [vmem:[%s255 + $0x18] sm:$0xf]
      %v6291 = vld [vmem:[%s255 + $0x1c] sm:$0xf]
      %v6292 = vld [vmem:[%s255 + $0x20] sm:$0xf]
      %v6293 = vld [vmem:[%s255 + $0x24] sm:$0xf]
      %v6294 = vld [vmem:[%s255 + $0x28] sm:$0xf]
      %v6295 = vld [vmem:[%s255 + $0x2c] sm:$0xf]
      %v6296 = vld [vmem:[%s255 + $0x30] sm:$0xf]
      %v6297 = vld [vmem:[%s255 + $0x34] sm:$0xf]
      %v6298 = vld [vmem:[%s255 + $0x38] sm:$0xf]
      %v6299 = vld [vmem:[%s255 + $0x3c] sm:$0xf]
      %v6300 = vld [vmem:[%s255 + $0x40] sm:$0xf]
      %v6301 = vld [vmem:[%s255 + $0x44] sm:$0xf]
      %v6302 = vld [vmem:[%s255 + $0x48] sm:$0xf]
      %v6303 = vld [vmem:[%s255 + $0x4c] sm:$0xf]
      %v6304 = vld [vmem:[%s255 + $0x50] sm:$0xf]
      %v6305 = vld [vmem:[%s255 + $0x54] sm:$0xf]
      %v6306 = vld [vmem:[%s255 + $0x58] sm:$0xf]
      %v6307 = vld [vmem:[%s255 + $0x5c] sm:$0xf]
      %v6308 = vld [vmem:[%s255 + $0x60] sm:$0xf]
      %v6309 = vld [vmem:[%s255 + $0x64] sm:$0xf]
      %v6310 = vld [vmem:[%s255 + $0x68] sm:$0xf]
      %v6311 = vld [vmem:[%s255 + $0x6c] sm:$0xf]
      %v6312 = vld [vmem:[%s255 + $0x70] sm:$0xf]
      %v6313 = vld [vmem:[%s255 + $0x74] sm:$0xf]
      %v6314 = vld [vmem:[%s255 + $0x78] sm:$0xf]
      %v6315 = vld [vmem:[%s255 + $0x7c] sm:$0xf]
      %v6316 = vunpack.c.l.bf16 %v6284
      %v6317 = vunpack.c.l.bf16 %v6285
      %v6318 = vunpack.c.l.bf16 %v6286
      %v6319 = vunpack.c.l.bf16 %v6287
      %v6320 = vunpack.c.l.bf16 %v6288
      %v6321 = vunpack.c.l.bf16 %v6289
      %v6322 = vunpack.c.l.bf16 %v6290
      %v6323 = vunpack.c.l.bf16 %v6291
      %v6324 = vunpack.c.l.bf16 %v6292
      %v6325 = vunpack.c.l.bf16 %v6293
      %v6326 = vunpack.c.l.bf16 %v6294
      %v6327 = vunpack.c.l.bf16 %v6295
      %v6328 = vunpack.c.l.bf16 %v6296
      %v6329 = vunpack.c.l.bf16 %v6297
      %v6330 = vunpack.c.l.bf16 %v6298
      %v6331 = vunpack.c.l.bf16 %v6299
      %v6332 = vunpack.c.l.bf16 %v6300
      %v6333 = vunpack.c.l.bf16 %v6301
      %v6334 = vunpack.c.l.bf16 %v6302
      %v6335 = vunpack.c.l.bf16 %v6303
      %v6336 = vunpack.c.l.bf16 %v6304
      %v6337 = vunpack.c.l.bf16 %v6305
      %v6338 = vunpack.c.l.bf16 %v6306
      %v6339 = vunpack.c.l.bf16 %v6307
      %v6340 = vunpack.c.l.bf16 %v6308
      %v6341 = vunpack.c.l.bf16 %v6309
      %v6342 = vunpack.c.l.bf16 %v6310
      %v6343 = vunpack.c.l.bf16 %v6311
      %v6344 = vunpack.c.l.bf16 %v6312
      %v6345 = vunpack.c.l.bf16 %v6313
      %v6346 = vunpack.c.l.bf16 %v6314
      %v6347 = vunpack.c.l.bf16 %v6315
      %v6380 = vrot.slane %v6316, 1
      %v6381 = vrot.slane %v6317, 1
      %v6382 = vsel %vm750, %v6380, %v6381
      %v6383 = vrot.slane %v6318, 1
      %v6384 = vrot.slane %v6319, 1
      %v6385 = vsel %vm750, %v6383, %v6384
      %v6386 = vrot.slane %v6320, 1
      %v6387 = vrot.slane %v6321, 1
      %v6388 = vsel %vm750, %v6386, %v6387
      %v6389 = vrot.slane %v6322, 1
      %v6390 = vrot.slane %v6323, 1
      %v6391 = vsel %vm750, %v6389, %v6390
      %v6392 = vrot.slane %v6324, 1
      %v6393 = vrot.slane %v6325, 1
      %v6394 = vsel %vm750, %v6392, %v6393
      %v6395 = vrot.slane %v6326, 1
      %v6396 = vrot.slane %v6327, 1
      %v6397 = vsel %vm750, %v6395, %v6396
      %v6398 = vrot.slane %v6328, 1
      %v6399 = vrot.slane %v6329, 1
      %v6400 = vsel %vm750, %v6398, %v6399
      %v6401 = vrot.slane %v6330, 1
      %v6402 = vrot.slane %v6331, 1
      %v6403 = vsel %vm750, %v6401, %v6402
      %v6404 = vrot.slane %v6332, 1
      %v6405 = vrot.slane %v6333, 1
      %v6406 = vsel %vm750, %v6404, %v6405
      %v6407 = vrot.slane %v6334, 1
      %v6408 = vrot.slane %v6335, 1
      %v6409 = vsel %vm750, %v6407, %v6408
      %v6410 = vrot.slane %v6336, 1
      %v6411 = vrot.slane %v6337, 1
      %v6412 = vsel %vm750, %v6410, %v6411
      %v6413 = vrot.slane %v6338, 1
      %v6414 = vrot.slane %v6339, 1
      %v6415 = vsel %vm750, %v6413, %v6414
      %v6416 = vrot.slane %v6340, 1
      %v6417 = vrot.slane %v6341, 1
      %v6418 = vsel %vm750, %v6416, %v6417
      %v6419 = vrot.slane %v6342, 1
      %v6420 = vrot.slane %v6343, 1
      %v6421 = vsel %vm750, %v6419, %v6420
      %v6422 = vrot.slane %v6344, 1
      %v6423 = vrot.slane %v6345, 1
      %v6424 = vsel %vm750, %v6422, %v6423
      %v6425 = vrot.slane %v6346, 1
      %v6426 = vrot.slane %v6347, 1
      %v6427 = vsel %vm750, %v6425, %v6426
      %v6476 = vadd.f32 %v6189, %v6380
      %v6477 = vadd.f32 %v6191, %v6382
      %v6478 = vadd.f32 %v6193, %v6381
      %v6479 = vadd.f32 %v6195, %v6383
      %v6480 = vadd.f32 %v6197, %v6385
      %v6481 = vadd.f32 %v6199, %v6384
      %v6482 = vadd.f32 %v6201, %v6386
      %v6483 = vadd.f32 %v6203, %v6388
      %v6484 = vadd.f32 %v6205, %v6387
      %v6485 = vadd.f32 %v6207, %v6389
      %v6486 = vadd.f32 %v6209, %v6391
      %v6487 = vadd.f32 %v6211, %v6390
      %v6488 = vadd.f32 %v6213, %v6392
      %v6489 = vadd.f32 %v6215, %v6394
      %v6490 = vadd.f32 %v6217, %v6393
      %v6491 = vadd.f32 %v6219, %v6395
      %v6492 = vadd.f32 %v6221, %v6397
      %v6493 = vadd.f32 %v6223, %v6396
      %v6494 = vadd.f32 %v6225, %v6398
      %v6495 = vadd.f32 %v6227, %v6400
      %v6496 = vadd.f32 %v6229, %v6399
      %v6497 = vadd.f32 %v6231, %v6401
      %v6498 = vadd.f32 %v6233, %v6403
      %v6499 = vadd.f32 %v6235, %v6402
      %v6500 = vadd.f32 %v6237, %v6404
      %v6501 = vadd.f32 %v6239, %v6406
      %v6502 = vadd.f32 %v6241, %v6405
      %v6503 = vadd.f32 %v6243, %v6407
      %v6504 = vadd.f32 %v6245, %v6409
      %v6505 = vadd.f32 %v6247, %v6408
      %v6506 = vadd.f32 %v6249, %v6410
      %v6507 = vadd.f32 %v6251, %v6412
      %v6508 = vadd.f32 %v6253, %v6411
      %v6509 = vadd.f32 %v6255, %v6413
      %v6510 = vadd.f32 %v6257, %v6415
      %v6511 = vadd.f32 %v6259, %v6414
      %v6512 = vadd.f32 %v6261, %v6416
      %v6513 = vadd.f32 %v6263, %v6418
      %v6514 = vadd.f32 %v6265, %v6417
      %v6515 = vadd.f32 %v6267, %v6419
      %v6516 = vadd.f32 %v6269, %v6421
      %v6517 = vadd.f32 %v6271, %v6420
      %v6518 = vadd.f32 %v6273, %v6422
      %v6519 = vadd.f32 %v6275, %v6424
      %v6520 = vadd.f32 %v6277, %v6423
      %v6521 = vadd.f32 %v6279, %v6425
      %v6522 = vadd.f32 %v6281, %v6427
      %v6523 = vadd.f32 %v6283, %v6426
      %6524 = vst [vmem:[%s263 - $0x7] sm:$0x80] %v6476
      %6525 = vst [vmem:[%s263 + $0x1] sm:$0xff] %v6477
      %6526 = vst [vmem:[%s263 + $0x9] sm:$0x7f] %v6478
      %6527 = vst [vmem:[%s263 + $0x9] sm:$0x80] %v6479
      %6528 = vst [vmem:[%s263 + $0x11] sm:$0xff] %v6480
      %6529 = vst [vmem:[%s263 + $0x19] sm:$0x7f] %v6481
      %6530 = vst [vmem:[%s263 + $0x19] sm:$0x80] %v6482
      %6531 = vst [vmem:[%s263 + $0x21] sm:$0xff] %v6483
      %6532 = vst [vmem:[%s263 + $0x29] sm:$0x7f] %v6484
      %6533 = vst [vmem:[%s263 + $0x29] sm:$0x80] %v6485
      %6534 = vst [vmem:[%s263 + $0x31] sm:$0xff] %v6486
      %6535 = vst [vmem:[%s263 + $0x39] sm:$0x7f] %v6487
      %6536 = vst [vmem:[%s263 + $0x39] sm:$0x80] %v6488
      %6537 = vst [vmem:[%s263 + $0x41] sm:$0xff] %v6489
      %6538 = vst [vmem:[%s263 + $0x49] sm:$0x7f] %v6490
      %6539 = vst [vmem:[%s263 + $0x49] sm:$0x80] %v6491
      %6540 = vst [vmem:[%s263 + $0x51] sm:$0xff] %v6492
      %6541 = vst [vmem:[%s263 + $0x59] sm:$0x7f] %v6493
      %6542 = vst [vmem:[%s263 + $0x59] sm:$0x80] %v6494
      %6543 = vst [vmem:[%s263 + $0x61] sm:$0xff] %v6495
      %6544 = vst [vmem:[%s263 + $0x69] sm:$0x7f] %v6496
      %6545 = vst [vmem:[%s263 + $0x69] sm:$0x80] %v6497
      %6546 = vst [vmem:[%s263 + $0x71] sm:$0xff] %v6498
      %6547 = vst [vmem:[%s263 + $0x79] sm:$0x7f] %v6499
      %6548 = vst [vmem:[%s263 + $0x79] sm:$0x80] %v6500
      %6549 = vst [vmem:[%s263 + $0x81] sm:$0xff] %v6501
      %6550 = vst [vmem:[%s263 + $0x89] sm:$0x7f] %v6502
      %6551 = vst [vmem:[%s263 + $0x89] sm:$0x80] %v6503
      %6552 = vst [vmem:[%s263 + $0x91] sm:$0xff] %v6504
      %6553 = vst [vmem:[%s263 + $0x99] sm:$0x7f] %v6505
      %6554 = vst [vmem:[%s263 + $0x99] sm:$0x80] %v6506
      %6555 = vst [vmem:[%s263 + $0xa1] sm:$0xff] %v6507
      %6556 = vst [vmem:[%s263 + $0xa9] sm:$0x7f] %v6508
      %6557 = vst [vmem:[%s263 + $0xa9] sm:$0x80] %v6509
      %6558 = vst [vmem:[%s263 + $0xb1] sm:$0xff] %v6510
      %6559 = vst [vmem:[%s263 + $0xb9] sm:$0x7f] %v6511
      %6560 = vst [vmem:[%s263 + $0xb9] sm:$0x80] %v6512
      %6561 = vst [vmem:[%s263 + $0xc1] sm:$0xff] %v6513
      %6562 = vst [vmem:[%s263 + $0xc9] sm:$0x7f] %v6514
      %6563 = vst [vmem:[%s263 + $0xc9] sm:$0x80] %v6515
      %6564 = vst [vmem:[%s263 + $0xd1] sm:$0xff] %v6516
      %6565 = vst [vmem:[%s263 + $0xd9] sm:$0x7f] %v6517
      %6566 = vst [vmem:[%s263 + $0xd9] sm:$0x80] %v6518
      %6567 = vst [vmem:[%s263 + $0xe1] sm:$0xff] %v6519
      %6568 = vst [vmem:[%s263 + $0xe9] sm:$0x7f] %v6520
      %6569 = vst [vmem:[%s263 + $0xe9] sm:$0x80] %v6521
      %6570 = vst [vmem:[%s263 + $0xf1] sm:$0xff] %v6522
      %6571 = vst [vmem:[%s263 + $0xf9] sm:$0x7f] %v6523
      %p6572 = scmp.lt.s32.totalorder %s18, 1
      %s6573 = scalar_select %p6572, %s18, 1
      %p6574 = scmp.lt.s32.totalorder %s19, 0
      %s6575 = scalar_select %p6574, %s19, 0
      %s6576 = smul.addr %s6573, 32
      %s6577 = sadd.s32 %s6575, %s6576
      %s6578 = smul.addr %s6577, 8
      %s6579 = scalar_lea.vmem %s3, %s6578
      // Predicated region
      $region33: #{frc_forward.5} parent=31 // pred_check
        %p6580 = pneg %p130
      $region34: #{frc_forward.5} parent=31 // pred_check_branch
        %6582 = sbr.rel (%p6580) target = $region36
      $region35: #{frc_forward.5} parent=31 // pred_region
        _
      $region36: #{frc_forward.5} parent=31 // pred_fallthru
        _
    $region32: #{frc_forward.5} parent=5 // pred_fallthru
      _
    %p6583 = scmp.le.s32.totalorder 2, %s9
    // Predicated region
    $region37: #{frc_forward.5} parent=5 // pred_check
      %p6584 = pneg %p6583
    $region38: #{frc_forward.5} parent=5 // pred_check_branch
      %6586 = sbr.rel (%p6584) target = $region40
    $region39: #{frc_forward.5} parent=5 // pred_region
      %s6587 = ssub.s32 %s9, 2
      // Predicated region
      $region41: #{frc_forward.5} parent=39 // pred_check
        %p6588 = pneg %p136
      $region42: #{frc_forward.5} parent=39 // pred_check_branch
        %6590 = sbr.rel (%p6588) target = $region44
      $region43: #{frc_forward.5} parent=39 // pred_region
        %p6591 = scmp.lt.s32.totalorder %s20, 1
        %s6592 = scalar_select %p6591, %s20, 1
        %p6593 = scmp.lt.s32.totalorder %s21, 0
        %s6594 = scalar_select %p6593, %s21, 0
        %s6595 = smul.addr %s6592, 32
        %s6596 = sadd.s32 %s6594, %s6595
        %s6597 = smul.addr %s6596, 8
        %s6598 = scalar_lea.vmem %s3, %s6597
      $region44: #{frc_forward.5} parent=39 // pred_fallthru
        _
    $region40: #{frc_forward.5} parent=5 // pred_fallthru
      _
  $region6: #{frc_forward.5} parent=0 // loop_footer
    %s13 = sadd.s32 1, %s9
  $region7: #{frc_forward.5} parent=0 // loop_footer_branch
    %8 = sbr.rel target = $region3
  $region8: #{frc_forward.5} parent=0 // loop_exit
    _

</llo_original>
